<compile_context>
chip_gen: v7x
topology: tpu7x:2x2x1
jax: 0.10.0
libtpu: 0.0.40
codegen_flags: <defaults>
</compile_context>

<pallas_src>
import math
import functools

import numpy as np
import jax
import jax.numpy as jnp
from jax.experimental import pallas as pl
from jax.experimental.pallas import tpu as pltpu


_PARALLEL_1D = pltpu.CompilerParams(dimension_semantics=("parallel",))
_EPS = 1e-5


# ----------------------------- in-kernel helpers -----------------------------

def _layernorm(x, g, b, eps=_EPS):
    mu = jnp.mean(x, axis=-1, keepdims=True)
    var = jnp.mean((x - mu) ** 2, axis=-1, keepdims=True)
    return (x - mu) * jax.lax.rsqrt(var + eps) * g + b


# batched-matmul dimension_numbers; batch axis = head axis (leading)
_DN_PROJ = (((2,), (1,)), ((0,), (0,)))   # [H,L,D]  x [H,D,Dh] -> [H,L,Dh]
_DN_QK   = (((2,), (2,)), ((0,), (0,)))   # [H,L,Dh] x [H,S,Dh] -> [H,L,S]
_DN_PV   = (((2,), (1,)), ((0,), (0,)))   # [H,L,S]  x [H,S,Dh] -> [H,L,Dh]
_DN_OUT  = (((2,), (1,)), ((0,), (0,)))   # [H,L,Dh] x [H,Dh,D] -> [H,L,D]


def _mha_heads(x_q, x_kv, wq, bq, wk, bk, wv, bv, wo, bo, *, nhead, scale):
    """Head-batched multi-head attention, fully in VMEM.

    x_q: [L, D] f32, x_kv: [S, D] f32.  Per-head weights prepared on the host:
      wq/wk/wv: [H, D, Dh] bf16, bq/bk/bv: [H, 1, Dh] f32,
      wo: [H, Dh, D] bf16, bo: [1, D] f32.
    No per-head Python loop, no lane-offset slices, no concatenate.
    """
    L, D = x_q.shape
    S = x_kv.shape[0]
    qb = jnp.broadcast_to(x_q.astype(jnp.bfloat16)[None], (nhead, L, D))
    kvb = jnp.broadcast_to(x_kv.astype(jnp.bfloat16)[None], (nhead, S, D))
    qh = (jax.lax.dot_general(qb, wq, _DN_PROJ,
                              preferred_element_type=jnp.float32) + bq) * scale
    kh = jax.lax.dot_general(kvb, wk, _DN_PROJ,
                             preferred_element_type=jnp.float32) + bk
    vh = jax.lax.dot_general(kvb, wv, _DN_PROJ,
                             preferred_element_type=jnp.float32) + bv
    s = jax.lax.dot_general(qh.astype(jnp.bfloat16), kh.astype(jnp.bfloat16),
                            _DN_QK, preferred_element_type=jnp.float32)      # [H,L,S]
    m = jnp.max(s, axis=-1, keepdims=True)
    e = jnp.exp(s - m)
    p = e * pl.reciprocal(jnp.sum(e, axis=-1, keepdims=True), approx=True)
    o = jax.lax.dot_general(p.astype(jnp.bfloat16), vh.astype(jnp.bfloat16),
                            _DN_PV, preferred_element_type=jnp.float32)      # [H,L,Dh]
    y = jax.lax.dot_general(o.astype(jnp.bfloat16), wo, _DN_OUT,
                            preferred_element_type=jnp.float32)              # [H,L,D]
    # sum over heads == concat(heads) @ Wo
    return jnp.sum(y, axis=0) + bo


def _ffn(h, w1, bb1, w2, bb2):
    f = jnp.maximum(jnp.dot(h.astype(jnp.bfloat16), w1,
                            preferred_element_type=jnp.float32) + bb1, 0.0)
    return jnp.dot(f.astype(jnp.bfloat16), w2,
                   preferred_element_type=jnp.float32) + bb2


# --------------------------- fused encoder layer -----------------------------

def _enc_layer_kernel(src_ref, pos_ref,
                      wq, bq, wk, bk, wv, bv, wo, bo,
                      g1, be1, w1, bb1, w2, bb2, g2, be2,
                      o_ref, *, nhead, scale):
    src = src_ref[0]                                    # [S, D]
    x = src + pos_ref[0]                                # q = k = v = src + pos
    src2 = _mha_heads(x, x, wq[...], bq[...], wk[...], bk[...], wv[...], bv[...],
                      wo[...], bo[...], nhead=nhead, scale=scale)
    h = _layernorm(src + src2, g1[...], be1[...])
    y = _ffn(h, w1[...], bb1[...], w2[...], bb2[...])
    o_ref[0] = _layernorm(h + y, g2[...], be2[...])


_ENC_KEYS = ('wq', 'bq', 'wk', 'bk', 'wv', 'bv', 'wo', 'bo',
             'g1', 'be1', 'w1', 'bb1', 'w2', 'bb2', 'g2', 'be2')


def _full_spec(arr):
    if arr.ndim == 2:
        return pl.BlockSpec(arr.shape, lambda b: (0, 0))
    return pl.BlockSpec(arr.shape, lambda b: (0, 0, 0))


def _bytes(*arrays):
    return int(sum(a.size * a.dtype.itemsize for a in arrays))


def pallas_encoder_layer(src, pos, p, *, nhead):
    """Whole encoder layer (forward_post) fused in one pallas_call, grid over batch."""
    B, S, D = src.shape
    F = p['w1'].shape[1]
    scale = 1.0 / math.sqrt(D // nhead)
    weights = [p[k] for k in _ENC_KEYS]
    batch_spec = pl.BlockSpec((1, S, D), lambda b: (b, 0, 0))
    flops = int(B * (8 * S * D * D + 4 * S * S * D + 4 * S * D * F))
    ce = pl.CostEstimate(flops=flops,
                         transcendentals=int(B * nhead * S * S),
                         bytes_accessed=_bytes(src, pos, *weights) + B * S * D * 4)
    return pl.pallas_call(
        functools.partial(_enc_layer_kernel, nhead=nhead, scale=scale),
        out_shape=jax.ShapeDtypeStruct((B, S, D), jnp.float32),
        grid=(B,),
        in_specs=[batch_spec, batch_spec] + [_full_spec(w) for w in weights],
        out_specs=batch_spec,
        compiler_params=_PARALLEL_1D,
        cost_estimate=ce,
    )(src, pos, *weights)


# --------------------------- fused decoder layer -----------------------------

def _dec_layer_kernel(tgt_ref, qpos_ref, mem_ref,
                      a_wq, a_bq, a_wk, a_bk, a_wv, a_bv, a_wo, a_bo,
                      g1, be1,
                      c_wq, c_bq, c_wk, c_bk, c_wv, c_bv, c_wo, c_bo,
                      g2, be2,
                      w1, bb1, w2, bb2, g3, be3,
                      o_ref, *, nhead, scale):
    tgt = tgt_ref[0]                                    # [T, D]
    qpos = qpos_ref[0]                                  # [T, D]
    mem_kv = mem_ref[0]                                 # [S, D] (= memory + pos)
    # self-attention (q = k = v = tgt + query_pos)
    x = tgt + qpos
    tgt2 = _mha_heads(x, x, a_wq[...], a_bq[...], a_wk[...], a_bk[...],
                      a_wv[...], a_bv[...], a_wo[...], a_bo[...],
                      nhead=nhead, scale=scale)
    t1 = _layernorm(tgt + tgt2, g1[...], be1[...])
    # cross-attention (q = t1 + query_pos, k = v = memory + pos)
    tgt2 = _mha_heads(t1 + qpos, mem_kv, c_wq[...], c_bq[...], c_wk[...], c_bk[...],
                      c_wv[...], c_bv[...], c_wo[...], c_bo[...],
                      nhead=nhead, scale=scale)
    h = _layernorm(t1 + tgt2, g2[...], be2[...])
    # FFN
    y = _ffn(h, w1[...], bb1[...], w2[...], bb2[...])
    o_ref[0] = _layernorm(h + y, g3[...], be3[...])


_DEC_KEYS = ('a_wq', 'a_bq', 'a_wk', 'a_bk', 'a_wv', 'a_bv', 'a_wo', 'a_bo',
             'g1', 'be1',
             'c_wq', 'c_bq', 'c_wk', 'c_bk', 'c_wv', 'c_bv', 'c_wo', 'c_bo',
             'g2', 'be2',
             'w1', 'bb1', 'w2', 'bb2', 'g3', 'be3')


def pallas_decoder_layer(tgt, qpos, mem_kv, p, *, nhead):
    """Whole decoder layer (forward_post) fused in one pallas_call, grid over batch."""
    B, T, D = tgt.shape
    S = mem_kv.shape[1]
    F = p['w1'].shape[1]
    scale = 1.0 / math.sqrt(D // nhead)
    weights = [p[k] for k in _DEC_KEYS]
    tgt_spec = pl.BlockSpec((1, T, D), lambda b: (b, 0, 0))
    mem_spec = pl.BlockSpec((1, S, D), lambda b: (b, 0, 0))
    flops = int(B * (12 * T * D * D + 4 * S * D * D + 4 * T * T * D
                     + 4 * T * S * D + 4 * T * D * F))
    ce = pl.CostEstimate(flops=flops,
                         transcendentals=int(B * nhead * (T * T + T * S)),
                         bytes_accessed=_bytes(tgt, qpos, mem_kv, *weights) + B * T * D * 4)
    return pl.pallas_call(
        functools.partial(_dec_layer_kernel, nhead=nhead, scale=scale),
        out_shape=jax.ShapeDtypeStruct((B, T, D), jnp.float32),
        grid=(B,),
        in_specs=[tgt_spec, tgt_spec, mem_spec] + [_full_spec(w) for w in weights],
        out_specs=tgt_spec,
        compiler_params=_PARALLEL_1D,
        cost_estimate=ce,
    )(tgt, qpos, mem_kv, *weights)


# --------------------------- final decoder LayerNorm -------------------------

def _ln3_kernel(x_ref, g_ref, b_ref, o_ref):
    o_ref[0] = _layernorm(x_ref[0], g_ref[...], b_ref[...])


def pallas_layernorm_3d(x, g, b):
    B, T, D = x.shape
    row3 = pl.BlockSpec((1, T, D), lambda i: (i, 0, 0))
    return pl.pallas_call(
        _ln3_kernel,
        out_shape=jax.ShapeDtypeStruct((B, T, D), jnp.float32),
        grid=(B,),
        in_specs=[row3,
                  pl.BlockSpec((1, D), lambda i: (0, 0)),
                  pl.BlockSpec((1, D), lambda i: (0, 0))],
        out_specs=row3,
        compiler_params=_PARALLEL_1D,
    )(x, g, b)


# --------------------------- diffusion utilities -----------------------------

def cosine_beta_schedule(timesteps, s=0.008):
    steps = timesteps + 1
    x = np.linspace(0, timesteps, steps, dtype=np.float64)
    alphas_cumprod = np.cos((x / timesteps + s) / (1 + s) * math.pi * 0.5) ** 2
    alphas_cumprod = alphas_cumprod / alphas_cumprod[0]
    betas = 1 - alphas_cumprod[1:] / alphas_cumprod[:-1]
    return np.clip(betas, 0, 0.999)


def make_buffers(timesteps=1000):
    betas = cosine_beta_schedule(timesteps)
    alphas = 1.0 - betas
    alphas_cumprod = np.cumprod(alphas, axis=0)
    return {
        'sqrt_alphas_cumprod': jnp.asarray(np.sqrt(alphas_cumprod), jnp.float32),
        'sqrt_one_minus_alphas_cumprod': jnp.asarray(np.sqrt(1.0 - alphas_cumprod), jnp.float32),
    }


def prepare_targets(event_gt, key, buffers, num_timesteps):
    scale = 0.5
    k_t, k_n = jax.random.split(key)
    t = jax.random.randint(k_t, (1,), 0, num_timesteps)
    noise = jax.random.normal(k_n, event_gt.shape, dtype=jnp.float32)
    x_start = (event_gt * 2.0 - 1.0) * scale
    sa = buffers['sqrt_alphas_cumprod'][t].reshape(-1, 1, 1)
    so = buffers['sqrt_one_minus_alphas_cumprod'][t].reshape(-1, 1, 1)
    x = sa * x_start + so * noise
    x = jnp.clip(x, -scale, scale)
    event_diffused = (x / scale + 1.0) / 2.0
    return event_diffused, noise, t


def get_timestep_embedding(timesteps, embedding_dim):
    half_dim = embedding_dim // 2
    emb = math.log(10000.0) / (half_dim - 1)
    emb = jnp.exp(jnp.arange(half_dim, dtype=jnp.float32) * -emb)
    emb = timesteps.astype(jnp.float32)[:, None] * emb[None, :]
    emb = jnp.concatenate([jnp.sin(emb), jnp.cos(emb)], axis=1)
    if embedding_dim % 2 == 1:
        emb = jnp.pad(emb, ((0, 0), (0, 1)))
    return emb


def _swish(x):
    return x * jax.nn.sigmoid(x)


# ------------------------------- full forward --------------------------------

def transformer_forward(params, buffers, past_label, src, mask, tgt_mask,
                        tgt_key_padding_mask, query_embed, pos_embed,
                        tgt_pos_embed, rng_key, *, nhead, time_emb_dim,
                        num_timesteps):
    # seq-first -> batch-major internal layout (single transposes at the boundary).
    src_b = jnp.transpose(src, (1, 0, 2))                                   # [B, S, D]
    pos_b = (jnp.zeros_like(src_b) if pos_embed is None
             else jnp.transpose(pos_embed, (1, 0, 2)))

    # --- encoder: one fused pallas_call per layer ---
    memory = src_b
    for lp in params['encoder_layers']:
        memory = pallas_encoder_layer(memory, pos_b, lp, nhead=nhead)

    # --- diffusion target preparation (random t, random noise) ---
    event_diffused, _noise, t = prepare_targets(past_label, rng_key, buffers, num_timesteps)

    # --- time embedding MLP: 1-row matmuls -> plain jnp (launch overhead >> compute) ---
    emb = get_timestep_embedding(t, time_emb_dim)                           # [1, E]
    h = _swish(emb @ params['time_in0_w'] + params['time_in0_b'])
    h = _swish(h @ params['time_in1_w'] + params['time_in1_b'])
    te = h @ params['time_proj_w'] + params['time_proj_b']                  # [1, D]

    # --- conv_in (1x1 Conv1d == matmul); fold the broadcast time-emb add into the bias ---
    B, C, T = event_diffused.shape
    x2d = event_diffused.transpose(0, 2, 1).reshape(B * T, C)
    fra2d = x2d @ params['conv_in_w'] + (params['conv_in_b'] + te.reshape(-1))
    D = fra2d.shape[1]
    out = fra2d.reshape(B, T, D)                                            # batch-major decoder input

    qry_b = (jnp.zeros((B, T, D), jnp.float32) if query_embed is None
             else jnp.transpose(query_embed, (1, 0, 2)))
    mem_kv = memory + pos_b                                                 # hoisted cross-attn K/V source

    # --- decoder: one fused pallas_call per layer, then the final LayerNorm ---
    for lp in params['decoder_layers']:
        out = pallas_decoder_layer(out, qry_b, mem_kv, lp, nhead=nhead)
    out = pallas_layernorm_3d(out, params['dec_norm_g'], params['dec_norm_b'])

    # back to PyTorch seq-first layout [S, B, D] / [T, B, D]
    return jnp.transpose(memory, (1, 0, 2)), jnp.transpose(out, (1, 0, 2))


# ------------------------------ parameter init --------------------------------

def _xavier(key, shape):
    limit = math.sqrt(6.0 / (shape[0] + shape[1]))
    return jax.random.uniform(key, shape, jnp.float32, -limit, limit)


def _init_linear(key, d_in, d_out):
    kw, kb = jax.random.split(key)
    w = _xavier(kw, (d_in, d_out))
    b = jax.random.uniform(kb, (d_out,), jnp.float32, -0.01, 0.01)
    return w, b


def _init_mha(key, d_model, nhead):
    """Per-head weight layout so the kernel never slices the lane dim."""
    dh = d_model // nhead
    kq, kk, kv, ko = jax.random.split(key, 4)

    def per_head_proj(k):
        w, b = _init_linear(k, d_model, d_model)
        w_h = w.reshape(d_model, nhead, dh).transpose(1, 0, 2).astype(jnp.bfloat16)  # [H,D,Dh]
        b_h = b.reshape(nhead, 1, dh)                                                 # [H,1,Dh]
        return w_h, b_h

    wq, bq = per_head_proj(kq)
    wk, bk = per_head_proj(kk)
    wv, bv = per_head_proj(kv)
    wo, bo = _init_linear(ko, d_model, d_model)
    return {'wq': wq, 'bq': bq, 'wk': wk, 'bk': bk, 'wv': wv, 'bv': bv,
            'wo': wo.reshape(nhead, dh, d_model).astype(jnp.bfloat16),                # [H,Dh,D]
            'bo': bo.reshape(1, d_model)}


def _ln_params(d_model):
    return jnp.ones((1, d_model), jnp.float32), jnp.zeros((1, d_model), jnp.float32)


def _init_enc_layer(key, d_model, dim_ff, nhead):
    k1, k2, k3 = jax.random.split(key, 3)
    layer = dict(_init_mha(k1, d_model, nhead))
    w1, b1 = _init_linear(k2, d_model, dim_ff)
    w2, b2 = _init_linear(k3, dim_ff, d_model)
    g1, be1 = _ln_params(d_model)
    g2, be2 = _ln_params(d_model)
    layer.update({
        'g1': g1, 'be1': be1,
        'w1': w1.astype(jnp.bfloat16), 'bb1': b1.reshape(1, dim_ff),
        'w2': w2.astype(jnp.bfloat16), 'bb2': b2.reshape(1, d_model),
        'g2': g2, 'be2': be2,
    })
    return layer


def _init_dec_layer(key, d_model, dim_ff, nhead):
    k1, k2, k3, k4 = jax.random.split(key, 4)
    layer = {('a_' + k): v for k, v in _init_mha(k1, d_model, nhead).items()}
    layer.update({('c_' + k): v for k, v in _init_mha(k2, d_model, nhead).items()})
    w1, b1 = _init_linear(k3, d_model, dim_ff)
    w2, b2 = _init_linear(k4, dim_ff, d_model)
    g1, be1 = _ln_params(d_model)
    g2, be2 = _ln_params(d_model)
    g3, be3 = _ln_params(d_model)
    layer.update({
        'g1': g1, 'be1': be1, 'g2': g2, 'be2': be2, 'g3': g3, 'be3': be3,
        'w1': w1.astype(jnp.bfloat16), 'bb1': b1.reshape(1, dim_ff),
        'w2': w2.astype(jnp.bfloat16), 'bb2': b2.reshape(1, d_model),
    })
    return layer


def init_params(key, *, n_class, d_model, dim_ff, n_enc, n_dec, nhead, time_emb_dim):
    keys = jax.random.split(key, 4 + n_enc + n_dec)
    ti0_w, ti0_b = _init_linear(keys[0], time_emb_dim, time_emb_dim)
    ti1_w, ti1_b = _init_linear(keys[1], time_emb_dim, time_emb_dim)
    tp_w, tp_b = _init_linear(keys[2], time_emb_dim, d_model)
    ci_w, ci_b = _init_linear(keys[3], n_class, d_model)      # conv_in (1x1)
    dn_g, dn_b = _ln_params(d_model)
    return {
        'time_in0_w': ti0_w, 'time_in0_b': ti0_b,
        'time_in1_w': ti1_w, 'time_in1_b': ti1_b,
        'time_proj_w': tp_w, 'time_proj_b': tp_b,
        'conv_in_w': ci_w, 'conv_in_b': ci_b,
        'dec_norm_g': dn_g, 'dec_norm_b': dn_b,
        'encoder_layers': [_init_enc_layer(keys[4 + i], d_model, dim_ff, nhead)
                           for i in range(n_enc)],
        'decoder_layers': [_init_dec_layer(keys[4 + n_enc + i], d_model, dim_ff, nhead)
                           for i in range(n_dec)],
    }


# ----------------------------------- main -------------------------------------

if __name__ == "__main__":
    # Small, forward-consistent shapes.
    B, S, T = 2, 8, 8            # batch, encoder seq len, target seq len
    n_class = 8
    d_model = 32
    nhead = 4
    dim_ff = 64
    n_enc = 2
    n_dec = 2
    time_emb_dim = 32
    timesteps = 1000

    root = jax.random.PRNGKey(0)
    k_par, k_lab, k_src, k_pos, k_qry, k_diff = jax.random.split(root, 6)

    params = init_params(k_par, n_class=n_class, d_model=d_model, dim_ff=dim_ff,
                         n_enc=n_enc, n_dec=n_dec, nhead=nhead,
                         time_emb_dim=time_emb_dim)
    buffers = make_buffers(timesteps=timesteps)

    # past_label: one-hot class labels in NCT layout [B, n_class, T]
    labels = jax.random.randint(k_lab, (B, T), 0, n_class)
    past_label = jax.nn.one_hot(labels, n_class, dtype=jnp.float32).transpose(0, 2, 1)

    src = jax.random.normal(k_src, (S, B, d_model), jnp.float32)            # seq-first
    pos_embed = 0.1 * jax.random.normal(k_pos, (S, B, d_model), jnp.float32)
    query_embed = 0.1 * jax.random.normal(k_qry, (T, B, d_model), jnp.float32)
    mask = None                                                             # key_padding_mask
    tgt_mask = None
    tgt_key_padding_mask = None
    tgt_pos_embed = None                                                    # unused by forward

    fwd = jax.jit(functools.partial(transformer_forward, nhead=nhead,
                                    time_emb_dim=time_emb_dim,
                                    num_timesteps=timesteps))

    memory, fra = fwd(params, buffers, past_label, src, mask, tgt_mask,
                      tgt_key_padding_mask, query_embed, pos_embed,
                      tgt_pos_embed, k_diff)

    jax.block_until_ready((memory, fra))
    assert memory.shape == (S, B, d_model)
    assert fra.shape == (T, B, d_model)
    assert bool(jnp.all(jnp.isfinite(memory))) and bool(jnp.all(jnp.isfinite(fra)))
    print("KERNEL_OK")
</pallas_src>

<mosaic_0001>
module attributes {stable_mosaic.version = 11 : i64} {
  func.func @_enc_layer_kernel(%arg0: i32, %arg1: memref<1x8x32xf32, #tpu.memory_space<vmem>>, %arg2: memref<1x8x32xf32, #tpu.memory_space<vmem>>, %arg3: memref<4x32x8xbf16, #tpu.memory_space<vmem>>, %arg4: memref<4x1x8xf32, #tpu.memory_space<vmem>>, %arg5: memref<4x32x8xbf16, #tpu.memory_space<vmem>>, %arg6: memref<4x1x8xf32, #tpu.memory_space<vmem>>, %arg7: memref<4x32x8xbf16, #tpu.memory_space<vmem>>, %arg8: memref<4x1x8xf32, #tpu.memory_space<vmem>>, %arg9: memref<4x8x32xbf16, #tpu.memory_space<vmem>>, %arg10: memref<1x32xf32, #tpu.memory_space<vmem>>, %arg11: memref<1x32xf32, #tpu.memory_space<vmem>>, %arg12: memref<1x32xf32, #tpu.memory_space<vmem>>, %arg13: memref<32x64xbf16, #tpu.memory_space<vmem>>, %arg14: memref<1x64xf32, #tpu.memory_space<vmem>>, %arg15: memref<64x32xbf16, #tpu.memory_space<vmem>>, %arg16: memref<1x32xf32, #tpu.memory_space<vmem>>, %arg17: memref<1x32xf32, #tpu.memory_space<vmem>>, %arg18: memref<1x32xf32, #tpu.memory_space<vmem>>, %arg19: memref<1x8x32xf32, #tpu.memory_space<vmem>>) attributes {dimension_semantics = [#tpu.dimension_semantics<parallel>], iteration_bounds = array<i64: 2>, scalar_prefetch = 0 : i64, scratch_operands = 0 : i64, tpu.core_type = #tpu.core_type<tc>, window_params = [{transform_indices = @transform_0, window_bounds = array<i64: 1, 8, 32>}, {transform_indices = @transform_1, window_bounds = array<i64: 1, 8, 32>}, {pipeline_mode = #tpu.pipeline_mode<synchronous>, transform_indices = @transform_2, window_bounds = array<i64: 4, 32, 8>}, {pipeline_mode = #tpu.pipeline_mode<synchronous>, transform_indices = @transform_3, window_bounds = array<i64: 4, 1, 8>}, {pipeline_mode = #tpu.pipeline_mode<synchronous>, transform_indices = @transform_4, window_bounds = array<i64: 4, 32, 8>}, {pipeline_mode = #tpu.pipeline_mode<synchronous>, transform_indices = @transform_5, window_bounds = array<i64: 4, 1, 8>}, {pipeline_mode = #tpu.pipeline_mode<synchronous>, transform_indices = @transform_6, window_bounds = array<i64: 4, 32, 8>}, {pipeline_mode = #tpu.pipeline_mode<synchronous>, transform_indices = @transform_7, window_bounds = array<i64: 4, 1, 8>}, {pipeline_mode = #tpu.pipeline_mode<synchronous>, transform_indices = @transform_8, window_bounds = array<i64: 4, 8, 32>}, {pipeline_mode = #tpu.pipeline_mode<synchronous>, transform_indices = @transform_9, window_bounds = array<i64: 1, 32>}, {pipeline_mode = #tpu.pipeline_mode<synchronous>, transform_indices = @transform_10, window_bounds = array<i64: 1, 32>}, {pipeline_mode = #tpu.pipeline_mode<synchronous>, transform_indices = @transform_11, window_bounds = array<i64: 1, 32>}, {pipeline_mode = #tpu.pipeline_mode<synchronous>, transform_indices = @transform_12, window_bounds = array<i64: 32, 64>}, {pipeline_mode = #tpu.pipeline_mode<synchronous>, transform_indices = @transform_13, window_bounds = array<i64: 1, 64>}, {pipeline_mode = #tpu.pipeline_mode<synchronous>, transform_indices = @transform_14, window_bounds = array<i64: 64, 32>}, {pipeline_mode = #tpu.pipeline_mode<synchronous>, transform_indices = @transform_15, window_bounds = array<i64: 1, 32>}, {pipeline_mode = #tpu.pipeline_mode<synchronous>, transform_indices = @transform_16, window_bounds = array<i64: 1, 32>}, {pipeline_mode = #tpu.pipeline_mode<synchronous>, transform_indices = @transform_17, window_bounds = array<i64: 1, 32>}, {transform_indices = @transform_18, window_bounds = array<i64: 1, 8, 32>}]} {
    %c0 = arith.constant 0 : index
    %c0_0 = arith.constant 0 : index
    %c0_1 = arith.constant 0 : index
    %0 = vector.load %arg1[%c0, %c0_0, %c0_1] : memref<1x8x32xf32, #tpu.memory_space<vmem>>, vector<1x8x32xf32>
    %1 = vector.shape_cast %0 : vector<1x8x32xf32> to vector<8x32xf32>
    %c0_2 = arith.constant 0 : index
    %c0_3 = arith.constant 0 : index
    %c0_4 = arith.constant 0 : index
    %2 = vector.load %arg2[%c0_2, %c0_3, %c0_4] : memref<1x8x32xf32, #tpu.memory_space<vmem>>, vector<1x8x32xf32>
    %3 = vector.shape_cast %2 : vector<1x8x32xf32> to vector<8x32xf32>
    %4 = arith.addf %1, %3 : vector<8x32xf32>
    %c0_5 = arith.constant 0 : index
    %c0_6 = arith.constant 0 : index
    %c0_7 = arith.constant 0 : index
    %5 = vector.load %arg3[%c0_5, %c0_6, %c0_7] : memref<4x32x8xbf16, #tpu.memory_space<vmem>>, vector<4x32x8xbf16>
    %c0_8 = arith.constant 0 : index
    %c0_9 = arith.constant 0 : index
    %c0_10 = arith.constant 0 : index
    %6 = vector.load %arg4[%c0_8, %c0_9, %c0_10] : memref<4x1x8xf32, #tpu.memory_space<vmem>>, vector<4x1x8xf32>
    %c0_11 = arith.constant 0 : index
    %c0_12 = arith.constant 0 : index
    %c0_13 = arith.constant 0 : index
    %7 = vector.load %arg5[%c0_11, %c0_12, %c0_13] : memref<4x32x8xbf16, #tpu.memory_space<vmem>>, vector<4x32x8xbf16>
    %c0_14 = arith.constant 0 : index
    %c0_15 = arith.constant 0 : index
    %c0_16 = arith.constant 0 : index
    %8 = vector.load %arg6[%c0_14, %c0_15, %c0_16] : memref<4x1x8xf32, #tpu.memory_space<vmem>>, vector<4x1x8xf32>
    %c0_17 = arith.constant 0 : index
    %c0_18 = arith.constant 0 : index
    %c0_19 = arith.constant 0 : index
    %9 = vector.load %arg7[%c0_17, %c0_18, %c0_19] : memref<4x32x8xbf16, #tpu.memory_space<vmem>>, vector<4x32x8xbf16>
    %c0_20 = arith.constant 0 : index
    %c0_21 = arith.constant 0 : index
    %c0_22 = arith.constant 0 : index
    %10 = vector.load %arg8[%c0_20, %c0_21, %c0_22] : memref<4x1x8xf32, #tpu.memory_space<vmem>>, vector<4x1x8xf32>
    %c0_23 = arith.constant 0 : index
    %c0_24 = arith.constant 0 : index
    %c0_25 = arith.constant 0 : index
    %11 = vector.load %arg9[%c0_23, %c0_24, %c0_25] : memref<4x8x32xbf16, #tpu.memory_space<vmem>>, vector<4x8x32xbf16>
    %c0_26 = arith.constant 0 : index
    %c0_27 = arith.constant 0 : index
    %12 = vector.load %arg10[%c0_26, %c0_27] : memref<1x32xf32, #tpu.memory_space<vmem>>, vector<1x32xf32>
    %13 = arith.truncf %4 : vector<8x32xf32> to vector<8x32xbf16>
    %14 = vector.shape_cast %13 : vector<8x32xbf16> to vector<1x8x32xbf16>
    %15 = vector.shape_cast %14 : vector<1x8x32xbf16> to vector<1x8x32xbf16>
    %16 = vector.broadcast %15 : vector<1x8x32xbf16> to vector<4x8x32xbf16>
    %17 = arith.truncf %4 : vector<8x32xf32> to vector<8x32xbf16>
    %18 = vector.shape_cast %17 : vector<8x32xbf16> to vector<1x8x32xbf16>
    %19 = vector.shape_cast %18 : vector<1x8x32xbf16> to vector<1x8x32xbf16>
    %20 = vector.broadcast %19 : vector<1x8x32xbf16> to vector<4x8x32xbf16>
    %cst = arith.constant dense<0.000000e+00> : vector<4x8x8xf32>
    %21 = tpu.matmul %16, %5, %cst {dimension_numbers = #tpu.dot_dimension_numbers<[2], [1], [1], [2], [0, 0, 0, 1, 1, 2], [0], [0]>} : vector<4x8x32xbf16>, vector<4x32x8xbf16>, vector<4x8x8xf32> -> vector<4x8x8xf32>
    %22 = vector.broadcast %6 : vector<4x1x8xf32> to vector<4x8x8xf32>
    %23 = arith.addf %21, %22 : vector<4x8x8xf32>
    %cst_28 = arith.constant 0.353553385 : f32
    %24 = vector.broadcast %cst_28 : f32 to vector<4x8x8xf32>
    %25 = arith.mulf %23, %24 : vector<4x8x8xf32>
    %cst_29 = arith.constant dense<0.000000e+00> : vector<4x8x8xf32>
    %26 = tpu.matmul %20, %7, %cst_29 {dimension_numbers = #tpu.dot_dimension_numbers<[2], [1], [1], [2], [0, 0, 0, 1, 1, 2], [0], [0]>} : vector<4x8x32xbf16>, vector<4x32x8xbf16>, vector<4x8x8xf32> -> vector<4x8x8xf32>
    %27 = vector.broadcast %8 : vector<4x1x8xf32> to vector<4x8x8xf32>
    %28 = arith.addf %26, %27 : vector<4x8x8xf32>
    %cst_30 = arith.constant dense<0.000000e+00> : vector<4x8x8xf32>
    %29 = tpu.matmul %20, %9, %cst_30 {dimension_numbers = #tpu.dot_dimension_numbers<[2], [1], [1], [2], [0, 0, 0, 1, 1, 2], [0], [0]>} : vector<4x8x32xbf16>, vector<4x32x8xbf16>, vector<4x8x8xf32> -> vector<4x8x8xf32>
    %30 = vector.broadcast %10 : vector<4x1x8xf32> to vector<4x8x8xf32>
    %31 = arith.addf %29, %30 : vector<4x8x8xf32>
    %32 = arith.truncf %25 : vector<4x8x8xf32> to vector<4x8x8xbf16>
    %33 = arith.truncf %28 : vector<4x8x8xf32> to vector<4x8x8xbf16>
    %cst_31 = arith.constant dense<0.000000e+00> : vector<4x8x8xf32>
    %34 = tpu.matmul %32, %33, %cst_31 {dimension_numbers = #tpu.dot_dimension_numbers<[2], [2], [1], [1], [0, 0, 0, 1, 1, 1], [0], [0]>} : vector<4x8x8xbf16>, vector<4x8x8xbf16>, vector<4x8x8xf32> -> vector<4x8x8xf32>
    %cst_32 = arith.constant dense<0xFF800000> : vector<4x8xf32>
    %35 = vector.multi_reduction <maximumf>, %34, %cst_32 [2] : vector<4x8x8xf32> to vector<4x8xf32>
    %36 = vector.shape_cast %35 : vector<4x8xf32> to vector<4x8x1xf32>
    %37 = vector.broadcast %36 : vector<4x8x1xf32> to vector<4x8x8xf32>
    %38 = arith.subf %34, %37 : vector<4x8x8xf32>
    %39 = math.exp %38 : vector<4x8x8xf32>
    %cst_33 = arith.constant dense<0.000000e+00> : vector<4x8xf32>
    %40 = vector.multi_reduction <add>, %39, %cst_33 [2] : vector<4x8x8xf32> to vector<4x8xf32>
    %41 = vector.shape_cast %40 : vector<4x8xf32> to vector<4x8x1xf32>
    %42 = tpu.reciprocal %41 {approx = true} : vector<4x8x1xf32> -> vector<4x8x1xf32>
    %43 = vector.broadcast %42 : vector<4x8x1xf32> to vector<4x8x8xf32>
    %44 = arith.mulf %39, %43 : vector<4x8x8xf32>
    %45 = arith.truncf %44 : vector<4x8x8xf32> to vector<4x8x8xbf16>
    %46 = arith.truncf %31 : vector<4x8x8xf32> to vector<4x8x8xbf16>
    %cst_34 = arith.constant dense<0.000000e+00> : vector<4x8x8xf32>
    %47 = tpu.matmul %45, %46, %cst_34 {dimension_numbers = #tpu.dot_dimension_numbers<[2], [1], [1], [2], [0, 0, 0, 1, 1, 2], [0], [0]>} : vector<4x8x8xbf16>, vector<4x8x8xbf16>, vector<4x8x8xf32> -> vector<4x8x8xf32>
    %48 = arith.truncf %47 : vector<4x8x8xf32> to vector<4x8x8xbf16>
    %cst_35 = arith.constant dense<0.000000e+00> : vector<4x8x32xf32>
    %49 = tpu.matmul %48, %11, %cst_35 {dimension_numbers = #tpu.dot_dimension_numbers<[2], [1], [1], [2], [0, 0, 0, 1, 1, 2], [0], [0]>} : vector<4x8x8xbf16>, vector<4x8x32xbf16>, vector<4x8x32xf32> -> vector<4x8x32xf32>
    %cst_36 = arith.constant dense<0.000000e+00> : vector<8x32xf32>
    %50 = vector.multi_reduction <add>, %49, %cst_36 [0] : vector<4x8x32xf32> to vector<8x32xf32>
    %51 = vector.broadcast %12 : vector<1x32xf32> to vector<8x32xf32>
    %52 = arith.addf %50, %51 : vector<8x32xf32>
    %53 = arith.addf %1, %52 : vector<8x32xf32>
    %c0_37 = arith.constant 0 : index
    %c0_38 = arith.constant 0 : index
    %54 = vector.load %arg11[%c0_37, %c0_38] : memref<1x32xf32, #tpu.memory_space<vmem>>, vector<1x32xf32>
    %c0_39 = arith.constant 0 : index
    %c0_40 = arith.constant 0 : index
    %55 = vector.load %arg12[%c0_39, %c0_40] : memref<1x32xf32, #tpu.memory_space<vmem>>, vector<1x32xf32>
    %cst_41 = arith.constant dense<0.000000e+00> : vector<8xf32>
    %56 = vector.multi_reduction <add>, %53, %cst_41 [1] : vector<8x32xf32> to vector<8xf32>
    %57 = vector.shape_cast %56 : vector<8xf32> to vector<8x1xf32>
    %cst_42 = arith.constant 3.200000e+01 : f32
    %58 = vector.broadcast %cst_42 : f32 to vector<8x1xf32>
    %59 = arith.divf %57, %58 : vector<8x1xf32>
    %60 = vector.broadcast %59 : vector<8x1xf32> to vector<8x32xf32>
    %61 = arith.subf %53, %60 : vector<8x32xf32>
    %62 = arith.mulf %61, %61 : vector<8x32xf32>
    %cst_43 = arith.constant dense<0.000000e+00> : vector<8xf32>
    %63 = vector.multi_reduction <add>, %62, %cst_43 [1] : vector<8x32xf32> to vector<8xf32>
    %64 = vector.shape_cast %63 : vector<8xf32> to vector<8x1xf32>
    %cst_44 = arith.constant 3.200000e+01 : f32
    %65 = vector.broadcast %cst_44 : f32 to vector<8x1xf32>
    %66 = arith.divf %64, %65 : vector<8x1xf32>
    %67 = vector.broadcast %59 : vector<8x1xf32> to vector<8x32xf32>
    %68 = arith.subf %53, %67 : vector<8x32xf32>
    %cst_45 = arith.constant 9.99999974E-6 : f32
    %69 = vector.broadcast %cst_45 : f32 to vector<8x1xf32>
    %70 = arith.addf %66, %69 : vector<8x1xf32>
    %71 = math.rsqrt %70 : vector<8x1xf32>
    %72 = vector.broadcast %71 : vector<8x1xf32> to vector<8x32xf32>
    %73 = arith.mulf %68, %72 : vector<8x32xf32>
    %74 = vector.broadcast %54 : vector<1x32xf32> to vector<8x32xf32>
    %75 = arith.mulf %73, %74 : vector<8x32xf32>
    %76 = vector.broadcast %55 : vector<1x32xf32> to vector<8x32xf32>
    %77 = arith.addf %75, %76 : vector<8x32xf32>
    %c0_46 = arith.constant 0 : index
    %c0_47 = arith.constant 0 : index
    %78 = vector.load %arg13[%c0_46, %c0_47] : memref<32x64xbf16, #tpu.memory_space<vmem>>, vector<32x64xbf16>
    %c0_48 = arith.constant 0 : index
    %c0_49 = arith.constant 0 : index
    %79 = vector.load %arg14[%c0_48, %c0_49] : memref<1x64xf32, #tpu.memory_space<vmem>>, vector<1x64xf32>
    %c0_50 = arith.constant 0 : index
    %c0_51 = arith.constant 0 : index
    %80 = vector.load %arg15[%c0_50, %c0_51] : memref<64x32xbf16, #tpu.memory_space<vmem>>, vector<64x32xbf16>
    %c0_52 = arith.constant 0 : index
    %c0_53 = arith.constant 0 : index
    %81 = vector.load %arg16[%c0_52, %c0_53] : memref<1x32xf32, #tpu.memory_space<vmem>>, vector<1x32xf32>
    %82 = arith.truncf %77 : vector<8x32xf32> to vector<8x32xbf16>
    %cst_54 = arith.constant dense<0.000000e+00> : vector<8x64xf32>
    %83 = tpu.matmul %82, %78, %cst_54 {dimension_numbers = #tpu.dot_dimension_numbers<[1], [0], [0], [1], [0, 0, 1, 1], [], []>} : vector<8x32xbf16>, vector<32x64xbf16>, vector<8x64xf32> -> vector<8x64xf32>
    %84 = vector.broadcast %79 : vector<1x64xf32> to vector<8x64xf32>
    %85 = arith.addf %83, %84 : vector<8x64xf32>
    %cst_55 = arith.constant 0.000000e+00 : f32
    %86 = vector.broadcast %cst_55 : f32 to vector<8x64xf32>
    %87 = arith.maximumf %85, %86 : vector<8x64xf32>
    %88 = arith.truncf %87 : vector<8x64xf32> to vector<8x64xbf16>
    %cst_56 = arith.constant dense<0.000000e+00> : vector<8x32xf32>
    %89 = tpu.matmul %88, %80, %cst_56 {dimension_numbers = #tpu.dot_dimension_numbers<[1], [0], [0], [1], [0, 0, 1, 1], [], []>} : vector<8x64xbf16>, vector<64x32xbf16>, vector<8x32xf32> -> vector<8x32xf32>
    %90 = vector.broadcast %81 : vector<1x32xf32> to vector<8x32xf32>
    %91 = arith.addf %89, %90 : vector<8x32xf32>
    %92 = arith.addf %77, %91 : vector<8x32xf32>
    %c0_57 = arith.constant 0 : index
    %c0_58 = arith.constant 0 : index
    %93 = vector.load %arg17[%c0_57, %c0_58] : memref<1x32xf32, #tpu.memory_space<vmem>>, vector<1x32xf32>
    %c0_59 = arith.constant 0 : index
    %c0_60 = arith.constant 0 : index
    %94 = vector.load %arg18[%c0_59, %c0_60] : memref<1x32xf32, #tpu.memory_space<vmem>>, vector<1x32xf32>
    %cst_61 = arith.constant dense<0.000000e+00> : vector<8xf32>
    %95 = vector.multi_reduction <add>, %92, %cst_61 [1] : vector<8x32xf32> to vector<8xf32>
    %96 = vector.shape_cast %95 : vector<8xf32> to vector<8x1xf32>
    %cst_62 = arith.constant 3.200000e+01 : f32
    %97 = vector.broadcast %cst_62 : f32 to vector<8x1xf32>
    %98 = arith.divf %96, %97 : vector<8x1xf32>
    %99 = vector.broadcast %98 : vector<8x1xf32> to vector<8x32xf32>
    %100 = arith.subf %92, %99 : vector<8x32xf32>
    %101 = arith.mulf %100, %100 : vector<8x32xf32>
    %cst_63 = arith.constant dense<0.000000e+00> : vector<8xf32>
    %102 = vector.multi_reduction <add>, %101, %cst_63 [1] : vector<8x32xf32> to vector<8xf32>
    %103 = vector.shape_cast %102 : vector<8xf32> to vector<8x1xf32>
    %cst_64 = arith.constant 3.200000e+01 : f32
    %104 = vector.broadcast %cst_64 : f32 to vector<8x1xf32>
    %105 = arith.divf %103, %104 : vector<8x1xf32>
    %106 = vector.broadcast %98 : vector<8x1xf32> to vector<8x32xf32>
    %107 = arith.subf %92, %106 : vector<8x32xf32>
    %cst_65 = arith.constant 9.99999974E-6 : f32
    %108 = vector.broadcast %cst_65 : f32 to vector<8x1xf32>
    %109 = arith.addf %105, %108 : vector<8x1xf32>
    %110 = math.rsqrt %109 : vector<8x1xf32>
    %111 = vector.broadcast %110 : vector<8x1xf32> to vector<8x32xf32>
    %112 = arith.mulf %107, %111 : vector<8x32xf32>
    %113 = vector.broadcast %93 : vector<1x32xf32> to vector<8x32xf32>
    %114 = arith.mulf %112, %113 : vector<8x32xf32>
    %115 = vector.broadcast %94 : vector<1x32xf32> to vector<8x32xf32>
    %116 = arith.addf %114, %115 : vector<8x32xf32>
    %c0_66 = arith.constant 0 : index
    %c0_67 = arith.constant 0 : index
    %c0_68 = arith.constant 0 : index
    %117 = vector.load %arg19[%c0_66, %c0_67, %c0_68] : memref<1x8x32xf32, #tpu.memory_space<vmem>>, vector<1x8x32xf32>
    %118 = vector.shape_cast %117 : vector<1x8x32xf32> to vector<8x32xf32>
    %119 = vector.shape_cast %116 : vector<8x32xf32> to vector<1x8x32xf32>
    tpu.vector_store %arg19[%c0_66, %c0_67, %c0_68], %119 {strides = array<i32>} : memref<1x8x32xf32, #tpu.memory_space<vmem>>, vector<1x8x32xf32>,
    return
  }
  func.func @transform_0(%arg0: i32) -> (i32, i32, i32) {
    %c0_i32 = arith.constant 0 : i32
    %c0_i32_0 = arith.constant 0 : i32
    %c0_i32_1 = arith.constant 0 : i32
    return %arg0, %c0_i32, %c0_i32_0 : i32, i32, i32
  }
  func.func @transform_1(%arg0: i32) -> (i32, i32, i32) {
    %c0_i32 = arith.constant 0 : i32
    %c0_i32_0 = arith.constant 0 : i32
    %c0_i32_1 = arith.constant 0 : i32
    return %arg0, %c0_i32, %c0_i32_0 : i32, i32, i32
  }
  func.func @transform_2(%arg0: i32) -> (i32, i32, i32) {
    %c0_i32 = arith.constant 0 : i32
    %c0_i32_0 = arith.constant 0 : i32
    %c0_i32_1 = arith.constant 0 : i32
    %c0_i32_2 = arith.constant 0 : i32
    return %c0_i32, %c0_i32_0, %c0_i32_1 : i32, i32, i32
  }
  func.func @transform_3(%arg0: i32) -> (i32, i32, i32) {
    %c0_i32 = arith.constant 0 : i32
    %c0_i32_0 = arith.constant 0 : i32
    %c0_i32_1 = arith.constant 0 : i32
    %c0_i32_2 = arith.constant 0 : i32
    return %c0_i32, %c0_i32_0, %c0_i32_1 : i32, i32, i32
  }
  func.func @transform_4(%arg0: i32) -> (i32, i32, i32) {
    %c0_i32 = arith.constant 0 : i32
    %c0_i32_0 = arith.constant 0 : i32
    %c0_i32_1 = arith.constant 0 : i32
    %c0_i32_2 = arith.constant 0 : i32
    return %c0_i32, %c0_i32_0, %c0_i32_1 : i32, i32, i32
  }
  func.func @transform_5(%arg0: i32) -> (i32, i32, i32) {
    %c0_i32 = arith.constant 0 : i32
    %c0_i32_0 = arith.constant 0 : i32
    %c0_i32_1 = arith.constant 0 : i32
    %c0_i32_2 = arith.constant 0 : i32
    return %c0_i32, %c0_i32_0, %c0_i32_1 : i32, i32, i32
  }
  func.func @transform_6(%arg0: i32) -> (i32, i32, i32) {
    %c0_i32 = arith.constant 0 : i32
    %c0_i32_0 = arith.constant 0 : i32
    %c0_i32_1 = arith.constant 0 : i32
    %c0_i32_2 = arith.constant 0 : i32
    return %c0_i32, %c0_i32_0, %c0_i32_1 : i32, i32, i32
  }
  func.func @transform_7(%arg0: i32) -> (i32, i32, i32) {
    %c0_i32 = arith.constant 0 : i32
    %c0_i32_0 = arith.constant 0 : i32
    %c0_i32_1 = arith.constant 0 : i32
    %c0_i32_2 = arith.constant 0 : i32
    return %c0_i32, %c0_i32_0, %c0_i32_1 : i32, i32, i32
  }
  func.func @transform_8(%arg0: i32) -> (i32, i32, i32) {
    %c0_i32 = arith.constant 0 : i32
    %c0_i32_0 = arith.constant 0 : i32
    %c0_i32_1 = arith.constant 0 : i32
    %c0_i32_2 = arith.constant 0 : i32
    return %c0_i32, %c0_i32_0, %c0_i32_1 : i32, i32, i32
  }
  func.func @transform_9(%arg0: i32) -> (i32, i32) {
    %c0_i32 = arith.constant 0 : i32
    %c0_i32_0 = arith.constant 0 : i32
    %c0_i32_1 = arith.constant 0 : i32
    return %c0_i32, %c0_i32_0 : i32, i32
  }
  func.func @transform_10(%arg0: i32) -> (i32, i32) {
    %c0_i32 = arith.constant 0 : i32
    %c0_i32_0 = arith.constant 0 : i32
    %c0_i32_1 = arith.constant 0 : i32
    return %c0_i32, %c0_i32_0 : i32, i32
  }
  func.func @transform_11(%arg0: i32) -> (i32, i32) {
    %c0_i32 = arith.constant 0 : i32
    %c0_i32_0 = arith.constant 0 : i32
    %c0_i32_1 = arith.constant 0 : i32
    return %c0_i32, %c0_i32_0 : i32, i32
  }
  func.func @transform_12(%arg0: i32) -> (i32, i32) {
    %c0_i32 = arith.constant 0 : i32
    %c0_i32_0 = arith.constant 0 : i32
    %c0_i32_1 = arith.constant 0 : i32
    return %c0_i32, %c0_i32_0 : i32, i32
  }
  func.func @transform_13(%arg0: i32) -> (i32, i32) {
    %c0_i32 = arith.constant 0 : i32
    %c0_i32_0 = arith.constant 0 : i32
    %c0_i32_1 = arith.constant 0 : i32
    return %c0_i32, %c0_i32_0 : i32, i32
  }
  func.func @transform_14(%arg0: i32) -> (i32, i32) {
    %c0_i32 = arith.constant 0 : i32
    %c0_i32_0 = arith.constant 0 : i32
    %c0_i32_1 = arith.constant 0 : i32
    return %c0_i32, %c0_i32_0 : i32, i32
  }
  func.func @transform_15(%arg0: i32) -> (i32, i32) {
    %c0_i32 = arith.constant 0 : i32
    %c0_i32_0 = arith.constant 0 : i32
    %c0_i32_1 = arith.constant 0 : i32
    return %c0_i32, %c0_i32_0 : i32, i32
  }
  func.func @transform_16(%arg0: i32) -> (i32, i32) {
    %c0_i32 = arith.constant 0 : i32
    %c0_i32_0 = arith.constant 0 : i32
    %c0_i32_1 = arith.constant 0 : i32
    return %c0_i32, %c0_i32_0 : i32, i32
  }
  func.func @transform_17(%arg0: i32) -> (i32, i32) {
    %c0_i32 = arith.constant 0 : i32
    %c0_i32_0 = arith.constant 0 : i32
    %c0_i32_1 = arith.constant 0 : i32
    return %c0_i32, %c0_i32_0 : i32, i32
  }
  func.func @transform_18(%arg0: i32) -> (i32, i32, i32) {
    %c0_i32 = arith.constant 0 : i32
    %c0_i32_0 = arith.constant 0 : i32
    %c0_i32_1 = arith.constant 0 : i32
    return %arg0, %c0_i32, %c0_i32_0 : i32, i32, i32
  }
}

module attributes {stable_mosaic.version = 11 : i64} {
  func.func @_ln3_kernel(%arg0: i32, %arg1: memref<1x8x32xf32, #tpu.memory_space<vmem>>, %arg2: memref<1x32xf32, #tpu.memory_space<vmem>>, %arg3: memref<1x32xf32, #tpu.memory_space<vmem>>, %arg4: memref<1x8x32xf32, #tpu.memory_space<vmem>>) attributes {dimension_semantics = [#tpu.dimension_semantics<parallel>], iteration_bounds = array<i64: 2>, scalar_prefetch = 0 : i64, scratch_operands = 0 : i64, tpu.core_type = #tpu.core_type<tc>, window_params = [{transform_indices = @transform_0, window_bounds = array<i64: 1, 8, 32>}, {pipeline_mode = #tpu.pipeline_mode<synchronous>, transform_indices = @transform_1, window_bounds = array<i64: 1, 32>}, {pipeline_mode = #tpu.pipeline_mode<synchronous>, transform_indices = @transform_2, window_bounds = array<i64: 1, 32>}, {transform_indices = @transform_3, window_bounds = array<i64: 1, 8, 32>}]} {
    %c0 = arith.constant 0 : index
    %c0_0 = arith.constant 0 : index
    %c0_1 = arith.constant 0 : index
    %0 = vector.load %arg1[%c0, %c0_0, %c0_1] : memref<1x8x32xf32, #tpu.memory_space<vmem>>, vector<1x8x32xf32>
    %1 = vector.shape_cast %0 : vector<1x8x32xf32> to vector<8x32xf32>
    %c0_2 = arith.constant 0 : index
    %c0_3 = arith.constant 0 : index
    %2 = vector.load %arg2[%c0_2, %c0_3] : memref<1x32xf32, #tpu.memory_space<vmem>>, vector<1x32xf32>
    %c0_4 = arith.constant 0 : index
    %c0_5 = arith.constant 0 : index
    %3 = vector.load %arg3[%c0_4, %c0_5] : memref<1x32xf32, #tpu.memory_space<vmem>>, vector<1x32xf32>
    %cst = arith.constant dense<0.000000e+00> : vector<8xf32>
    %4 = vector.multi_reduction <add>, %1, %cst [1] : vector<8x32xf32> to vector<8xf32>
    %5 = vector.shape_cast %4 : vector<8xf32> to vector<8x1xf32>
    %cst_6 = arith.constant 3.200000e+01 : f32
    %6 = vector.broadcast %cst_6 : f32 to vector<8x1xf32>
    %7 = arith.divf %5, %6 : vector<8x1xf32>
    %8 = vector.broadcast %7 : vector<8x1xf32> to vector<8x32xf32>
    %9 = arith.subf %1, %8 : vector<8x32xf32>
    %10 = arith.mulf %9, %9 : vector<8x32xf32>
    %cst_7 = arith.constant dense<0.000000e+00> : vector<8xf32>
    %11 = vector.multi_reduction <add>, %10, %cst_7 [1] : vector<8x32xf32> to vector<8xf32>
    %12 = vector.shape_cast %11 : vector<8xf32> to vector<8x1xf32>
    %cst_8 = arith.constant 3.200000e+01 : f32
    %13 = vector.broadcast %cst_8 : f32 to vector<8x1xf32>
    %14 = arith.divf %12, %13 : vector<8x1xf32>
    %15 = vector.broadcast %7 : vector<8x1xf32> to vector<8x32xf32>
    %16 = arith.subf %1, %15 : vector<8x32xf32>
    %cst_9 = arith.constant 9.99999974E-6 : f32
    %17 = vector.broadcast %cst_9 : f32 to vector<8x1xf32>
    %18 = arith.addf %14, %17 : vector<8x1xf32>
    %19 = math.rsqrt %18 : vector<8x1xf32>
    %20 = vector.broadcast %19 : vector<8x1xf32> to vector<8x32xf32>
    %21 = arith.mulf %16, %20 : vector<8x32xf32>
    %22 = vector.broadcast %2 : vector<1x32xf32> to vector<8x32xf32>
    %23 = arith.mulf %21, %22 : vector<8x32xf32>
    %24 = vector.broadcast %3 : vector<1x32xf32> to vector<8x32xf32>
    %25 = arith.addf %23, %24 : vector<8x32xf32>
    %c0_10 = arith.constant 0 : index
    %c0_11 = arith.constant 0 : index
    %c0_12 = arith.constant 0 : index
    %26 = vector.load %arg4[%c0_10, %c0_11, %c0_12] : memref<1x8x32xf32, #tpu.memory_space<vmem>>, vector<1x8x32xf32>
    %27 = vector.shape_cast %26 : vector<1x8x32xf32> to vector<8x32xf32>
    %28 = vector.shape_cast %25 : vector<8x32xf32> to vector<1x8x32xf32>
    tpu.vector_store %arg4[%c0_10, %c0_11, %c0_12], %28 {strides = array<i32>} : memref<1x8x32xf32, #tpu.memory_space<vmem>>, vector<1x8x32xf32>,
    return
  }
  func.func @transform_0(%arg0: i32) -> (i32, i32, i32) {
    %c0_i32 = arith.constant 0 : i32
    %c0_i32_0 = arith.constant 0 : i32
    %c0_i32_1 = arith.constant 0 : i32
    return %arg0, %c0_i32, %c0_i32_0 : i32, i32, i32
  }
  func.func @transform_1(%arg0: i32) -> (i32, i32) {
    %c0_i32 = arith.constant 0 : i32
    %c0_i32_0 = arith.constant 0 : i32
    %c0_i32_1 = arith.constant 0 : i32
    return %c0_i32, %c0_i32_0 : i32, i32
  }
  func.func @transform_2(%arg0: i32) -> (i32, i32) {
    %c0_i32 = arith.constant 0 : i32
    %c0_i32_0 = arith.constant 0 : i32
    %c0_i32_1 = arith.constant 0 : i32
    return %c0_i32, %c0_i32_0 : i32, i32
  }
  func.func @transform_3(%arg0: i32) -> (i32, i32, i32) {
    %c0_i32 = arith.constant 0 : i32
    %c0_i32_0 = arith.constant 0 : i32
    %c0_i32_1 = arith.constant 0 : i32
    return %arg0, %c0_i32, %c0_i32_0 : i32, i32, i32
  }
}

module attributes {stable_mosaic.version = 11 : i64} {
  func.func @_dec_layer_kernel(%arg0: i32, %arg1: memref<1x8x32xf32, #tpu.memory_space<vmem>>, %arg2: memref<1x8x32xf32, #tpu.memory_space<vmem>>, %arg3: memref<1x8x32xf32, #tpu.memory_space<vmem>>, %arg4: memref<4x32x8xbf16, #tpu.memory_space<vmem>>, %arg5: memref<4x1x8xf32, #tpu.memory_space<vmem>>, %arg6: memref<4x32x8xbf16, #tpu.memory_space<vmem>>, %arg7: memref<4x1x8xf32, #tpu.memory_space<vmem>>, %arg8: memref<4x32x8xbf16, #tpu.memory_space<vmem>>, %arg9: memref<4x1x8xf32, #tpu.memory_space<vmem>>, %arg10: memref<4x8x32xbf16, #tpu.memory_space<vmem>>, %arg11: memref<1x32xf32, #tpu.memory_space<vmem>>, %arg12: memref<1x32xf32, #tpu.memory_space<vmem>>, %arg13: memref<1x32xf32, #tpu.memory_space<vmem>>, %arg14: memref<4x32x8xbf16, #tpu.memory_space<vmem>>, %arg15: memref<4x1x8xf32, #tpu.memory_space<vmem>>, %arg16: memref<4x32x8xbf16, #tpu.memory_space<vmem>>, %arg17: memref<4x1x8xf32, #tpu.memory_space<vmem>>, %arg18: memref<4x32x8xbf16, #tpu.memory_space<vmem>>, %arg19: memref<4x1x8xf32, #tpu.memory_space<vmem>>, %arg20: memref<4x8x32xbf16, #tpu.memory_space<vmem>>, %arg21: memref<1x32xf32, #tpu.memory_space<vmem>>, %arg22: memref<1x32xf32, #tpu.memory_space<vmem>>, %arg23: memref<1x32xf32, #tpu.memory_space<vmem>>, %arg24: memref<32x64xbf16, #tpu.memory_space<vmem>>, %arg25: memref<1x64xf32, #tpu.memory_space<vmem>>, %arg26: memref<64x32xbf16, #tpu.memory_space<vmem>>, %arg27: memref<1x32xf32, #tpu.memory_space<vmem>>, %arg28: memref<1x32xf32, #tpu.memory_space<vmem>>, %arg29: memref<1x32xf32, #tpu.memory_space<vmem>>, %arg30: memref<1x8x32xf32, #tpu.memory_space<vmem>>) attributes {dimension_semantics = [#tpu.dimension_semantics<parallel>], iteration_bounds = array<i64: 2>, scalar_prefetch = 0 : i64, scratch_operands = 0 : i64, tpu.core_type = #tpu.core_type<tc>, window_params = [{transform_indices = @transform_0, window_bounds = array<i64: 1, 8, 32>}, {transform_indices = @transform_1, window_bounds = array<i64: 1, 8, 32>}, {transform_indices = @transform_2, window_bounds = array<i64: 1, 8, 32>}, {pipeline_mode = #tpu.pipeline_mode<synchronous>, transform_indices = @transform_3, window_bounds = array<i64: 4, 32, 8>}, {pipeline_mode = #tpu.pipeline_mode<synchronous>, transform_indices = @transform_4, window_bounds = array<i64: 4, 1, 8>}, {pipeline_mode = #tpu.pipeline_mode<synchronous>, transform_indices = @transform_5, window_bounds = array<i64: 4, 32, 8>}, {pipeline_mode = #tpu.pipeline_mode<synchronous>, transform_indices = @transform_6, window_bounds = array<i64: 4, 1, 8>}, {pipeline_mode = #tpu.pipeline_mode<synchronous>, transform_indices = @transform_7, window_bounds = array<i64: 4, 32, 8>}, {pipeline_mode = #tpu.pipeline_mode<synchronous>, transform_indices = @transform_8, window_bounds = array<i64: 4, 1, 8>}, {pipeline_mode = #tpu.pipeline_mode<synchronous>, transform_indices = @transform_9, window_bounds = array<i64: 4, 8, 32>}, {pipeline_mode = #tpu.pipeline_mode<synchronous>, transform_indices = @transform_10, window_bounds = array<i64: 1, 32>}, {pipeline_mode = #tpu.pipeline_mode<synchronous>, transform_indices = @transform_11, window_bounds = array<i64: 1, 32>}, {pipeline_mode = #tpu.pipeline_mode<synchronous>, transform_indices = @transform_12, window_bounds = array<i64: 1, 32>}, {pipeline_mode = #tpu.pipeline_mode<synchronous>, transform_indices = @transform_13, window_bounds = array<i64: 4, 32, 8>}, {pipeline_mode = #tpu.pipeline_mode<synchronous>, transform_indices = @transform_14, window_bounds = array<i64: 4, 1, 8>}, {pipeline_mode = #tpu.pipeline_mode<synchronous>, transform_indices = @transform_15, window_bounds = array<i64: 4, 32, 8>}, {pipeline_mode = #tpu.pipeline_mode<synchronous>, transform_indices = @transform_16, window_bounds = array<i64: 4, 1, 8>}, {pipeline_mode = #tpu.pipeline_mode<synchronous>, transform_indices = @transform_17, window_bounds = array<i64: 4, 32, 8>}, {pipeline_mode = #tpu.pipeline_mode<synchronous>, transform_indices = @transform_18, window_bounds = array<i64: 4, 1, 8>}, {pipeline_mode = #tpu.pipeline_mode<synchronous>, transform_indices = @transform_19, window_bounds = array<i64: 4, 8, 32>}, {pipeline_mode = #tpu.pipeline_mode<synchronous>, transform_indices = @transform_20, window_bounds = array<i64: 1, 32>}, {pipeline_mode = #tpu.pipeline_mode<synchronous>, transform_indices = @transform_21, window_bounds = array<i64: 1, 32>}, {pipeline_mode = #tpu.pipeline_mode<synchronous>, transform_indices = @transform_22, window_bounds = array<i64: 1, 32>}, {pipeline_mode = #tpu.pipeline_mode<synchronous>, transform_indices = @transform_23, window_bounds = array<i64: 32, 64>}, {pipeline_mode = #tpu.pipeline_mode<synchronous>, transform_indices = @transform_24, window_bounds = array<i64: 1, 64>}, {pipeline_mode = #tpu.pipeline_mode<synchronous>, transform_indices = @transform_25, window_bounds = array<i64: 64, 32>}, {pipeline_mode = #tpu.pipeline_mode<synchronous>, transform_indices = @transform_26, window_bounds = array<i64: 1, 32>}, {pipeline_mode = #tpu.pipeline_mode<synchronous>, transform_indices = @transform_27, window_bounds = array<i64: 1, 32>}, {pipeline_mode = #tpu.pipeline_mode<synchronous>, transform_indices = @transform_28, window_bounds = array<i64: 1, 32>}, {transform_indices = @transform_29, window_bounds = array<i64: 1, 8, 32>}]} {
    %c0 = arith.constant 0 : index
    %c0_0 = arith.constant 0 : index
    %c0_1 = arith.constant 0 : index
    %0 = vector.load %arg1[%c0, %c0_0, %c0_1] : memref<1x8x32xf32, #tpu.memory_space<vmem>>, vector<1x8x32xf32>
    %1 = vector.shape_cast %0 : vector<1x8x32xf32> to vector<8x32xf32>
    %c0_2 = arith.constant 0 : index
    %c0_3 = arith.constant 0 : index
    %c0_4 = arith.constant 0 : index
    %2 = vector.load %arg2[%c0_2, %c0_3, %c0_4] : memref<1x8x32xf32, #tpu.memory_space<vmem>>, vector<1x8x32xf32>
    %3 = vector.shape_cast %2 : vector<1x8x32xf32> to vector<8x32xf32>
    %c0_5 = arith.constant 0 : index
    %c0_6 = arith.constant 0 : index
    %c0_7 = arith.constant 0 : index
    %4 = vector.load %arg3[%c0_5, %c0_6, %c0_7] : memref<1x8x32xf32, #tpu.memory_space<vmem>>, vector<1x8x32xf32>
    %5 = vector.shape_cast %4 : vector<1x8x32xf32> to vector<8x32xf32>
    %6 = arith.addf %1, %3 : vector<8x32xf32>
    %c0_8 = arith.constant 0 : index
    %c0_9 = arith.constant 0 : index
    %c0_10 = arith.constant 0 : index
    %7 = vector.load %arg4[%c0_8, %c0_9, %c0_10] : memref<4x32x8xbf16, #tpu.memory_space<vmem>>, vector<4x32x8xbf16>
    %c0_11 = arith.constant 0 : index
    %c0_12 = arith.constant 0 : index
    %c0_13 = arith.constant 0 : index
    %8 = vector.load %arg5[%c0_11, %c0_12, %c0_13] : memref<4x1x8xf32, #tpu.memory_space<vmem>>, vector<4x1x8xf32>
    %c0_14 = arith.constant 0 : index
    %c0_15 = arith.constant 0 : index
    %c0_16 = arith.constant 0 : index
    %9 = vector.load %arg6[%c0_14, %c0_15, %c0_16] : memref<4x32x8xbf16, #tpu.memory_space<vmem>>, vector<4x32x8xbf16>
    %c0_17 = arith.constant 0 : index
    %c0_18 = arith.constant 0 : index
    %c0_19 = arith.constant 0 : index
    %10 = vector.load %arg7[%c0_17, %c0_18, %c0_19] : memref<4x1x8xf32, #tpu.memory_space<vmem>>, vector<4x1x8xf32>
    %c0_20 = arith.constant 0 : index
    %c0_21 = arith.constant 0 : index
    %c0_22 = arith.constant 0 : index
    %11 = vector.load %arg8[%c0_20, %c0_21, %c0_22] : memref<4x32x8xbf16, #tpu.memory_space<vmem>>, vector<4x32x8xbf16>
    %c0_23 = arith.constant 0 : index
    %c0_24 = arith.constant 0 : index
    %c0_25 = arith.constant 0 : index
    %12 = vector.load %arg9[%c0_23, %c0_24, %c0_25] : memref<4x1x8xf32, #tpu.memory_space<vmem>>, vector<4x1x8xf32>
    %c0_26 = arith.constant 0 : index
    %c0_27 = arith.constant 0 : index
    %c0_28 = arith.constant 0 : index
    %13 = vector.load %arg10[%c0_26, %c0_27, %c0_28] : memref<4x8x32xbf16, #tpu.memory_space<vmem>>, vector<4x8x32xbf16>
    %c0_29 = arith.constant 0 : index
    %c0_30 = arith.constant 0 : index
    %14 = vector.load %arg11[%c0_29, %c0_30] : memref<1x32xf32, #tpu.memory_space<vmem>>, vector<1x32xf32>
    %15 = arith.truncf %6 : vector<8x32xf32> to vector<8x32xbf16>
    %16 = vector.shape_cast %15 : vector<8x32xbf16> to vector<1x8x32xbf16>
    %17 = vector.shape_cast %16 : vector<1x8x32xbf16> to vector<1x8x32xbf16>
    %18 = vector.broadcast %17 : vector<1x8x32xbf16> to vector<4x8x32xbf16>
    %19 = arith.truncf %6 : vector<8x32xf32> to vector<8x32xbf16>
    %20 = vector.shape_cast %19 : vector<8x32xbf16> to vector<1x8x32xbf16>
    %21 = vector.shape_cast %20 : vector<1x8x32xbf16> to vector<1x8x32xbf16>
    %22 = vector.broadcast %21 : vector<1x8x32xbf16> to vector<4x8x32xbf16>
    %cst = arith.constant dense<0.000000e+00> : vector<4x8x8xf32>
    %23 = tpu.matmul %18, %7, %cst {dimension_numbers = #tpu.dot_dimension_numbers<[2], [1], [1], [2], [0, 0, 0, 1, 1, 2], [0], [0]>} : vector<4x8x32xbf16>, vector<4x32x8xbf16>, vector<4x8x8xf32> -> vector<4x8x8xf32>
    %24 = vector.broadcast %8 : vector<4x1x8xf32> to vector<4x8x8xf32>
    %25 = arith.addf %23, %24 : vector<4x8x8xf32>
    %cst_31 = arith.constant 0.353553385 : f32
    %26 = vector.broadcast %cst_31 : f32 to vector<4x8x8xf32>
    %27 = arith.mulf %25, %26 : vector<4x8x8xf32>
    %cst_32 = arith.constant dense<0.000000e+00> : vector<4x8x8xf32>
    %28 = tpu.matmul %22, %9, %cst_32 {dimension_numbers = #tpu.dot_dimension_numbers<[2], [1], [1], [2], [0, 0, 0, 1, 1, 2], [0], [0]>} : vector<4x8x32xbf16>, vector<4x32x8xbf16>, vector<4x8x8xf32> -> vector<4x8x8xf32>
    %29 = vector.broadcast %10 : vector<4x1x8xf32> to vector<4x8x8xf32>
    %30 = arith.addf %28, %29 : vector<4x8x8xf32>
    %cst_33 = arith.constant dense<0.000000e+00> : vector<4x8x8xf32>
    %31 = tpu.matmul %22, %11, %cst_33 {dimension_numbers = #tpu.dot_dimension_numbers<[2], [1], [1], [2], [0, 0, 0, 1, 1, 2], [0], [0]>} : vector<4x8x32xbf16>, vector<4x32x8xbf16>, vector<4x8x8xf32> -> vector<4x8x8xf32>
    %32 = vector.broadcast %12 : vector<4x1x8xf32> to vector<4x8x8xf32>
    %33 = arith.addf %31, %32 : vector<4x8x8xf32>
    %34 = arith.truncf %27 : vector<4x8x8xf32> to vector<4x8x8xbf16>
    %35 = arith.truncf %30 : vector<4x8x8xf32> to vector<4x8x8xbf16>
    %cst_34 = arith.constant dense<0.000000e+00> : vector<4x8x8xf32>
    %36 = tpu.matmul %34, %35, %cst_34 {dimension_numbers = #tpu.dot_dimension_numbers<[2], [2], [1], [1], [0, 0, 0, 1, 1, 1], [0], [0]>} : vector<4x8x8xbf16>, vector<4x8x8xbf16>, vector<4x8x8xf32> -> vector<4x8x8xf32>
    %cst_35 = arith.constant dense<0xFF800000> : vector<4x8xf32>
    %37 = vector.multi_reduction <maximumf>, %36, %cst_35 [2] : vector<4x8x8xf32> to vector<4x8xf32>
    %38 = vector.shape_cast %37 : vector<4x8xf32> to vector<4x8x1xf32>
    %39 = vector.broadcast %38 : vector<4x8x1xf32> to vector<4x8x8xf32>
    %40 = arith.subf %36, %39 : vector<4x8x8xf32>
    %41 = math.exp %40 : vector<4x8x8xf32>
    %cst_36 = arith.constant dense<0.000000e+00> : vector<4x8xf32>
    %42 = vector.multi_reduction <add>, %41, %cst_36 [2] : vector<4x8x8xf32> to vector<4x8xf32>
    %43 = vector.shape_cast %42 : vector<4x8xf32> to vector<4x8x1xf32>
    %44 = tpu.reciprocal %43 {approx = true} : vector<4x8x1xf32> -> vector<4x8x1xf32>
    %45 = vector.broadcast %44 : vector<4x8x1xf32> to vector<4x8x8xf32>
    %46 = arith.mulf %41, %45 : vector<4x8x8xf32>
    %47 = arith.truncf %46 : vector<4x8x8xf32> to vector<4x8x8xbf16>
    %48 = arith.truncf %33 : vector<4x8x8xf32> to vector<4x8x8xbf16>
    %cst_37 = arith.constant dense<0.000000e+00> : vector<4x8x8xf32>
    %49 = tpu.matmul %47, %48, %cst_37 {dimension_numbers = #tpu.dot_dimension_numbers<[2], [1], [1], [2], [0, 0, 0, 1, 1, 2], [0], [0]>} : vector<4x8x8xbf16>, vector<4x8x8xbf16>, vector<4x8x8xf32> -> vector<4x8x8xf32>
    %50 = arith.truncf %49 : vector<4x8x8xf32> to vector<4x8x8xbf16>
    %cst_38 = arith.constant dense<0.000000e+00> : vector<4x8x32xf32>
    %51 = tpu.matmul %50, %13, %cst_38 {dimension_numbers = #tpu.dot_dimension_numbers<[2], [1], [1], [2], [0, 0, 0, 1, 1, 2], [0], [0]>} : vector<4x8x8xbf16>, vector<4x8x32xbf16>, vector<4x8x32xf32> -> vector<4x8x32xf32>
    %cst_39 = arith.constant dense<0.000000e+00> : vector<8x32xf32>
    %52 = vector.multi_reduction <add>, %51, %cst_39 [0] : vector<4x8x32xf32> to vector<8x32xf32>
    %53 = vector.broadcast %14 : vector<1x32xf32> to vector<8x32xf32>
    %54 = arith.addf %52, %53 : vector<8x32xf32>
    %55 = arith.addf %1, %54 : vector<8x32xf32>
    %c0_40 = arith.constant 0 : index
    %c0_41 = arith.constant 0 : index
    %56 = vector.load %arg12[%c0_40, %c0_41] : memref<1x32xf32, #tpu.memory_space<vmem>>, vector<1x32xf32>
    %c0_42 = arith.constant 0 : index
    %c0_43 = arith.constant 0 : index
    %57 = vector.load %arg13[%c0_42, %c0_43] : memref<1x32xf32, #tpu.memory_space<vmem>>, vector<1x32xf32>
    %cst_44 = arith.constant dense<0.000000e+00> : vector<8xf32>
    %58 = vector.multi_reduction <add>, %55, %cst_44 [1] : vector<8x32xf32> to vector<8xf32>
    %59 = vector.shape_cast %58 : vector<8xf32> to vector<8x1xf32>
    %cst_45 = arith.constant 3.200000e+01 : f32
    %60 = vector.broadcast %cst_45 : f32 to vector<8x1xf32>
    %61 = arith.divf %59, %60 : vector<8x1xf32>
    %62 = vector.broadcast %61 : vector<8x1xf32> to vector<8x32xf32>
    %63 = arith.subf %55, %62 : vector<8x32xf32>
    %64 = arith.mulf %63, %63 : vector<8x32xf32>
    %cst_46 = arith.constant dense<0.000000e+00> : vector<8xf32>
    %65 = vector.multi_reduction <add>, %64, %cst_46 [1] : vector<8x32xf32> to vector<8xf32>
    %66 = vector.shape_cast %65 : vector<8xf32> to vector<8x1xf32>
    %cst_47 = arith.constant 3.200000e+01 : f32
    %67 = vector.broadcast %cst_47 : f32 to vector<8x1xf32>
    %68 = arith.divf %66, %67 : vector<8x1xf32>
    %69 = vector.broadcast %61 : vector<8x1xf32> to vector<8x32xf32>
    %70 = arith.subf %55, %69 : vector<8x32xf32>
    %cst_48 = arith.constant 9.99999974E-6 : f32
    %71 = vector.broadcast %cst_48 : f32 to vector<8x1xf32>
    %72 = arith.addf %68, %71 : vector<8x1xf32>
    %73 = math.rsqrt %72 : vector<8x1xf32>
    %74 = vector.broadcast %73 : vector<8x1xf32> to vector<8x32xf32>
    %75 = arith.mulf %70, %74 : vector<8x32xf32>
    %76 = vector.broadcast %56 : vector<1x32xf32> to vector<8x32xf32>
    %77 = arith.mulf %75, %76 : vector<8x32xf32>
    %78 = vector.broadcast %57 : vector<1x32xf32> to vector<8x32xf32>
    %79 = arith.addf %77, %78 : vector<8x32xf32>
    %80 = arith.addf %79, %3 : vector<8x32xf32>
    %c0_49 = arith.constant 0 : index
    %c0_50 = arith.constant 0 : index
    %c0_51 = arith.constant 0 : index
    %81 = vector.load %arg14[%c0_49, %c0_50, %c0_51] : memref<4x32x8xbf16, #tpu.memory_space<vmem>>, vector<4x32x8xbf16>
    %c0_52 = arith.constant 0 : index
    %c0_53 = arith.constant 0 : index
    %c0_54 = arith.constant 0 : index
    %82 = vector.load %arg15[%c0_52, %c0_53, %c0_54] : memref<4x1x8xf32, #tpu.memory_space<vmem>>, vector<4x1x8xf32>
    %c0_55 = arith.constant 0 : index
    %c0_56 = arith.constant 0 : index
    %c0_57 = arith.constant 0 : index
    %83 = vector.load %arg16[%c0_55, %c0_56, %c0_57] : memref<4x32x8xbf16, #tpu.memory_space<vmem>>, vector<4x32x8xbf16>
    %c0_58 = arith.constant 0 : index
    %c0_59 = arith.constant 0 : index
    %c0_60 = arith.constant 0 : index
    %84 = vector.load %arg17[%c0_58, %c0_59, %c0_60] : memref<4x1x8xf32, #tpu.memory_space<vmem>>, vector<4x1x8xf32>
    %c0_61 = arith.constant 0 : index
    %c0_62 = arith.constant 0 : index
    %c0_63 = arith.constant 0 : index
    %85 = vector.load %arg18[%c0_61, %c0_62, %c0_63] : memref<4x32x8xbf16, #tpu.memory_space<vmem>>, vector<4x32x8xbf16>
    %c0_64 = arith.constant 0 : index
    %c0_65 = arith.constant 0 : index
    %c0_66 = arith.constant 0 : index
    %86 = vector.load %arg19[%c0_64, %c0_65, %c0_66] : memref<4x1x8xf32, #tpu.memory_space<vmem>>, vector<4x1x8xf32>
    %c0_67 = arith.constant 0 : index
    %c0_68 = arith.constant 0 : index
    %c0_69 = arith.constant 0 : index
    %87 = vector.load %arg20[%c0_67, %c0_68, %c0_69] : memref<4x8x32xbf16, #tpu.memory_space<vmem>>, vector<4x8x32xbf16>
    %c0_70 = arith.constant 0 : index
    %c0_71 = arith.constant 0 : index
    %88 = vector.load %arg21[%c0_70, %c0_71] : memref<1x32xf32, #tpu.memory_space<vmem>>, vector<1x32xf32>
    %89 = arith.truncf %80 : vector<8x32xf32> to vector<8x32xbf16>
    %90 = vector.shape_cast %89 : vector<8x32xbf16> to vector<1x8x32xbf16>
    %91 = vector.shape_cast %90 : vector<1x8x32xbf16> to vector<1x8x32xbf16>
    %92 = vector.broadcast %91 : vector<1x8x32xbf16> to vector<4x8x32xbf16>
    %93 = arith.truncf %5 : vector<8x32xf32> to vector<8x32xbf16>
    %94 = vector.shape_cast %93 : vector<8x32xbf16> to vector<1x8x32xbf16>
    %95 = vector.shape_cast %94 : vector<1x8x32xbf16> to vector<1x8x32xbf16>
    %96 = vector.broadcast %95 : vector<1x8x32xbf16> to vector<4x8x32xbf16>
    %cst_72 = arith.constant dense<0.000000e+00> : vector<4x8x8xf32>
    %97 = tpu.matmul %92, %81, %cst_72 {dimension_numbers = #tpu.dot_dimension_numbers<[2], [1], [1], [2], [0, 0, 0, 1, 1, 2], [0], [0]>} : vector<4x8x32xbf16>, vector<4x32x8xbf16>, vector<4x8x8xf32> -> vector<4x8x8xf32>
    %98 = vector.broadcast %82 : vector<4x1x8xf32> to vector<4x8x8xf32>
    %99 = arith.addf %97, %98 : vector<4x8x8xf32>
    %cst_73 = arith.constant 0.353553385 : f32
    %100 = vector.broadcast %cst_73 : f32 to vector<4x8x8xf32>
    %101 = arith.mulf %99, %100 : vector<4x8x8xf32>
    %cst_74 = arith.constant dense<0.000000e+00> : vector<4x8x8xf32>
    %102 = tpu.matmul %96, %83, %cst_74 {dimension_numbers = #tpu.dot_dimension_numbers<[2], [1], [1], [2], [0, 0, 0, 1, 1, 2], [0], [0]>} : vector<4x8x32xbf16>, vector<4x32x8xbf16>, vector<4x8x8xf32> -> vector<4x8x8xf32>
    %103 = vector.broadcast %84 : vector<4x1x8xf32> to vector<4x8x8xf32>
    %104 = arith.addf %102, %103 : vector<4x8x8xf32>
    %cst_75 = arith.constant dense<0.000000e+00> : vector<4x8x8xf32>
    %105 = tpu.matmul %96, %85, %cst_75 {dimension_numbers = #tpu.dot_dimension_numbers<[2], [1], [1], [2], [0, 0, 0, 1, 1, 2], [0], [0]>} : vector<4x8x32xbf16>, vector<4x32x8xbf16>, vector<4x8x8xf32> -> vector<4x8x8xf32>
    %106 = vector.broadcast %86 : vector<4x1x8xf32> to vector<4x8x8xf32>
    %107 = arith.addf %105, %106 : vector<4x8x8xf32>
    %108 = arith.truncf %101 : vector<4x8x8xf32> to vector<4x8x8xbf16>
    %109 = arith.truncf %104 : vector<4x8x8xf32> to vector<4x8x8xbf16>
    %cst_76 = arith.constant dense<0.000000e+00> : vector<4x8x8xf32>
    %110 = tpu.matmul %108, %109, %cst_76 {dimension_numbers = #tpu.dot_dimension_numbers<[2], [2], [1], [1], [0, 0, 0, 1, 1, 1], [0], [0]>} : vector<4x8x8xbf16>, vector<4x8x8xbf16>, vector<4x8x8xf32> -> vector<4x8x8xf32>
    %cst_77 = arith.constant dense<0xFF800000> : vector<4x8xf32>
    %111 = vector.multi_reduction <maximumf>, %110, %cst_77 [2] : vector<4x8x8xf32> to vector<4x8xf32>
    %112 = vector.shape_cast %111 : vector<4x8xf32> to vector<4x8x1xf32>
    %113 = vector.broadcast %112 : vector<4x8x1xf32> to vector<4x8x8xf32>
    %114 = arith.subf %110, %113 : vector<4x8x8xf32>
    %115 = math.exp %114 : vector<4x8x8xf32>
    %cst_78 = arith.constant dense<0.000000e+00> : vector<4x8xf32>
    %116 = vector.multi_reduction <add>, %115, %cst_78 [2] : vector<4x8x8xf32> to vector<4x8xf32>
    %117 = vector.shape_cast %116 : vector<4x8xf32> to vector<4x8x1xf32>
    %118 = tpu.reciprocal %117 {approx = true} : vector<4x8x1xf32> -> vector<4x8x1xf32>
    %119 = vector.broadcast %118 : vector<4x8x1xf32> to vector<4x8x8xf32>
    %120 = arith.mulf %115, %119 : vector<4x8x8xf32>
    %121 = arith.truncf %120 : vector<4x8x8xf32> to vector<4x8x8xbf16>
    %122 = arith.truncf %107 : vector<4x8x8xf32> to vector<4x8x8xbf16>
    %cst_79 = arith.constant dense<0.000000e+00> : vector<4x8x8xf32>
    %123 = tpu.matmul %121, %122, %cst_79 {dimension_numbers = #tpu.dot_dimension_numbers<[2], [1], [1], [2], [0, 0, 0, 1, 1, 2], [0], [0]>} : vector<4x8x8xbf16>, vector<4x8x8xbf16>, vector<4x8x8xf32> -> vector<4x8x8xf32>
    %124 = arith.truncf %123 : vector<4x8x8xf32> to vector<4x8x8xbf16>
    %cst_80 = arith.constant dense<0.000000e+00> : vector<4x8x32xf32>
    %125 = tpu.matmul %124, %87, %cst_80 {dimension_numbers = #tpu.dot_dimension_numbers<[2], [1], [1], [2], [0, 0, 0, 1, 1, 2], [0], [0]>} : vector<4x8x8xbf16>, vector<4x8x32xbf16>, vector<4x8x32xf32> -> vector<4x8x32xf32>
    %cst_81 = arith.constant dense<0.000000e+00> : vector<8x32xf32>
    %126 = vector.multi_reduction <add>, %125, %cst_81 [0] : vector<4x8x32xf32> to vector<8x32xf32>
    %127 = vector.broadcast %88 : vector<1x32xf32> to vector<8x32xf32>
    %128 = arith.addf %126, %127 : vector<8x32xf32>
    %129 = arith.addf %79, %128 : vector<8x32xf32>
    %c0_82 = arith.constant 0 : index
    %c0_83 = arith.constant 0 : index
    %130 = vector.load %arg22[%c0_82, %c0_83] : memref<1x32xf32, #tpu.memory_space<vmem>>, vector<1x32xf32>
    %c0_84 = arith.constant 0 : index
    %c0_85 = arith.constant 0 : index
    %131 = vector.load %arg23[%c0_84, %c0_85] : memref<1x32xf32, #tpu.memory_space<vmem>>, vector<1x32xf32>
    %cst_86 = arith.constant dense<0.000000e+00> : vector<8xf32>
    %132 = vector.multi_reduction <add>, %129, %cst_86 [1] : vector<8x32xf32> to vector<8xf32>
    %133 = vector.shape_cast %132 : vector<8xf32> to vector<8x1xf32>
    %cst_87 = arith.constant 3.200000e+01 : f32
    %134 = vector.broadcast %cst_87 : f32 to vector<8x1xf32>
    %135 = arith.divf %133, %134 : vector<8x1xf32>
    %136 = vector.broadcast %135 : vector<8x1xf32> to vector<8x32xf32>
    %137 = arith.subf %129, %136 : vector<8x32xf32>
    %138 = arith.mulf %137, %137 : vector<8x32xf32>
    %cst_88 = arith.constant dense<0.000000e+00> : vector<8xf32>
    %139 = vector.multi_reduction <add>, %138, %cst_88 [1] : vector<8x32xf32> to vector<8xf32>
    %140 = vector.shape_cast %139 : vector<8xf32> to vector<8x1xf32>
    %cst_89 = arith.constant 3.200000e+01 : f32
    %141 = vector.broadcast %cst_89 : f32 to vector<8x1xf32>
    %142 = arith.divf %140, %141 : vector<8x1xf32>
    %143 = vector.broadcast %135 : vector<8x1xf32> to vector<8x32xf32>
    %144 = arith.subf %129, %143 : vector<8x32xf32>
    %cst_90 = arith.constant 9.99999974E-6 : f32
    %145 = vector.broadcast %cst_90 : f32 to vector<8x1xf32>
    %146 = arith.addf %142, %145 : vector<8x1xf32>
    %147 = math.rsqrt %146 : vector<8x1xf32>
    %148 = vector.broadcast %147 : vector<8x1xf32> to vector<8x32xf32>
    %149 = arith.mulf %144, %148 : vector<8x32xf32>
    %150 = vector.broadcast %130 : vector<1x32xf32> to vector<8x32xf32>
    %151 = arith.mulf %149, %150 : vector<8x32xf32>
    %152 = vector.broadcast %131 : vector<1x32xf32> to vector<8x32xf32>
    %153 = arith.addf %151, %152 : vector<8x32xf32>
    %c0_91 = arith.constant 0 : index
    %c0_92 = arith.constant 0 : index
    %154 = vector.load %arg24[%c0_91, %c0_92] : memref<32x64xbf16, #tpu.memory_space<vmem>>, vector<32x64xbf16>
    %c0_93 = arith.constant 0 : index
    %c0_94 = arith.constant 0 : index
    %155 = vector.load %arg25[%c0_93, %c0_94] : memref<1x64xf32, #tpu.memory_space<vmem>>, vector<1x64xf32>
    %c0_95 = arith.constant 0 : index
    %c0_96 = arith.constant 0 : index
    %156 = vector.load %arg26[%c0_95, %c0_96] : memref<64x32xbf16, #tpu.memory_space<vmem>>, vector<64x32xbf16>
    %c0_97 = arith.constant 0 : index
    %c0_98 = arith.constant 0 : index
    %157 = vector.load %arg27[%c0_97, %c0_98] : memref<1x32xf32, #tpu.memory_space<vmem>>, vector<1x32xf32>
    %158 = arith.truncf %153 : vector<8x32xf32> to vector<8x32xbf16>
    %cst_99 = arith.constant dense<0.000000e+00> : vector<8x64xf32>
    %159 = tpu.matmul %158, %154, %cst_99 {dimension_numbers = #tpu.dot_dimension_numbers<[1], [0], [0], [1], [0, 0, 1, 1], [], []>} : vector<8x32xbf16>, vector<32x64xbf16>, vector<8x64xf32> -> vector<8x64xf32>
    %160 = vector.broadcast %155 : vector<1x64xf32> to vector<8x64xf32>
    %161 = arith.addf %159, %160 : vector<8x64xf32>
    %cst_100 = arith.constant 0.000000e+00 : f32
    %162 = vector.broadcast %cst_100 : f32 to vector<8x64xf32>
    %163 = arith.maximumf %161, %162 : vector<8x64xf32>
    %164 = arith.truncf %163 : vector<8x64xf32> to vector<8x64xbf16>
    %cst_101 = arith.constant dense<0.000000e+00> : vector<8x32xf32>
    %165 = tpu.matmul %164, %156, %cst_101 {dimension_numbers = #tpu.dot_dimension_numbers<[1], [0], [0], [1], [0, 0, 1, 1], [], []>} : vector<8x64xbf16>, vector<64x32xbf16>, vector<8x32xf32> -> vector<8x32xf32>
    %166 = vector.broadcast %157 : vector<1x32xf32> to vector<8x32xf32>
    %167 = arith.addf %165, %166 : vector<8x32xf32>
    %168 = arith.addf %153, %167 : vector<8x32xf32>
    %c0_102 = arith.constant 0 : index
    %c0_103 = arith.constant 0 : index
    %169 = vector.load %arg28[%c0_102, %c0_103] : memref<1x32xf32, #tpu.memory_space<vmem>>, vector<1x32xf32>
    %c0_104 = arith.constant 0 : index
    %c0_105 = arith.constant 0 : index
    %170 = vector.load %arg29[%c0_104, %c0_105] : memref<1x32xf32, #tpu.memory_space<vmem>>, vector<1x32xf32>
    %cst_106 = arith.constant dense<0.000000e+00> : vector<8xf32>
    %171 = vector.multi_reduction <add>, %168, %cst_106 [1] : vector<8x32xf32> to vector<8xf32>
    %172 = vector.shape_cast %171 : vector<8xf32> to vector<8x1xf32>
    %cst_107 = arith.constant 3.200000e+01 : f32
    %173 = vector.broadcast %cst_107 : f32 to vector<8x1xf32>
    %174 = arith.divf %172, %173 : vector<8x1xf32>
    %175 = vector.broadcast %174 : vector<8x1xf32> to vector<8x32xf32>
    %176 = arith.subf %168, %175 : vector<8x32xf32>
    %177 = arith.mulf %176, %176 : vector<8x32xf32>
    %cst_108 = arith.constant dense<0.000000e+00> : vector<8xf32>
    %178 = vector.multi_reduction <add>, %177, %cst_108 [1] : vector<8x32xf32> to vector<8xf32>
    %179 = vector.shape_cast %178 : vector<8xf32> to vector<8x1xf32>
    %cst_109 = arith.constant 3.200000e+01 : f32
    %180 = vector.broadcast %cst_109 : f32 to vector<8x1xf32>
    %181 = arith.divf %179, %180 : vector<8x1xf32>
    %182 = vector.broadcast %174 : vector<8x1xf32> to vector<8x32xf32>
    %183 = arith.subf %168, %182 : vector<8x32xf32>
    %cst_110 = arith.constant 9.99999974E-6 : f32
    %184 = vector.broadcast %cst_110 : f32 to vector<8x1xf32>
    %185 = arith.addf %181, %184 : vector<8x1xf32>
    %186 = math.rsqrt %185 : vector<8x1xf32>
    %187 = vector.broadcast %186 : vector<8x1xf32> to vector<8x32xf32>
    %188 = arith.mulf %183, %187 : vector<8x32xf32>
    %189 = vector.broadcast %169 : vector<1x32xf32> to vector<8x32xf32>
    %190 = arith.mulf %188, %189 : vector<8x32xf32>
    %191 = vector.broadcast %170 : vector<1x32xf32> to vector<8x32xf32>
    %192 = arith.addf %190, %191 : vector<8x32xf32>
    %c0_111 = arith.constant 0 : index
    %c0_112 = arith.constant 0 : index
    %c0_113 = arith.constant 0 : index
    %193 = vector.load %arg30[%c0_111, %c0_112, %c0_113] : memref<1x8x32xf32, #tpu.memory_space<vmem>>, vector<1x8x32xf32>
    %194 = vector.shape_cast %193 : vector<1x8x32xf32> to vector<8x32xf32>
    %195 = vector.shape_cast %192 : vector<8x32xf32> to vector<1x8x32xf32>
    tpu.vector_store %arg30[%c0_111, %c0_112, %c0_113], %195 {strides = array<i32>} : memref<1x8x32xf32, #tpu.memory_space<vmem>>, vector<1x8x32xf32>,
    return
  }
  func.func @transform_0(%arg0: i32) -> (i32, i32, i32) {
    %c0_i32 = arith.constant 0 : i32
    %c0_i32_0 = arith.constant 0 : i32
    %c0_i32_1 = arith.constant 0 : i32
    return %arg0, %c0_i32, %c0_i32_0 : i32, i32, i32
  }
  func.func @transform_1(%arg0: i32) -> (i32, i32, i32) {
    %c0_i32 = arith.constant 0 : i32
    %c0_i32_0 = arith.constant 0 : i32
    %c0_i32_1 = arith.constant 0 : i32
    return %arg0, %c0_i32, %c0_i32_0 : i32, i32, i32
  }
  func.func @transform_2(%arg0: i32) -> (i32, i32, i32) {
    %c0_i32 = arith.constant 0 : i32
    %c0_i32_0 = arith.constant 0 : i32
    %c0_i32_1 = arith.constant 0 : i32
    return %arg0, %c0_i32, %c0_i32_0 : i32, i32, i32
  }
  func.func @transform_3(%arg0: i32) -> (i32, i32, i32) {
    %c0_i32 = arith.constant 0 : i32
    %c0_i32_0 = arith.constant 0 : i32
    %c0_i32_1 = arith.constant 0 : i32
    %c0_i32_2 = arith.constant 0 : i32
    return %c0_i32, %c0_i32_0, %c0_i32_1 : i32, i32, i32
  }
  func.func @transform_4(%arg0: i32) -> (i32, i32, i32) {
    %c0_i32 = arith.constant 0 : i32
    %c0_i32_0 = arith.constant 0 : i32
    %c0_i32_1 = arith.constant 0 : i32
    %c0_i32_2 = arith.constant 0 : i32
    return %c0_i32, %c0_i32_0, %c0_i32_1 : i32, i32, i32
  }
  func.func @transform_5(%arg0: i32) -> (i32, i32, i32) {
    %c0_i32 = arith.constant 0 : i32
    %c0_i32_0 = arith.constant 0 : i32
    %c0_i32_1 = arith.constant 0 : i32
    %c0_i32_2 = arith.constant 0 : i32
    return %c0_i32, %c0_i32_0, %c0_i32_1 : i32, i32, i32
  }
  func.func @transform_6(%arg0: i32) -> (i32, i32, i32) {
    %c0_i32 = arith.constant 0 : i32
    %c0_i32_0 = arith.constant 0 : i32
    %c0_i32_1 = arith.constant 0 : i32
    %c0_i32_2 = arith.constant 0 : i32
    return %c0_i32, %c0_i32_0, %c0_i32_1 : i32, i32, i32
  }
  func.func @transform_7(%arg0: i32) -> (i32, i32, i32) {
    %c0_i32 = arith.constant 0 : i32
    %c0_i32_0 = arith.constant 0 : i32
    %c0_i32_1 = arith.constant 0 : i32
    %c0_i32_2 = arith.constant 0 : i32
    return %c0_i32, %c0_i32_0, %c0_i32_1 : i32, i32, i32
  }
  func.func @transform_8(%arg0: i32) -> (i32, i32, i32) {
    %c0_i32 = arith.constant 0 : i32
    %c0_i32_0 = arith.constant 0 : i32
    %c0_i32_1 = arith.constant 0 : i32
    %c0_i32_2 = arith.constant 0 : i32
    return %c0_i32, %c0_i32_0, %c0_i32_1 : i32, i32, i32
  }
  func.func @transform_9(%arg0: i32) -> (i32, i32, i32) {
    %c0_i32 = arith.constant 0 : i32
    %c0_i32_0 = arith.constant 0 : i32
    %c0_i32_1 = arith.constant 0 : i32
    %c0_i32_2 = arith.constant 0 : i32
    return %c0_i32, %c0_i32_0, %c0_i32_1 : i32, i32, i32
  }
  func.func @transform_10(%arg0: i32) -> (i32, i32) {
    %c0_i32 = arith.constant 0 : i32
    %c0_i32_0 = arith.constant 0 : i32
    %c0_i32_1 = arith.constant 0 : i32
    return %c0_i32, %c0_i32_0 : i32, i32
  }
  func.func @transform_11(%arg0: i32) -> (i32, i32) {
    %c0_i32 = arith.constant 0 : i32
    %c0_i32_0 = arith.constant 0 : i32
    %c0_i32_1 = arith.constant 0 : i32
    return %c0_i32, %c0_i32_0 : i32, i32
  }
  func.func @transform_12(%arg0: i32) -> (i32, i32) {
    %c0_i32 = arith.constant 0 : i32
    %c0_i32_0 = arith.constant 0 : i32
    %c0_i32_1 = arith.constant 0 : i32
    return %c0_i32, %c0_i32_0 : i32, i32
  }
  func.func @transform_13(%arg0: i32) -> (i32, i32, i32) {
    %c0_i32 = arith.constant 0 : i32
    %c0_i32_0 = arith.constant 0 : i32
    %c0_i32_1 = arith.constant 0 : i32
    %c0_i32_2 = arith.constant 0 : i32
    return %c0_i32, %c0_i32_0, %c0_i32_1 : i32, i32, i32
  }
  func.func @transform_14(%arg0: i32) -> (i32, i32, i32) {
    %c0_i32 = arith.constant 0 : i32
    %c0_i32_0 = arith.constant 0 : i32
    %c0_i32_1 = arith.constant 0 : i32
    %c0_i32_2 = arith.constant 0 : i32
    return %c0_i32, %c0_i32_0, %c0_i32_1 : i32, i32, i32
  }
  func.func @transform_15(%arg0: i32) -> (i32, i32, i32) {
    %c0_i32 = arith.constant 0 : i32
    %c0_i32_0 = arith.constant 0 : i32
    %c0_i32_1 = arith.constant 0 : i32
    %c0_i32_2 = arith.constant 0 : i32
    return %c0_i32, %c0_i32_0, %c0_i32_1 : i32, i32, i32
  }
  func.func @transform_16(%arg0: i32) -> (i32, i32, i32) {
    %c0_i32 = arith.constant 0 : i32
    %c0_i32_0 = arith.constant 0 : i32
    %c0_i32_1 = arith.constant 0 : i32
    %c0_i32_2 = arith.constant 0 : i32
    return %c0_i32, %c0_i32_0, %c0_i32_1 : i32, i32, i32
  }
  func.func @transform_17(%arg0: i32) -> (i32, i32, i32) {
    %c0_i32 = arith.constant 0 : i32
    %c0_i32_0 = arith.constant 0 : i32
    %c0_i32_1 = arith.constant 0 : i32
    %c0_i32_2 = arith.constant 0 : i32
    return %c0_i32, %c0_i32_0, %c0_i32_1 : i32, i32, i32
  }
  func.func @transform_18(%arg0: i32) -> (i32, i32, i32) {
    %c0_i32 = arith.constant 0 : i32
    %c0_i32_0 = arith.constant 0 : i32
    %c0_i32_1 = arith.constant 0 : i32
    %c0_i32_2 = arith.constant 0 : i32
    return %c0_i32, %c0_i32_0, %c0_i32_1 : i32, i32, i32
  }
  func.func @transform_19(%arg0: i32) -> (i32, i32, i32) {
    %c0_i32 = arith.constant 0 : i32
    %c0_i32_0 = arith.constant 0 : i32
    %c0_i32_1 = arith.constant 0 : i32
    %c0_i32_2 = arith.constant 0 : i32
    return %c0_i32, %c0_i32_0, %c0_i32_1 : i32, i32, i32
  }
  func.func @transform_20(%arg0: i32) -> (i32, i32) {
    %c0_i32 = arith.constant 0 : i32
    %c0_i32_0 = arith.constant 0 : i32
    %c0_i32_1 = arith.constant 0 : i32
    return %c0_i32, %c0_i32_0 : i32, i32
  }
  func.func @transform_21(%arg0: i32) -> (i32, i32) {
    %c0_i32 = arith.constant 0 : i32
    %c0_i32_0 = arith.constant 0 : i32
    %c0_i32_1 = arith.constant 0 : i32
    return %c0_i32, %c0_i32_0 : i32, i32
  }
  func.func @transform_22(%arg0: i32) -> (i32, i32) {
    %c0_i32 = arith.constant 0 : i32
    %c0_i32_0 = arith.constant 0 : i32
    %c0_i32_1 = arith.constant 0 : i32
    return %c0_i32, %c0_i32_0 : i32, i32
  }
  func.func @transform_23(%arg0: i32) -> (i32, i32) {
    %c0_i32 = arith.constant 0 : i32
    %c0_i32_0 = arith.constant 0 : i32
    %c0_i32_1 = arith.constant 0 : i32
    return %c0_i32, %c0_i32_0 : i32, i32
  }
  func.func @transform_24(%arg0: i32) -> (i32, i32) {
    %c0_i32 = arith.constant 0 : i32
    %c0_i32_0 = arith.constant 0 : i32
    %c0_i32_1 = arith.constant 0 : i32
    return %c0_i32, %c0_i32_0 : i32, i32
  }
  func.func @transform_25(%arg0: i32) -> (i32, i32) {
    %c0_i32 = arith.constant 0 : i32
    %c0_i32_0 = arith.constant 0 : i32
    %c0_i32_1 = arith.constant 0 : i32
    return %c0_i32, %c0_i32_0 : i32, i32
  }
  func.func @transform_26(%arg0: i32) -> (i32, i32) {
    %c0_i32 = arith.constant 0 : i32
    %c0_i32_0 = arith.constant 0 : i32
    %c0_i32_1 = arith.constant 0 : i32
    return %c0_i32, %c0_i32_0 : i32, i32
  }
  func.func @transform_27(%arg0: i32) -> (i32, i32) {
    %c0_i32 = arith.constant 0 : i32
    %c0_i32_0 = arith.constant 0 : i32
    %c0_i32_1 = arith.constant 0 : i32
    return %c0_i32, %c0_i32_0 : i32, i32
  }
  func.func @transform_28(%arg0: i32) -> (i32, i32) {
    %c0_i32 = arith.constant 0 : i32
    %c0_i32_0 = arith.constant 0 : i32
    %c0_i32_1 = arith.constant 0 : i32
    return %c0_i32, %c0_i32_0 : i32, i32
  }
  func.func @transform_29(%arg0: i32) -> (i32, i32, i32) {
    %c0_i32 = arith.constant 0 : i32
    %c0_i32_0 = arith.constant 0 : i32
    %c0_i32_1 = arith.constant 0 : i32
    return %arg0, %c0_i32, %c0_i32_0 : i32, i32, i32
  }
}

</mosaic_0001>

<llo_original>
// kernel: transformer_forward.9
$region0: #{transformer_forward.9}
  #allocation0 [shape = 'u32[]', space=smem, size = 0x4, offset = 0x4, fixed_abs, tag = 'smem constant byte address 0x4 - core index']
  #allocation1 [shape = 'u32[144,128]{1,0:T(1,128)}', space=vmem, size = 0x12000, scoped, tag = 'internal scratch']
  %s0 = inlined_call_operand.vmem [shape: f32[2,8,32], index: 0, kind: input, shape index: {}]
  %s1 = inlined_call_operand.vmem [shape: f32[1,32], index: 1, kind: input, shape index: {}]
  %s2 = inlined_call_operand.vmem [shape: f32[1,32], index: 2, kind: input, shape index: {}]
  %s3 = inlined_call_operand.vmem [shape: f32[2,8,32], index: 3, kind: output, shape index: {}]
  %s4 = sld [smem:[#allocation0]]
  $region45: #{transformer_forward.9} parent=0
    _
  %s6 = ssub.s32 1, %s4
  %s7 = scalar_select 0, %s6, %s4
  loop: start=0, step=1, limit=4
  $region2: #{transformer_forward.9} parent=0 // loop_pre_header
    _
  $region3: #{transformer_forward.9} parent=0 // loop_header
    %s9 = sphi 0, %s13
    %p10 = scmp.ge.s32.totalorder %s9, 4
    %s19 = sphi 0, %s21
    %s22 = sphi 0, %s19
    %s23 = sphi 0, %s22
    %s39 = sphi 0, %s23
    %s43 = sphi 0, %s43
    %s45 = sphi 0, %s43
    %s46 = sphi 0, %s45
    %s60 = sphi 0, %s46
    %s64 = sphi 0, %s64
    %s66 = sphi 0, %s64
    %s67 = sphi 0, %s66
    %s81 = sphi 0, %s67
    %s87 = sphi 0, %s89
    %s90 = sphi 0, %s87
    %s91 = sphi 0, %s90
    %s107 = sphi 0, %s91
  $region4: #{transformer_forward.9} parent=0 // loop_header_branch
    %12 = sbr.rel (%p10) target = $region8
  $region5: #{transformer_forward.9} parent=0 // loop_body
    %s14 = ssub.s32 %s9, 1
    %s15 = ssub.s32 %s9, 2
    %s16 = sadd.s32 %s9, 1
    %s17 = ssub.s32 %s9, %s16
    %p18 = scmp.eq.s32.totalorder %s17, 0
    %s20 = sadd.s32 %s19, 1
    %s21 = scalar_select %p18, %s19, %s20
    %p24 = pneg %p18
    %p25 = scmp.eq.s32.totalorder %s9, 1
    %p26 = por %p24, %p25
    %p27 = scmp.ne.s32.totalorder %s19, %s22
    %p28 = scmp.eq.s32.totalorder %s9, 0
    %p29 = por %p27, %p28
    %p30 = scmp.ne.s32.totalorder %s19, %s22
    %p31 = scmp.eq.s32.totalorder %s14, 1
    %p32 = por %p30, %p31
    %p33 = scmp.ne.s32.totalorder %s22, %s23
    %p34 = scmp.eq.s32.totalorder %s14, 0
    %p35 = por %p33, %p34
    %p36 = scmp.ne.s32.totalorder %s22, %s23
    %p37 = scmp.eq.s32.totalorder %s15, 1
    %p38 = por %p36, %p37
    %p40 = scmp.ne.s32.totalorder %s23, %s39
    %p41 = scmp.eq.s32.totalorder %s15, 0
    %p42 = por %p40, %p41
    %s44 = sadd.s32 %s43, 1
    %p47 = scmp.eq.s32.totalorder %s9, 1
    %p48 = scmp.ne.s32.totalorder %s43, %s45
    %p49 = scmp.eq.s32.totalorder %s9, 0
    %p50 = por %p48, %p49
    %p51 = scmp.ne.s32.totalorder %s43, %s45
    %p52 = scmp.eq.s32.totalorder %s14, 1
    %p53 = por %p51, %p52
    %p54 = scmp.ne.s32.totalorder %s45, %s46
    %p55 = scmp.eq.s32.totalorder %s14, 0
    %p56 = por %p54, %p55
    %p57 = scmp.ne.s32.totalorder %s45, %s46
    %p58 = scmp.eq.s32.totalorder %s15, 1
    %p59 = por %p57, %p58
    %p61 = scmp.ne.s32.totalorder %s46, %s60
    %p62 = scmp.eq.s32.totalorder %s15, 0
    %p63 = por %p61, %p62
    %s65 = sadd.s32 %s64, 1
    %p68 = scmp.eq.s32.totalorder %s9, 1
    %p69 = scmp.ne.s32.totalorder %s64, %s66
    %p70 = scmp.eq.s32.totalorder %s9, 0
    %p71 = por %p69, %p70
    %p72 = scmp.ne.s32.totalorder %s64, %s66
    %p73 = scmp.eq.s32.totalorder %s14, 1
    %p74 = por %p72, %p73
    %p75 = scmp.ne.s32.totalorder %s66, %s67
    %p76 = scmp.eq.s32.totalorder %s14, 0
    %p77 = por %p75, %p76
    %p78 = scmp.ne.s32.totalorder %s66, %s67
    %p79 = scmp.eq.s32.totalorder %s15, 1
    %p80 = por %p78, %p79
    %p82 = scmp.ne.s32.totalorder %s67, %s81
    %p83 = scmp.eq.s32.totalorder %s15, 0
    %p84 = por %p82, %p83
    %s85 = ssub.s32 %s9, %s16
    %p86 = scmp.eq.s32.totalorder %s85, 0
    %s88 = sadd.s32 %s87, 1
    %s89 = scalar_select %p86, %s87, %s88
    %p92 = pneg %p86
    %p93 = scmp.eq.s32.totalorder %s9, 1
    %p94 = por %p92, %p93
    %p95 = scmp.ne.s32.totalorder %s87, %s90
    %p96 = scmp.eq.s32.totalorder %s9, 0
    %p97 = por %p95, %p96
    %p98 = scmp.ne.s32.totalorder %s87, %s90
    %p99 = scmp.eq.s32.totalorder %s14, 1
    %p100 = por %p98, %p99
    %p101 = scmp.ne.s32.totalorder %s90, %s91
    %p102 = scmp.eq.s32.totalorder %s14, 0
    %p103 = por %p101, %p102
    %p104 = scmp.ne.s32.totalorder %s90, %s91
    %p105 = scmp.eq.s32.totalorder %s15, 1
    %p106 = por %p104, %p105
    %p108 = scmp.ne.s32.totalorder %s91, %s107
    %p109 = scmp.eq.s32.totalorder %s15, 0
    %p110 = por %p108, %p109
    %p111 = scmp.le.s32.totalorder 1, %s9
    %p112 = scmp.lt.s32.totalorder %s9, 3
    %p113 = pnand %p111, %p112
    %p114 = pneg %p113
    // Predicated region
    $region9: #{transformer_forward.9} parent=5 // pred_check
      _
    $region10: #{transformer_forward.9} parent=5 // pred_check_branch
      %116 = sbr.rel (%p113) target = $region12
    $region11: #{transformer_forward.9} parent=5 // pred_region
      %s117 = ssub.s32 %s9, 1
      // Predicated region
      $region13: #{transformer_forward.9} parent=11 // pred_check
        %p118 = pneg %p56
      $region14: #{transformer_forward.9} parent=11 // pred_check_branch
        %120 = sbr.rel (%p118) target = $region16
      $region15: #{transformer_forward.9} parent=11 // pred_region
        _
      $region16: #{transformer_forward.9} parent=11 // pred_fallthru
        _
      // Predicated region
      $region17: #{transformer_forward.9} parent=11 // pred_check
        %p121 = pneg %p77
      $region18: #{transformer_forward.9} parent=11 // pred_check_branch
        %123 = sbr.rel (%p121) target = $region20
      $region19: #{transformer_forward.9} parent=11 // pred_region
        _
      $region20: #{transformer_forward.9} parent=11 // pred_fallthru
        _
    $region12: #{transformer_forward.9} parent=5 // pred_fallthru
      _
    %p124 = scmp.lt.s32.totalorder %s9, 2
    // Predicated region
    $region21: #{transformer_forward.9} parent=5 // pred_check
      %p125 = pneg %p124
    $region22: #{transformer_forward.9} parent=5 // pred_check_branch
      %127 = sbr.rel (%p125) target = $region24
    $region23: #{transformer_forward.9} parent=5 // pred_region
      // Predicated region
      $region25: #{transformer_forward.9} parent=23 // pred_check
        %p128 = pneg %p29
      $region26: #{transformer_forward.9} parent=23 // pred_check_branch
        %130 = sbr.rel (%p128) target = $region28
      $region27: #{transformer_forward.9} parent=23 // pred_region
        %p131 = scmp.lt.s32.totalorder %s9, 1
        %s132 = scalar_select %p131, %s9, 1
        %s133 = smul.addr %s132, 8
        %s134 = scalar_lea.vmem %s0, %s133
      $region28: #{transformer_forward.9} parent=23 // pred_fallthru
        _
    $region24: #{transformer_forward.9} parent=5 // pred_fallthru
      _
    %p135 = scmp.le.s32.totalorder 1, %s9
    %p136 = scmp.lt.s32.totalorder %s9, 3
    %p137 = pnand %p135, %p136
    %p138 = pneg %p137
    // Predicated region
    $region29: #{transformer_forward.9} parent=5 // pred_check
      _
    $region30: #{transformer_forward.9} parent=5 // pred_check_branch
      %140 = sbr.rel (%p137) target = $region32
    $region31: #{transformer_forward.9} parent=5 // pred_region
      %s141 = ssub.s32 %s9, 1
      %p142 = scmp.lt.s32.totalorder %s14, 1
      %s143 = scalar_select %p142, %s14, 1
      %s144 = smul.addr %s143, 8
      %s145 = scalar_lea.vmem %s0, %s144
      %p146 = pneg %p35
      %p147 = pneg %p32
      %p148 = pneg %p56
      %p149 = pneg %p53
      %p150 = pneg %p77
      %p151 = pneg %p74
      %p152 = pneg %p103
      %p153 = pneg %p100
      %p154 = scmp.lt.s32.totalorder %s14, 1
      %s155 = scalar_select %p154, %s14, 1
      %s156 = smul.addr %s155, 8
      %s157 = scalar_lea.vmem %s3, %s156
      %p158 = scmp.lt.s32.totalorder %s14, 1
      %s159 = scalar_select %p158, %s14, 1
      %s160 = smul.addr %s159, 8
      %s161 = scalar_lea.vmem %s0, %s160
      %p162 = scmp.lt.s32.totalorder %s14, 1
      %s163 = scalar_select %p162, %s14, 1
      %s164 = smul.addr %s163, 8
      %s165 = scalar_lea.vmem %s3, %s164
      %v166 = vld [vmem:[%s161] sm:$0xff]
      %v167 = vld [vmem:[%s1] sm:$0x1]
      %v168 = vld [vmem:[%s2] sm:$0x1]
      %vm169 = vcmask 261120
      %v170 = vsel %vm169, %v166, 0.0
      %171 = vadd.xlane.f32.xlu0 %v170
      %v172 = vpop.xlane.xlu0 %171
      %v173 = vrcp.pop 32.0
      %v174 = vmul.f32 %v172, %v173
      %v175 = vsub.f32 %v166, %v174
      %v176 = vmul.f32 %v175, %v175
      %v177 = vsel %vm169, %v176, 0.0
      %178 = vadd.xlane.f32.xlu0 %v177
      %v179 = vpop.xlane.xlu0 %178
      %v180 = vmul.f32 %v179, %v173
      %v181 = vadd.f32 %v180, 1e-05
      %v182 = vrsqrt.pop %v181
      %v183 = vmul.f32 %v175, %v182
      %v185 = vlaneseq
      %v186 = vshrl.u32 %v185, 7
      %v187 = vsub.s32 0, %v186
      %v188 = vrot.slane %v167, %v187
      %v190 = vmul.f32 %v183, %v188
      %v192 = vlaneseq
      %v193 = vshrl.u32 %v192, 7
      %v194 = vsub.s32 0, %v193
      %v195 = vrot.slane %v168, %v194
      %v197 = vadd.f32 %v190, %v195
      %198 = vst.msk [vmem:[%s165] sm:$0xff] %vm169, %v197
      %p199 = scmp.lt.s32.totalorder %s14, 1
      %s200 = scalar_select %p199, %s14, 1
      %s201 = smul.addr %s200, 8
      %s202 = scalar_lea.vmem %s3, %s201
      // Predicated region
      $region33: #{transformer_forward.9} parent=31 // pred_check
        %p203 = pneg %p100
      $region34: #{transformer_forward.9} parent=31 // pred_check_branch
        %205 = sbr.rel (%p203) target = $region36
      $region35: #{transformer_forward.9} parent=31 // pred_region
        _
      $region36: #{transformer_forward.9} parent=31 // pred_fallthru
        _
    $region32: #{transformer_forward.9} parent=5 // pred_fallthru
      _
    %p206 = scmp.le.s32.totalorder 2, %s9
    // Predicated region
    $region37: #{transformer_forward.9} parent=5 // pred_check
      %p207 = pneg %p206
    $region38: #{transformer_forward.9} parent=5 // pred_check_branch
      %209 = sbr.rel (%p207) target = $region40
    $region39: #{transformer_forward.9} parent=5 // pred_region
      %s210 = ssub.s32 %s9, 2
      // Predicated region
      $region41: #{transformer_forward.9} parent=39 // pred_check
        %p211 = pneg %p106
      $region42: #{transformer_forward.9} parent=39 // pred_check_branch
        %213 = sbr.rel (%p211) target = $region44
      $region43: #{transformer_forward.9} parent=39 // pred_region
        %p214 = scmp.lt.s32.totalorder %s15, 1
        %s215 = scalar_select %p214, %s15, 1
        %s216 = smul.addr %s215, 8
        %s217 = scalar_lea.vmem %s3, %s216
      $region44: #{transformer_forward.9} parent=39 // pred_fallthru
        _
    $region40: #{transformer_forward.9} parent=5 // pred_fallthru
      _
  $region6: #{transformer_forward.9} parent=0 // loop_footer
    %s13 = sadd.s32 1, %s9
  $region7: #{transformer_forward.9} parent=0 // loop_footer_branch
    %8 = sbr.rel target = $region3
  $region8: #{transformer_forward.9} parent=0 // loop_exit
    _

// kernel: transformer_forward.5
$region0: #{transformer_forward.5}
  #allocation0 [shape = 'u32[]', space=smem, size = 0x4, offset = 0x4, fixed_abs, tag = 'smem constant byte address 0x4 - core index']
  #allocation1 [shape = 'u32[144,128]{1,0:T(1,128)}', space=vmem, size = 0x12000, scoped, tag = 'internal scratch']
  %s0 = inlined_call_operand.vmem [shape: f32[2,8,32], index: 0, kind: input, shape index: {}]
  %s1 = inlined_call_operand.vmem [shape: f32[2,8,32], index: 1, kind: input, shape index: {}]
  %s2 = inlined_call_operand.vmem [shape: bf16[4,32,8], index: 2, kind: input, shape index: {}]
  %s3 = inlined_call_operand.vmem [shape: f32[4,1,8], index: 3, kind: input, shape index: {}]
  %s4 = inlined_call_operand.vmem [shape: bf16[4,32,8], index: 4, kind: input, shape index: {}]
  %s5 = inlined_call_operand.vmem [shape: f32[4,1,8], index: 5, kind: input, shape index: {}]
  %s6 = inlined_call_operand.vmem [shape: bf16[4,32,8], index: 6, kind: input, shape index: {}]
  %s7 = inlined_call_operand.vmem [shape: f32[4,1,8], index: 7, kind: input, shape index: {}]
  %s8 = inlined_call_operand.vmem [shape: bf16[4,8,32], index: 8, kind: input, shape index: {}]
  %s9 = inlined_call_operand.vmem [shape: f32[1,32], index: 9, kind: input, shape index: {}]
  %s10 = inlined_call_operand.vmem [shape: f32[1,32], index: 10, kind: input, shape index: {}]
  %s11 = inlined_call_operand.vmem [shape: f32[1,32], index: 11, kind: input, shape index: {}]
  %s12 = inlined_call_operand.vmem [shape: bf16[32,64], index: 12, kind: input, shape index: {}]
  %s13 = inlined_call_operand.vmem [shape: f32[1,64], index: 13, kind: input, shape index: {}]
  %s14 = inlined_call_operand.vmem [shape: bf16[64,32], index: 14, kind: input, shape index: {}]
  %s15 = inlined_call_operand.vmem [shape: f32[1,32], index: 15, kind: input, shape index: {}]
  %s16 = inlined_call_operand.vmem [shape: f32[1,32], index: 16, kind: input, shape index: {}]
  %s17 = inlined_call_operand.vmem [shape: f32[1,32], index: 17, kind: input, shape index: {}]
  %s18 = inlined_call_operand.vmem [shape: f32[2,8,32], index: 18, kind: output, shape index: {}]
  %s19 = sld [smem:[#allocation0]]
  $region105: #{transformer_forward.5} parent=0
    _
  %s21 = ssub.s32 1, %s19
  %s22 = scalar_select 0, %s21, %s19
  loop: start=0, step=1, limit=4
  $region2: #{transformer_forward.5} parent=0 // loop_pre_header
    _
  $region3: #{transformer_forward.5} parent=0 // loop_header
    %s24 = sphi 0, %s28
    %p25 = scmp.ge.s32.totalorder %s24, 4
    %s34 = sphi 0, %s36
    %s37 = sphi 0, %s34
    %s38 = sphi 0, %s37
    %s54 = sphi 0, %s38
    %s60 = sphi 0, %s62
    %s63 = sphi 0, %s60
    %s64 = sphi 0, %s63
    %s80 = sphi 0, %s64
    %s84 = sphi 0, %s84
    %s86 = sphi 0, %s84
    %s87 = sphi 0, %s86
    %s101 = sphi 0, %s87
    %s105 = sphi 0, %s105
    %s107 = sphi 0, %s105
    %s108 = sphi 0, %s107
    %s122 = sphi 0, %s108
    %s126 = sphi 0, %s126
    %s128 = sphi 0, %s126
    %s129 = sphi 0, %s128
    %s143 = sphi 0, %s129
    %s147 = sphi 0, %s147
    %s149 = sphi 0, %s147
    %s150 = sphi 0, %s149
    %s164 = sphi 0, %s150
    %s168 = sphi 0, %s168
    %s170 = sphi 0, %s168
    %s171 = sphi 0, %s170
    %s185 = sphi 0, %s171
    %s189 = sphi 0, %s189
    %s191 = sphi 0, %s189
    %s192 = sphi 0, %s191
    %s206 = sphi 0, %s192
    %s210 = sphi 0, %s210
    %s212 = sphi 0, %s210
    %s213 = sphi 0, %s212
    %s227 = sphi 0, %s213
    %s231 = sphi 0, %s231
    %s233 = sphi 0, %s231
    %s234 = sphi 0, %s233
    %s248 = sphi 0, %s234
    %s252 = sphi 0, %s252
    %s254 = sphi 0, %s252
    %s255 = sphi 0, %s254
    %s269 = sphi 0, %s255
    %s273 = sphi 0, %s273
    %s275 = sphi 0, %s273
    %s276 = sphi 0, %s275
    %s290 = sphi 0, %s276
    %s294 = sphi 0, %s294
    %s296 = sphi 0, %s294
    %s297 = sphi 0, %s296
    %s311 = sphi 0, %s297
    %s315 = sphi 0, %s315
    %s317 = sphi 0, %s315
    %s318 = sphi 0, %s317
    %s332 = sphi 0, %s318
    %s336 = sphi 0, %s336
    %s338 = sphi 0, %s336
    %s339 = sphi 0, %s338
    %s353 = sphi 0, %s339
    %s357 = sphi 0, %s357
    %s359 = sphi 0, %s357
    %s360 = sphi 0, %s359
    %s374 = sphi 0, %s360
    %s378 = sphi 0, %s378
    %s380 = sphi 0, %s378
    %s381 = sphi 0, %s380
    %s395 = sphi 0, %s381
    %s399 = sphi 0, %s399
    %s401 = sphi 0, %s399
    %s402 = sphi 0, %s401
    %s416 = sphi 0, %s402
    %s422 = sphi 0, %s424
    %s425 = sphi 0, %s422
    %s426 = sphi 0, %s425
    %s442 = sphi 0, %s426
  $region4: #{transformer_forward.5} parent=0 // loop_header_branch
    %27 = sbr.rel (%p25) target = $region8
  $region5: #{transformer_forward.5} parent=0 // loop_body
    %s29 = ssub.s32 %s24, 1
    %s30 = ssub.s32 %s24, 2
    %s31 = sadd.s32 %s24, 1
    %s32 = ssub.s32 %s24, %s31
    %p33 = scmp.eq.s32.totalorder %s32, 0
    %s35 = sadd.s32 %s34, 1
    %s36 = scalar_select %p33, %s34, %s35
    %p39 = pneg %p33
    %p40 = scmp.eq.s32.totalorder %s24, 1
    %p41 = por %p39, %p40
    %p42 = scmp.ne.s32.totalorder %s34, %s37
    %p43 = scmp.eq.s32.totalorder %s24, 0
    %p44 = por %p42, %p43
    %p45 = scmp.ne.s32.totalorder %s34, %s37
    %p46 = scmp.eq.s32.totalorder %s29, 1
    %p47 = por %p45, %p46
    %p48 = scmp.ne.s32.totalorder %s37, %s38
    %p49 = scmp.eq.s32.totalorder %s29, 0
    %p50 = por %p48, %p49
    %p51 = scmp.ne.s32.totalorder %s37, %s38
    %p52 = scmp.eq.s32.totalorder %s30, 1
    %p53 = por %p51, %p52
    %p55 = scmp.ne.s32.totalorder %s38, %s54
    %p56 = scmp.eq.s32.totalorder %s30, 0
    %p57 = por %p55, %p56
    %s58 = ssub.s32 %s24, %s31
    %p59 = scmp.eq.s32.totalorder %s58, 0
    %s61 = sadd.s32 %s60, 1
    %s62 = scalar_select %p59, %s60, %s61
    %p65 = pneg %p59
    %p66 = scmp.eq.s32.totalorder %s24, 1
    %p67 = por %p65, %p66
    %p68 = scmp.ne.s32.totalorder %s60, %s63
    %p69 = scmp.eq.s32.totalorder %s24, 0
    %p70 = por %p68, %p69
    %p71 = scmp.ne.s32.totalorder %s60, %s63
    %p72 = scmp.eq.s32.totalorder %s29, 1
    %p73 = por %p71, %p72
    %p74 = scmp.ne.s32.totalorder %s63, %s64
    %p75 = scmp.eq.s32.totalorder %s29, 0
    %p76 = por %p74, %p75
    %p77 = scmp.ne.s32.totalorder %s63, %s64
    %p78 = scmp.eq.s32.totalorder %s30, 1
    %p79 = por %p77, %p78
    %p81 = scmp.ne.s32.totalorder %s64, %s80
    %p82 = scmp.eq.s32.totalorder %s30, 0
    %p83 = por %p81, %p82
    %s85 = sadd.s32 %s84, 1
    %p88 = scmp.eq.s32.totalorder %s24, 1
    %p89 = scmp.ne.s32.totalorder %s84, %s86
    %p90 = scmp.eq.s32.totalorder %s24, 0
    %p91 = por %p89, %p90
    %p92 = scmp.ne.s32.totalorder %s84, %s86
    %p93 = scmp.eq.s32.totalorder %s29, 1
    %p94 = por %p92, %p93
    %p95 = scmp.ne.s32.totalorder %s86, %s87
    %p96 = scmp.eq.s32.totalorder %s29, 0
    %p97 = por %p95, %p96
    %p98 = scmp.ne.s32.totalorder %s86, %s87
    %p99 = scmp.eq.s32.totalorder %s30, 1
    %p100 = por %p98, %p99
    %p102 = scmp.ne.s32.totalorder %s87, %s101
    %p103 = scmp.eq.s32.totalorder %s30, 0
    %p104 = por %p102, %p103
    %s106 = sadd.s32 %s105, 1
    %p109 = scmp.eq.s32.totalorder %s24, 1
    %p110 = scmp.ne.s32.totalorder %s105, %s107
    %p111 = scmp.eq.s32.totalorder %s24, 0
    %p112 = por %p110, %p111
    %p113 = scmp.ne.s32.totalorder %s105, %s107
    %p114 = scmp.eq.s32.totalorder %s29, 1
    %p115 = por %p113, %p114
    %p116 = scmp.ne.s32.totalorder %s107, %s108
    %p117 = scmp.eq.s32.totalorder %s29, 0
    %p118 = por %p116, %p117
    %p119 = scmp.ne.s32.totalorder %s107, %s108
    %p120 = scmp.eq.s32.totalorder %s30, 1
    %p121 = por %p119, %p120
    %p123 = scmp.ne.s32.totalorder %s108, %s122
    %p124 = scmp.eq.s32.totalorder %s30, 0
    %p125 = por %p123, %p124
    %s127 = sadd.s32 %s126, 1
    %p130 = scmp.eq.s32.totalorder %s24, 1
    %p131 = scmp.ne.s32.totalorder %s126, %s128
    %p132 = scmp.eq.s32.totalorder %s24, 0
    %p133 = por %p131, %p132
    %p134 = scmp.ne.s32.totalorder %s126, %s128
    %p135 = scmp.eq.s32.totalorder %s29, 1
    %p136 = por %p134, %p135
    %p137 = scmp.ne.s32.totalorder %s128, %s129
    %p138 = scmp.eq.s32.totalorder %s29, 0
    %p139 = por %p137, %p138
    %p140 = scmp.ne.s32.totalorder %s128, %s129
    %p141 = scmp.eq.s32.totalorder %s30, 1
    %p142 = por %p140, %p141
    %p144 = scmp.ne.s32.totalorder %s129, %s143
    %p145 = scmp.eq.s32.totalorder %s30, 0
    %p146 = por %p144, %p145
    %s148 = sadd.s32 %s147, 1
    %p151 = scmp.eq.s32.totalorder %s24, 1
    %p152 = scmp.ne.s32.totalorder %s147, %s149
    %p153 = scmp.eq.s32.totalorder %s24, 0
    %p154 = por %p152, %p153
    %p155 = scmp.ne.s32.totalorder %s147, %s149
    %p156 = scmp.eq.s32.totalorder %s29, 1
    %p157 = por %p155, %p156
    %p158 = scmp.ne.s32.totalorder %s149, %s150
    %p159 = scmp.eq.s32.totalorder %s29, 0
    %p160 = por %p158, %p159
    %p161 = scmp.ne.s32.totalorder %s149, %s150
    %p162 = scmp.eq.s32.totalorder %s30, 1
    %p163 = por %p161, %p162
    %p165 = scmp.ne.s32.totalorder %s150, %s164
    %p166 = scmp.eq.s32.totalorder %s30, 0
    %p167 = por %p165, %p166
    %s169 = sadd.s32 %s168, 1
    %p172 = scmp.eq.s32.totalorder %s24, 1
    %p173 = scmp.ne.s32.totalorder %s168, %s170
    %p174 = scmp.eq.s32.totalorder %s24, 0
    %p175 = por %p173, %p174
    %p176 = scmp.ne.s32.totalorder %s168, %s170
    %p177 = scmp.eq.s32.totalorder %s29, 1
    %p178 = por %p176, %p177
    %p179 = scmp.ne.s32.totalorder %s170, %s171
    %p180 = scmp.eq.s32.totalorder %s29, 0
    %p181 = por %p179, %p180
    %p182 = scmp.ne.s32.totalorder %s170, %s171
    %p183 = scmp.eq.s32.totalorder %s30, 1
    %p184 = por %p182, %p183
    %p186 = scmp.ne.s32.totalorder %s171, %s185
    %p187 = scmp.eq.s32.totalorder %s30, 0
    %p188 = por %p186, %p187
    %s190 = sadd.s32 %s189, 1
    %p193 = scmp.eq.s32.totalorder %s24, 1
    %p194 = scmp.ne.s32.totalorder %s189, %s191
    %p195 = scmp.eq.s32.totalorder %s24, 0
    %p196 = por %p194, %p195
    %p197 = scmp.ne.s32.totalorder %s189, %s191
    %p198 = scmp.eq.s32.totalorder %s29, 1
    %p199 = por %p197, %p198
    %p200 = scmp.ne.s32.totalorder %s191, %s192
    %p201 = scmp.eq.s32.totalorder %s29, 0
    %p202 = por %p200, %p201
    %p203 = scmp.ne.s32.totalorder %s191, %s192
    %p204 = scmp.eq.s32.totalorder %s30, 1
    %p205 = por %p203, %p204
    %p207 = scmp.ne.s32.totalorder %s192, %s206
    %p208 = scmp.eq.s32.totalorder %s30, 0
    %p209 = por %p207, %p208
    %s211 = sadd.s32 %s210, 1
    %p214 = scmp.eq.s32.totalorder %s24, 1
    %p215 = scmp.ne.s32.totalorder %s210, %s212
    %p216 = scmp.eq.s32.totalorder %s24, 0
    %p217 = por %p215, %p216
    %p218 = scmp.ne.s32.totalorder %s210, %s212
    %p219 = scmp.eq.s32.totalorder %s29, 1
    %p220 = por %p218, %p219
    %p221 = scmp.ne.s32.totalorder %s212, %s213
    %p222 = scmp.eq.s32.totalorder %s29, 0
    %p223 = por %p221, %p222
    %p224 = scmp.ne.s32.totalorder %s212, %s213
    %p225 = scmp.eq.s32.totalorder %s30, 1
    %p226 = por %p224, %p225
    %p228 = scmp.ne.s32.totalorder %s213, %s227
    %p229 = scmp.eq.s32.totalorder %s30, 0
    %p230 = por %p228, %p229
    %s232 = sadd.s32 %s231, 1
    %p235 = scmp.eq.s32.totalorder %s24, 1
    %p236 = scmp.ne.s32.totalorder %s231, %s233
    %p237 = scmp.eq.s32.totalorder %s24, 0
    %p238 = por %p236, %p237
    %p239 = scmp.ne.s32.totalorder %s231, %s233
    %p240 = scmp.eq.s32.totalorder %s29, 1
    %p241 = por %p239, %p240
    %p242 = scmp.ne.s32.totalorder %s233, %s234
    %p243 = scmp.eq.s32.totalorder %s29, 0
    %p244 = por %p242, %p243
    %p245 = scmp.ne.s32.totalorder %s233, %s234
    %p246 = scmp.eq.s32.totalorder %s30, 1
    %p247 = por %p245, %p246
    %p249 = scmp.ne.s32.totalorder %s234, %s248
    %p250 = scmp.eq.s32.totalorder %s30, 0
    %p251 = por %p249, %p250
    %s253 = sadd.s32 %s252, 1
    %p256 = scmp.eq.s32.totalorder %s24, 1
    %p257 = scmp.ne.s32.totalorder %s252, %s254
    %p258 = scmp.eq.s32.totalorder %s24, 0
    %p259 = por %p257, %p258
    %p260 = scmp.ne.s32.totalorder %s252, %s254
    %p261 = scmp.eq.s32.totalorder %s29, 1
    %p262 = por %p260, %p261
    %p263 = scmp.ne.s32.totalorder %s254, %s255
    %p264 = scmp.eq.s32.totalorder %s29, 0
    %p265 = por %p263, %p264
    %p266 = scmp.ne.s32.totalorder %s254, %s255
    %p267 = scmp.eq.s32.totalorder %s30, 1
    %p268 = por %p266, %p267
    %p270 = scmp.ne.s32.totalorder %s255, %s269
    %p271 = scmp.eq.s32.totalorder %s30, 0
    %p272 = por %p270, %p271
    %s274 = sadd.s32 %s273, 1
    %p277 = scmp.eq.s32.totalorder %s24, 1
    %p278 = scmp.ne.s32.totalorder %s273, %s275
    %p279 = scmp.eq.s32.totalorder %s24, 0
    %p280 = por %p278, %p279
    %p281 = scmp.ne.s32.totalorder %s273, %s275
    %p282 = scmp.eq.s32.totalorder %s29, 1
    %p283 = por %p281, %p282
    %p284 = scmp.ne.s32.totalorder %s275, %s276
    %p285 = scmp.eq.s32.totalorder %s29, 0
    %p286 = por %p284, %p285
    %p287 = scmp.ne.s32.totalorder %s275, %s276
    %p288 = scmp.eq.s32.totalorder %s30, 1
    %p289 = por %p287, %p288
    %p291 = scmp.ne.s32.totalorder %s276, %s290
    %p292 = scmp.eq.s32.totalorder %s30, 0
    %p293 = por %p291, %p292
    %s295 = sadd.s32 %s294, 1
    %p298 = scmp.eq.s32.totalorder %s24, 1
    %p299 = scmp.ne.s32.totalorder %s294, %s296
    %p300 = scmp.eq.s32.totalorder %s24, 0
    %p301 = por %p299, %p300
    %p302 = scmp.ne.s32.totalorder %s294, %s296
    %p303 = scmp.eq.s32.totalorder %s29, 1
    %p304 = por %p302, %p303
    %p305 = scmp.ne.s32.totalorder %s296, %s297
    %p306 = scmp.eq.s32.totalorder %s29, 0
    %p307 = por %p305, %p306
    %p308 = scmp.ne.s32.totalorder %s296, %s297
    %p309 = scmp.eq.s32.totalorder %s30, 1
    %p310 = por %p308, %p309
    %p312 = scmp.ne.s32.totalorder %s297, %s311
    %p313 = scmp.eq.s32.totalorder %s30, 0
    %p314 = por %p312, %p313
    %s316 = sadd.s32 %s315, 1
    %p319 = scmp.eq.s32.totalorder %s24, 1
    %p320 = scmp.ne.s32.totalorder %s315, %s317
    %p321 = scmp.eq.s32.totalorder %s24, 0
    %p322 = por %p320, %p321
    %p323 = scmp.ne.s32.totalorder %s315, %s317
    %p324 = scmp.eq.s32.totalorder %s29, 1
    %p325 = por %p323, %p324
    %p326 = scmp.ne.s32.totalorder %s317, %s318
    %p327 = scmp.eq.s32.totalorder %s29, 0
    %p328 = por %p326, %p327
    %p329 = scmp.ne.s32.totalorder %s317, %s318
    %p330 = scmp.eq.s32.totalorder %s30, 1
    %p331 = por %p329, %p330
    %p333 = scmp.ne.s32.totalorder %s318, %s332
    %p334 = scmp.eq.s32.totalorder %s30, 0
    %p335 = por %p333, %p334
    %s337 = sadd.s32 %s336, 1
    %p340 = scmp.eq.s32.totalorder %s24, 1
    %p341 = scmp.ne.s32.totalorder %s336, %s338
    %p342 = scmp.eq.s32.totalorder %s24, 0
    %p343 = por %p341, %p342
    %p344 = scmp.ne.s32.totalorder %s336, %s338
    %p345 = scmp.eq.s32.totalorder %s29, 1
    %p346 = por %p344, %p345
    %p347 = scmp.ne.s32.totalorder %s338, %s339
    %p348 = scmp.eq.s32.totalorder %s29, 0
    %p349 = por %p347, %p348
    %p350 = scmp.ne.s32.totalorder %s338, %s339
    %p351 = scmp.eq.s32.totalorder %s30, 1
    %p352 = por %p350, %p351
    %p354 = scmp.ne.s32.totalorder %s339, %s353
    %p355 = scmp.eq.s32.totalorder %s30, 0
    %p356 = por %p354, %p355
    %s358 = sadd.s32 %s357, 1
    %p361 = scmp.eq.s32.totalorder %s24, 1
    %p362 = scmp.ne.s32.totalorder %s357, %s359
    %p363 = scmp.eq.s32.totalorder %s24, 0
    %p364 = por %p362, %p363
    %p365 = scmp.ne.s32.totalorder %s357, %s359
    %p366 = scmp.eq.s32.totalorder %s29, 1
    %p367 = por %p365, %p366
    %p368 = scmp.ne.s32.totalorder %s359, %s360
    %p369 = scmp.eq.s32.totalorder %s29, 0
    %p370 = por %p368, %p369
    %p371 = scmp.ne.s32.totalorder %s359, %s360
    %p372 = scmp.eq.s32.totalorder %s30, 1
    %p373 = por %p371, %p372
    %p375 = scmp.ne.s32.totalorder %s360, %s374
    %p376 = scmp.eq.s32.totalorder %s30, 0
    %p377 = por %p375, %p376
    %s379 = sadd.s32 %s378, 1
    %p382 = scmp.eq.s32.totalorder %s24, 1
    %p383 = scmp.ne.s32.totalorder %s378, %s380
    %p384 = scmp.eq.s32.totalorder %s24, 0
    %p385 = por %p383, %p384
    %p386 = scmp.ne.s32.totalorder %s378, %s380
    %p387 = scmp.eq.s32.totalorder %s29, 1
    %p388 = por %p386, %p387
    %p389 = scmp.ne.s32.totalorder %s380, %s381
    %p390 = scmp.eq.s32.totalorder %s29, 0
    %p391 = por %p389, %p390
    %p392 = scmp.ne.s32.totalorder %s380, %s381
    %p393 = scmp.eq.s32.totalorder %s30, 1
    %p394 = por %p392, %p393
    %p396 = scmp.ne.s32.totalorder %s381, %s395
    %p397 = scmp.eq.s32.totalorder %s30, 0
    %p398 = por %p396, %p397
    %s400 = sadd.s32 %s399, 1
    %p403 = scmp.eq.s32.totalorder %s24, 1
    %p404 = scmp.ne.s32.totalorder %s399, %s401
    %p405 = scmp.eq.s32.totalorder %s24, 0
    %p406 = por %p404, %p405
    %p407 = scmp.ne.s32.totalorder %s399, %s401
    %p408 = scmp.eq.s32.totalorder %s29, 1
    %p409 = por %p407, %p408
    %p410 = scmp.ne.s32.totalorder %s401, %s402
    %p411 = scmp.eq.s32.totalorder %s29, 0
    %p412 = por %p410, %p411
    %p413 = scmp.ne.s32.totalorder %s401, %s402
    %p414 = scmp.eq.s32.totalorder %s30, 1
    %p415 = por %p413, %p414
    %p417 = scmp.ne.s32.totalorder %s402, %s416
    %p418 = scmp.eq.s32.totalorder %s30, 0
    %p419 = por %p417, %p418
    %s420 = ssub.s32 %s24, %s31
    %p421 = scmp.eq.s32.totalorder %s420, 0
    %s423 = sadd.s32 %s422, 1
    %s424 = scalar_select %p421, %s422, %s423
    %p427 = pneg %p421
    %p428 = scmp.eq.s32.totalorder %s24, 1
    %p429 = por %p427, %p428
    %p430 = scmp.ne.s32.totalorder %s422, %s425
    %p431 = scmp.eq.s32.totalorder %s24, 0
    %p432 = por %p430, %p431
    %p433 = scmp.ne.s32.totalorder %s422, %s425
    %p434 = scmp.eq.s32.totalorder %s29, 1
    %p435 = por %p433, %p434
    %p436 = scmp.ne.s32.totalorder %s425, %s426
    %p437 = scmp.eq.s32.totalorder %s29, 0
    %p438 = por %p436, %p437
    %p439 = scmp.ne.s32.totalorder %s425, %s426
    %p440 = scmp.eq.s32.totalorder %s30, 1
    %p441 = por %p439, %p440
    %p443 = scmp.ne.s32.totalorder %s426, %s442
    %p444 = scmp.eq.s32.totalorder %s30, 0
    %p445 = por %p443, %p444
    %p446 = scmp.le.s32.totalorder 1, %s24
    %p447 = scmp.lt.s32.totalorder %s24, 3
    %p448 = pnand %p446, %p447
    %p449 = pneg %p448
    // Predicated region
    $region9: #{transformer_forward.5} parent=5 // pred_check
      _
    $region10: #{transformer_forward.5} parent=5 // pred_check_branch
      %451 = sbr.rel (%p448) target = $region12
    $region11: #{transformer_forward.5} parent=5 // pred_region
      %s452 = ssub.s32 %s24, 1
      // Predicated region
      $region13: #{transformer_forward.5} parent=11 // pred_check
        %p453 = pneg %p97
      $region14: #{transformer_forward.5} parent=11 // pred_check_branch
        %455 = sbr.rel (%p453) target = $region16
      $region15: #{transformer_forward.5} parent=11 // pred_region
        _
      $region16: #{transformer_forward.5} parent=11 // pred_fallthru
        _
      // Predicated region
      $region17: #{transformer_forward.5} parent=11 // pred_check
        %p456 = pneg %p118
      $region18: #{transformer_forward.5} parent=11 // pred_check_branch
        %458 = sbr.rel (%p456) target = $region20
      $region19: #{transformer_forward.5} parent=11 // pred_region
        _
      $region20: #{transformer_forward.5} parent=11 // pred_fallthru
        _
      // Predicated region
      $region21: #{transformer_forward.5} parent=11 // pred_check
        %p459 = pneg %p139
      $region22: #{transformer_forward.5} parent=11 // pred_check_branch
        %461 = sbr.rel (%p459) target = $region24
      $region23: #{transformer_forward.5} parent=11 // pred_region
        _
      $region24: #{transformer_forward.5} parent=11 // pred_fallthru
        _
      // Predicated region
      $region25: #{transformer_forward.5} parent=11 // pred_check
        %p462 = pneg %p160
      $region26: #{transformer_forward.5} parent=11 // pred_check_branch
        %464 = sbr.rel (%p462) target = $region28
      $region27: #{transformer_forward.5} parent=11 // pred_region
        _
      $region28: #{transformer_forward.5} parent=11 // pred_fallthru
        _
      // Predicated region
      $region29: #{transformer_forward.5} parent=11 // pred_check
        %p465 = pneg %p181
      $region30: #{transformer_forward.5} parent=11 // pred_check_branch
        %467 = sbr.rel (%p465) target = $region32
      $region31: #{transformer_forward.5} parent=11 // pred_region
        _
      $region32: #{transformer_forward.5} parent=11 // pred_fallthru
        _
      // Predicated region
      $region33: #{transformer_forward.5} parent=11 // pred_check
        %p468 = pneg %p202
      $region34: #{transformer_forward.5} parent=11 // pred_check_branch
        %470 = sbr.rel (%p468) target = $region36
      $region35: #{transformer_forward.5} parent=11 // pred_region
        _
      $region36: #{transformer_forward.5} parent=11 // pred_fallthru
        _
      // Predicated region
      $region37: #{transformer_forward.5} parent=11 // pred_check
        %p471 = pneg %p223
      $region38: #{transformer_forward.5} parent=11 // pred_check_branch
        %473 = sbr.rel (%p471) target = $region40
      $region39: #{transformer_forward.5} parent=11 // pred_region
        _
      $region40: #{transformer_forward.5} parent=11 // pred_fallthru
        _
      // Predicated region
      $region41: #{transformer_forward.5} parent=11 // pred_check
        %p474 = pneg %p244
      $region42: #{transformer_forward.5} parent=11 // pred_check_branch
        %476 = sbr.rel (%p474) target = $region44
      $region43: #{transformer_forward.5} parent=11 // pred_region
        _
      $region44: #{transformer_forward.5} parent=11 // pred_fallthru
        _
      // Predicated region
      $region45: #{transformer_forward.5} parent=11 // pred_check
        %p477 = pneg %p265
      $region46: #{transformer_forward.5} parent=11 // pred_check_branch
        %479 = sbr.rel (%p477) target = $region48
      $region47: #{transformer_forward.5} parent=11 // pred_region
        _
      $region48: #{transformer_forward.5} parent=11 // pred_fallthru
        _
      // Predicated region
      $region49: #{transformer_forward.5} parent=11 // pred_check
        %p480 = pneg %p286
      $region50: #{transformer_forward.5} parent=11 // pred_check_branch
        %482 = sbr.rel (%p480) target = $region52
      $region51: #{transformer_forward.5} parent=11 // pred_region
        _
      $region52: #{transformer_forward.5} parent=11 // pred_fallthru
        _
      // Predicated region
      $region53: #{transformer_forward.5} parent=11 // pred_check
        %p483 = pneg %p307
      $region54: #{transformer_forward.5} parent=11 // pred_check_branch
        %485 = sbr.rel (%p483) target = $region56
      $region55: #{transformer_forward.5} parent=11 // pred_region
        _
      $region56: #{transformer_forward.5} parent=11 // pred_fallthru
        _
      // Predicated region
      $region57: #{transformer_forward.5} parent=11 // pred_check
        %p486 = pneg %p328
      $region58: #{transformer_forward.5} parent=11 // pred_check_branch
        %488 = sbr.rel (%p486) target = $region60
      $region59: #{transformer_forward.5} parent=11 // pred_region
        _
      $region60: #{transformer_forward.5} parent=11 // pred_fallthru
        _
      // Predicated region
      $region61: #{transformer_forward.5} parent=11 // pred_check
        %p489 = pneg %p349
      $region62: #{transformer_forward.5} parent=11 // pred_check_branch
        %491 = sbr.rel (%p489) target = $region64
      $region63: #{transformer_forward.5} parent=11 // pred_region
        _
      $region64: #{transformer_forward.5} parent=11 // pred_fallthru
        _
      // Predicated region
      $region65: #{transformer_forward.5} parent=11 // pred_check
        %p492 = pneg %p370
      $region66: #{transformer_forward.5} parent=11 // pred_check_branch
        %494 = sbr.rel (%p492) target = $region68
      $region67: #{transformer_forward.5} parent=11 // pred_region
        _
      $region68: #{transformer_forward.5} parent=11 // pred_fallthru
        _
      // Predicated region
      $region69: #{transformer_forward.5} parent=11 // pred_check
        %p495 = pneg %p391
      $region70: #{transformer_forward.5} parent=11 // pred_check_branch
        %497 = sbr.rel (%p495) target = $region72
      $region71: #{transformer_forward.5} parent=11 // pred_region
        _
      $region72: #{transformer_forward.5} parent=11 // pred_fallthru
        _
      // Predicated region
      $region73: #{transformer_forward.5} parent=11 // pred_check
        %p498 = pneg %p412
      $region74: #{transformer_forward.5} parent=11 // pred_check_branch
        %500 = sbr.rel (%p498) target = $region76
      $region75: #{transformer_forward.5} parent=11 // pred_region
        _
      $region76: #{transformer_forward.5} parent=11 // pred_fallthru
        _
    $region12: #{transformer_forward.5} parent=5 // pred_fallthru
      _
    %p501 = scmp.lt.s32.totalorder %s24, 2
    // Predicated region
    $region77: #{transformer_forward.5} parent=5 // pred_check
      %p502 = pneg %p501
    $region78: #{transformer_forward.5} parent=5 // pred_check_branch
      %504 = sbr.rel (%p502) target = $region80
    $region79: #{transformer_forward.5} parent=5 // pred_region
      // Predicated region
      $region81: #{transformer_forward.5} parent=79 // pred_check
        %p505 = pneg %p44
      $region82: #{transformer_forward.5} parent=79 // pred_check_branch
        %507 = sbr.rel (%p505) target = $region84
      $region83: #{transformer_forward.5} parent=79 // pred_region
        %p508 = scmp.lt.s32.totalorder %s24, 1
        %s509 = scalar_select %p508, %s24, 1
        %s510 = smul.addr %s509, 8
        %s511 = scalar_lea.vmem %s0, %s510
      $region84: #{transformer_forward.5} parent=79 // pred_fallthru
        _
      // Predicated region
      $region85: #{transformer_forward.5} parent=79 // pred_check
        %p512 = pneg %p70
      $region86: #{transformer_forward.5} parent=79 // pred_check_branch
        %514 = sbr.rel (%p512) target = $region88
      $region87: #{transformer_forward.5} parent=79 // pred_region
        %p515 = scmp.lt.s32.totalorder %s24, 1
        %s516 = scalar_select %p515, %s24, 1
        %s517 = smul.addr %s516, 8
        %s518 = scalar_lea.vmem %s1, %s517
      $region88: #{transformer_forward.5} parent=79 // pred_fallthru
        _
    $region80: #{transformer_forward.5} parent=5 // pred_fallthru
      _
    %p519 = scmp.le.s32.totalorder 1, %s24
    %p520 = scmp.lt.s32.totalorder %s24, 3
    %p521 = pnand %p519, %p520
    %p522 = pneg %p521
    // Predicated region
    $region89: #{transformer_forward.5} parent=5 // pred_check
      _
    $region90: #{transformer_forward.5} parent=5 // pred_check_branch
      %524 = sbr.rel (%p521) target = $region92
    $region91: #{transformer_forward.5} parent=5 // pred_region
      %s525 = ssub.s32 %s24, 1
      %p526 = scmp.lt.s32.totalorder %s29, 1
      %s527 = scalar_select %p526, %s29, 1
      %s528 = smul.addr %s527, 8
      %s529 = scalar_lea.vmem %s0, %s528
      %p530 = pneg %p50
      %p531 = pneg %p47
      %p532 = scmp.lt.s32.totalorder %s29, 1
      %s533 = scalar_select %p532, %s29, 1
      %s534 = smul.addr %s533, 8
      %s535 = scalar_lea.vmem %s1, %s534
      %p536 = pneg %p76
      %p537 = pneg %p73
      %p538 = pneg %p97
      %p539 = pneg %p94
      %p540 = pneg %p118
      %p541 = pneg %p115
      %p542 = pneg %p139
      %p543 = pneg %p136
      %p544 = pneg %p160
      %p545 = pneg %p157
      %p546 = pneg %p181
      %p547 = pneg %p178
      %p548 = pneg %p202
      %p549 = pneg %p199
      %p550 = pneg %p223
      %p551 = pneg %p220
      %p552 = pneg %p244
      %p553 = pneg %p241
      %p554 = pneg %p265
      %p555 = pneg %p262
      %p556 = pneg %p286
      %p557 = pneg %p283
      %p558 = pneg %p307
      %p559 = pneg %p304
      %p560 = pneg %p328
      %p561 = pneg %p325
      %p562 = pneg %p349
      %p563 = pneg %p346
      %p564 = pneg %p370
      %p565 = pneg %p367
      %p566 = pneg %p391
      %p567 = pneg %p388
      %p568 = pneg %p412
      %p569 = pneg %p409
      %p570 = pneg %p438
      %p571 = pneg %p435
      %p572 = scmp.lt.s32.totalorder %s29, 1
      %s573 = scalar_select %p572, %s29, 1
      %s574 = smul.addr %s573, 8
      %s575 = scalar_lea.vmem %s18, %s574
      %p576 = scmp.lt.s32.totalorder %s29, 1
      %s577 = scalar_select %p576, %s29, 1
      %s578 = smul.addr %s577, 8
      %s579 = scalar_lea.vmem %s0, %s578
      %p580 = scmp.lt.s32.totalorder %s29, 1
      %s581 = scalar_select %p580, %s29, 1
      %s582 = smul.addr %s581, 8
      %s583 = scalar_lea.vmem %s1, %s582
      %p584 = scmp.lt.s32.totalorder %s29, 1
      %s585 = scalar_select %p584, %s29, 1
      %s586 = smul.addr %s585, 8
      %s587 = scalar_lea.vmem %s18, %s586
      %v589 = vld [vmem:[%s579] sm:$0xff]
      %v590 = vld [vmem:[%s583] sm:$0xff]
      %v591 = vadd.f32 %v589, %v590
      %v592 = vld [vmem:[%s2] sm:$0xf]
      %v593 = vld [vmem:[%s2 + $0x4] sm:$0xf]
      %v594 = vld [vmem:[%s2 + $0x8] sm:$0xf]
      %v595 = vld [vmem:[%s2 + $0xc] sm:$0xf]
      %v596 = vld [vmem:[%s2 + $0x10] sm:$0xf]
      %v597 = vld [vmem:[%s2 + $0x14] sm:$0xf]
      %v598 = vld [vmem:[%s2 + $0x18] sm:$0xf]
      %v599 = vld [vmem:[%s2 + $0x1c] sm:$0xf]
      %v600 = vld [vmem:[%s2 + $0x20] sm:$0xf]
      %v601 = vld [vmem:[%s2 + $0x24] sm:$0xf]
      %v602 = vld [vmem:[%s2 + $0x28] sm:$0xf]
      %v603 = vld [vmem:[%s2 + $0x2c] sm:$0xf]
      %v604 = vld [vmem:[%s2 + $0x30] sm:$0xf]
      %v605 = vld [vmem:[%s2 + $0x34] sm:$0xf]
      %v606 = vld [vmem:[%s2 + $0x38] sm:$0xf]
      %v607 = vld [vmem:[%s2 + $0x3c] sm:$0xf]
      %v608 = vld [vmem:[%s3] sm:$0x1]
      %v609 = vld [vmem:[%s3 + $0x1] sm:$0x1]
      %v610 = vld [vmem:[%s3 + $0x2] sm:$0x1]
      %v611 = vld [vmem:[%s3 + $0x3] sm:$0x1]
      %v612 = vld [vmem:[%s4] sm:$0xf]
      %v613 = vld [vmem:[%s4 + $0x4] sm:$0xf]
      %v614 = vld [vmem:[%s4 + $0x8] sm:$0xf]
      %v615 = vld [vmem:[%s4 + $0xc] sm:$0xf]
      %v616 = vld [vmem:[%s4 + $0x10] sm:$0xf]
      %v617 = vld [vmem:[%s4 + $0x14] sm:$0xf]
      %v618 = vld [vmem:[%s4 + $0x18] sm:$0xf]
      %v619 = vld [vmem:[%s4 + $0x1c] sm:$0xf]
      %v620 = vld [vmem:[%s4 + $0x20] sm:$0xf]
      %v621 = vld [vmem:[%s4 + $0x24] sm:$0xf]
      %v622 = vld [vmem:[%s4 + $0x28] sm:$0xf]
      %v623 = vld [vmem:[%s4 + $0x2c] sm:$0xf]
      %v624 = vld [vmem:[%s4 + $0x30] sm:$0xf]
      %v625 = vld [vmem:[%s4 + $0x34] sm:$0xf]
      %v626 = vld [vmem:[%s4 + $0x38] sm:$0xf]
      %v627 = vld [vmem:[%s4 + $0x3c] sm:$0xf]
      %v628 = vld [vmem:[%s5] sm:$0x1]
      %v629 = vld [vmem:[%s5 + $0x1] sm:$0x1]
      %v630 = vld [vmem:[%s5 + $0x2] sm:$0x1]
      %v631 = vld [vmem:[%s5 + $0x3] sm:$0x1]
      %v632 = vld [vmem:[%s6] sm:$0xf]
      %v633 = vld [vmem:[%s6 + $0x4] sm:$0xf]
      %v634 = vld [vmem:[%s6 + $0x8] sm:$0xf]
      %v635 = vld [vmem:[%s6 + $0xc] sm:$0xf]
      %v636 = vld [vmem:[%s6 + $0x10] sm:$0xf]
      %v637 = vld [vmem:[%s6 + $0x14] sm:$0xf]
      %v638 = vld [vmem:[%s6 + $0x18] sm:$0xf]
      %v639 = vld [vmem:[%s6 + $0x1c] sm:$0xf]
      %v640 = vld [vmem:[%s6 + $0x20] sm:$0xf]
      %v641 = vld [vmem:[%s6 + $0x24] sm:$0xf]
      %v642 = vld [vmem:[%s6 + $0x28] sm:$0xf]
      %v643 = vld [vmem:[%s6 + $0x2c] sm:$0xf]
      %v644 = vld [vmem:[%s6 + $0x30] sm:$0xf]
      %v645 = vld [vmem:[%s6 + $0x34] sm:$0xf]
      %v646 = vld [vmem:[%s6 + $0x38] sm:$0xf]
      %v647 = vld [vmem:[%s6 + $0x3c] sm:$0xf]
      %v648 = vld [vmem:[%s7] sm:$0x1]
      %v649 = vld [vmem:[%s7 + $0x1] sm:$0x1]
      %v650 = vld [vmem:[%s7 + $0x2] sm:$0x1]
      %v651 = vld [vmem:[%s7 + $0x3] sm:$0x1]
      %v652 = vld [vmem:[%s8] sm:$0xf]
      %v653 = vld [vmem:[%s8 + $0x4] sm:$0xf]
      %v654 = vld [vmem:[%s8 + $0x8] sm:$0xf]
      %v655 = vld [vmem:[%s8 + $0xc] sm:$0xf]
      %v656 = vld [vmem:[%s9] sm:$0x1]
      %v657 = vpack.c.bf16 %v591, %v591
      %v662 = vlaneseq
      %v663 = vshrl.u32 %v662, 7
      %v664 = vsub.s32 0, %v663
      %v665 = vrot.slane %v608, %v664
      %v666 = vlaneseq
      %v667 = vshrl.u32 %v666, 7
      %v668 = vsub.s32 0, %v667
      %v669 = vrot.slane %v609, %v668
      %v670 = vlaneseq
      %v671 = vshrl.u32 %v670, 7
      %v672 = vsub.s32 0, %v671
      %v673 = vrot.slane %v610, %v672
      %v674 = vlaneseq
      %v675 = vshrl.u32 %v674, 7
      %v676 = vsub.s32 0, %v675
      %v677 = vrot.slane %v611, %v676
      %v686 = vunpack.c.l.b16 %v592
      %v687 = vunpack.c.l.b16 %v593
      %v688 = vunpack.c.l.b16 %v594
      %v689 = vunpack.c.l.b16 %v595
      %v690 = vpack.c.b16 %v687, %v686
      %v691 = vpack.c.b16 %v689, %v688
      %vm694 = vcmask 261120
      %v696 = vsel %vm694, %v657, 0
      %698 = vmatprep.subr.bf16.mxu0 0
      %699 = vmatpush1.bf16.msra.mxu0 %v690
      %700 = vmatprep.subr.bf16.mxu0 0
      %701 = vmatpush1.bf16.msra.mxu0 %v691
      %702 = vmatprep.subr.bf16.mxu0 0
      %703 = vmatpush1.bf16.msra.mxu0 0
      %704 = vmatprep.subr.bf16.mxu0 0
      %705 = vmatpush1.bf16.msra.mxu0 0
      %706 = vmatprep.subr.bf16.mxu0 0
      %707 = vmatpush1.bf16.msra.mxu0 0
      %708 = vmatprep.subr.bf16.mxu0 0
      %709 = vmatpush1.bf16.msra.mxu0 0
      %710 = vmatprep.subr.bf16.mxu0 0
      %711 = vmatpush1.bf16.msra.mxu0 0
      %712 = vmatprep.subr.bf16.mxu0 0
      %713 = vmatpush1.bf16.msra.mxu0 0
      %714 = vmatprep.subr.bf16.mxu0 0
      %715 = vmatpush1.bf16.msra.mxu0 0
      %716 = vmatprep.subr.bf16.mxu0 0
      %717 = vmatpush1.bf16.msra.mxu0 0
      %718 = vmatprep.subr.bf16.mxu0 0
      %719 = vmatpush1.bf16.msra.mxu0 0
      %720 = vmatprep.subr.bf16.mxu0 0
      %721 = vmatpush1.bf16.msra.mxu0 0
      %722 = vmatprep.subr.bf16.mxu0 0
      %723 = vmatpush1.bf16.msra.mxu0 0
      %724 = vmatprep.subr.bf16.mxu0 0
      %725 = vmatpush1.bf16.msra.mxu0 0
      %726 = vmatprep.subr.bf16.mxu0 0
      %727 = vmatpush1.bf16.msra.mxu0 0
      %728 = vmatprep.subr.bf16.mxu0 0
      %729 = vmatpush1.bf16.msra.mxu0 0
      %730 = vmatprep.mubr.bf16.mxu0 0
      %731 = vmatmul.mubr.bf16.gmra.mrb[0].mxu0 %v696
      %v732 = vpop.f32.mrb[0].mxu0
      %v733 = vadd.f32 %v665, %v732
      %v734 = vpop.f32.mrb[0].mxu0
      %v735 = vpop.f32.mrb[0].mxu0
      %v736 = vpop.f32.mrb[0].mxu0
      %737 = vdwg.mxu0
      %v742 = vunpack.c.l.b16 %v596
      %v743 = vunpack.c.l.b16 %v597
      %v744 = vunpack.c.l.b16 %v598
      %v745 = vunpack.c.l.b16 %v599
      %v746 = vpack.c.b16 %v743, %v742
      %v747 = vpack.c.b16 %v745, %v744
      %750 = vmatprep.subr.bf16.mxu0 0
      %751 = vmatpush1.bf16.msra.mxu0 %v746
      %752 = vmatprep.subr.bf16.mxu0 0
      %753 = vmatpush1.bf16.msra.mxu0 %v747
      %754 = vmatprep.subr.bf16.mxu0 0
      %755 = vmatpush1.bf16.msra.mxu0 0
      %756 = vmatprep.subr.bf16.mxu0 0
      %757 = vmatpush1.bf16.msra.mxu0 0
      %758 = vmatprep.subr.bf16.mxu0 0
      %759 = vmatpush1.bf16.msra.mxu0 0
      %760 = vmatprep.subr.bf16.mxu0 0
      %761 = vmatpush1.bf16.msra.mxu0 0
      %762 = vmatprep.subr.bf16.mxu0 0
      %763 = vmatpush1.bf16.msra.mxu0 0
      %764 = vmatprep.subr.bf16.mxu0 0
      %765 = vmatpush1.bf16.msra.mxu0 0
      %766 = vmatprep.subr.bf16.mxu0 0
      %767 = vmatpush1.bf16.msra.mxu0 0
      %768 = vmatprep.subr.bf16.mxu0 0
      %769 = vmatpush1.bf16.msra.mxu0 0
      %770 = vmatprep.subr.bf16.mxu0 0
      %771 = vmatpush1.bf16.msra.mxu0 0
      %772 = vmatprep.subr.bf16.mxu0 0
      %773 = vmatpush1.bf16.msra.mxu0 0
      %774 = vmatprep.subr.bf16.mxu0 0
      %775 = vmatpush1.bf16.msra.mxu0 0
      %776 = vmatprep.subr.bf16.mxu0 0
      %777 = vmatpush1.bf16.msra.mxu0 0
      %778 = vmatprep.subr.bf16.mxu0 0
      %779 = vmatpush1.bf16.msra.mxu0 0
      %780 = vmatprep.subr.bf16.mxu0 0
      %781 = vmatpush1.bf16.msra.mxu0 0
      %782 = vmatprep.mubr.bf16.mxu0 0
      %783 = vmatmul.mubr.bf16.gmra.mrb[0].mxu0 %v696
      %v784 = vpop.f32.mrb[0].mxu0
      %v785 = vadd.f32 %v669, %v784
      %v786 = vpop.f32.mrb[0].mxu0
      %v787 = vpop.f32.mrb[0].mxu0
      %v788 = vpop.f32.mrb[0].mxu0
      %789 = vdwg.mxu0
      %v794 = vunpack.c.l.b16 %v600
      %v795 = vunpack.c.l.b16 %v601
      %v796 = vunpack.c.l.b16 %v602
      %v797 = vunpack.c.l.b16 %v603
      %v798 = vpack.c.b16 %v795, %v794
      %v799 = vpack.c.b16 %v797, %v796
      %802 = vmatprep.subr.bf16.mxu0 0
      %803 = vmatpush1.bf16.msra.mxu0 %v798
      %804 = vmatprep.subr.bf16.mxu0 0
      %805 = vmatpush1.bf16.msra.mxu0 %v799
      %806 = vmatprep.subr.bf16.mxu0 0
      %807 = vmatpush1.bf16.msra.mxu0 0
      %808 = vmatprep.subr.bf16.mxu0 0
      %809 = vmatpush1.bf16.msra.mxu0 0
      %810 = vmatprep.subr.bf16.mxu0 0
      %811 = vmatpush1.bf16.msra.mxu0 0
      %812 = vmatprep.subr.bf16.mxu0 0
      %813 = vmatpush1.bf16.msra.mxu0 0
      %814 = vmatprep.subr.bf16.mxu0 0
      %815 = vmatpush1.bf16.msra.mxu0 0
      %816 = vmatprep.subr.bf16.mxu0 0
      %817 = vmatpush1.bf16.msra.mxu0 0
      %818 = vmatprep.subr.bf16.mxu0 0
      %819 = vmatpush1.bf16.msra.mxu0 0
      %820 = vmatprep.subr.bf16.mxu0 0
      %821 = vmatpush1.bf16.msra.mxu0 0
      %822 = vmatprep.subr.bf16.mxu0 0
      %823 = vmatpush1.bf16.msra.mxu0 0
      %824 = vmatprep.subr.bf16.mxu0 0
      %825 = vmatpush1.bf16.msra.mxu0 0
      %826 = vmatprep.subr.bf16.mxu0 0
      %827 = vmatpush1.bf16.msra.mxu0 0
      %828 = vmatprep.subr.bf16.mxu0 0
      %829 = vmatpush1.bf16.msra.mxu0 0
      %830 = vmatprep.subr.bf16.mxu0 0
      %831 = vmatpush1.bf16.msra.mxu0 0
      %832 = vmatprep.subr.bf16.mxu0 0
      %833 = vmatpush1.bf16.msra.mxu0 0
      %834 = vmatprep.mubr.bf16.mxu0 0
      %835 = vmatmul.mubr.bf16.gmra.mrb[0].mxu0 %v696
      %v836 = vpop.f32.mrb[0].mxu0
      %v837 = vadd.f32 %v673, %v836
      %v838 = vpop.f32.mrb[0].mxu0
      %v839 = vpop.f32.mrb[0].mxu0
      %v840 = vpop.f32.mrb[0].mxu0
      %841 = vdwg.mxu0
      %v846 = vunpack.c.l.b16 %v604
      %v847 = vunpack.c.l.b16 %v605
      %v848 = vunpack.c.l.b16 %v606
      %v849 = vunpack.c.l.b16 %v607
      %v850 = vpack.c.b16 %v847, %v846
      %v851 = vpack.c.b16 %v849, %v848
      %854 = vmatprep.subr.bf16.mxu0 0
      %855 = vmatpush1.bf16.msra.mxu0 %v850
      %856 = vmatprep.subr.bf16.mxu0 0
      %857 = vmatpush1.bf16.msra.mxu0 %v851
      %858 = vmatprep.subr.bf16.mxu0 0
      %859 = vmatpush1.bf16.msra.mxu0 0
      %860 = vmatprep.subr.bf16.mxu0 0
      %861 = vmatpush1.bf16.msra.mxu0 0
      %862 = vmatprep.subr.bf16.mxu0 0
      %863 = vmatpush1.bf16.msra.mxu0 0
      %864 = vmatprep.subr.bf16.mxu0 0
      %865 = vmatpush1.bf16.msra.mxu0 0
      %866 = vmatprep.subr.bf16.mxu0 0
      %867 = vmatpush1.bf16.msra.mxu0 0
      %868 = vmatprep.subr.bf16.mxu0 0
      %869 = vmatpush1.bf16.msra.mxu0 0
      %870 = vmatprep.subr.bf16.mxu0 0
      %871 = vmatpush1.bf16.msra.mxu0 0
      %872 = vmatprep.subr.bf16.mxu0 0
      %873 = vmatpush1.bf16.msra.mxu0 0
      %874 = vmatprep.subr.bf16.mxu0 0
      %875 = vmatpush1.bf16.msra.mxu0 0
      %876 = vmatprep.subr.bf16.mxu0 0
      %877 = vmatpush1.bf16.msra.mxu0 0
      %878 = vmatprep.subr.bf16.mxu0 0
      %879 = vmatpush1.bf16.msra.mxu0 0
      %880 = vmatprep.subr.bf16.mxu0 0
      %881 = vmatpush1.bf16.msra.mxu0 0
      %882 = vmatprep.subr.bf16.mxu0 0
      %883 = vmatpush1.bf16.msra.mxu0 0
      %884 = vmatprep.subr.bf16.mxu0 0
      %885 = vmatpush1.bf16.msra.mxu0 0
      %886 = vmatprep.mubr.bf16.mxu0 0
      %887 = vmatmul.mubr.bf16.gmra.mrb[0].mxu0 %v696
      %v888 = vpop.f32.mrb[0].mxu0
      %v889 = vadd.f32 %v677, %v888
      %v890 = vpop.f32.mrb[0].mxu0
      %v891 = vpop.f32.mrb[0].mxu0
      %v892 = vpop.f32.mrb[0].mxu0
      %893 = vdwg.mxu0
      %v894 = vmul.f32 %v733, 0.35355338
      %v895 = vmul.f32 %v785, 0.35355338
      %v896 = vmul.f32 %v837, 0.35355338
      %v897 = vmul.f32 %v889, 0.35355338
      %v902 = vlaneseq
      %v903 = vshrl.u32 %v902, 7
      %v904 = vsub.s32 0, %v903
      %v905 = vrot.slane %v628, %v904
      %v906 = vlaneseq
      %v907 = vshrl.u32 %v906, 7
      %v908 = vsub.s32 0, %v907
      %v909 = vrot.slane %v629, %v908
      %v910 = vlaneseq
      %v911 = vshrl.u32 %v910, 7
      %v912 = vsub.s32 0, %v911
      %v913 = vrot.slane %v630, %v912
      %v914 = vlaneseq
      %v915 = vshrl.u32 %v914, 7
      %v916 = vsub.s32 0, %v915
      %v917 = vrot.slane %v631, %v916
      %v926 = vunpack.c.l.b16 %v612
      %v927 = vunpack.c.l.b16 %v613
      %v928 = vunpack.c.l.b16 %v614
      %v929 = vunpack.c.l.b16 %v615
      %v930 = vpack.c.b16 %v927, %v926
      %v931 = vpack.c.b16 %v929, %v928
      %934 = vmatprep.subr.bf16.mxu0 0
      %935 = vmatpush1.bf16.msra.mxu0 %v930
      %936 = vmatprep.subr.bf16.mxu0 0
      %937 = vmatpush1.bf16.msra.mxu0 %v931
      %938 = vmatprep.subr.bf16.mxu0 0
      %939 = vmatpush1.bf16.msra.mxu0 0
      %940 = vmatprep.subr.bf16.mxu0 0
      %941 = vmatpush1.bf16.msra.mxu0 0
      %942 = vmatprep.subr.bf16.mxu0 0
      %943 = vmatpush1.bf16.msra.mxu0 0
      %944 = vmatprep.subr.bf16.mxu0 0
      %945 = vmatpush1.bf16.msra.mxu0 0
      %946 = vmatprep.subr.bf16.mxu0 0
      %947 = vmatpush1.bf16.msra.mxu0 0
      %948 = vmatprep.subr.bf16.mxu0 0
      %949 = vmatpush1.bf16.msra.mxu0 0
      %950 = vmatprep.subr.bf16.mxu0 0
      %951 = vmatpush1.bf16.msra.mxu0 0
      %952 = vmatprep.subr.bf16.mxu0 0
      %953 = vmatpush1.bf16.msra.mxu0 0
      %954 = vmatprep.subr.bf16.mxu0 0
      %955 = vmatpush1.bf16.msra.mxu0 0
      %956 = vmatprep.subr.bf16.mxu0 0
      %957 = vmatpush1.bf16.msra.mxu0 0
      %958 = vmatprep.subr.bf16.mxu0 0
      %959 = vmatpush1.bf16.msra.mxu0 0
      %960 = vmatprep.subr.bf16.mxu0 0
      %961 = vmatpush1.bf16.msra.mxu0 0
      %962 = vmatprep.subr.bf16.mxu0 0
      %963 = vmatpush1.bf16.msra.mxu0 0
      %964 = vmatprep.subr.bf16.mxu0 0
      %965 = vmatpush1.bf16.msra.mxu0 0
      %966 = vmatprep.mubr.bf16.mxu0 0
      %967 = vmatmul.mubr.bf16.gmra.mrb[0].mxu0 %v696
      %v968 = vpop.f32.mrb[0].mxu0
      %v969 = vadd.f32 %v905, %v968
      %v970 = vpop.f32.mrb[0].mxu0
      %v971 = vpop.f32.mrb[0].mxu0
      %v972 = vpop.f32.mrb[0].mxu0
      %973 = vdwg.mxu0
      %v978 = vunpack.c.l.b16 %v616
      %v979 = vunpack.c.l.b16 %v617
      %v980 = vunpack.c.l.b16 %v618
      %v981 = vunpack.c.l.b16 %v619
      %v982 = vpack.c.b16 %v979, %v978
      %v983 = vpack.c.b16 %v981, %v980
      %986 = vmatprep.subr.bf16.mxu0 0
      %987 = vmatpush1.bf16.msra.mxu0 %v982
      %988 = vmatprep.subr.bf16.mxu0 0
      %989 = vmatpush1.bf16.msra.mxu0 %v983
      %990 = vmatprep.subr.bf16.mxu0 0
      %991 = vmatpush1.bf16.msra.mxu0 0
      %992 = vmatprep.subr.bf16.mxu0 0
      %993 = vmatpush1.bf16.msra.mxu0 0
      %994 = vmatprep.subr.bf16.mxu0 0
      %995 = vmatpush1.bf16.msra.mxu0 0
      %996 = vmatprep.subr.bf16.mxu0 0
      %997 = vmatpush1.bf16.msra.mxu0 0
      %998 = vmatprep.subr.bf16.mxu0 0
      %999 = vmatpush1.bf16.msra.mxu0 0
      %1000 = vmatprep.subr.bf16.mxu0 0
      %1001 = vmatpush1.bf16.msra.mxu0 0
      %1002 = vmatprep.subr.bf16.mxu0 0
      %1003 = vmatpush1.bf16.msra.mxu0 0
      %1004 = vmatprep.subr.bf16.mxu0 0
      %1005 = vmatpush1.bf16.msra.mxu0 0
      %1006 = vmatprep.subr.bf16.mxu0 0
      %1007 = vmatpush1.bf16.msra.mxu0 0
      %1008 = vmatprep.subr.bf16.mxu0 0
      %1009 = vmatpush1.bf16.msra.mxu0 0
      %1010 = vmatprep.subr.bf16.mxu0 0
      %1011 = vmatpush1.bf16.msra.mxu0 0
      %1012 = vmatprep.subr.bf16.mxu0 0
      %1013 = vmatpush1.bf16.msra.mxu0 0
      %1014 = vmatprep.subr.bf16.mxu0 0
      %1015 = vmatpush1.bf16.msra.mxu0 0
      %1016 = vmatprep.subr.bf16.mxu0 0
      %1017 = vmatpush1.bf16.msra.mxu0 0
      %1018 = vmatprep.mubr.bf16.mxu0 0
      %1019 = vmatmul.mubr.bf16.gmra.mrb[0].mxu0 %v696
      %v1020 = vpop.f32.mrb[0].mxu0
      %v1021 = vadd.f32 %v909, %v1020
      %v1022 = vpop.f32.mrb[0].mxu0
      %v1023 = vpop.f32.mrb[0].mxu0
      %v1024 = vpop.f32.mrb[0].mxu0
      %1025 = vdwg.mxu0
      %v1030 = vunpack.c.l.b16 %v620
      %v1031 = vunpack.c.l.b16 %v621
      %v1032 = vunpack.c.l.b16 %v622
      %v1033 = vunpack.c.l.b16 %v623
      %v1034 = vpack.c.b16 %v1031, %v1030
      %v1035 = vpack.c.b16 %v1033, %v1032
      %1038 = vmatprep.subr.bf16.mxu0 0
      %1039 = vmatpush1.bf16.msra.mxu0 %v1034
      %1040 = vmatprep.subr.bf16.mxu0 0
      %1041 = vmatpush1.bf16.msra.mxu0 %v1035
      %1042 = vmatprep.subr.bf16.mxu0 0
      %1043 = vmatpush1.bf16.msra.mxu0 0
      %1044 = vmatprep.subr.bf16.mxu0 0
      %1045 = vmatpush1.bf16.msra.mxu0 0
      %1046 = vmatprep.subr.bf16.mxu0 0
      %1047 = vmatpush1.bf16.msra.mxu0 0
      %1048 = vmatprep.subr.bf16.mxu0 0
      %1049 = vmatpush1.bf16.msra.mxu0 0
      %1050 = vmatprep.subr.bf16.mxu0 0
      %1051 = vmatpush1.bf16.msra.mxu0 0
      %1052 = vmatprep.subr.bf16.mxu0 0
      %1053 = vmatpush1.bf16.msra.mxu0 0
      %1054 = vmatprep.subr.bf16.mxu0 0
      %1055 = vmatpush1.bf16.msra.mxu0 0
      %1056 = vmatprep.subr.bf16.mxu0 0
      %1057 = vmatpush1.bf16.msra.mxu0 0
      %1058 = vmatprep.subr.bf16.mxu0 0
      %1059 = vmatpush1.bf16.msra.mxu0 0
      %1060 = vmatprep.subr.bf16.mxu0 0
      %1061 = vmatpush1.bf16.msra.mxu0 0
      %1062 = vmatprep.subr.bf16.mxu0 0
      %1063 = vmatpush1.bf16.msra.mxu0 0
      %1064 = vmatprep.subr.bf16.mxu0 0
      %1065 = vmatpush1.bf16.msra.mxu0 0
      %1066 = vmatprep.subr.bf16.mxu0 0
      %1067 = vmatpush1.bf16.msra.mxu0 0
      %1068 = vmatprep.subr.bf16.mxu0 0
      %1069 = vmatpush1.bf16.msra.mxu0 0
      %1070 = vmatprep.mubr.bf16.mxu0 0
      %1071 = vmatmul.mubr.bf16.gmra.mrb[0].mxu0 %v696
      %v1072 = vpop.f32.mrb[0].mxu0
      %v1073 = vadd.f32 %v913, %v1072
      %v1074 = vpop.f32.mrb[0].mxu0
      %v1075 = vpop.f32.mrb[0].mxu0
      %v1076 = vpop.f32.mrb[0].mxu0
      %1077 = vdwg.mxu0
      %v1082 = vunpack.c.l.b16 %v624
      %v1083 = vunpack.c.l.b16 %v625
      %v1084 = vunpack.c.l.b16 %v626
      %v1085 = vunpack.c.l.b16 %v627
      %v1086 = vpack.c.b16 %v1083, %v1082
      %v1087 = vpack.c.b16 %v1085, %v1084
      %1090 = vmatprep.subr.bf16.mxu0 0
      %1091 = vmatpush1.bf16.msra.mxu0 %v1086
      %1092 = vmatprep.subr.bf16.mxu0 0
      %1093 = vmatpush1.bf16.msra.mxu0 %v1087
      %1094 = vmatprep.subr.bf16.mxu0 0
      %1095 = vmatpush1.bf16.msra.mxu0 0
      %1096 = vmatprep.subr.bf16.mxu0 0
      %1097 = vmatpush1.bf16.msra.mxu0 0
      %1098 = vmatprep.subr.bf16.mxu0 0
      %1099 = vmatpush1.bf16.msra.mxu0 0
      %1100 = vmatprep.subr.bf16.mxu0 0
      %1101 = vmatpush1.bf16.msra.mxu0 0
      %1102 = vmatprep.subr.bf16.mxu0 0
      %1103 = vmatpush1.bf16.msra.mxu0 0
      %1104 = vmatprep.subr.bf16.mxu0 0
      %1105 = vmatpush1.bf16.msra.mxu0 0
      %1106 = vmatprep.subr.bf16.mxu0 0
      %1107 = vmatpush1.bf16.msra.mxu0 0
      %1108 = vmatprep.subr.bf16.mxu0 0
      %1109 = vmatpush1.bf16.msra.mxu0 0
      %1110 = vmatprep.subr.bf16.mxu0 0
      %1111 = vmatpush1.bf16.msra.mxu0 0
      %1112 = vmatprep.subr.bf16.mxu0 0
      %1113 = vmatpush1.bf16.msra.mxu0 0
      %1114 = vmatprep.subr.bf16.mxu0 0
      %1115 = vmatpush1.bf16.msra.mxu0 0
      %1116 = vmatprep.subr.bf16.mxu0 0
      %1117 = vmatpush1.bf16.msra.mxu0 0
      %1118 = vmatprep.subr.bf16.mxu0 0
      %1119 = vmatpush1.bf16.msra.mxu0 0
      %1120 = vmatprep.subr.bf16.mxu0 0
      %1121 = vmatpush1.bf16.msra.mxu0 0
      %1122 = vmatprep.mubr.bf16.mxu0 0
      %1123 = vmatmul.mubr.bf16.gmra.mrb[0].mxu0 %v696
      %v1124 = vpop.f32.mrb[0].mxu0
      %v1125 = vadd.f32 %v917, %v1124
      %v1126 = vpop.f32.mrb[0].mxu0
      %v1127 = vpop.f32.mrb[0].mxu0
      %v1128 = vpop.f32.mrb[0].mxu0
      %1129 = vdwg.mxu0
      %v1134 = vlaneseq
      %v1135 = vshrl.u32 %v1134, 7
      %v1136 = vsub.s32 0, %v1135
      %v1137 = vrot.slane %v648, %v1136
      %v1138 = vlaneseq
      %v1139 = vshrl.u32 %v1138, 7
      %v1140 = vsub.s32 0, %v1139
      %v1141 = vrot.slane %v649, %v1140
      %v1142 = vlaneseq
      %v1143 = vshrl.u32 %v1142, 7
      %v1144 = vsub.s32 0, %v1143
      %v1145 = vrot.slane %v650, %v1144
      %v1146 = vlaneseq
      %v1147 = vshrl.u32 %v1146, 7
      %v1148 = vsub.s32 0, %v1147
      %v1149 = vrot.slane %v651, %v1148
      %v1158 = vunpack.c.l.b16 %v632
      %v1159 = vunpack.c.l.b16 %v633
      %v1160 = vunpack.c.l.b16 %v634
      %v1161 = vunpack.c.l.b16 %v635
      %v1162 = vpack.c.b16 %v1159, %v1158
      %v1163 = vpack.c.b16 %v1161, %v1160
      %1166 = vmatprep.subr.bf16.mxu0 0
      %1167 = vmatpush1.bf16.msra.mxu0 %v1162
      %1168 = vmatprep.subr.bf16.mxu0 0
      %1169 = vmatpush1.bf16.msra.mxu0 %v1163
      %1170 = vmatprep.subr.bf16.mxu0 0
      %1171 = vmatpush1.bf16.msra.mxu0 0
      %1172 = vmatprep.subr.bf16.mxu0 0
      %1173 = vmatpush1.bf16.msra.mxu0 0
      %1174 = vmatprep.subr.bf16.mxu0 0
      %1175 = vmatpush1.bf16.msra.mxu0 0
      %1176 = vmatprep.subr.bf16.mxu0 0
      %1177 = vmatpush1.bf16.msra.mxu0 0
      %1178 = vmatprep.subr.bf16.mxu0 0
      %1179 = vmatpush1.bf16.msra.mxu0 0
      %1180 = vmatprep.subr.bf16.mxu0 0
      %1181 = vmatpush1.bf16.msra.mxu0 0
      %1182 = vmatprep.subr.bf16.mxu0 0
      %1183 = vmatpush1.bf16.msra.mxu0 0
      %1184 = vmatprep.subr.bf16.mxu0 0
      %1185 = vmatpush1.bf16.msra.mxu0 0
      %1186 = vmatprep.subr.bf16.mxu0 0
      %1187 = vmatpush1.bf16.msra.mxu0 0
      %1188 = vmatprep.subr.bf16.mxu0 0
      %1189 = vmatpush1.bf16.msra.mxu0 0
      %1190 = vmatprep.subr.bf16.mxu0 0
      %1191 = vmatpush1.bf16.msra.mxu0 0
      %1192 = vmatprep.subr.bf16.mxu0 0
      %1193 = vmatpush1.bf16.msra.mxu0 0
      %1194 = vmatprep.subr.bf16.mxu0 0
      %1195 = vmatpush1.bf16.msra.mxu0 0
      %1196 = vmatprep.subr.bf16.mxu0 0
      %1197 = vmatpush1.bf16.msra.mxu0 0
      %1198 = vmatprep.mubr.bf16.mxu0 0
      %1199 = vmatmul.mubr.bf16.gmra.mrb[0].mxu0 %v696
      %v1200 = vpop.f32.mrb[0].mxu0
      %v1201 = vadd.f32 %v1137, %v1200
      %v1202 = vpop.f32.mrb[0].mxu0
      %v1203 = vpop.f32.mrb[0].mxu0
      %v1204 = vpop.f32.mrb[0].mxu0
      %1205 = vdwg.mxu0
      %v1210 = vunpack.c.l.b16 %v636
      %v1211 = vunpack.c.l.b16 %v637
      %v1212 = vunpack.c.l.b16 %v638
      %v1213 = vunpack.c.l.b16 %v639
      %v1214 = vpack.c.b16 %v1211, %v1210
      %v1215 = vpack.c.b16 %v1213, %v1212
      %1218 = vmatprep.subr.bf16.mxu0 0
      %1219 = vmatpush1.bf16.msra.mxu0 %v1214
      %1220 = vmatprep.subr.bf16.mxu0 0
      %1221 = vmatpush1.bf16.msra.mxu0 %v1215
      %1222 = vmatprep.subr.bf16.mxu0 0
      %1223 = vmatpush1.bf16.msra.mxu0 0
      %1224 = vmatprep.subr.bf16.mxu0 0
      %1225 = vmatpush1.bf16.msra.mxu0 0
      %1226 = vmatprep.subr.bf16.mxu0 0
      %1227 = vmatpush1.bf16.msra.mxu0 0
      %1228 = vmatprep.subr.bf16.mxu0 0
      %1229 = vmatpush1.bf16.msra.mxu0 0
      %1230 = vmatprep.subr.bf16.mxu0 0
      %1231 = vmatpush1.bf16.msra.mxu0 0
      %1232 = vmatprep.subr.bf16.mxu0 0
      %1233 = vmatpush1.bf16.msra.mxu0 0
      %1234 = vmatprep.subr.bf16.mxu0 0
      %1235 = vmatpush1.bf16.msra.mxu0 0
      %1236 = vmatprep.subr.bf16.mxu0 0
      %1237 = vmatpush1.bf16.msra.mxu0 0
      %1238 = vmatprep.subr.bf16.mxu0 0
      %1239 = vmatpush1.bf16.msra.mxu0 0
      %1240 = vmatprep.subr.bf16.mxu0 0
      %1241 = vmatpush1.bf16.msra.mxu0 0
      %1242 = vmatprep.subr.bf16.mxu0 0
      %1243 = vmatpush1.bf16.msra.mxu0 0
      %1244 = vmatprep.subr.bf16.mxu0 0
      %1245 = vmatpush1.bf16.msra.mxu0 0
      %1246 = vmatprep.subr.bf16.mxu0 0
      %1247 = vmatpush1.bf16.msra.mxu0 0
      %1248 = vmatprep.subr.bf16.mxu0 0
      %1249 = vmatpush1.bf16.msra.mxu0 0
      %1250 = vmatprep.mubr.bf16.mxu0 0
      %1251 = vmatmul.mubr.bf16.gmra.mrb[0].mxu0 %v696
      %v1252 = vpop.f32.mrb[0].mxu0
      %v1253 = vadd.f32 %v1141, %v1252
      %v1254 = vpop.f32.mrb[0].mxu0
      %v1255 = vpop.f32.mrb[0].mxu0
      %v1256 = vpop.f32.mrb[0].mxu0
      %1257 = vdwg.mxu0
      %v1262 = vunpack.c.l.b16 %v640
      %v1263 = vunpack.c.l.b16 %v641
      %v1264 = vunpack.c.l.b16 %v642
      %v1265 = vunpack.c.l.b16 %v643
      %v1266 = vpack.c.b16 %v1263, %v1262
      %v1267 = vpack.c.b16 %v1265, %v1264
      %1270 = vmatprep.subr.bf16.mxu0 0
      %1271 = vmatpush1.bf16.msra.mxu0 %v1266
      %1272 = vmatprep.subr.bf16.mxu0 0
      %1273 = vmatpush1.bf16.msra.mxu0 %v1267
      %1274 = vmatprep.subr.bf16.mxu0 0
      %1275 = vmatpush1.bf16.msra.mxu0 0
      %1276 = vmatprep.subr.bf16.mxu0 0
      %1277 = vmatpush1.bf16.msra.mxu0 0
      %1278 = vmatprep.subr.bf16.mxu0 0
      %1279 = vmatpush1.bf16.msra.mxu0 0
      %1280 = vmatprep.subr.bf16.mxu0 0
      %1281 = vmatpush1.bf16.msra.mxu0 0
      %1282 = vmatprep.subr.bf16.mxu0 0
      %1283 = vmatpush1.bf16.msra.mxu0 0
      %1284 = vmatprep.subr.bf16.mxu0 0
      %1285 = vmatpush1.bf16.msra.mxu0 0
      %1286 = vmatprep.subr.bf16.mxu0 0
      %1287 = vmatpush1.bf16.msra.mxu0 0
      %1288 = vmatprep.subr.bf16.mxu0 0
      %1289 = vmatpush1.bf16.msra.mxu0 0
      %1290 = vmatprep.subr.bf16.mxu0 0
      %1291 = vmatpush1.bf16.msra.mxu0 0
      %1292 = vmatprep.subr.bf16.mxu0 0
      %1293 = vmatpush1.bf16.msra.mxu0 0
      %1294 = vmatprep.subr.bf16.mxu0 0
      %1295 = vmatpush1.bf16.msra.mxu0 0
      %1296 = vmatprep.subr.bf16.mxu0 0
      %1297 = vmatpush1.bf16.msra.mxu0 0
      %1298 = vmatprep.subr.bf16.mxu0 0
      %1299 = vmatpush1.bf16.msra.mxu0 0
      %1300 = vmatprep.subr.bf16.mxu0 0
      %1301 = vmatpush1.bf16.msra.mxu0 0
      %1302 = vmatprep.mubr.bf16.mxu0 0
      %1303 = vmatmul.mubr.bf16.gmra.mrb[0].mxu0 %v696
      %v1304 = vpop.f32.mrb[0].mxu0
      %v1305 = vadd.f32 %v1145, %v1304
      %v1306 = vpop.f32.mrb[0].mxu0
      %v1307 = vpop.f32.mrb[0].mxu0
      %v1308 = vpop.f32.mrb[0].mxu0
      %1309 = vdwg.mxu0
      %v1314 = vunpack.c.l.b16 %v644
      %v1315 = vunpack.c.l.b16 %v645
      %v1316 = vunpack.c.l.b16 %v646
      %v1317 = vunpack.c.l.b16 %v647
      %v1318 = vpack.c.b16 %v1315, %v1314
      %v1319 = vpack.c.b16 %v1317, %v1316
      %1322 = vmatprep.subr.bf16.mxu0 0
      %1323 = vmatpush1.bf16.msra.mxu0 %v1318
      %1324 = vmatprep.subr.bf16.mxu0 0
      %1325 = vmatpush1.bf16.msra.mxu0 %v1319
      %1326 = vmatprep.subr.bf16.mxu0 0
      %1327 = vmatpush1.bf16.msra.mxu0 0
      %1328 = vmatprep.subr.bf16.mxu0 0
      %1329 = vmatpush1.bf16.msra.mxu0 0
      %1330 = vmatprep.subr.bf16.mxu0 0
      %1331 = vmatpush1.bf16.msra.mxu0 0
      %1332 = vmatprep.subr.bf16.mxu0 0
      %1333 = vmatpush1.bf16.msra.mxu0 0
      %1334 = vmatprep.subr.bf16.mxu0 0
      %1335 = vmatpush1.bf16.msra.mxu0 0
      %1336 = vmatprep.subr.bf16.mxu0 0
      %1337 = vmatpush1.bf16.msra.mxu0 0
      %1338 = vmatprep.subr.bf16.mxu0 0
      %1339 = vmatpush1.bf16.msra.mxu0 0
      %1340 = vmatprep.subr.bf16.mxu0 0
      %1341 = vmatpush1.bf16.msra.mxu0 0
      %1342 = vmatprep.subr.bf16.mxu0 0
      %1343 = vmatpush1.bf16.msra.mxu0 0
      %1344 = vmatprep.subr.bf16.mxu0 0
      %1345 = vmatpush1.bf16.msra.mxu0 0
      %1346 = vmatprep.subr.bf16.mxu0 0
      %1347 = vmatpush1.bf16.msra.mxu0 0
      %1348 = vmatprep.subr.bf16.mxu0 0
      %1349 = vmatpush1.bf16.msra.mxu0 0
      %1350 = vmatprep.subr.bf16.mxu0 0
      %1351 = vmatpush1.bf16.msra.mxu0 0
      %1352 = vmatprep.subr.bf16.mxu0 0
      %1353 = vmatpush1.bf16.msra.mxu0 0
      %1354 = vmatprep.mubr.bf16.mxu0 0
      %1355 = vmatmul.mubr.bf16.gmra.mrb[0].mxu0 %v696
      %v1356 = vpop.f32.mrb[0].mxu0
      %v1357 = vadd.f32 %v1149, %v1356
      %v1358 = vpop.f32.mrb[0].mxu0
      %v1359 = vpop.f32.mrb[0].mxu0
      %v1360 = vpop.f32.mrb[0].mxu0
      %1361 = vdwg.mxu0
      %v1362 = vpack.c.bf16 %v894, %v894
      %v1363 = vpack.c.bf16 %v895, %v895
      %v1364 = vpack.c.bf16 %v896, %v896
      %v1365 = vpack.c.bf16 %v897, %v897
      %v1366 = vpack.c.bf16 %v969, %v969
      %v1367 = vpack.c.bf16 %v1021, %v1021
      %v1368 = vpack.c.bf16 %v1073, %v1073
      %v1369 = vpack.c.bf16 %v1125, %v1125
      %vm1370 = vcmask 64512
      %v1372 = vsel %vm1370, %v1362, 0
      %v1375 = vsel %vm1370, %v1366, 0
      %1377 = vmatprep.subr.bf16.mxu0 0
      %1378 = vmatpush1.bf16.xpose.msra.mxu0 %v1375
      %1379 = vmatprep.subr.bf16.mxu0 0
      %1380 = vmatpush1.bf16.xpose.msra.mxu0 0
      %1381 = vmatprep.subr.bf16.mxu0 0
      %1382 = vmatpush1.bf16.xpose.msra.mxu0 0
      %1383 = vmatprep.subr.bf16.mxu0 0
      %1384 = vmatpush1.bf16.xpose.msra.mxu0 0
      %1385 = vmatprep.subr.bf16.mxu0 0
      %1386 = vmatpush1.bf16.xpose.msra.mxu0 0
      %1387 = vmatprep.subr.bf16.mxu0 0
      %1388 = vmatpush1.bf16.xpose.msra.mxu0 0
      %1389 = vmatprep.subr.bf16.mxu0 0
      %1390 = vmatpush1.bf16.xpose.msra.mxu0 0
      %1391 = vmatprep.subr.bf16.mxu0 0
      %1392 = vmatpush1.bf16.xpose.msra.mxu0 0
      %1393 = vmatprep.subr.bf16.mxu0 0
      %1394 = vmatpush1.bf16.xpose.msra.mxu0 0
      %1395 = vmatprep.subr.bf16.mxu0 0
      %1396 = vmatpush1.bf16.xpose.msra.mxu0 0
      %1397 = vmatprep.subr.bf16.mxu0 0
      %1398 = vmatpush1.bf16.xpose.msra.mxu0 0
      %1399 = vmatprep.subr.bf16.mxu0 0
      %1400 = vmatpush1.bf16.xpose.msra.mxu0 0
      %1401 = vmatprep.subr.bf16.mxu0 0
      %1402 = vmatpush1.bf16.xpose.msra.mxu0 0
      %1403 = vmatprep.subr.bf16.mxu0 0
      %1404 = vmatpush1.bf16.xpose.msra.mxu0 0
      %1405 = vmatprep.subr.bf16.mxu0 0
      %1406 = vmatpush1.bf16.xpose.msra.mxu0 0
      %1407 = vmatprep.subr.bf16.mxu0 0
      %1408 = vmatpush1.bf16.xpose.msra.mxu0 0
      %1409 = vmatprep.mubr.bf16.mxu0 0
      %1410 = vmatmul.mubr.bf16.gmra.mrb[0].mxu0 %v1372
      %v1411 = vpop.f32.mrb[0].mxu0
      %v1412 = vadd.f32 0.0, %v1411
      %v1413 = vpop.f32.mrb[0].mxu0
      %v1414 = vpop.f32.mrb[0].mxu0
      %v1415 = vpop.f32.mrb[0].mxu0
      %1416 = vdwg.mxu0
      %v1418 = vsel %vm1370, %v1363, 0
      %v1421 = vsel %vm1370, %v1367, 0
      %1423 = vmatprep.subr.bf16.mxu0 0
      %1424 = vmatpush1.bf16.xpose.msra.mxu0 %v1421
      %1425 = vmatprep.subr.bf16.mxu0 0
      %1426 = vmatpush1.bf16.xpose.msra.mxu0 0
      %1427 = vmatprep.subr.bf16.mxu0 0
      %1428 = vmatpush1.bf16.xpose.msra.mxu0 0
      %1429 = vmatprep.subr.bf16.mxu0 0
      %1430 = vmatpush1.bf16.xpose.msra.mxu0 0
      %1431 = vmatprep.subr.bf16.mxu0 0
      %1432 = vmatpush1.bf16.xpose.msra.mxu0 0
      %1433 = vmatprep.subr.bf16.mxu0 0
      %1434 = vmatpush1.bf16.xpose.msra.mxu0 0
      %1435 = vmatprep.subr.bf16.mxu0 0
      %1436 = vmatpush1.bf16.xpose.msra.mxu0 0
      %1437 = vmatprep.subr.bf16.mxu0 0
      %1438 = vmatpush1.bf16.xpose.msra.mxu0 0
      %1439 = vmatprep.subr.bf16.mxu0 0
      %1440 = vmatpush1.bf16.xpose.msra.mxu0 0
      %1441 = vmatprep.subr.bf16.mxu0 0
      %1442 = vmatpush1.bf16.xpose.msra.mxu0 0
      %1443 = vmatprep.subr.bf16.mxu0 0
      %1444 = vmatpush1.bf16.xpose.msra.mxu0 0
      %1445 = vmatprep.subr.bf16.mxu0 0
      %1446 = vmatpush1.bf16.xpose.msra.mxu0 0
      %1447 = vmatprep.subr.bf16.mxu0 0
      %1448 = vmatpush1.bf16.xpose.msra.mxu0 0
      %1449 = vmatprep.subr.bf16.mxu0 0
      %1450 = vmatpush1.bf16.xpose.msra.mxu0 0
      %1451 = vmatprep.subr.bf16.mxu0 0
      %1452 = vmatpush1.bf16.xpose.msra.mxu0 0
      %1453 = vmatprep.subr.bf16.mxu0 0
      %1454 = vmatpush1.bf16.xpose.msra.mxu0 0
      %1455 = vmatprep.mubr.bf16.mxu0 0
      %1456 = vmatmul.mubr.bf16.gmra.mrb[0].mxu0 %v1418
      %v1457 = vpop.f32.mrb[0].mxu0
      %v1458 = vadd.f32 0.0, %v1457
      %v1459 = vpop.f32.mrb[0].mxu0
      %v1460 = vpop.f32.mrb[0].mxu0
      %v1461 = vpop.f32.mrb[0].mxu0
      %1462 = vdwg.mxu0
      %v1464 = vsel %vm1370, %v1364, 0
      %v1467 = vsel %vm1370, %v1368, 0
      %1469 = vmatprep.subr.bf16.mxu0 0
      %1470 = vmatpush1.bf16.xpose.msra.mxu0 %v1467
      %1471 = vmatprep.subr.bf16.mxu0 0
      %1472 = vmatpush1.bf16.xpose.msra.mxu0 0
      %1473 = vmatprep.subr.bf16.mxu0 0
      %1474 = vmatpush1.bf16.xpose.msra.mxu0 0
      %1475 = vmatprep.subr.bf16.mxu0 0
      %1476 = vmatpush1.bf16.xpose.msra.mxu0 0
      %1477 = vmatprep.subr.bf16.mxu0 0
      %1478 = vmatpush1.bf16.xpose.msra.mxu0 0
      %1479 = vmatprep.subr.bf16.mxu0 0
      %1480 = vmatpush1.bf16.xpose.msra.mxu0 0
      %1481 = vmatprep.subr.bf16.mxu0 0
      %1482 = vmatpush1.bf16.xpose.msra.mxu0 0
      %1483 = vmatprep.subr.bf16.mxu0 0
      %1484 = vmatpush1.bf16.xpose.msra.mxu0 0
      %1485 = vmatprep.subr.bf16.mxu0 0
      %1486 = vmatpush1.bf16.xpose.msra.mxu0 0
      %1487 = vmatprep.subr.bf16.mxu0 0
      %1488 = vmatpush1.bf16.xpose.msra.mxu0 0
      %1489 = vmatprep.subr.bf16.mxu0 0
      %1490 = vmatpush1.bf16.xpose.msra.mxu0 0
      %1491 = vmatprep.subr.bf16.mxu0 0
      %1492 = vmatpush1.bf16.xpose.msra.mxu0 0
      %1493 = vmatprep.subr.bf16.mxu0 0
      %1494 = vmatpush1.bf16.xpose.msra.mxu0 0
      %1495 = vmatprep.subr.bf16.mxu0 0
      %1496 = vmatpush1.bf16.xpose.msra.mxu0 0
      %1497 = vmatprep.subr.bf16.mxu0 0
      %1498 = vmatpush1.bf16.xpose.msra.mxu0 0
      %1499 = vmatprep.subr.bf16.mxu0 0
      %1500 = vmatpush1.bf16.xpose.msra.mxu0 0
      %1501 = vmatprep.mubr.bf16.mxu0 0
      %1502 = vmatmul.mubr.bf16.gmra.mrb[0].mxu0 %v1464
      %v1503 = vpop.f32.mrb[0].mxu0
      %v1504 = vadd.f32 0.0, %v1503
      %v1505 = vpop.f32.mrb[0].mxu0
      %v1506 = vpop.f32.mrb[0].mxu0
      %v1507 = vpop.f32.mrb[0].mxu0
      %1508 = vdwg.mxu0
      %v1510 = vsel %vm1370, %v1365, 0
      %v1513 = vsel %vm1370, %v1369, 0
      %1515 = vmatprep.subr.bf16.mxu0 0
      %1516 = vmatpush1.bf16.xpose.msra.mxu0 %v1513
      %1517 = vmatprep.subr.bf16.mxu0 0
      %1518 = vmatpush1.bf16.xpose.msra.mxu0 0
      %1519 = vmatprep.subr.bf16.mxu0 0
      %1520 = vmatpush1.bf16.xpose.msra.mxu0 0
      %1521 = vmatprep.subr.bf16.mxu0 0
      %1522 = vmatpush1.bf16.xpose.msra.mxu0 0
      %1523 = vmatprep.subr.bf16.mxu0 0
      %1524 = vmatpush1.bf16.xpose.msra.mxu0 0
      %1525 = vmatprep.subr.bf16.mxu0 0
      %1526 = vmatpush1.bf16.xpose.msra.mxu0 0
      %1527 = vmatprep.subr.bf16.mxu0 0
      %1528 = vmatpush1.bf16.xpose.msra.mxu0 0
      %1529 = vmatprep.subr.bf16.mxu0 0
      %1530 = vmatpush1.bf16.xpose.msra.mxu0 0
      %1531 = vmatprep.subr.bf16.mxu0 0
      %1532 = vmatpush1.bf16.xpose.msra.mxu0 0
      %1533 = vmatprep.subr.bf16.mxu0 0
      %1534 = vmatpush1.bf16.xpose.msra.mxu0 0
      %1535 = vmatprep.subr.bf16.mxu0 0
      %1536 = vmatpush1.bf16.xpose.msra.mxu0 0
      %1537 = vmatprep.subr.bf16.mxu0 0
      %1538 = vmatpush1.bf16.xpose.msra.mxu0 0
      %1539 = vmatprep.subr.bf16.mxu0 0
      %1540 = vmatpush1.bf16.xpose.msra.mxu0 0
      %1541 = vmatprep.subr.bf16.mxu0 0
      %1542 = vmatpush1.bf16.xpose.msra.mxu0 0
      %1543 = vmatprep.subr.bf16.mxu0 0
      %1544 = vmatpush1.bf16.xpose.msra.mxu0 0
      %1545 = vmatprep.subr.bf16.mxu0 0
      %1546 = vmatpush1.bf16.xpose.msra.mxu0 0
      %1547 = vmatprep.mubr.bf16.mxu0 0
      %1548 = vmatmul.mubr.bf16.gmra.mrb[0].mxu0 %v1510
      %v1549 = vpop.f32.mrb[0].mxu0
      %v1550 = vadd.f32 0.0, %v1549
      %v1551 = vpop.f32.mrb[0].mxu0
      %v1552 = vpop.f32.mrb[0].mxu0
      %v1553 = vpop.f32.mrb[0].mxu0
      %1554 = vdwg.mxu0
      %v1555 = vsel %vm1370, %v1412, -inf
      %1556 = vmax.xlane.f32.xlu0 %v1555
      %v1557 = vpop.xlane.xlu0 %1556
      %v1558 = vsel %vm1370, %v1458, -inf
      %1559 = vmax.xlane.f32.xlu0 %v1558
      %v1560 = vpop.xlane.xlu0 %1559
      %v1561 = vsel %vm1370, %v1504, -inf
      %1562 = vmax.xlane.f32.xlu0 %v1561
      %v1563 = vpop.xlane.xlu0 %1562
      %v1564 = vsel %vm1370, %v1550, -inf
      %1565 = vmax.xlane.f32.xlu0 %v1564
      %v1566 = vpop.xlane.xlu0 %1565
      %v1567 = vsub.f32 %v1412, %v1557
      %v1568 = vsub.f32 %v1458, %v1560
      %v1569 = vsub.f32 %v1504, %v1563
      %v1570 = vsub.f32 %v1550, %v1566
      %v1571 = vmul.f32 %v1567, 1.442695
      %v1572 = vpow.pop %v1571
      %v1573 = vmul.f32 %v1568, 1.442695
      %v1574 = vpow.pop %v1573
      %v1575 = vmul.f32 %v1569, 1.442695
      %v1576 = vpow.pop %v1575
      %v1577 = vmul.f32 %v1570, 1.442695
      %v1578 = vpow.pop %v1577
      %v1579 = vsel %vm1370, %v1572, 0.0
      %1580 = vadd.xlane.f32.xlu0 %v1579
      %v1581 = vpop.xlane.xlu0 %1580
      %v1582 = vsel %vm1370, %v1574, 0.0
      %1583 = vadd.xlane.f32.xlu0 %v1582
      %v1584 = vpop.xlane.xlu0 %1583
      %v1585 = vsel %vm1370, %v1576, 0.0
      %1586 = vadd.xlane.f32.xlu0 %v1585
      %v1587 = vpop.xlane.xlu0 %1586
      %v1588 = vsel %vm1370, %v1578, 0.0
      %1589 = vadd.xlane.f32.xlu0 %v1588
      %v1590 = vpop.xlane.xlu0 %1589
      %v1591 = vrcp.pop %v1581
      %v1592 = vrcp.pop %v1584
      %v1593 = vrcp.pop %v1587
      %v1594 = vrcp.pop %v1590
      %v1595 = vmul.f32 %v1572, %v1591
      %v1596 = vmul.f32 %v1574, %v1592
      %v1597 = vmul.f32 %v1576, %v1593
      %v1598 = vmul.f32 %v1578, %v1594
      %v1599 = vpack.c.bf16 %v1595, %v1595
      %v1600 = vpack.c.bf16 %v1596, %v1596
      %v1601 = vpack.c.bf16 %v1597, %v1597
      %v1602 = vpack.c.bf16 %v1598, %v1598
      %v1603 = vpack.c.bf16 %v1201, %v1201
      %v1604 = vpack.c.bf16 %v1253, %v1253
      %v1605 = vpack.c.bf16 %v1305, %v1305
      %v1606 = vpack.c.bf16 %v1357, %v1357
      %v1608 = vsel %vm1370, %v1599, 0
      %vm1610 = vcmask 1043456
      %v1612 = vsel %vm1610, %v1603, 0
      %1614 = vmatprep.subr.bf16.mxu0 0
      %1615 = vmatpush1.bf16.msra.mxu0 %v1612
      %1616 = vmatprep.subr.bf16.mxu0 0
      %1617 = vmatpush1.bf16.msra.mxu0 0
      %1618 = vmatprep.subr.bf16.mxu0 0
      %1619 = vmatpush1.bf16.msra.mxu0 0
      %1620 = vmatprep.subr.bf16.mxu0 0
      %1621 = vmatpush1.bf16.msra.mxu0 0
      %1622 = vmatprep.subr.bf16.mxu0 0
      %1623 = vmatpush1.bf16.msra.mxu0 0
      %1624 = vmatprep.subr.bf16.mxu0 0
      %1625 = vmatpush1.bf16.msra.mxu0 0
      %1626 = vmatprep.subr.bf16.mxu0 0
      %1627 = vmatpush1.bf16.msra.mxu0 0
      %1628 = vmatprep.subr.bf16.mxu0 0
      %1629 = vmatpush1.bf16.msra.mxu0 0
      %1630 = vmatprep.subr.bf16.mxu0 0
      %1631 = vmatpush1.bf16.msra.mxu0 0
      %1632 = vmatprep.subr.bf16.mxu0 0
      %1633 = vmatpush1.bf16.msra.mxu0 0
      %1634 = vmatprep.subr.bf16.mxu0 0
      %1635 = vmatpush1.bf16.msra.mxu0 0
      %1636 = vmatprep.subr.bf16.mxu0 0
      %1637 = vmatpush1.bf16.msra.mxu0 0
      %1638 = vmatprep.subr.bf16.mxu0 0
      %1639 = vmatpush1.bf16.msra.mxu0 0
      %1640 = vmatprep.subr.bf16.mxu0 0
      %1641 = vmatpush1.bf16.msra.mxu0 0
      %1642 = vmatprep.subr.bf16.mxu0 0
      %1643 = vmatpush1.bf16.msra.mxu0 0
      %1644 = vmatprep.subr.bf16.mxu0 0
      %1645 = vmatpush1.bf16.msra.mxu0 0
      %1646 = vmatprep.mubr.bf16.mxu0 0
      %1647 = vmatmul.mubr.bf16.gmra.mrb[0].mxu0 %v1608
      %v1648 = vpop.f32.mrb[0].mxu0
      %v1649 = vadd.f32 0.0, %v1648
      %v1650 = vpop.f32.mrb[0].mxu0
      %v1651 = vpop.f32.mrb[0].mxu0
      %v1652 = vpop.f32.mrb[0].mxu0
      %1653 = vdwg.mxu0
      %v1655 = vsel %vm1370, %v1600, 0
      %v1658 = vsel %vm1610, %v1604, 0
      %1660 = vmatprep.subr.bf16.mxu0 0
      %1661 = vmatpush1.bf16.msra.mxu0 %v1658
      %1662 = vmatprep.subr.bf16.mxu0 0
      %1663 = vmatpush1.bf16.msra.mxu0 0
      %1664 = vmatprep.subr.bf16.mxu0 0
      %1665 = vmatpush1.bf16.msra.mxu0 0
      %1666 = vmatprep.subr.bf16.mxu0 0
      %1667 = vmatpush1.bf16.msra.mxu0 0
      %1668 = vmatprep.subr.bf16.mxu0 0
      %1669 = vmatpush1.bf16.msra.mxu0 0
      %1670 = vmatprep.subr.bf16.mxu0 0
      %1671 = vmatpush1.bf16.msra.mxu0 0
      %1672 = vmatprep.subr.bf16.mxu0 0
      %1673 = vmatpush1.bf16.msra.mxu0 0
      %1674 = vmatprep.subr.bf16.mxu0 0
      %1675 = vmatpush1.bf16.msra.mxu0 0
      %1676 = vmatprep.subr.bf16.mxu0 0
      %1677 = vmatpush1.bf16.msra.mxu0 0
      %1678 = vmatprep.subr.bf16.mxu0 0
      %1679 = vmatpush1.bf16.msra.mxu0 0
      %1680 = vmatprep.subr.bf16.mxu0 0
      %1681 = vmatpush1.bf16.msra.mxu0 0
      %1682 = vmatprep.subr.bf16.mxu0 0
      %1683 = vmatpush1.bf16.msra.mxu0 0
      %1684 = vmatprep.subr.bf16.mxu0 0
      %1685 = vmatpush1.bf16.msra.mxu0 0
      %1686 = vmatprep.subr.bf16.mxu0 0
      %1687 = vmatpush1.bf16.msra.mxu0 0
      %1688 = vmatprep.subr.bf16.mxu0 0
      %1689 = vmatpush1.bf16.msra.mxu0 0
      %1690 = vmatprep.subr.bf16.mxu0 0
      %1691 = vmatpush1.bf16.msra.mxu0 0
      %1692 = vmatprep.mubr.bf16.mxu0 0
      %1693 = vmatmul.mubr.bf16.gmra.mrb[0].mxu0 %v1655
      %v1694 = vpop.f32.mrb[0].mxu0
      %v1695 = vadd.f32 0.0, %v1694
      %v1696 = vpop.f32.mrb[0].mxu0
      %v1697 = vpop.f32.mrb[0].mxu0
      %v1698 = vpop.f32.mrb[0].mxu0
      %1699 = vdwg.mxu0
      %v1701 = vsel %vm1370, %v1601, 0
      %v1704 = vsel %vm1610, %v1605, 0
      %1706 = vmatprep.subr.bf16.mxu0 0
      %1707 = vmatpush1.bf16.msra.mxu0 %v1704
      %1708 = vmatprep.subr.bf16.mxu0 0
      %1709 = vmatpush1.bf16.msra.mxu0 0
      %1710 = vmatprep.subr.bf16.mxu0 0
      %1711 = vmatpush1.bf16.msra.mxu0 0
      %1712 = vmatprep.subr.bf16.mxu0 0
      %1713 = vmatpush1.bf16.msra.mxu0 0
      %1714 = vmatprep.subr.bf16.mxu0 0
      %1715 = vmatpush1.bf16.msra.mxu0 0
      %1716 = vmatprep.subr.bf16.mxu0 0
      %1717 = vmatpush1.bf16.msra.mxu0 0
      %1718 = vmatprep.subr.bf16.mxu0 0
      %1719 = vmatpush1.bf16.msra.mxu0 0
      %1720 = vmatprep.subr.bf16.mxu0 0
      %1721 = vmatpush1.bf16.msra.mxu0 0
      %1722 = vmatprep.subr.bf16.mxu0 0
      %1723 = vmatpush1.bf16.msra.mxu0 0
      %1724 = vmatprep.subr.bf16.mxu0 0
      %1725 = vmatpush1.bf16.msra.mxu0 0
      %1726 = vmatprep.subr.bf16.mxu0 0
      %1727 = vmatpush1.bf16.msra.mxu0 0
      %1728 = vmatprep.subr.bf16.mxu0 0
      %1729 = vmatpush1.bf16.msra.mxu0 0
      %1730 = vmatprep.subr.bf16.mxu0 0
      %1731 = vmatpush1.bf16.msra.mxu0 0
      %1732 = vmatprep.subr.bf16.mxu0 0
      %1733 = vmatpush1.bf16.msra.mxu0 0
      %1734 = vmatprep.subr.bf16.mxu0 0
      %1735 = vmatpush1.bf16.msra.mxu0 0
      %1736 = vmatprep.subr.bf16.mxu0 0
      %1737 = vmatpush1.bf16.msra.mxu0 0
      %1738 = vmatprep.mubr.bf16.mxu0 0
      %1739 = vmatmul.mubr.bf16.gmra.mrb[0].mxu0 %v1701
      %v1740 = vpop.f32.mrb[0].mxu0
      %v1741 = vadd.f32 0.0, %v1740
      %v1742 = vpop.f32.mrb[0].mxu0
      %v1743 = vpop.f32.mrb[0].mxu0
      %v1744 = vpop.f32.mrb[0].mxu0
      %1745 = vdwg.mxu0
      %v1747 = vsel %vm1370, %v1602, 0
      %v1750 = vsel %vm1610, %v1606, 0
      %1752 = vmatprep.subr.bf16.mxu0 0
      %1753 = vmatpush1.bf16.msra.mxu0 %v1750
      %1754 = vmatprep.subr.bf16.mxu0 0
      %1755 = vmatpush1.bf16.msra.mxu0 0
      %1756 = vmatprep.subr.bf16.mxu0 0
      %1757 = vmatpush1.bf16.msra.mxu0 0
      %1758 = vmatprep.subr.bf16.mxu0 0
      %1759 = vmatpush1.bf16.msra.mxu0 0
      %1760 = vmatprep.subr.bf16.mxu0 0
      %1761 = vmatpush1.bf16.msra.mxu0 0
      %1762 = vmatprep.subr.bf16.mxu0 0
      %1763 = vmatpush1.bf16.msra.mxu0 0
      %1764 = vmatprep.subr.bf16.mxu0 0
      %1765 = vmatpush1.bf16.msra.mxu0 0
      %1766 = vmatprep.subr.bf16.mxu0 0
      %1767 = vmatpush1.bf16.msra.mxu0 0
      %1768 = vmatprep.subr.bf16.mxu0 0
      %1769 = vmatpush1.bf16.msra.mxu0 0
      %1770 = vmatprep.subr.bf16.mxu0 0
      %1771 = vmatpush1.bf16.msra.mxu0 0
      %1772 = vmatprep.subr.bf16.mxu0 0
      %1773 = vmatpush1.bf16.msra.mxu0 0
      %1774 = vmatprep.subr.bf16.mxu0 0
      %1775 = vmatpush1.bf16.msra.mxu0 0
      %1776 = vmatprep.subr.bf16.mxu0 0
      %1777 = vmatpush1.bf16.msra.mxu0 0
      %1778 = vmatprep.subr.bf16.mxu0 0
      %1779 = vmatpush1.bf16.msra.mxu0 0
      %1780 = vmatprep.subr.bf16.mxu0 0
      %1781 = vmatpush1.bf16.msra.mxu0 0
      %1782 = vmatprep.subr.bf16.mxu0 0
      %1783 = vmatpush1.bf16.msra.mxu0 0
      %1784 = vmatprep.mubr.bf16.mxu0 0
      %1785 = vmatmul.mubr.bf16.gmra.mrb[0].mxu0 %v1747
      %v1786 = vpop.f32.mrb[0].mxu0
      %v1787 = vadd.f32 0.0, %v1786
      %v1788 = vpop.f32.mrb[0].mxu0
      %v1789 = vpop.f32.mrb[0].mxu0
      %v1790 = vpop.f32.mrb[0].mxu0
      %1791 = vdwg.mxu0
      %v1792 = vpack.c.bf16 %v1649, %v1649
      %v1793 = vpack.c.bf16 %v1695, %v1695
      %v1794 = vpack.c.bf16 %v1741, %v1741
      %v1795 = vpack.c.bf16 %v1787, %v1787
      %v1797 = vsel %vm1370, %v1792, 0
      %v1800 = vsel %vm1610, %v652, 0
      %1802 = vmatprep.subr.bf16.mxu0 0
      %1803 = vmatpush1.bf16.msra.mxu0 %v1800
      %1804 = vmatprep.subr.bf16.mxu0 0
      %1805 = vmatpush1.bf16.msra.mxu0 0
      %1806 = vmatprep.subr.bf16.mxu0 0
      %1807 = vmatpush1.bf16.msra.mxu0 0
      %1808 = vmatprep.subr.bf16.mxu0 0
      %1809 = vmatpush1.bf16.msra.mxu0 0
      %1810 = vmatprep.subr.bf16.mxu0 0
      %1811 = vmatpush1.bf16.msra.mxu0 0
      %1812 = vmatprep.subr.bf16.mxu0 0
      %1813 = vmatpush1.bf16.msra.mxu0 0
      %1814 = vmatprep.subr.bf16.mxu0 0
      %1815 = vmatpush1.bf16.msra.mxu0 0
      %1816 = vmatprep.subr.bf16.mxu0 0
      %1817 = vmatpush1.bf16.msra.mxu0 0
      %1818 = vmatprep.subr.bf16.mxu0 0
      %1819 = vmatpush1.bf16.msra.mxu0 0
      %1820 = vmatprep.subr.bf16.mxu0 0
      %1821 = vmatpush1.bf16.msra.mxu0 0
      %1822 = vmatprep.subr.bf16.mxu0 0
      %1823 = vmatpush1.bf16.msra.mxu0 0
      %1824 = vmatprep.subr.bf16.mxu0 0
      %1825 = vmatpush1.bf16.msra.mxu0 0
      %1826 = vmatprep.subr.bf16.mxu0 0
      %1827 = vmatpush1.bf16.msra.mxu0 0
      %1828 = vmatprep.subr.bf16.mxu0 0
      %1829 = vmatpush1.bf16.msra.mxu0 0
      %1830 = vmatprep.subr.bf16.mxu0 0
      %1831 = vmatpush1.bf16.msra.mxu0 0
      %1832 = vmatprep.subr.bf16.mxu0 0
      %1833 = vmatpush1.bf16.msra.mxu0 0
      %1834 = vmatprep.mubr.bf16.mxu0 0
      %1835 = vmatmul.mubr.bf16.gmra.mrb[0].mxu0 %v1797
      %v1836 = vpop.f32.mrb[0].mxu0
      %v1837 = vadd.f32 0.0, %v1836
      %v1838 = vpop.f32.mrb[0].mxu0
      %v1839 = vpop.f32.mrb[0].mxu0
      %v1840 = vpop.f32.mrb[0].mxu0
      %1841 = vdwg.mxu0
      %v1843 = vsel %vm1370, %v1793, 0
      %v1846 = vsel %vm1610, %v653, 0
      %1848 = vmatprep.subr.bf16.mxu0 0
      %1849 = vmatpush1.bf16.msra.mxu0 %v1846
      %1850 = vmatprep.subr.bf16.mxu0 0
      %1851 = vmatpush1.bf16.msra.mxu0 0
      %1852 = vmatprep.subr.bf16.mxu0 0
      %1853 = vmatpush1.bf16.msra.mxu0 0
      %1854 = vmatprep.subr.bf16.mxu0 0
      %1855 = vmatpush1.bf16.msra.mxu0 0
      %1856 = vmatprep.subr.bf16.mxu0 0
      %1857 = vmatpush1.bf16.msra.mxu0 0
      %1858 = vmatprep.subr.bf16.mxu0 0
      %1859 = vmatpush1.bf16.msra.mxu0 0
      %1860 = vmatprep.subr.bf16.mxu0 0
      %1861 = vmatpush1.bf16.msra.mxu0 0
      %1862 = vmatprep.subr.bf16.mxu0 0
      %1863 = vmatpush1.bf16.msra.mxu0 0
      %1864 = vmatprep.subr.bf16.mxu0 0
      %1865 = vmatpush1.bf16.msra.mxu0 0
      %1866 = vmatprep.subr.bf16.mxu0 0
      %1867 = vmatpush1.bf16.msra.mxu0 0
      %1868 = vmatprep.subr.bf16.mxu0 0
      %1869 = vmatpush1.bf16.msra.mxu0 0
      %1870 = vmatprep.subr.bf16.mxu0 0
      %1871 = vmatpush1.bf16.msra.mxu0 0
      %1872 = vmatprep.subr.bf16.mxu0 0
      %1873 = vmatpush1.bf16.msra.mxu0 0
      %1874 = vmatprep.subr.bf16.mxu0 0
      %1875 = vmatpush1.bf16.msra.mxu0 0
      %1876 = vmatprep.subr.bf16.mxu0 0
      %1877 = vmatpush1.bf16.msra.mxu0 0
      %1878 = vmatprep.subr.bf16.mxu0 0
      %1879 = vmatpush1.bf16.msra.mxu0 0
      %1880 = vmatprep.mubr.bf16.mxu0 0
      %1881 = vmatmul.mubr.bf16.gmra.mrb[0].mxu0 %v1843
      %v1882 = vpop.f32.mrb[0].mxu0
      %v1883 = vadd.f32 0.0, %v1882
      %v1884 = vpop.f32.mrb[0].mxu0
      %v1885 = vpop.f32.mrb[0].mxu0
      %v1886 = vpop.f32.mrb[0].mxu0
      %1887 = vdwg.mxu0
      %v1889 = vsel %vm1370, %v1794, 0
      %v1892 = vsel %vm1610, %v654, 0
      %1894 = vmatprep.subr.bf16.mxu0 0
      %1895 = vmatpush1.bf16.msra.mxu0 %v1892
      %1896 = vmatprep.subr.bf16.mxu0 0
      %1897 = vmatpush1.bf16.msra.mxu0 0
      %1898 = vmatprep.subr.bf16.mxu0 0
      %1899 = vmatpush1.bf16.msra.mxu0 0
      %1900 = vmatprep.subr.bf16.mxu0 0
      %1901 = vmatpush1.bf16.msra.mxu0 0
      %1902 = vmatprep.subr.bf16.mxu0 0
      %1903 = vmatpush1.bf16.msra.mxu0 0
      %1904 = vmatprep.subr.bf16.mxu0 0
      %1905 = vmatpush1.bf16.msra.mxu0 0
      %1906 = vmatprep.subr.bf16.mxu0 0
      %1907 = vmatpush1.bf16.msra.mxu0 0
      %1908 = vmatprep.subr.bf16.mxu0 0
      %1909 = vmatpush1.bf16.msra.mxu0 0
      %1910 = vmatprep.subr.bf16.mxu0 0
      %1911 = vmatpush1.bf16.msra.mxu0 0
      %1912 = vmatprep.subr.bf16.mxu0 0
      %1913 = vmatpush1.bf16.msra.mxu0 0
      %1914 = vmatprep.subr.bf16.mxu0 0
      %1915 = vmatpush1.bf16.msra.mxu0 0
      %1916 = vmatprep.subr.bf16.mxu0 0
      %1917 = vmatpush1.bf16.msra.mxu0 0
      %1918 = vmatprep.subr.bf16.mxu0 0
      %1919 = vmatpush1.bf16.msra.mxu0 0
      %1920 = vmatprep.subr.bf16.mxu0 0
      %1921 = vmatpush1.bf16.msra.mxu0 0
      %1922 = vmatprep.subr.bf16.mxu0 0
      %1923 = vmatpush1.bf16.msra.mxu0 0
      %1924 = vmatprep.subr.bf16.mxu0 0
      %1925 = vmatpush1.bf16.msra.mxu0 0
      %1926 = vmatprep.mubr.bf16.mxu0 0
      %1927 = vmatmul.mubr.bf16.gmra.mrb[0].mxu0 %v1889
      %v1928 = vpop.f32.mrb[0].mxu0
      %v1929 = vadd.f32 0.0, %v1928
      %v1930 = vpop.f32.mrb[0].mxu0
      %v1931 = vpop.f32.mrb[0].mxu0
      %v1932 = vpop.f32.mrb[0].mxu0
      %1933 = vdwg.mxu0
      %v1935 = vsel %vm1370, %v1795, 0
      %v1938 = vsel %vm1610, %v655, 0
      %1940 = vmatprep.subr.bf16.mxu0 0
      %1941 = vmatpush1.bf16.msra.mxu0 %v1938
      %1942 = vmatprep.subr.bf16.mxu0 0
      %1943 = vmatpush1.bf16.msra.mxu0 0
      %1944 = vmatprep.subr.bf16.mxu0 0
      %1945 = vmatpush1.bf16.msra.mxu0 0
      %1946 = vmatprep.subr.bf16.mxu0 0
      %1947 = vmatpush1.bf16.msra.mxu0 0
      %1948 = vmatprep.subr.bf16.mxu0 0
      %1949 = vmatpush1.bf16.msra.mxu0 0
      %1950 = vmatprep.subr.bf16.mxu0 0
      %1951 = vmatpush1.bf16.msra.mxu0 0
      %1952 = vmatprep.subr.bf16.mxu0 0
      %1953 = vmatpush1.bf16.msra.mxu0 0
      %1954 = vmatprep.subr.bf16.mxu0 0
      %1955 = vmatpush1.bf16.msra.mxu0 0
      %1956 = vmatprep.subr.bf16.mxu0 0
      %1957 = vmatpush1.bf16.msra.mxu0 0
      %1958 = vmatprep.subr.bf16.mxu0 0
      %1959 = vmatpush1.bf16.msra.mxu0 0
      %1960 = vmatprep.subr.bf16.mxu0 0
      %1961 = vmatpush1.bf16.msra.mxu0 0
      %1962 = vmatprep.subr.bf16.mxu0 0
      %1963 = vmatpush1.bf16.msra.mxu0 0
      %1964 = vmatprep.subr.bf16.mxu0 0
      %1965 = vmatpush1.bf16.msra.mxu0 0
      %1966 = vmatprep.subr.bf16.mxu0 0
      %1967 = vmatpush1.bf16.msra.mxu0 0
      %1968 = vmatprep.subr.bf16.mxu0 0
      %1969 = vmatpush1.bf16.msra.mxu0 0
      %1970 = vmatprep.subr.bf16.mxu0 0
      %1971 = vmatpush1.bf16.msra.mxu0 0
      %1972 = vmatprep.mubr.bf16.mxu0 0
      %1973 = vmatmul.mubr.bf16.gmra.mrb[0].mxu0 %v1935
      %v1974 = vpop.f32.mrb[0].mxu0
      %v1975 = vadd.f32 0.0, %v1974
      %v1976 = vpop.f32.mrb[0].mxu0
      %v1977 = vpop.f32.mrb[0].mxu0
      %v1978 = vpop.f32.mrb[0].mxu0
      %1979 = vdwg.mxu0
      %v1980 = vsel %vm694, %v1837, 0.0
      %v1981 = vsel %vm694, %v1883, 0.0
      %v1982 = vadd.f32 %v1980, %v1981
      %v1983 = vsel %vm694, %v1929, 0.0
      %v1984 = vadd.f32 %v1982, %v1983
      %v1985 = vsel %vm694, %v1975, 0.0
      %v1986 = vadd.f32 %v1984, %v1985
      %v1988 = vlaneseq
      %v1989 = vshrl.u32 %v1988, 7
      %v1990 = vsub.s32 0, %v1989
      %v1991 = vrot.slane %v656, %v1990
      %v1993 = vadd.f32 %v1986, %v1991
      %v1994 = vadd.f32 %v589, %v1993
      %v1995 = vld [vmem:[%s10] sm:$0x1]
      %v1996 = vld [vmem:[%s11] sm:$0x1]
      %v1997 = vsel %vm694, %v1994, 0.0
      %1998 = vadd.xlane.f32.xlu0 %v1997
      %v1999 = vpop.xlane.xlu0 %1998
      %v2000 = vrcp.pop 32.0
      %v2001 = vmul.f32 %v1999, %v2000
      %v2002 = vsub.f32 %v1994, %v2001
      %v2003 = vmul.f32 %v2002, %v2002
      %v2004 = vsel %vm694, %v2003, 0.0
      %2005 = vadd.xlane.f32.xlu0 %v2004
      %v2006 = vpop.xlane.xlu0 %2005
      %v2007 = vmul.f32 %v2006, %v2000
      %v2008 = vadd.f32 %v2007, 1e-05
      %v2009 = vrsqrt.pop %v2008
      %v2010 = vmul.f32 %v2002, %v2009
      %v2012 = vlaneseq
      %v2013 = vshrl.u32 %v2012, 7
      %v2014 = vsub.s32 0, %v2013
      %v2015 = vrot.slane %v1995, %v2014
      %v2017 = vmul.f32 %v2010, %v2015
      %v2019 = vlaneseq
      %v2020 = vshrl.u32 %v2019, 7
      %v2021 = vsub.s32 0, %v2020
      %v2022 = vrot.slane %v1996, %v2021
      %v2024 = vadd.f32 %v2017, %v2022
      %v2025 = vld [vmem:[%s12] sm:$0xf]
      %v2026 = vld [vmem:[%s12 + $0x4] sm:$0xf]
      %v2027 = vld [vmem:[%s12 + $0x8] sm:$0xf]
      %v2028 = vld [vmem:[%s12 + $0xc] sm:$0xf]
      %v2029 = vld [vmem:[%s13] sm:$0x1]
      %v2030 = vld [vmem:[%s14] sm:$0xf]
      %v2031 = vld [vmem:[%s14 + $0x4] sm:$0xf]
      %v2032 = vld [vmem:[%s14 + $0x8] sm:$0xf]
      %v2033 = vld [vmem:[%s14 + $0xc] sm:$0xf]
      %v2034 = vld [vmem:[%s14 + $0x10] sm:$0xf]
      %v2035 = vld [vmem:[%s14 + $0x14] sm:$0xf]
      %v2036 = vld [vmem:[%s14 + $0x18] sm:$0xf]
      %v2037 = vld [vmem:[%s14 + $0x1c] sm:$0xf]
      %v2038 = vld [vmem:[%s15] sm:$0x1]
      %v2039 = vpack.c.bf16 %v2024, %v2024
      %v2041 = vlaneseq
      %v2042 = vshrl.u32 %v2041, 7
      %v2043 = vsub.s32 0, %v2042
      %v2044 = vrot.slane %v2029, %v2043
      %v2050 = vunpack.c.l.b16 %v2025
      %v2051 = vunpack.c.l.b16 %v2026
      %v2052 = vunpack.c.l.b16 %v2027
      %v2053 = vunpack.c.l.b16 %v2028
      %v2054 = vpack.c.b16 %v2051, %v2050
      %v2055 = vpack.c.b16 %v2053, %v2052
      %v2059 = vsel %vm694, %v2039, 0
      %2061 = vmatprep.subr.bf16.mxu0 0
      %2062 = vmatpush1.bf16.msra.mxu0 %v2054
      %2063 = vmatprep.subr.bf16.mxu0 0
      %2064 = vmatpush1.bf16.msra.mxu0 %v2055
      %2065 = vmatprep.subr.bf16.mxu0 0
      %2066 = vmatpush1.bf16.msra.mxu0 0
      %2067 = vmatprep.subr.bf16.mxu0 0
      %2068 = vmatpush1.bf16.msra.mxu0 0
      %2069 = vmatprep.subr.bf16.mxu0 0
      %2070 = vmatpush1.bf16.msra.mxu0 0
      %2071 = vmatprep.subr.bf16.mxu0 0
      %2072 = vmatpush1.bf16.msra.mxu0 0
      %2073 = vmatprep.subr.bf16.mxu0 0
      %2074 = vmatpush1.bf16.msra.mxu0 0
      %2075 = vmatprep.subr.bf16.mxu0 0
      %2076 = vmatpush1.bf16.msra.mxu0 0
      %2077 = vmatprep.subr.bf16.mxu0 0
      %2078 = vmatpush1.bf16.msra.mxu0 0
      %2079 = vmatprep.subr.bf16.mxu0 0
      %2080 = vmatpush1.bf16.msra.mxu0 0
      %2081 = vmatprep.subr.bf16.mxu0 0
      %2082 = vmatpush1.bf16.msra.mxu0 0
      %2083 = vmatprep.subr.bf16.mxu0 0
      %2084 = vmatpush1.bf16.msra.mxu0 0
      %2085 = vmatprep.subr.bf16.mxu0 0
      %2086 = vmatpush1.bf16.msra.mxu0 0
      %2087 = vmatprep.subr.bf16.mxu0 0
      %2088 = vmatpush1.bf16.msra.mxu0 0
      %2089 = vmatprep.subr.bf16.mxu0 0
      %2090 = vmatpush1.bf16.msra.mxu0 0
      %2091 = vmatprep.subr.bf16.mxu0 0
      %2092 = vmatpush1.bf16.msra.mxu0 0
      %2093 = vmatprep.mubr.bf16.mxu0 0
      %2094 = vmatmul.mubr.bf16.gmra.mrb[0].mxu0 %v2059
      %v2095 = vpop.f32.mrb[0].mxu0
      %v2096 = vadd.f32 %v2044, %v2095
      %v2097 = vpop.f32.mrb[0].mxu0
      %v2098 = vpop.f32.mrb[0].mxu0
      %v2099 = vpop.f32.mrb[0].mxu0
      %2100 = vdwg.mxu0
      %v2101 = vmax.f32 %v2096, 0.0
      %v2102 = vpack.c.bf16 %v2101, %v2101
      %v2104 = vlaneseq
      %v2105 = vshrl.u32 %v2104, 7
      %v2106 = vsub.s32 0, %v2105
      %v2107 = vrot.slane %v2038, %v2106
      %v2117 = vunpack.c.l.b16 %v2030
      %v2118 = vunpack.c.l.b16 %v2031
      %v2119 = vunpack.c.l.b16 %v2032
      %v2120 = vunpack.c.l.b16 %v2033
      %v2121 = vunpack.c.l.b16 %v2034
      %v2122 = vunpack.c.l.b16 %v2035
      %v2123 = vunpack.c.l.b16 %v2036
      %v2124 = vunpack.c.l.b16 %v2037
      %v2125 = vpack.c.b16 %v2118, %v2117
      %v2126 = vpack.c.b16 %v2120, %v2119
      %v2127 = vpack.c.b16 %v2122, %v2121
      %v2128 = vpack.c.b16 %v2124, %v2123
      %vm2133 = vcmask 523264
      %v2135 = vsel %vm2133, %v2102, 0
      %2137 = vmatprep.subr.bf16.mxu0 0
      %2138 = vmatpush1.bf16.msra.mxu0 %v2125
      %2139 = vmatprep.subr.bf16.mxu0 0
      %2140 = vmatpush1.bf16.msra.mxu0 %v2126
      %2141 = vmatprep.subr.bf16.mxu0 0
      %2142 = vmatpush1.bf16.msra.mxu0 %v2127
      %2143 = vmatprep.subr.bf16.mxu0 0
      %2144 = vmatpush1.bf16.msra.mxu0 %v2128
      %2145 = vmatprep.subr.bf16.mxu0 0
      %2146 = vmatpush1.bf16.msra.mxu0 0
      %2147 = vmatprep.subr.bf16.mxu0 0
      %2148 = vmatpush1.bf16.msra.mxu0 0
      %2149 = vmatprep.subr.bf16.mxu0 0
      %2150 = vmatpush1.bf16.msra.mxu0 0
      %2151 = vmatprep.subr.bf16.mxu0 0
      %2152 = vmatpush1.bf16.msra.mxu0 0
      %2153 = vmatprep.subr.bf16.mxu0 0
      %2154 = vmatpush1.bf16.msra.mxu0 0
      %2155 = vmatprep.subr.bf16.mxu0 0
      %2156 = vmatpush1.bf16.msra.mxu0 0
      %2157 = vmatprep.subr.bf16.mxu0 0
      %2158 = vmatpush1.bf16.msra.mxu0 0
      %2159 = vmatprep.subr.bf16.mxu0 0
      %2160 = vmatpush1.bf16.msra.mxu0 0
      %2161 = vmatprep.subr.bf16.mxu0 0
      %2162 = vmatpush1.bf16.msra.mxu0 0
      %2163 = vmatprep.subr.bf16.mxu0 0
      %2164 = vmatpush1.bf16.msra.mxu0 0
      %2165 = vmatprep.subr.bf16.mxu0 0
      %2166 = vmatpush1.bf16.msra.mxu0 0
      %2167 = vmatprep.subr.bf16.mxu0 0
      %2168 = vmatpush1.bf16.msra.mxu0 0
      %2169 = vmatprep.mubr.bf16.mxu0 0
      %2170 = vmatmul.mubr.bf16.gmra.mrb[0].mxu0 %v2135
      %v2171 = vpop.f32.mrb[0].mxu0
      %v2172 = vadd.f32 %v2107, %v2171
      %v2173 = vpop.f32.mrb[0].mxu0
      %v2174 = vpop.f32.mrb[0].mxu0
      %v2175 = vpop.f32.mrb[0].mxu0
      %2176 = vdwg.mxu0
      %v2177 = vadd.f32 %v2024, %v2172
      %v2178 = vld [vmem:[%s16] sm:$0x1]
      %v2179 = vld [vmem:[%s17] sm:$0x1]
      %v2180 = vsel %vm694, %v2177, 0.0
      %2181 = vadd.xlane.f32.xlu0 %v2180
      %v2182 = vpop.xlane.xlu0 %2181
      %v2183 = vmul.f32 %v2182, %v2000
      %v2184 = vsub.f32 %v2177, %v2183
      %v2185 = vmul.f32 %v2184, %v2184
      %v2186 = vsel %vm694, %v2185, 0.0
      %2187 = vadd.xlane.f32.xlu0 %v2186
      %v2188 = vpop.xlane.xlu0 %2187
      %v2189 = vmul.f32 %v2188, %v2000
      %v2190 = vadd.f32 %v2189, 1e-05
      %v2191 = vrsqrt.pop %v2190
      %v2192 = vmul.f32 %v2184, %v2191
      %v2194 = vlaneseq
      %v2195 = vshrl.u32 %v2194, 7
      %v2196 = vsub.s32 0, %v2195
      %v2197 = vrot.slane %v2178, %v2196
      %v2199 = vmul.f32 %v2192, %v2197
      %v2201 = vlaneseq
      %v2202 = vshrl.u32 %v2201, 7
      %v2203 = vsub.s32 0, %v2202
      %v2204 = vrot.slane %v2179, %v2203
      %v2206 = vadd.f32 %v2199, %v2204
      %2207 = vst.msk [vmem:[%s587] sm:$0xff] %vm694, %v2206
      %p2208 = scmp.lt.s32.totalorder %s29, 1
      %s2209 = scalar_select %p2208, %s29, 1
      %s2210 = smul.addr %s2209, 8
      %s2211 = scalar_lea.vmem %s18, %s2210
      // Predicated region
      $region93: #{transformer_forward.5} parent=91 // pred_check
        %p2212 = pneg %p435
      $region94: #{transformer_forward.5} parent=91 // pred_check_branch
        %2214 = sbr.rel (%p2212) target = $region96
      $region95: #{transformer_forward.5} parent=91 // pred_region
        _
      $region96: #{transformer_forward.5} parent=91 // pred_fallthru
        _
    $region92: #{transformer_forward.5} parent=5 // pred_fallthru
      _
    %p2215 = scmp.le.s32.totalorder 2, %s24
    // Predicated region
    $region97: #{transformer_forward.5} parent=5 // pred_check
      %p2216 = pneg %p2215
    $region98: #{transformer_forward.5} parent=5 // pred_check_branch
      %2218 = sbr.rel (%p2216) target = $region100
    $region99: #{transformer_forward.5} parent=5 // pred_region
      %s2219 = ssub.s32 %s24, 2
      // Predicated region
      $region101: #{transformer_forward.5} parent=99 // pred_check
        %p2220 = pneg %p441
      $region102: #{transformer_forward.5} parent=99 // pred_check_branch
        %2222 = sbr.rel (%p2220) target = $region104
      $region103: #{transformer_forward.5} parent=99 // pred_region
        %p2223 = scmp.lt.s32.totalorder %s30, 1
        %s2224 = scalar_select %p2223, %s30, 1
        %s2225 = smul.addr %s2224, 8
        %s2226 = scalar_lea.vmem %s18, %s2225
      $region104: #{transformer_forward.5} parent=99 // pred_fallthru
        _
    $region100: #{transformer_forward.5} parent=5 // pred_fallthru
      _
  $region6: #{transformer_forward.5} parent=0 // loop_footer
    %s28 = sadd.s32 1, %s24
  $region7: #{transformer_forward.5} parent=0 // loop_footer_branch
    %23 = sbr.rel target = $region3
  $region8: #{transformer_forward.5} parent=0 // loop_exit
    _

// kernel: transformer_forward.7
$region0: #{transformer_forward.7}
  #allocation0 [shape = 'u32[]', space=smem, size = 0x4, offset = 0x4, fixed_abs, tag = 'smem constant byte address 0x4 - core index']
  #allocation1 [shape = 'u32[144,128]{1,0:T(1,128)}', space=vmem, size = 0x12000, scoped, tag = 'internal scratch']
  %s0 = inlined_call_operand.smem [shape: u32[30], index: -1, kind: input, shape index: {}]
  %s1 = sld [smem:[%s0]]
  %s2 = scalar_lea.smem %s0, 1
  %s3 = sld [smem:[%s2]]
  %s4 = scalar_lea.smem %s0, 2
  %s5 = sld [smem:[%s4]]
  %s6 = scalar_lea.smem %s0, 3
  %s7 = sld [smem:[%s6]]
  %s8 = scalar_lea.smem %s0, 4
  %s9 = sld [smem:[%s8]]
  %s10 = scalar_lea.smem %s0, 5
  %s11 = sld [smem:[%s10]]
  %s12 = scalar_lea.smem %s0, 6
  %s13 = sld [smem:[%s12]]
  %s14 = scalar_lea.smem %s0, 7
  %s15 = sld [smem:[%s14]]
  %s16 = scalar_lea.smem %s0, 8
  %s17 = sld [smem:[%s16]]
  %s18 = scalar_lea.smem %s0, 9
  %s19 = sld [smem:[%s18]]
  %s20 = scalar_lea.smem %s0, 10
  %s21 = sld [smem:[%s20]]
  %s22 = scalar_lea.smem %s0, 11
  %s23 = sld [smem:[%s22]]
  %s24 = scalar_lea.smem %s0, 12
  %s25 = sld [smem:[%s24]]
  %s26 = scalar_lea.smem %s0, 13
  %s27 = sld [smem:[%s26]]
  %s28 = scalar_lea.smem %s0, 14
  %s29 = sld [smem:[%s28]]
  %s30 = scalar_lea.smem %s0, 15
  %s31 = sld [smem:[%s30]]
  %s32 = scalar_lea.smem %s0, 16
  %s33 = sld [smem:[%s32]]
  %s34 = scalar_lea.smem %s0, 17
  %s35 = sld [smem:[%s34]]
  %s36 = scalar_lea.smem %s0, 18
  %s37 = sld [smem:[%s36]]
  %s38 = scalar_lea.smem %s0, 19
  %s39 = sld [smem:[%s38]]
  %s40 = scalar_lea.smem %s0, 20
  %s41 = sld [smem:[%s40]]
  %s42 = scalar_lea.smem %s0, 21
  %s43 = sld [smem:[%s42]]
  %s44 = scalar_lea.smem %s0, 22
  %s45 = sld [smem:[%s44]]
  %s46 = scalar_lea.smem %s0, 23
  %s47 = sld [smem:[%s46]]
  %s48 = scalar_lea.smem %s0, 24
  %s49 = sld [smem:[%s48]]
  %s50 = scalar_lea.smem %s0, 25
  %s51 = sld [smem:[%s50]]
  %s52 = scalar_lea.smem %s0, 26
  %s53 = sld [smem:[%s52]]
  %s54 = scalar_lea.smem %s0, 27
  %s55 = sld [smem:[%s54]]
  %s56 = scalar_lea.smem %s0, 28
  %s57 = sld [smem:[%s56]]
  %s58 = scalar_lea.smem %s0, 29
  %s59 = sld [smem:[%s58]]
  %s60 = sld [smem:[#allocation0]]
  $region149: #{transformer_forward.7} parent=0
    _
  %s62 = ssub.s32 1, %s60
  %s63 = scalar_select 0, %s62, %s60
  loop: start=0, step=1, limit=4
  $region2: #{transformer_forward.7} parent=0 // loop_pre_header
    _
  $region3: #{transformer_forward.7} parent=0 // loop_header
    %s65 = sphi 0, %s69
    %p66 = scmp.ge.s32.totalorder %s65, 4
    %s75 = sphi 0, %s77
    %s78 = sphi 0, %s75
    %s79 = sphi 0, %s78
    %s95 = sphi 0, %s79
    %s101 = sphi 0, %s103
    %s104 = sphi 0, %s101
    %s105 = sphi 0, %s104
    %s121 = sphi 0, %s105
    %s127 = sphi 0, %s129
    %s130 = sphi 0, %s127
    %s131 = sphi 0, %s130
    %s147 = sphi 0, %s131
    %s151 = sphi 0, %s151
    %s153 = sphi 0, %s151
    %s154 = sphi 0, %s153
    %s168 = sphi 0, %s154
    %s172 = sphi 0, %s172
    %s174 = sphi 0, %s172
    %s175 = sphi 0, %s174
    %s189 = sphi 0, %s175
    %s193 = sphi 0, %s193
    %s195 = sphi 0, %s193
    %s196 = sphi 0, %s195
    %s210 = sphi 0, %s196
    %s214 = sphi 0, %s214
    %s216 = sphi 0, %s214
    %s217 = sphi 0, %s216
    %s231 = sphi 0, %s217
    %s235 = sphi 0, %s235
    %s237 = sphi 0, %s235
    %s238 = sphi 0, %s237
    %s252 = sphi 0, %s238
    %s256 = sphi 0, %s256
    %s258 = sphi 0, %s256
    %s259 = sphi 0, %s258
    %s273 = sphi 0, %s259
    %s277 = sphi 0, %s277
    %s279 = sphi 0, %s277
    %s280 = sphi 0, %s279
    %s294 = sphi 0, %s280
    %s298 = sphi 0, %s298
    %s300 = sphi 0, %s298
    %s301 = sphi 0, %s300
    %s315 = sphi 0, %s301
    %s319 = sphi 0, %s319
    %s321 = sphi 0, %s319
    %s322 = sphi 0, %s321
    %s336 = sphi 0, %s322
    %s340 = sphi 0, %s340
    %s342 = sphi 0, %s340
    %s343 = sphi 0, %s342
    %s357 = sphi 0, %s343
    %s361 = sphi 0, %s361
    %s363 = sphi 0, %s361
    %s364 = sphi 0, %s363
    %s378 = sphi 0, %s364
    %s382 = sphi 0, %s382
    %s384 = sphi 0, %s382
    %s385 = sphi 0, %s384
    %s399 = sphi 0, %s385
    %s403 = sphi 0, %s403
    %s405 = sphi 0, %s403
    %s406 = sphi 0, %s405
    %s420 = sphi 0, %s406
    %s424 = sphi 0, %s424
    %s426 = sphi 0, %s424
    %s427 = sphi 0, %s426
    %s441 = sphi 0, %s427
    %s445 = sphi 0, %s445
    %s447 = sphi 0, %s445
    %s448 = sphi 0, %s447
    %s462 = sphi 0, %s448
    %s466 = sphi 0, %s466
    %s468 = sphi 0, %s466
    %s469 = sphi 0, %s468
    %s483 = sphi 0, %s469
    %s487 = sphi 0, %s487
    %s489 = sphi 0, %s487
    %s490 = sphi 0, %s489
    %s504 = sphi 0, %s490
    %s508 = sphi 0, %s508
    %s510 = sphi 0, %s508
    %s511 = sphi 0, %s510
    %s525 = sphi 0, %s511
    %s529 = sphi 0, %s529
    %s531 = sphi 0, %s529
    %s532 = sphi 0, %s531
    %s546 = sphi 0, %s532
    %s550 = sphi 0, %s550
    %s552 = sphi 0, %s550
    %s553 = sphi 0, %s552
    %s567 = sphi 0, %s553
    %s571 = sphi 0, %s571
    %s573 = sphi 0, %s571
    %s574 = sphi 0, %s573
    %s588 = sphi 0, %s574
    %s592 = sphi 0, %s592
    %s594 = sphi 0, %s592
    %s595 = sphi 0, %s594
    %s609 = sphi 0, %s595
    %s613 = sphi 0, %s613
    %s615 = sphi 0, %s613
    %s616 = sphi 0, %s615
    %s630 = sphi 0, %s616
    %s634 = sphi 0, %s634
    %s636 = sphi 0, %s634
    %s637 = sphi 0, %s636
    %s651 = sphi 0, %s637
    %s655 = sphi 0, %s655
    %s657 = sphi 0, %s655
    %s658 = sphi 0, %s657
    %s672 = sphi 0, %s658
    %s676 = sphi 0, %s676
    %s678 = sphi 0, %s676
    %s679 = sphi 0, %s678
    %s693 = sphi 0, %s679
    %s699 = sphi 0, %s701
    %s702 = sphi 0, %s699
    %s703 = sphi 0, %s702
    %s719 = sphi 0, %s703
  $region4: #{transformer_forward.7} parent=0 // loop_header_branch
    %68 = sbr.rel (%p66) target = $region8
  $region5: #{transformer_forward.7} parent=0 // loop_body
    %s70 = ssub.s32 %s65, 1
    %s71 = ssub.s32 %s65, 2
    %s72 = sadd.s32 %s65, 1
    %s73 = ssub.s32 %s65, %s72
    %p74 = scmp.eq.s32.totalorder %s73, 0
    %s76 = sadd.s32 %s75, 1
    %s77 = scalar_select %p74, %s75, %s76
    %p80 = pneg %p74
    %p81 = scmp.eq.s32.totalorder %s65, 1
    %p82 = por %p80, %p81
    %p83 = scmp.ne.s32.totalorder %s75, %s78
    %p84 = scmp.eq.s32.totalorder %s65, 0
    %p85 = por %p83, %p84
    %p86 = scmp.ne.s32.totalorder %s75, %s78
    %p87 = scmp.eq.s32.totalorder %s70, 1
    %p88 = por %p86, %p87
    %p89 = scmp.ne.s32.totalorder %s78, %s79
    %p90 = scmp.eq.s32.totalorder %s70, 0
    %p91 = por %p89, %p90
    %p92 = scmp.ne.s32.totalorder %s78, %s79
    %p93 = scmp.eq.s32.totalorder %s71, 1
    %p94 = por %p92, %p93
    %p96 = scmp.ne.s32.totalorder %s79, %s95
    %p97 = scmp.eq.s32.totalorder %s71, 0
    %p98 = por %p96, %p97
    %s99 = ssub.s32 %s65, %s72
    %p100 = scmp.eq.s32.totalorder %s99, 0
    %s102 = sadd.s32 %s101, 1
    %s103 = scalar_select %p100, %s101, %s102
    %p106 = pneg %p100
    %p107 = scmp.eq.s32.totalorder %s65, 1
    %p108 = por %p106, %p107
    %p109 = scmp.ne.s32.totalorder %s101, %s104
    %p110 = scmp.eq.s32.totalorder %s65, 0
    %p111 = por %p109, %p110
    %p112 = scmp.ne.s32.totalorder %s101, %s104
    %p113 = scmp.eq.s32.totalorder %s70, 1
    %p114 = por %p112, %p113
    %p115 = scmp.ne.s32.totalorder %s104, %s105
    %p116 = scmp.eq.s32.totalorder %s70, 0
    %p117 = por %p115, %p116
    %p118 = scmp.ne.s32.totalorder %s104, %s105
    %p119 = scmp.eq.s32.totalorder %s71, 1
    %p120 = por %p118, %p119
    %p122 = scmp.ne.s32.totalorder %s105, %s121
    %p123 = scmp.eq.s32.totalorder %s71, 0
    %p124 = por %p122, %p123
    %s125 = ssub.s32 %s65, %s72
    %p126 = scmp.eq.s32.totalorder %s125, 0
    %s128 = sadd.s32 %s127, 1
    %s129 = scalar_select %p126, %s127, %s128
    %p132 = pneg %p126
    %p133 = scmp.eq.s32.totalorder %s65, 1
    %p134 = por %p132, %p133
    %p135 = scmp.ne.s32.totalorder %s127, %s130
    %p136 = scmp.eq.s32.totalorder %s65, 0
    %p137 = por %p135, %p136
    %p138 = scmp.ne.s32.totalorder %s127, %s130
    %p139 = scmp.eq.s32.totalorder %s70, 1
    %p140 = por %p138, %p139
    %p141 = scmp.ne.s32.totalorder %s130, %s131
    %p142 = scmp.eq.s32.totalorder %s70, 0
    %p143 = por %p141, %p142
    %p144 = scmp.ne.s32.totalorder %s130, %s131
    %p145 = scmp.eq.s32.totalorder %s71, 1
    %p146 = por %p144, %p145
    %p148 = scmp.ne.s32.totalorder %s131, %s147
    %p149 = scmp.eq.s32.totalorder %s71, 0
    %p150 = por %p148, %p149
    %s152 = sadd.s32 %s151, 1
    %p155 = scmp.eq.s32.totalorder %s65, 1
    %p156 = scmp.ne.s32.totalorder %s151, %s153
    %p157 = scmp.eq.s32.totalorder %s65, 0
    %p158 = por %p156, %p157
    %p159 = scmp.ne.s32.totalorder %s151, %s153
    %p160 = scmp.eq.s32.totalorder %s70, 1
    %p161 = por %p159, %p160
    %p162 = scmp.ne.s32.totalorder %s153, %s154
    %p163 = scmp.eq.s32.totalorder %s70, 0
    %p164 = por %p162, %p163
    %p165 = scmp.ne.s32.totalorder %s153, %s154
    %p166 = scmp.eq.s32.totalorder %s71, 1
    %p167 = por %p165, %p166
    %p169 = scmp.ne.s32.totalorder %s154, %s168
    %p170 = scmp.eq.s32.totalorder %s71, 0
    %p171 = por %p169, %p170
    %s173 = sadd.s32 %s172, 1
    %p176 = scmp.eq.s32.totalorder %s65, 1
    %p177 = scmp.ne.s32.totalorder %s172, %s174
    %p178 = scmp.eq.s32.totalorder %s65, 0
    %p179 = por %p177, %p178
    %p180 = scmp.ne.s32.totalorder %s172, %s174
    %p181 = scmp.eq.s32.totalorder %s70, 1
    %p182 = por %p180, %p181
    %p183 = scmp.ne.s32.totalorder %s174, %s175
    %p184 = scmp.eq.s32.totalorder %s70, 0
    %p185 = por %p183, %p184
    %p186 = scmp.ne.s32.totalorder %s174, %s175
    %p187 = scmp.eq.s32.totalorder %s71, 1
    %p188 = por %p186, %p187
    %p190 = scmp.ne.s32.totalorder %s175, %s189
    %p191 = scmp.eq.s32.totalorder %s71, 0
    %p192 = por %p190, %p191
    %s194 = sadd.s32 %s193, 1
    %p197 = scmp.eq.s32.totalorder %s65, 1
    %p198 = scmp.ne.s32.totalorder %s193, %s195
    %p199 = scmp.eq.s32.totalorder %s65, 0
    %p200 = por %p198, %p199
    %p201 = scmp.ne.s32.totalorder %s193, %s195
    %p202 = scmp.eq.s32.totalorder %s70, 1
    %p203 = por %p201, %p202
    %p204 = scmp.ne.s32.totalorder %s195, %s196
    %p205 = scmp.eq.s32.totalorder %s70, 0
    %p206 = por %p204, %p205
    %p207 = scmp.ne.s32.totalorder %s195, %s196
    %p208 = scmp.eq.s32.totalorder %s71, 1
    %p209 = por %p207, %p208
    %p211 = scmp.ne.s32.totalorder %s196, %s210
    %p212 = scmp.eq.s32.totalorder %s71, 0
    %p213 = por %p211, %p212
    %s215 = sadd.s32 %s214, 1
    %p218 = scmp.eq.s32.totalorder %s65, 1
    %p219 = scmp.ne.s32.totalorder %s214, %s216
    %p220 = scmp.eq.s32.totalorder %s65, 0
    %p221 = por %p219, %p220
    %p222 = scmp.ne.s32.totalorder %s214, %s216
    %p223 = scmp.eq.s32.totalorder %s70, 1
    %p224 = por %p222, %p223
    %p225 = scmp.ne.s32.totalorder %s216, %s217
    %p226 = scmp.eq.s32.totalorder %s70, 0
    %p227 = por %p225, %p226
    %p228 = scmp.ne.s32.totalorder %s216, %s217
    %p229 = scmp.eq.s32.totalorder %s71, 1
    %p230 = por %p228, %p229
    %p232 = scmp.ne.s32.totalorder %s217, %s231
    %p233 = scmp.eq.s32.totalorder %s71, 0
    %p234 = por %p232, %p233
    %s236 = sadd.s32 %s235, 1
    %p239 = scmp.eq.s32.totalorder %s65, 1
    %p240 = scmp.ne.s32.totalorder %s235, %s237
    %p241 = scmp.eq.s32.totalorder %s65, 0
    %p242 = por %p240, %p241
    %p243 = scmp.ne.s32.totalorder %s235, %s237
    %p244 = scmp.eq.s32.totalorder %s70, 1
    %p245 = por %p243, %p244
    %p246 = scmp.ne.s32.totalorder %s237, %s238
    %p247 = scmp.eq.s32.totalorder %s70, 0
    %p248 = por %p246, %p247
    %p249 = scmp.ne.s32.totalorder %s237, %s238
    %p250 = scmp.eq.s32.totalorder %s71, 1
    %p251 = por %p249, %p250
    %p253 = scmp.ne.s32.totalorder %s238, %s252
    %p254 = scmp.eq.s32.totalorder %s71, 0
    %p255 = por %p253, %p254
    %s257 = sadd.s32 %s256, 1
    %p260 = scmp.eq.s32.totalorder %s65, 1
    %p261 = scmp.ne.s32.totalorder %s256, %s258
    %p262 = scmp.eq.s32.totalorder %s65, 0
    %p263 = por %p261, %p262
    %p264 = scmp.ne.s32.totalorder %s256, %s258
    %p265 = scmp.eq.s32.totalorder %s70, 1
    %p266 = por %p264, %p265
    %p267 = scmp.ne.s32.totalorder %s258, %s259
    %p268 = scmp.eq.s32.totalorder %s70, 0
    %p269 = por %p267, %p268
    %p270 = scmp.ne.s32.totalorder %s258, %s259
    %p271 = scmp.eq.s32.totalorder %s71, 1
    %p272 = por %p270, %p271
    %p274 = scmp.ne.s32.totalorder %s259, %s273
    %p275 = scmp.eq.s32.totalorder %s71, 0
    %p276 = por %p274, %p275
    %s278 = sadd.s32 %s277, 1
    %p281 = scmp.eq.s32.totalorder %s65, 1
    %p282 = scmp.ne.s32.totalorder %s277, %s279
    %p283 = scmp.eq.s32.totalorder %s65, 0
    %p284 = por %p282, %p283
    %p285 = scmp.ne.s32.totalorder %s277, %s279
    %p286 = scmp.eq.s32.totalorder %s70, 1
    %p287 = por %p285, %p286
    %p288 = scmp.ne.s32.totalorder %s279, %s280
    %p289 = scmp.eq.s32.totalorder %s70, 0
    %p290 = por %p288, %p289
    %p291 = scmp.ne.s32.totalorder %s279, %s280
    %p292 = scmp.eq.s32.totalorder %s71, 1
    %p293 = por %p291, %p292
    %p295 = scmp.ne.s32.totalorder %s280, %s294
    %p296 = scmp.eq.s32.totalorder %s71, 0
    %p297 = por %p295, %p296
    %s299 = sadd.s32 %s298, 1
    %p302 = scmp.eq.s32.totalorder %s65, 1
    %p303 = scmp.ne.s32.totalorder %s298, %s300
    %p304 = scmp.eq.s32.totalorder %s65, 0
    %p305 = por %p303, %p304
    %p306 = scmp.ne.s32.totalorder %s298, %s300
    %p307 = scmp.eq.s32.totalorder %s70, 1
    %p308 = por %p306, %p307
    %p309 = scmp.ne.s32.totalorder %s300, %s301
    %p310 = scmp.eq.s32.totalorder %s70, 0
    %p311 = por %p309, %p310
    %p312 = scmp.ne.s32.totalorder %s300, %s301
    %p313 = scmp.eq.s32.totalorder %s71, 1
    %p314 = por %p312, %p313
    %p316 = scmp.ne.s32.totalorder %s301, %s315
    %p317 = scmp.eq.s32.totalorder %s71, 0
    %p318 = por %p316, %p317
    %s320 = sadd.s32 %s319, 1
    %p323 = scmp.eq.s32.totalorder %s65, 1
    %p324 = scmp.ne.s32.totalorder %s319, %s321
    %p325 = scmp.eq.s32.totalorder %s65, 0
    %p326 = por %p324, %p325
    %p327 = scmp.ne.s32.totalorder %s319, %s321
    %p328 = scmp.eq.s32.totalorder %s70, 1
    %p329 = por %p327, %p328
    %p330 = scmp.ne.s32.totalorder %s321, %s322
    %p331 = scmp.eq.s32.totalorder %s70, 0
    %p332 = por %p330, %p331
    %p333 = scmp.ne.s32.totalorder %s321, %s322
    %p334 = scmp.eq.s32.totalorder %s71, 1
    %p335 = por %p333, %p334
    %p337 = scmp.ne.s32.totalorder %s322, %s336
    %p338 = scmp.eq.s32.totalorder %s71, 0
    %p339 = por %p337, %p338
    %s341 = sadd.s32 %s340, 1
    %p344 = scmp.eq.s32.totalorder %s65, 1
    %p345 = scmp.ne.s32.totalorder %s340, %s342
    %p346 = scmp.eq.s32.totalorder %s65, 0
    %p347 = por %p345, %p346
    %p348 = scmp.ne.s32.totalorder %s340, %s342
    %p349 = scmp.eq.s32.totalorder %s70, 1
    %p350 = por %p348, %p349
    %p351 = scmp.ne.s32.totalorder %s342, %s343
    %p352 = scmp.eq.s32.totalorder %s70, 0
    %p353 = por %p351, %p352
    %p354 = scmp.ne.s32.totalorder %s342, %s343
    %p355 = scmp.eq.s32.totalorder %s71, 1
    %p356 = por %p354, %p355
    %p358 = scmp.ne.s32.totalorder %s343, %s357
    %p359 = scmp.eq.s32.totalorder %s71, 0
    %p360 = por %p358, %p359
    %s362 = sadd.s32 %s361, 1
    %p365 = scmp.eq.s32.totalorder %s65, 1
    %p366 = scmp.ne.s32.totalorder %s361, %s363
    %p367 = scmp.eq.s32.totalorder %s65, 0
    %p368 = por %p366, %p367
    %p369 = scmp.ne.s32.totalorder %s361, %s363
    %p370 = scmp.eq.s32.totalorder %s70, 1
    %p371 = por %p369, %p370
    %p372 = scmp.ne.s32.totalorder %s363, %s364
    %p373 = scmp.eq.s32.totalorder %s70, 0
    %p374 = por %p372, %p373
    %p375 = scmp.ne.s32.totalorder %s363, %s364
    %p376 = scmp.eq.s32.totalorder %s71, 1
    %p377 = por %p375, %p376
    %p379 = scmp.ne.s32.totalorder %s364, %s378
    %p380 = scmp.eq.s32.totalorder %s71, 0
    %p381 = por %p379, %p380
    %s383 = sadd.s32 %s382, 1
    %p386 = scmp.eq.s32.totalorder %s65, 1
    %p387 = scmp.ne.s32.totalorder %s382, %s384
    %p388 = scmp.eq.s32.totalorder %s65, 0
    %p389 = por %p387, %p388
    %p390 = scmp.ne.s32.totalorder %s382, %s384
    %p391 = scmp.eq.s32.totalorder %s70, 1
    %p392 = por %p390, %p391
    %p393 = scmp.ne.s32.totalorder %s384, %s385
    %p394 = scmp.eq.s32.totalorder %s70, 0
    %p395 = por %p393, %p394
    %p396 = scmp.ne.s32.totalorder %s384, %s385
    %p397 = scmp.eq.s32.totalorder %s71, 1
    %p398 = por %p396, %p397
    %p400 = scmp.ne.s32.totalorder %s385, %s399
    %p401 = scmp.eq.s32.totalorder %s71, 0
    %p402 = por %p400, %p401
    %s404 = sadd.s32 %s403, 1
    %p407 = scmp.eq.s32.totalorder %s65, 1
    %p408 = scmp.ne.s32.totalorder %s403, %s405
    %p409 = scmp.eq.s32.totalorder %s65, 0
    %p410 = por %p408, %p409
    %p411 = scmp.ne.s32.totalorder %s403, %s405
    %p412 = scmp.eq.s32.totalorder %s70, 1
    %p413 = por %p411, %p412
    %p414 = scmp.ne.s32.totalorder %s405, %s406
    %p415 = scmp.eq.s32.totalorder %s70, 0
    %p416 = por %p414, %p415
    %p417 = scmp.ne.s32.totalorder %s405, %s406
    %p418 = scmp.eq.s32.totalorder %s71, 1
    %p419 = por %p417, %p418
    %p421 = scmp.ne.s32.totalorder %s406, %s420
    %p422 = scmp.eq.s32.totalorder %s71, 0
    %p423 = por %p421, %p422
    %s425 = sadd.s32 %s424, 1
    %p428 = scmp.eq.s32.totalorder %s65, 1
    %p429 = scmp.ne.s32.totalorder %s424, %s426
    %p430 = scmp.eq.s32.totalorder %s65, 0
    %p431 = por %p429, %p430
    %p432 = scmp.ne.s32.totalorder %s424, %s426
    %p433 = scmp.eq.s32.totalorder %s70, 1
    %p434 = por %p432, %p433
    %p435 = scmp.ne.s32.totalorder %s426, %s427
    %p436 = scmp.eq.s32.totalorder %s70, 0
    %p437 = por %p435, %p436
    %p438 = scmp.ne.s32.totalorder %s426, %s427
    %p439 = scmp.eq.s32.totalorder %s71, 1
    %p440 = por %p438, %p439
    %p442 = scmp.ne.s32.totalorder %s427, %s441
    %p443 = scmp.eq.s32.totalorder %s71, 0
    %p444 = por %p442, %p443
    %s446 = sadd.s32 %s445, 1
    %p449 = scmp.eq.s32.totalorder %s65, 1
    %p450 = scmp.ne.s32.totalorder %s445, %s447
    %p451 = scmp.eq.s32.totalorder %s65, 0
    %p452 = por %p450, %p451
    %p453 = scmp.ne.s32.totalorder %s445, %s447
    %p454 = scmp.eq.s32.totalorder %s70, 1
    %p455 = por %p453, %p454
    %p456 = scmp.ne.s32.totalorder %s447, %s448
    %p457 = scmp.eq.s32.totalorder %s70, 0
    %p458 = por %p456, %p457
    %p459 = scmp.ne.s32.totalorder %s447, %s448
    %p460 = scmp.eq.s32.totalorder %s71, 1
    %p461 = por %p459, %p460
    %p463 = scmp.ne.s32.totalorder %s448, %s462
    %p464 = scmp.eq.s32.totalorder %s71, 0
    %p465 = por %p463, %p464
    %s467 = sadd.s32 %s466, 1
    %p470 = scmp.eq.s32.totalorder %s65, 1
    %p471 = scmp.ne.s32.totalorder %s466, %s468
    %p472 = scmp.eq.s32.totalorder %s65, 0
    %p473 = por %p471, %p472
    %p474 = scmp.ne.s32.totalorder %s466, %s468
    %p475 = scmp.eq.s32.totalorder %s70, 1
    %p476 = por %p474, %p475
    %p477 = scmp.ne.s32.totalorder %s468, %s469
    %p478 = scmp.eq.s32.totalorder %s70, 0
    %p479 = por %p477, %p478
    %p480 = scmp.ne.s32.totalorder %s468, %s469
    %p481 = scmp.eq.s32.totalorder %s71, 1
    %p482 = por %p480, %p481
    %p484 = scmp.ne.s32.totalorder %s469, %s483
    %p485 = scmp.eq.s32.totalorder %s71, 0
    %p486 = por %p484, %p485
    %s488 = sadd.s32 %s487, 1
    %p491 = scmp.eq.s32.totalorder %s65, 1
    %p492 = scmp.ne.s32.totalorder %s487, %s489
    %p493 = scmp.eq.s32.totalorder %s65, 0
    %p494 = por %p492, %p493
    %p495 = scmp.ne.s32.totalorder %s487, %s489
    %p496 = scmp.eq.s32.totalorder %s70, 1
    %p497 = por %p495, %p496
    %p498 = scmp.ne.s32.totalorder %s489, %s490
    %p499 = scmp.eq.s32.totalorder %s70, 0
    %p500 = por %p498, %p499
    %p501 = scmp.ne.s32.totalorder %s489, %s490
    %p502 = scmp.eq.s32.totalorder %s71, 1
    %p503 = por %p501, %p502
    %p505 = scmp.ne.s32.totalorder %s490, %s504
    %p506 = scmp.eq.s32.totalorder %s71, 0
    %p507 = por %p505, %p506
    %s509 = sadd.s32 %s508, 1
    %p512 = scmp.eq.s32.totalorder %s65, 1
    %p513 = scmp.ne.s32.totalorder %s508, %s510
    %p514 = scmp.eq.s32.totalorder %s65, 0
    %p515 = por %p513, %p514
    %p516 = scmp.ne.s32.totalorder %s508, %s510
    %p517 = scmp.eq.s32.totalorder %s70, 1
    %p518 = por %p516, %p517
    %p519 = scmp.ne.s32.totalorder %s510, %s511
    %p520 = scmp.eq.s32.totalorder %s70, 0
    %p521 = por %p519, %p520
    %p522 = scmp.ne.s32.totalorder %s510, %s511
    %p523 = scmp.eq.s32.totalorder %s71, 1
    %p524 = por %p522, %p523
    %p526 = scmp.ne.s32.totalorder %s511, %s525
    %p527 = scmp.eq.s32.totalorder %s71, 0
    %p528 = por %p526, %p527
    %s530 = sadd.s32 %s529, 1
    %p533 = scmp.eq.s32.totalorder %s65, 1
    %p534 = scmp.ne.s32.totalorder %s529, %s531
    %p535 = scmp.eq.s32.totalorder %s65, 0
    %p536 = por %p534, %p535
    %p537 = scmp.ne.s32.totalorder %s529, %s531
    %p538 = scmp.eq.s32.totalorder %s70, 1
    %p539 = por %p537, %p538
    %p540 = scmp.ne.s32.totalorder %s531, %s532
    %p541 = scmp.eq.s32.totalorder %s70, 0
    %p542 = por %p540, %p541
    %p543 = scmp.ne.s32.totalorder %s531, %s532
    %p544 = scmp.eq.s32.totalorder %s71, 1
    %p545 = por %p543, %p544
    %p547 = scmp.ne.s32.totalorder %s532, %s546
    %p548 = scmp.eq.s32.totalorder %s71, 0
    %p549 = por %p547, %p548
    %s551 = sadd.s32 %s550, 1
    %p554 = scmp.eq.s32.totalorder %s65, 1
    %p555 = scmp.ne.s32.totalorder %s550, %s552
    %p556 = scmp.eq.s32.totalorder %s65, 0
    %p557 = por %p555, %p556
    %p558 = scmp.ne.s32.totalorder %s550, %s552
    %p559 = scmp.eq.s32.totalorder %s70, 1
    %p560 = por %p558, %p559
    %p561 = scmp.ne.s32.totalorder %s552, %s553
    %p562 = scmp.eq.s32.totalorder %s70, 0
    %p563 = por %p561, %p562
    %p564 = scmp.ne.s32.totalorder %s552, %s553
    %p565 = scmp.eq.s32.totalorder %s71, 1
    %p566 = por %p564, %p565
    %p568 = scmp.ne.s32.totalorder %s553, %s567
    %p569 = scmp.eq.s32.totalorder %s71, 0
    %p570 = por %p568, %p569
    %s572 = sadd.s32 %s571, 1
    %p575 = scmp.eq.s32.totalorder %s65, 1
    %p576 = scmp.ne.s32.totalorder %s571, %s573
    %p577 = scmp.eq.s32.totalorder %s65, 0
    %p578 = por %p576, %p577
    %p579 = scmp.ne.s32.totalorder %s571, %s573
    %p580 = scmp.eq.s32.totalorder %s70, 1
    %p581 = por %p579, %p580
    %p582 = scmp.ne.s32.totalorder %s573, %s574
    %p583 = scmp.eq.s32.totalorder %s70, 0
    %p584 = por %p582, %p583
    %p585 = scmp.ne.s32.totalorder %s573, %s574
    %p586 = scmp.eq.s32.totalorder %s71, 1
    %p587 = por %p585, %p586
    %p589 = scmp.ne.s32.totalorder %s574, %s588
    %p590 = scmp.eq.s32.totalorder %s71, 0
    %p591 = por %p589, %p590
    %s593 = sadd.s32 %s592, 1
    %p596 = scmp.eq.s32.totalorder %s65, 1
    %p597 = scmp.ne.s32.totalorder %s592, %s594
    %p598 = scmp.eq.s32.totalorder %s65, 0
    %p599 = por %p597, %p598
    %p600 = scmp.ne.s32.totalorder %s592, %s594
    %p601 = scmp.eq.s32.totalorder %s70, 1
    %p602 = por %p600, %p601
    %p603 = scmp.ne.s32.totalorder %s594, %s595
    %p604 = scmp.eq.s32.totalorder %s70, 0
    %p605 = por %p603, %p604
    %p606 = scmp.ne.s32.totalorder %s594, %s595
    %p607 = scmp.eq.s32.totalorder %s71, 1
    %p608 = por %p606, %p607
    %p610 = scmp.ne.s32.totalorder %s595, %s609
    %p611 = scmp.eq.s32.totalorder %s71, 0
    %p612 = por %p610, %p611
    %s614 = sadd.s32 %s613, 1
    %p617 = scmp.eq.s32.totalorder %s65, 1
    %p618 = scmp.ne.s32.totalorder %s613, %s615
    %p619 = scmp.eq.s32.totalorder %s65, 0
    %p620 = por %p618, %p619
    %p621 = scmp.ne.s32.totalorder %s613, %s615
    %p622 = scmp.eq.s32.totalorder %s70, 1
    %p623 = por %p621, %p622
    %p624 = scmp.ne.s32.totalorder %s615, %s616
    %p625 = scmp.eq.s32.totalorder %s70, 0
    %p626 = por %p624, %p625
    %p627 = scmp.ne.s32.totalorder %s615, %s616
    %p628 = scmp.eq.s32.totalorder %s71, 1
    %p629 = por %p627, %p628
    %p631 = scmp.ne.s32.totalorder %s616, %s630
    %p632 = scmp.eq.s32.totalorder %s71, 0
    %p633 = por %p631, %p632
    %s635 = sadd.s32 %s634, 1
    %p638 = scmp.eq.s32.totalorder %s65, 1
    %p639 = scmp.ne.s32.totalorder %s634, %s636
    %p640 = scmp.eq.s32.totalorder %s65, 0
    %p641 = por %p639, %p640
    %p642 = scmp.ne.s32.totalorder %s634, %s636
    %p643 = scmp.eq.s32.totalorder %s70, 1
    %p644 = por %p642, %p643
    %p645 = scmp.ne.s32.totalorder %s636, %s637
    %p646 = scmp.eq.s32.totalorder %s70, 0
    %p647 = por %p645, %p646
    %p648 = scmp.ne.s32.totalorder %s636, %s637
    %p649 = scmp.eq.s32.totalorder %s71, 1
    %p650 = por %p648, %p649
    %p652 = scmp.ne.s32.totalorder %s637, %s651
    %p653 = scmp.eq.s32.totalorder %s71, 0
    %p654 = por %p652, %p653
    %s656 = sadd.s32 %s655, 1
    %p659 = scmp.eq.s32.totalorder %s65, 1
    %p660 = scmp.ne.s32.totalorder %s655, %s657
    %p661 = scmp.eq.s32.totalorder %s65, 0
    %p662 = por %p660, %p661
    %p663 = scmp.ne.s32.totalorder %s655, %s657
    %p664 = scmp.eq.s32.totalorder %s70, 1
    %p665 = por %p663, %p664
    %p666 = scmp.ne.s32.totalorder %s657, %s658
    %p667 = scmp.eq.s32.totalorder %s70, 0
    %p668 = por %p666, %p667
    %p669 = scmp.ne.s32.totalorder %s657, %s658
    %p670 = scmp.eq.s32.totalorder %s71, 1
    %p671 = por %p669, %p670
    %p673 = scmp.ne.s32.totalorder %s658, %s672
    %p674 = scmp.eq.s32.totalorder %s71, 0
    %p675 = por %p673, %p674
    %s677 = sadd.s32 %s676, 1
    %p680 = scmp.eq.s32.totalorder %s65, 1
    %p681 = scmp.ne.s32.totalorder %s676, %s678
    %p682 = scmp.eq.s32.totalorder %s65, 0
    %p683 = por %p681, %p682
    %p684 = scmp.ne.s32.totalorder %s676, %s678
    %p685 = scmp.eq.s32.totalorder %s70, 1
    %p686 = por %p684, %p685
    %p687 = scmp.ne.s32.totalorder %s678, %s679
    %p688 = scmp.eq.s32.totalorder %s70, 0
    %p689 = por %p687, %p688
    %p690 = scmp.ne.s32.totalorder %s678, %s679
    %p691 = scmp.eq.s32.totalorder %s71, 1
    %p692 = por %p690, %p691
    %p694 = scmp.ne.s32.totalorder %s679, %s693
    %p695 = scmp.eq.s32.totalorder %s71, 0
    %p696 = por %p694, %p695
    %s697 = ssub.s32 %s65, %s72
    %p698 = scmp.eq.s32.totalorder %s697, 0
    %s700 = sadd.s32 %s699, 1
    %s701 = scalar_select %p698, %s699, %s700
    %p704 = pneg %p698
    %p705 = scmp.eq.s32.totalorder %s65, 1
    %p706 = por %p704, %p705
    %p707 = scmp.ne.s32.totalorder %s699, %s702
    %p708 = scmp.eq.s32.totalorder %s65, 0
    %p709 = por %p707, %p708
    %p710 = scmp.ne.s32.totalorder %s699, %s702
    %p711 = scmp.eq.s32.totalorder %s70, 1
    %p712 = por %p710, %p711
    %p713 = scmp.ne.s32.totalorder %s702, %s703
    %p714 = scmp.eq.s32.totalorder %s70, 0
    %p715 = por %p713, %p714
    %p716 = scmp.ne.s32.totalorder %s702, %s703
    %p717 = scmp.eq.s32.totalorder %s71, 1
    %p718 = por %p716, %p717
    %p720 = scmp.ne.s32.totalorder %s703, %s719
    %p721 = scmp.eq.s32.totalorder %s71, 0
    %p722 = por %p720, %p721
    %p723 = scmp.le.s32.totalorder 1, %s65
    %p724 = scmp.lt.s32.totalorder %s65, 3
    %p725 = pnand %p723, %p724
    %p726 = pneg %p725
    // Predicated region
    $region9: #{transformer_forward.7} parent=5 // pred_check
      _
    $region10: #{transformer_forward.7} parent=5 // pred_check_branch
      %728 = sbr.rel (%p725) target = $region12
    $region11: #{transformer_forward.7} parent=5 // pred_region
      %s729 = ssub.s32 %s65, 1
      // Predicated region
      $region13: #{transformer_forward.7} parent=11 // pred_check
        %p730 = pneg %p164
      $region14: #{transformer_forward.7} parent=11 // pred_check_branch
        %732 = sbr.rel (%p730) target = $region16
      $region15: #{transformer_forward.7} parent=11 // pred_region
        _
      $region16: #{transformer_forward.7} parent=11 // pred_fallthru
        _
      // Predicated region
      $region17: #{transformer_forward.7} parent=11 // pred_check
        %p733 = pneg %p185
      $region18: #{transformer_forward.7} parent=11 // pred_check_branch
        %735 = sbr.rel (%p733) target = $region20
      $region19: #{transformer_forward.7} parent=11 // pred_region
        _
      $region20: #{transformer_forward.7} parent=11 // pred_fallthru
        _
      // Predicated region
      $region21: #{transformer_forward.7} parent=11 // pred_check
        %p736 = pneg %p206
      $region22: #{transformer_forward.7} parent=11 // pred_check_branch
        %738 = sbr.rel (%p736) target = $region24
      $region23: #{transformer_forward.7} parent=11 // pred_region
        _
      $region24: #{transformer_forward.7} parent=11 // pred_fallthru
        _
      // Predicated region
      $region25: #{transformer_forward.7} parent=11 // pred_check
        %p739 = pneg %p227
      $region26: #{transformer_forward.7} parent=11 // pred_check_branch
        %741 = sbr.rel (%p739) target = $region28
      $region27: #{transformer_forward.7} parent=11 // pred_region
        _
      $region28: #{transformer_forward.7} parent=11 // pred_fallthru
        _
      // Predicated region
      $region29: #{transformer_forward.7} parent=11 // pred_check
        %p742 = pneg %p248
      $region30: #{transformer_forward.7} parent=11 // pred_check_branch
        %744 = sbr.rel (%p742) target = $region32
      $region31: #{transformer_forward.7} parent=11 // pred_region
        _
      $region32: #{transformer_forward.7} parent=11 // pred_fallthru
        _
      // Predicated region
      $region33: #{transformer_forward.7} parent=11 // pred_check
        %p745 = pneg %p269
      $region34: #{transformer_forward.7} parent=11 // pred_check_branch
        %747 = sbr.rel (%p745) target = $region36
      $region35: #{transformer_forward.7} parent=11 // pred_region
        _
      $region36: #{transformer_forward.7} parent=11 // pred_fallthru
        _
      // Predicated region
      $region37: #{transformer_forward.7} parent=11 // pred_check
        %p748 = pneg %p290
      $region38: #{transformer_forward.7} parent=11 // pred_check_branch
        %750 = sbr.rel (%p748) target = $region40
      $region39: #{transformer_forward.7} parent=11 // pred_region
        _
      $region40: #{transformer_forward.7} parent=11 // pred_fallthru
        _
      // Predicated region
      $region41: #{transformer_forward.7} parent=11 // pred_check
        %p751 = pneg %p311
      $region42: #{transformer_forward.7} parent=11 // pred_check_branch
        %753 = sbr.rel (%p751) target = $region44
      $region43: #{transformer_forward.7} parent=11 // pred_region
        _
      $region44: #{transformer_forward.7} parent=11 // pred_fallthru
        _
      // Predicated region
      $region45: #{transformer_forward.7} parent=11 // pred_check
        %p754 = pneg %p332
      $region46: #{transformer_forward.7} parent=11 // pred_check_branch
        %756 = sbr.rel (%p754) target = $region48
      $region47: #{transformer_forward.7} parent=11 // pred_region
        _
      $region48: #{transformer_forward.7} parent=11 // pred_fallthru
        _
      // Predicated region
      $region49: #{transformer_forward.7} parent=11 // pred_check
        %p757 = pneg %p353
      $region50: #{transformer_forward.7} parent=11 // pred_check_branch
        %759 = sbr.rel (%p757) target = $region52
      $region51: #{transformer_forward.7} parent=11 // pred_region
        _
      $region52: #{transformer_forward.7} parent=11 // pred_fallthru
        _
      // Predicated region
      $region53: #{transformer_forward.7} parent=11 // pred_check
        %p760 = pneg %p374
      $region54: #{transformer_forward.7} parent=11 // pred_check_branch
        %762 = sbr.rel (%p760) target = $region56
      $region55: #{transformer_forward.7} parent=11 // pred_region
        _
      $region56: #{transformer_forward.7} parent=11 // pred_fallthru
        _
      // Predicated region
      $region57: #{transformer_forward.7} parent=11 // pred_check
        %p763 = pneg %p395
      $region58: #{transformer_forward.7} parent=11 // pred_check_branch
        %765 = sbr.rel (%p763) target = $region60
      $region59: #{transformer_forward.7} parent=11 // pred_region
        _
      $region60: #{transformer_forward.7} parent=11 // pred_fallthru
        _
      // Predicated region
      $region61: #{transformer_forward.7} parent=11 // pred_check
        %p766 = pneg %p416
      $region62: #{transformer_forward.7} parent=11 // pred_check_branch
        %768 = sbr.rel (%p766) target = $region64
      $region63: #{transformer_forward.7} parent=11 // pred_region
        _
      $region64: #{transformer_forward.7} parent=11 // pred_fallthru
        _
      // Predicated region
      $region65: #{transformer_forward.7} parent=11 // pred_check
        %p769 = pneg %p437
      $region66: #{transformer_forward.7} parent=11 // pred_check_branch
        %771 = sbr.rel (%p769) target = $region68
      $region67: #{transformer_forward.7} parent=11 // pred_region
        _
      $region68: #{transformer_forward.7} parent=11 // pred_fallthru
        _
      // Predicated region
      $region69: #{transformer_forward.7} parent=11 // pred_check
        %p772 = pneg %p458
      $region70: #{transformer_forward.7} parent=11 // pred_check_branch
        %774 = sbr.rel (%p772) target = $region72
      $region71: #{transformer_forward.7} parent=11 // pred_region
        _
      $region72: #{transformer_forward.7} parent=11 // pred_fallthru
        _
      // Predicated region
      $region73: #{transformer_forward.7} parent=11 // pred_check
        %p775 = pneg %p479
      $region74: #{transformer_forward.7} parent=11 // pred_check_branch
        %777 = sbr.rel (%p775) target = $region76
      $region75: #{transformer_forward.7} parent=11 // pred_region
        _
      $region76: #{transformer_forward.7} parent=11 // pred_fallthru
        _
      // Predicated region
      $region77: #{transformer_forward.7} parent=11 // pred_check
        %p778 = pneg %p500
      $region78: #{transformer_forward.7} parent=11 // pred_check_branch
        %780 = sbr.rel (%p778) target = $region80
      $region79: #{transformer_forward.7} parent=11 // pred_region
        _
      $region80: #{transformer_forward.7} parent=11 // pred_fallthru
        _
      // Predicated region
      $region81: #{transformer_forward.7} parent=11 // pred_check
        %p781 = pneg %p521
      $region82: #{transformer_forward.7} parent=11 // pred_check_branch
        %783 = sbr.rel (%p781) target = $region84
      $region83: #{transformer_forward.7} parent=11 // pred_region
        _
      $region84: #{transformer_forward.7} parent=11 // pred_fallthru
        _
      // Predicated region
      $region85: #{transformer_forward.7} parent=11 // pred_check
        %p784 = pneg %p542
      $region86: #{transformer_forward.7} parent=11 // pred_check_branch
        %786 = sbr.rel (%p784) target = $region88
      $region87: #{transformer_forward.7} parent=11 // pred_region
        _
      $region88: #{transformer_forward.7} parent=11 // pred_fallthru
        _
      // Predicated region
      $region89: #{transformer_forward.7} parent=11 // pred_check
        %p787 = pneg %p563
      $region90: #{transformer_forward.7} parent=11 // pred_check_branch
        %789 = sbr.rel (%p787) target = $region92
      $region91: #{transformer_forward.7} parent=11 // pred_region
        _
      $region92: #{transformer_forward.7} parent=11 // pred_fallthru
        _
      // Predicated region
      $region93: #{transformer_forward.7} parent=11 // pred_check
        %p790 = pneg %p584
      $region94: #{transformer_forward.7} parent=11 // pred_check_branch
        %792 = sbr.rel (%p790) target = $region96
      $region95: #{transformer_forward.7} parent=11 // pred_region
        _
      $region96: #{transformer_forward.7} parent=11 // pred_fallthru
        _
      // Predicated region
      $region97: #{transformer_forward.7} parent=11 // pred_check
        %p793 = pneg %p605
      $region98: #{transformer_forward.7} parent=11 // pred_check_branch
        %795 = sbr.rel (%p793) target = $region100
      $region99: #{transformer_forward.7} parent=11 // pred_region
        _
      $region100: #{transformer_forward.7} parent=11 // pred_fallthru
        _
      // Predicated region
      $region101: #{transformer_forward.7} parent=11 // pred_check
        %p796 = pneg %p626
      $region102: #{transformer_forward.7} parent=11 // pred_check_branch
        %798 = sbr.rel (%p796) target = $region104
      $region103: #{transformer_forward.7} parent=11 // pred_region
        _
      $region104: #{transformer_forward.7} parent=11 // pred_fallthru
        _
      // Predicated region
      $region105: #{transformer_forward.7} parent=11 // pred_check
        %p799 = pneg %p647
      $region106: #{transformer_forward.7} parent=11 // pred_check_branch
        %801 = sbr.rel (%p799) target = $region108
      $region107: #{transformer_forward.7} parent=11 // pred_region
        _
      $region108: #{transformer_forward.7} parent=11 // pred_fallthru
        _
      // Predicated region
      $region109: #{transformer_forward.7} parent=11 // pred_check
        %p802 = pneg %p668
      $region110: #{transformer_forward.7} parent=11 // pred_check_branch
        %804 = sbr.rel (%p802) target = $region112
      $region111: #{transformer_forward.7} parent=11 // pred_region
        _
      $region112: #{transformer_forward.7} parent=11 // pred_fallthru
        _
      // Predicated region
      $region113: #{transformer_forward.7} parent=11 // pred_check
        %p805 = pneg %p689
      $region114: #{transformer_forward.7} parent=11 // pred_check_branch
        %807 = sbr.rel (%p805) target = $region116
      $region115: #{transformer_forward.7} parent=11 // pred_region
        _
      $region116: #{transformer_forward.7} parent=11 // pred_fallthru
        _
    $region12: #{transformer_forward.7} parent=5 // pred_fallthru
      _
    %p808 = scmp.lt.s32.totalorder %s65, 2
    // Predicated region
    $region117: #{transformer_forward.7} parent=5 // pred_check
      %p809 = pneg %p808
    $region118: #{transformer_forward.7} parent=5 // pred_check_branch
      %811 = sbr.rel (%p809) target = $region120
    $region119: #{transformer_forward.7} parent=5 // pred_region
      // Predicated region
      $region121: #{transformer_forward.7} parent=119 // pred_check
        %p812 = pneg %p85
      $region122: #{transformer_forward.7} parent=119 // pred_check_branch
        %814 = sbr.rel (%p812) target = $region124
      $region123: #{transformer_forward.7} parent=119 // pred_region
        %p815 = scmp.lt.s32.totalorder %s65, 1
        %s816 = scalar_select %p815, %s65, 1
        %s817 = smul.addr %s816, 8
        %s818 = scalar_lea.vmem %s1, %s817
      $region124: #{transformer_forward.7} parent=119 // pred_fallthru
        _
      // Predicated region
      $region125: #{transformer_forward.7} parent=119 // pred_check
        %p819 = pneg %p111
      $region126: #{transformer_forward.7} parent=119 // pred_check_branch
        %821 = sbr.rel (%p819) target = $region128
      $region127: #{transformer_forward.7} parent=119 // pred_region
        %p822 = scmp.lt.s32.totalorder %s65, 1
        %s823 = scalar_select %p822, %s65, 1
        %s824 = smul.addr %s823, 8
        %s825 = scalar_lea.vmem %s3, %s824
      $region128: #{transformer_forward.7} parent=119 // pred_fallthru
        _
      // Predicated region
      $region129: #{transformer_forward.7} parent=119 // pred_check
        %p826 = pneg %p137
      $region130: #{transformer_forward.7} parent=119 // pred_check_branch
        %828 = sbr.rel (%p826) target = $region132
      $region131: #{transformer_forward.7} parent=119 // pred_region
        %p829 = scmp.lt.s32.totalorder %s65, 1
        %s830 = scalar_select %p829, %s65, 1
        %s831 = smul.addr %s830, 8
        %s832 = scalar_lea.vmem %s5, %s831
      $region132: #{transformer_forward.7} parent=119 // pred_fallthru
        _
    $region120: #{transformer_forward.7} parent=5 // pred_fallthru
      _
    %p833 = scmp.le.s32.totalorder 1, %s65
    %p834 = scmp.lt.s32.totalorder %s65, 3
    %p835 = pnand %p833, %p834
    %p836 = pneg %p835
    // Predicated region
    $region133: #{transformer_forward.7} parent=5 // pred_check
      _
    $region134: #{transformer_forward.7} parent=5 // pred_check_branch
      %838 = sbr.rel (%p835) target = $region136
    $region135: #{transformer_forward.7} parent=5 // pred_region
      %s839 = ssub.s32 %s65, 1
      %p840 = scmp.lt.s32.totalorder %s70, 1
      %s841 = scalar_select %p840, %s70, 1
      %s842 = smul.addr %s841, 8
      %s843 = scalar_lea.vmem %s1, %s842
      %p844 = pneg %p91
      %p845 = pneg %p88
      %p846 = scmp.lt.s32.totalorder %s70, 1
      %s847 = scalar_select %p846, %s70, 1
      %s848 = smul.addr %s847, 8
      %s849 = scalar_lea.vmem %s3, %s848
      %p850 = pneg %p117
      %p851 = pneg %p114
      %p852 = scmp.lt.s32.totalorder %s70, 1
      %s853 = scalar_select %p852, %s70, 1
      %s854 = smul.addr %s853, 8
      %s855 = scalar_lea.vmem %s5, %s854
      %p856 = pneg %p143
      %p857 = pneg %p140
      %p858 = pneg %p164
      %p859 = pneg %p161
      %p860 = pneg %p185
      %p861 = pneg %p182
      %p862 = pneg %p206
      %p863 = pneg %p203
      %p864 = pneg %p227
      %p865 = pneg %p224
      %p866 = pneg %p248
      %p867 = pneg %p245
      %p868 = pneg %p269
      %p869 = pneg %p266
      %p870 = pneg %p290
      %p871 = pneg %p287
      %p872 = pneg %p311
      %p873 = pneg %p308
      %p874 = pneg %p332
      %p875 = pneg %p329
      %p876 = pneg %p353
      %p877 = pneg %p350
      %p878 = pneg %p374
      %p879 = pneg %p371
      %p880 = pneg %p395
      %p881 = pneg %p392
      %p882 = pneg %p416
      %p883 = pneg %p413
      %p884 = pneg %p437
      %p885 = pneg %p434
      %p886 = pneg %p458
      %p887 = pneg %p455
      %p888 = pneg %p479
      %p889 = pneg %p476
      %p890 = pneg %p500
      %p891 = pneg %p497
      %p892 = pneg %p521
      %p893 = pneg %p518
      %p894 = pneg %p542
      %p895 = pneg %p539
      %p896 = pneg %p563
      %p897 = pneg %p560
      %p898 = pneg %p584
      %p899 = pneg %p581
      %p900 = pneg %p605
      %p901 = pneg %p602
      %p902 = pneg %p626
      %p903 = pneg %p623
      %p904 = pneg %p647
      %p905 = pneg %p644
      %p906 = pneg %p668
      %p907 = pneg %p665
      %p908 = pneg %p689
      %p909 = pneg %p686
      %p910 = pneg %p715
      %p911 = pneg %p712
      %p912 = scmp.lt.s32.totalorder %s70, 1
      %s913 = scalar_select %p912, %s70, 1
      %s914 = smul.addr %s913, 8
      %s915 = scalar_lea.vmem %s59, %s914
      %p916 = scmp.lt.s32.totalorder %s70, 1
      %s917 = scalar_select %p916, %s70, 1
      %s918 = smul.addr %s917, 8
      %s919 = scalar_lea.vmem %s1, %s918
      %p920 = scmp.lt.s32.totalorder %s70, 1
      %s921 = scalar_select %p920, %s70, 1
      %s922 = smul.addr %s921, 8
      %s923 = scalar_lea.vmem %s3, %s922
      %p924 = scmp.lt.s32.totalorder %s70, 1
      %s925 = scalar_select %p924, %s70, 1
      %s926 = smul.addr %s925, 8
      %s927 = scalar_lea.vmem %s5, %s926
      %p928 = scmp.lt.s32.totalorder %s70, 1
      %s929 = scalar_select %p928, %s70, 1
      %s930 = smul.addr %s929, 8
      %s931 = scalar_lea.vmem %s59, %s930
      %v933 = vld [vmem:[%s919] sm:$0xff]
      %v934 = vld [vmem:[%s923] sm:$0xff]
      %v935 = vld [vmem:[%s927] sm:$0xff]
      %v936 = vadd.f32 %v933, %v934
      %v937 = vld [vmem:[%s7] sm:$0xf]
      %v938 = vld [vmem:[%s7 + $0x4] sm:$0xf]
      %v939 = vld [vmem:[%s7 + $0x8] sm:$0xf]
      %v940 = vld [vmem:[%s7 + $0xc] sm:$0xf]
      %v941 = vld [vmem:[%s7 + $0x10] sm:$0xf]
      %v942 = vld [vmem:[%s7 + $0x14] sm:$0xf]
      %v943 = vld [vmem:[%s7 + $0x18] sm:$0xf]
      %v944 = vld [vmem:[%s7 + $0x1c] sm:$0xf]
      %v945 = vld [vmem:[%s7 + $0x20] sm:$0xf]
      %v946 = vld [vmem:[%s7 + $0x24] sm:$0xf]
      %v947 = vld [vmem:[%s7 + $0x28] sm:$0xf]
      %v948 = vld [vmem:[%s7 + $0x2c] sm:$0xf]
      %v949 = vld [vmem:[%s7 + $0x30] sm:$0xf]
      %v950 = vld [vmem:[%s7 + $0x34] sm:$0xf]
      %v951 = vld [vmem:[%s7 + $0x38] sm:$0xf]
      %v952 = vld [vmem:[%s7 + $0x3c] sm:$0xf]
      %v953 = vld [vmem:[%s9] sm:$0x1]
      %v954 = vld [vmem:[%s9 + $0x1] sm:$0x1]
      %v955 = vld [vmem:[%s9 + $0x2] sm:$0x1]
      %v956 = vld [vmem:[%s9 + $0x3] sm:$0x1]
      %v957 = vld [vmem:[%s11] sm:$0xf]
      %v958 = vld [vmem:[%s11 + $0x4] sm:$0xf]
      %v959 = vld [vmem:[%s11 + $0x8] sm:$0xf]
      %v960 = vld [vmem:[%s11 + $0xc] sm:$0xf]
      %v961 = vld [vmem:[%s11 + $0x10] sm:$0xf]
      %v962 = vld [vmem:[%s11 + $0x14] sm:$0xf]
      %v963 = vld [vmem:[%s11 + $0x18] sm:$0xf]
      %v964 = vld [vmem:[%s11 + $0x1c] sm:$0xf]
      %v965 = vld [vmem:[%s11 + $0x20] sm:$0xf]
      %v966 = vld [vmem:[%s11 + $0x24] sm:$0xf]
      %v967 = vld [vmem:[%s11 + $0x28] sm:$0xf]
      %v968 = vld [vmem:[%s11 + $0x2c] sm:$0xf]
      %v969 = vld [vmem:[%s11 + $0x30] sm:$0xf]
      %v970 = vld [vmem:[%s11 + $0x34] sm:$0xf]
      %v971 = vld [vmem:[%s11 + $0x38] sm:$0xf]
      %v972 = vld [vmem:[%s11 + $0x3c] sm:$0xf]
      %v973 = vld [vmem:[%s13] sm:$0x1]
      %v974 = vld [vmem:[%s13 + $0x1] sm:$0x1]
      %v975 = vld [vmem:[%s13 + $0x2] sm:$0x1]
      %v976 = vld [vmem:[%s13 + $0x3] sm:$0x1]
      %v977 = vld [vmem:[%s15] sm:$0xf]
      %v978 = vld [vmem:[%s15 + $0x4] sm:$0xf]
      %v979 = vld [vmem:[%s15 + $0x8] sm:$0xf]
      %v980 = vld [vmem:[%s15 + $0xc] sm:$0xf]
      %v981 = vld [vmem:[%s15 + $0x10] sm:$0xf]
      %v982 = vld [vmem:[%s15 + $0x14] sm:$0xf]
      %v983 = vld [vmem:[%s15 + $0x18] sm:$0xf]
      %v984 = vld [vmem:[%s15 + $0x1c] sm:$0xf]
      %v985 = vld [vmem:[%s15 + $0x20] sm:$0xf]
      %v986 = vld [vmem:[%s15 + $0x24] sm:$0xf]
      %v987 = vld [vmem:[%s15 + $0x28] sm:$0xf]
      %v988 = vld [vmem:[%s15 + $0x2c] sm:$0xf]
      %v989 = vld [vmem:[%s15 + $0x30] sm:$0xf]
      %v990 = vld [vmem:[%s15 + $0x34] sm:$0xf]
      %v991 = vld [vmem:[%s15 + $0x38] sm:$0xf]
      %v992 = vld [vmem:[%s15 + $0x3c] sm:$0xf]
      %v993 = vld [vmem:[%s17] sm:$0x1]
      %v994 = vld [vmem:[%s17 + $0x1] sm:$0x1]
      %v995 = vld [vmem:[%s17 + $0x2] sm:$0x1]
      %v996 = vld [vmem:[%s17 + $0x3] sm:$0x1]
      %v997 = vld [vmem:[%s19] sm:$0xf]
      %v998 = vld [vmem:[%s19 + $0x4] sm:$0xf]
      %v999 = vld [vmem:[%s19 + $0x8] sm:$0xf]
      %v1000 = vld [vmem:[%s19 + $0xc] sm:$0xf]
      %v1001 = vld [vmem:[%s21] sm:$0x1]
      %v1002 = vpack.c.bf16 %v936, %v936
      %v1007 = vlaneseq
      %v1008 = vshrl.u32 %v1007, 7
      %v1009 = vsub.s32 0, %v1008
      %v1010 = vrot.slane %v953, %v1009
      %v1011 = vlaneseq
      %v1012 = vshrl.u32 %v1011, 7
      %v1013 = vsub.s32 0, %v1012
      %v1014 = vrot.slane %v954, %v1013
      %v1015 = vlaneseq
      %v1016 = vshrl.u32 %v1015, 7
      %v1017 = vsub.s32 0, %v1016
      %v1018 = vrot.slane %v955, %v1017
      %v1019 = vlaneseq
      %v1020 = vshrl.u32 %v1019, 7
      %v1021 = vsub.s32 0, %v1020
      %v1022 = vrot.slane %v956, %v1021
      %v1031 = vunpack.c.l.b16 %v937
      %v1032 = vunpack.c.l.b16 %v938
      %v1033 = vunpack.c.l.b16 %v939
      %v1034 = vunpack.c.l.b16 %v940
      %v1035 = vpack.c.b16 %v1032, %v1031
      %v1036 = vpack.c.b16 %v1034, %v1033
      %vm1039 = vcmask 261120
      %v1041 = vsel %vm1039, %v1002, 0
      %1043 = vmatprep.subr.bf16.mxu0 0
      %1044 = vmatpush1.bf16.msra.mxu0 %v1035
      %1045 = vmatprep.subr.bf16.mxu0 0
      %1046 = vmatpush1.bf16.msra.mxu0 %v1036
      %1047 = vmatprep.subr.bf16.mxu0 0
      %1048 = vmatpush1.bf16.msra.mxu0 0
      %1049 = vmatprep.subr.bf16.mxu0 0
      %1050 = vmatpush1.bf16.msra.mxu0 0
      %1051 = vmatprep.subr.bf16.mxu0 0
      %1052 = vmatpush1.bf16.msra.mxu0 0
      %1053 = vmatprep.subr.bf16.mxu0 0
      %1054 = vmatpush1.bf16.msra.mxu0 0
      %1055 = vmatprep.subr.bf16.mxu0 0
      %1056 = vmatpush1.bf16.msra.mxu0 0
      %1057 = vmatprep.subr.bf16.mxu0 0
      %1058 = vmatpush1.bf16.msra.mxu0 0
      %1059 = vmatprep.subr.bf16.mxu0 0
      %1060 = vmatpush1.bf16.msra.mxu0 0
      %1061 = vmatprep.subr.bf16.mxu0 0
      %1062 = vmatpush1.bf16.msra.mxu0 0
      %1063 = vmatprep.subr.bf16.mxu0 0
      %1064 = vmatpush1.bf16.msra.mxu0 0
      %1065 = vmatprep.subr.bf16.mxu0 0
      %1066 = vmatpush1.bf16.msra.mxu0 0
      %1067 = vmatprep.subr.bf16.mxu0 0
      %1068 = vmatpush1.bf16.msra.mxu0 0
      %1069 = vmatprep.subr.bf16.mxu0 0
      %1070 = vmatpush1.bf16.msra.mxu0 0
      %1071 = vmatprep.subr.bf16.mxu0 0
      %1072 = vmatpush1.bf16.msra.mxu0 0
      %1073 = vmatprep.subr.bf16.mxu0 0
      %1074 = vmatpush1.bf16.msra.mxu0 0
      %1075 = vmatprep.mubr.bf16.mxu0 0
      %1076 = vmatmul.mubr.bf16.gmra.mrb[0].mxu0 %v1041
      %v1077 = vpop.f32.mrb[0].mxu0
      %v1078 = vadd.f32 %v1010, %v1077
      %v1079 = vpop.f32.mrb[0].mxu0
      %v1080 = vpop.f32.mrb[0].mxu0
      %v1081 = vpop.f32.mrb[0].mxu0
      %1082 = vdwg.mxu0
      %v1087 = vunpack.c.l.b16 %v941
      %v1088 = vunpack.c.l.b16 %v942
      %v1089 = vunpack.c.l.b16 %v943
      %v1090 = vunpack.c.l.b16 %v944
      %v1091 = vpack.c.b16 %v1088, %v1087
      %v1092 = vpack.c.b16 %v1090, %v1089
      %1095 = vmatprep.subr.bf16.mxu0 0
      %1096 = vmatpush1.bf16.msra.mxu0 %v1091
      %1097 = vmatprep.subr.bf16.mxu0 0
      %1098 = vmatpush1.bf16.msra.mxu0 %v1092
      %1099 = vmatprep.subr.bf16.mxu0 0
      %1100 = vmatpush1.bf16.msra.mxu0 0
      %1101 = vmatprep.subr.bf16.mxu0 0
      %1102 = vmatpush1.bf16.msra.mxu0 0
      %1103 = vmatprep.subr.bf16.mxu0 0
      %1104 = vmatpush1.bf16.msra.mxu0 0
      %1105 = vmatprep.subr.bf16.mxu0 0
      %1106 = vmatpush1.bf16.msra.mxu0 0
      %1107 = vmatprep.subr.bf16.mxu0 0
      %1108 = vmatpush1.bf16.msra.mxu0 0
      %1109 = vmatprep.subr.bf16.mxu0 0
      %1110 = vmatpush1.bf16.msra.mxu0 0
      %1111 = vmatprep.subr.bf16.mxu0 0
      %1112 = vmatpush1.bf16.msra.mxu0 0
      %1113 = vmatprep.subr.bf16.mxu0 0
      %1114 = vmatpush1.bf16.msra.mxu0 0
      %1115 = vmatprep.subr.bf16.mxu0 0
      %1116 = vmatpush1.bf16.msra.mxu0 0
      %1117 = vmatprep.subr.bf16.mxu0 0
      %1118 = vmatpush1.bf16.msra.mxu0 0
      %1119 = vmatprep.subr.bf16.mxu0 0
      %1120 = vmatpush1.bf16.msra.mxu0 0
      %1121 = vmatprep.subr.bf16.mxu0 0
      %1122 = vmatpush1.bf16.msra.mxu0 0
      %1123 = vmatprep.subr.bf16.mxu0 0
      %1124 = vmatpush1.bf16.msra.mxu0 0
      %1125 = vmatprep.subr.bf16.mxu0 0
      %1126 = vmatpush1.bf16.msra.mxu0 0
      %1127 = vmatprep.mubr.bf16.mxu0 0
      %1128 = vmatmul.mubr.bf16.gmra.mrb[0].mxu0 %v1041
      %v1129 = vpop.f32.mrb[0].mxu0
      %v1130 = vadd.f32 %v1014, %v1129
      %v1131 = vpop.f32.mrb[0].mxu0
      %v1132 = vpop.f32.mrb[0].mxu0
      %v1133 = vpop.f32.mrb[0].mxu0
      %1134 = vdwg.mxu0
      %v1139 = vunpack.c.l.b16 %v945
      %v1140 = vunpack.c.l.b16 %v946
      %v1141 = vunpack.c.l.b16 %v947
      %v1142 = vunpack.c.l.b16 %v948
      %v1143 = vpack.c.b16 %v1140, %v1139
      %v1144 = vpack.c.b16 %v1142, %v1141
      %1147 = vmatprep.subr.bf16.mxu0 0
      %1148 = vmatpush1.bf16.msra.mxu0 %v1143
      %1149 = vmatprep.subr.bf16.mxu0 0
      %1150 = vmatpush1.bf16.msra.mxu0 %v1144
      %1151 = vmatprep.subr.bf16.mxu0 0
      %1152 = vmatpush1.bf16.msra.mxu0 0
      %1153 = vmatprep.subr.bf16.mxu0 0
      %1154 = vmatpush1.bf16.msra.mxu0 0
      %1155 = vmatprep.subr.bf16.mxu0 0
      %1156 = vmatpush1.bf16.msra.mxu0 0
      %1157 = vmatprep.subr.bf16.mxu0 0
      %1158 = vmatpush1.bf16.msra.mxu0 0
      %1159 = vmatprep.subr.bf16.mxu0 0
      %1160 = vmatpush1.bf16.msra.mxu0 0
      %1161 = vmatprep.subr.bf16.mxu0 0
      %1162 = vmatpush1.bf16.msra.mxu0 0
      %1163 = vmatprep.subr.bf16.mxu0 0
      %1164 = vmatpush1.bf16.msra.mxu0 0
      %1165 = vmatprep.subr.bf16.mxu0 0
      %1166 = vmatpush1.bf16.msra.mxu0 0
      %1167 = vmatprep.subr.bf16.mxu0 0
      %1168 = vmatpush1.bf16.msra.mxu0 0
      %1169 = vmatprep.subr.bf16.mxu0 0
      %1170 = vmatpush1.bf16.msra.mxu0 0
      %1171 = vmatprep.subr.bf16.mxu0 0
      %1172 = vmatpush1.bf16.msra.mxu0 0
      %1173 = vmatprep.subr.bf16.mxu0 0
      %1174 = vmatpush1.bf16.msra.mxu0 0
      %1175 = vmatprep.subr.bf16.mxu0 0
      %1176 = vmatpush1.bf16.msra.mxu0 0
      %1177 = vmatprep.subr.bf16.mxu0 0
      %1178 = vmatpush1.bf16.msra.mxu0 0
      %1179 = vmatprep.mubr.bf16.mxu0 0
      %1180 = vmatmul.mubr.bf16.gmra.mrb[0].mxu0 %v1041
      %v1181 = vpop.f32.mrb[0].mxu0
      %v1182 = vadd.f32 %v1018, %v1181
      %v1183 = vpop.f32.mrb[0].mxu0
      %v1184 = vpop.f32.mrb[0].mxu0
      %v1185 = vpop.f32.mrb[0].mxu0
      %1186 = vdwg.mxu0
      %v1191 = vunpack.c.l.b16 %v949
      %v1192 = vunpack.c.l.b16 %v950
      %v1193 = vunpack.c.l.b16 %v951
      %v1194 = vunpack.c.l.b16 %v952
      %v1195 = vpack.c.b16 %v1192, %v1191
      %v1196 = vpack.c.b16 %v1194, %v1193
      %1199 = vmatprep.subr.bf16.mxu0 0
      %1200 = vmatpush1.bf16.msra.mxu0 %v1195
      %1201 = vmatprep.subr.bf16.mxu0 0
      %1202 = vmatpush1.bf16.msra.mxu0 %v1196
      %1203 = vmatprep.subr.bf16.mxu0 0
      %1204 = vmatpush1.bf16.msra.mxu0 0
      %1205 = vmatprep.subr.bf16.mxu0 0
      %1206 = vmatpush1.bf16.msra.mxu0 0
      %1207 = vmatprep.subr.bf16.mxu0 0
      %1208 = vmatpush1.bf16.msra.mxu0 0
      %1209 = vmatprep.subr.bf16.mxu0 0
      %1210 = vmatpush1.bf16.msra.mxu0 0
      %1211 = vmatprep.subr.bf16.mxu0 0
      %1212 = vmatpush1.bf16.msra.mxu0 0
      %1213 = vmatprep.subr.bf16.mxu0 0
      %1214 = vmatpush1.bf16.msra.mxu0 0
      %1215 = vmatprep.subr.bf16.mxu0 0
      %1216 = vmatpush1.bf16.msra.mxu0 0
      %1217 = vmatprep.subr.bf16.mxu0 0
      %1218 = vmatpush1.bf16.msra.mxu0 0
      %1219 = vmatprep.subr.bf16.mxu0 0
      %1220 = vmatpush1.bf16.msra.mxu0 0
      %1221 = vmatprep.subr.bf16.mxu0 0
      %1222 = vmatpush1.bf16.msra.mxu0 0
      %1223 = vmatprep.subr.bf16.mxu0 0
      %1224 = vmatpush1.bf16.msra.mxu0 0
      %1225 = vmatprep.subr.bf16.mxu0 0
      %1226 = vmatpush1.bf16.msra.mxu0 0
      %1227 = vmatprep.subr.bf16.mxu0 0
      %1228 = vmatpush1.bf16.msra.mxu0 0
      %1229 = vmatprep.subr.bf16.mxu0 0
      %1230 = vmatpush1.bf16.msra.mxu0 0
      %1231 = vmatprep.mubr.bf16.mxu0 0
      %1232 = vmatmul.mubr.bf16.gmra.mrb[0].mxu0 %v1041
      %v1233 = vpop.f32.mrb[0].mxu0
      %v1234 = vadd.f32 %v1022, %v1233
      %v1235 = vpop.f32.mrb[0].mxu0
      %v1236 = vpop.f32.mrb[0].mxu0
      %v1237 = vpop.f32.mrb[0].mxu0
      %1238 = vdwg.mxu0
      %v1239 = vmul.f32 %v1078, 0.35355338
      %v1240 = vmul.f32 %v1130, 0.35355338
      %v1241 = vmul.f32 %v1182, 0.35355338
      %v1242 = vmul.f32 %v1234, 0.35355338
      %v1247 = vlaneseq
      %v1248 = vshrl.u32 %v1247, 7
      %v1249 = vsub.s32 0, %v1248
      %v1250 = vrot.slane %v973, %v1249
      %v1251 = vlaneseq
      %v1252 = vshrl.u32 %v1251, 7
      %v1253 = vsub.s32 0, %v1252
      %v1254 = vrot.slane %v974, %v1253
      %v1255 = vlaneseq
      %v1256 = vshrl.u32 %v1255, 7
      %v1257 = vsub.s32 0, %v1256
      %v1258 = vrot.slane %v975, %v1257
      %v1259 = vlaneseq
      %v1260 = vshrl.u32 %v1259, 7
      %v1261 = vsub.s32 0, %v1260
      %v1262 = vrot.slane %v976, %v1261
      %v1271 = vunpack.c.l.b16 %v957
      %v1272 = vunpack.c.l.b16 %v958
      %v1273 = vunpack.c.l.b16 %v959
      %v1274 = vunpack.c.l.b16 %v960
      %v1275 = vpack.c.b16 %v1272, %v1271
      %v1276 = vpack.c.b16 %v1274, %v1273
      %1279 = vmatprep.subr.bf16.mxu0 0
      %1280 = vmatpush1.bf16.msra.mxu0 %v1275
      %1281 = vmatprep.subr.bf16.mxu0 0
      %1282 = vmatpush1.bf16.msra.mxu0 %v1276
      %1283 = vmatprep.subr.bf16.mxu0 0
      %1284 = vmatpush1.bf16.msra.mxu0 0
      %1285 = vmatprep.subr.bf16.mxu0 0
      %1286 = vmatpush1.bf16.msra.mxu0 0
      %1287 = vmatprep.subr.bf16.mxu0 0
      %1288 = vmatpush1.bf16.msra.mxu0 0
      %1289 = vmatprep.subr.bf16.mxu0 0
      %1290 = vmatpush1.bf16.msra.mxu0 0
      %1291 = vmatprep.subr.bf16.mxu0 0
      %1292 = vmatpush1.bf16.msra.mxu0 0
      %1293 = vmatprep.subr.bf16.mxu0 0
      %1294 = vmatpush1.bf16.msra.mxu0 0
      %1295 = vmatprep.subr.bf16.mxu0 0
      %1296 = vmatpush1.bf16.msra.mxu0 0
      %1297 = vmatprep.subr.bf16.mxu0 0
      %1298 = vmatpush1.bf16.msra.mxu0 0
      %1299 = vmatprep.subr.bf16.mxu0 0
      %1300 = vmatpush1.bf16.msra.mxu0 0
      %1301 = vmatprep.subr.bf16.mxu0 0
      %1302 = vmatpush1.bf16.msra.mxu0 0
      %1303 = vmatprep.subr.bf16.mxu0 0
      %1304 = vmatpush1.bf16.msra.mxu0 0
      %1305 = vmatprep.subr.bf16.mxu0 0
      %1306 = vmatpush1.bf16.msra.mxu0 0
      %1307 = vmatprep.subr.bf16.mxu0 0
      %1308 = vmatpush1.bf16.msra.mxu0 0
      %1309 = vmatprep.subr.bf16.mxu0 0
      %1310 = vmatpush1.bf16.msra.mxu0 0
      %1311 = vmatprep.mubr.bf16.mxu0 0
      %1312 = vmatmul.mubr.bf16.gmra.mrb[0].mxu0 %v1041
      %v1313 = vpop.f32.mrb[0].mxu0
      %v1314 = vadd.f32 %v1250, %v1313
      %v1315 = vpop.f32.mrb[0].mxu0
      %v1316 = vpop.f32.mrb[0].mxu0
      %v1317 = vpop.f32.mrb[0].mxu0
      %1318 = vdwg.mxu0
      %v1323 = vunpack.c.l.b16 %v961
      %v1324 = vunpack.c.l.b16 %v962
      %v1325 = vunpack.c.l.b16 %v963
      %v1326 = vunpack.c.l.b16 %v964
      %v1327 = vpack.c.b16 %v1324, %v1323
      %v1328 = vpack.c.b16 %v1326, %v1325
      %1331 = vmatprep.subr.bf16.mxu0 0
      %1332 = vmatpush1.bf16.msra.mxu0 %v1327
      %1333 = vmatprep.subr.bf16.mxu0 0
      %1334 = vmatpush1.bf16.msra.mxu0 %v1328
      %1335 = vmatprep.subr.bf16.mxu0 0
      %1336 = vmatpush1.bf16.msra.mxu0 0
      %1337 = vmatprep.subr.bf16.mxu0 0
      %1338 = vmatpush1.bf16.msra.mxu0 0
      %1339 = vmatprep.subr.bf16.mxu0 0
      %1340 = vmatpush1.bf16.msra.mxu0 0
      %1341 = vmatprep.subr.bf16.mxu0 0
      %1342 = vmatpush1.bf16.msra.mxu0 0
      %1343 = vmatprep.subr.bf16.mxu0 0
      %1344 = vmatpush1.bf16.msra.mxu0 0
      %1345 = vmatprep.subr.bf16.mxu0 0
      %1346 = vmatpush1.bf16.msra.mxu0 0
      %1347 = vmatprep.subr.bf16.mxu0 0
      %1348 = vmatpush1.bf16.msra.mxu0 0
      %1349 = vmatprep.subr.bf16.mxu0 0
      %1350 = vmatpush1.bf16.msra.mxu0 0
      %1351 = vmatprep.subr.bf16.mxu0 0
      %1352 = vmatpush1.bf16.msra.mxu0 0
      %1353 = vmatprep.subr.bf16.mxu0 0
      %1354 = vmatpush1.bf16.msra.mxu0 0
      %1355 = vmatprep.subr.bf16.mxu0 0
      %1356 = vmatpush1.bf16.msra.mxu0 0
      %1357 = vmatprep.subr.bf16.mxu0 0
      %1358 = vmatpush1.bf16.msra.mxu0 0
      %1359 = vmatprep.subr.bf16.mxu0 0
      %1360 = vmatpush1.bf16.msra.mxu0 0
      %1361 = vmatprep.subr.bf16.mxu0 0
      %1362 = vmatpush1.bf16.msra.mxu0 0
      %1363 = vmatprep.mubr.bf16.mxu0 0
      %1364 = vmatmul.mubr.bf16.gmra.mrb[0].mxu0 %v1041
      %v1365 = vpop.f32.mrb[0].mxu0
      %v1366 = vadd.f32 %v1254, %v1365
      %v1367 = vpop.f32.mrb[0].mxu0
      %v1368 = vpop.f32.mrb[0].mxu0
      %v1369 = vpop.f32.mrb[0].mxu0
      %1370 = vdwg.mxu0
      %v1375 = vunpack.c.l.b16 %v965
      %v1376 = vunpack.c.l.b16 %v966
      %v1377 = vunpack.c.l.b16 %v967
      %v1378 = vunpack.c.l.b16 %v968
      %v1379 = vpack.c.b16 %v1376, %v1375
      %v1380 = vpack.c.b16 %v1378, %v1377
      %1383 = vmatprep.subr.bf16.mxu0 0
      %1384 = vmatpush1.bf16.msra.mxu0 %v1379
      %1385 = vmatprep.subr.bf16.mxu0 0
      %1386 = vmatpush1.bf16.msra.mxu0 %v1380
      %1387 = vmatprep.subr.bf16.mxu0 0
      %1388 = vmatpush1.bf16.msra.mxu0 0
      %1389 = vmatprep.subr.bf16.mxu0 0
      %1390 = vmatpush1.bf16.msra.mxu0 0
      %1391 = vmatprep.subr.bf16.mxu0 0
      %1392 = vmatpush1.bf16.msra.mxu0 0
      %1393 = vmatprep.subr.bf16.mxu0 0
      %1394 = vmatpush1.bf16.msra.mxu0 0
      %1395 = vmatprep.subr.bf16.mxu0 0
      %1396 = vmatpush1.bf16.msra.mxu0 0
      %1397 = vmatprep.subr.bf16.mxu0 0
      %1398 = vmatpush1.bf16.msra.mxu0 0
      %1399 = vmatprep.subr.bf16.mxu0 0
      %1400 = vmatpush1.bf16.msra.mxu0 0
      %1401 = vmatprep.subr.bf16.mxu0 0
      %1402 = vmatpush1.bf16.msra.mxu0 0
      %1403 = vmatprep.subr.bf16.mxu0 0
      %1404 = vmatpush1.bf16.msra.mxu0 0
      %1405 = vmatprep.subr.bf16.mxu0 0
      %1406 = vmatpush1.bf16.msra.mxu0 0
      %1407 = vmatprep.subr.bf16.mxu0 0
      %1408 = vmatpush1.bf16.msra.mxu0 0
      %1409 = vmatprep.subr.bf16.mxu0 0
      %1410 = vmatpush1.bf16.msra.mxu0 0
      %1411 = vmatprep.subr.bf16.mxu0 0
      %1412 = vmatpush1.bf16.msra.mxu0 0
      %1413 = vmatprep.subr.bf16.mxu0 0
      %1414 = vmatpush1.bf16.msra.mxu0 0
      %1415 = vmatprep.mubr.bf16.mxu0 0
      %1416 = vmatmul.mubr.bf16.gmra.mrb[0].mxu0 %v1041
      %v1417 = vpop.f32.mrb[0].mxu0
      %v1418 = vadd.f32 %v1258, %v1417
      %v1419 = vpop.f32.mrb[0].mxu0
      %v1420 = vpop.f32.mrb[0].mxu0
      %v1421 = vpop.f32.mrb[0].mxu0
      %1422 = vdwg.mxu0
      %v1427 = vunpack.c.l.b16 %v969
      %v1428 = vunpack.c.l.b16 %v970
      %v1429 = vunpack.c.l.b16 %v971
      %v1430 = vunpack.c.l.b16 %v972
      %v1431 = vpack.c.b16 %v1428, %v1427
      %v1432 = vpack.c.b16 %v1430, %v1429
      %1435 = vmatprep.subr.bf16.mxu0 0
      %1436 = vmatpush1.bf16.msra.mxu0 %v1431
      %1437 = vmatprep.subr.bf16.mxu0 0
      %1438 = vmatpush1.bf16.msra.mxu0 %v1432
      %1439 = vmatprep.subr.bf16.mxu0 0
      %1440 = vmatpush1.bf16.msra.mxu0 0
      %1441 = vmatprep.subr.bf16.mxu0 0
      %1442 = vmatpush1.bf16.msra.mxu0 0
      %1443 = vmatprep.subr.bf16.mxu0 0
      %1444 = vmatpush1.bf16.msra.mxu0 0
      %1445 = vmatprep.subr.bf16.mxu0 0
      %1446 = vmatpush1.bf16.msra.mxu0 0
      %1447 = vmatprep.subr.bf16.mxu0 0
      %1448 = vmatpush1.bf16.msra.mxu0 0
      %1449 = vmatprep.subr.bf16.mxu0 0
      %1450 = vmatpush1.bf16.msra.mxu0 0
      %1451 = vmatprep.subr.bf16.mxu0 0
      %1452 = vmatpush1.bf16.msra.mxu0 0
      %1453 = vmatprep.subr.bf16.mxu0 0
      %1454 = vmatpush1.bf16.msra.mxu0 0
      %1455 = vmatprep.subr.bf16.mxu0 0
      %1456 = vmatpush1.bf16.msra.mxu0 0
      %1457 = vmatprep.subr.bf16.mxu0 0
      %1458 = vmatpush1.bf16.msra.mxu0 0
      %1459 = vmatprep.subr.bf16.mxu0 0
      %1460 = vmatpush1.bf16.msra.mxu0 0
      %1461 = vmatprep.subr.bf16.mxu0 0
      %1462 = vmatpush1.bf16.msra.mxu0 0
      %1463 = vmatprep.subr.bf16.mxu0 0
      %1464 = vmatpush1.bf16.msra.mxu0 0
      %1465 = vmatprep.subr.bf16.mxu0 0
      %1466 = vmatpush1.bf16.msra.mxu0 0
      %1467 = vmatprep.mubr.bf16.mxu0 0
      %1468 = vmatmul.mubr.bf16.gmra.mrb[0].mxu0 %v1041
      %v1469 = vpop.f32.mrb[0].mxu0
      %v1470 = vadd.f32 %v1262, %v1469
      %v1471 = vpop.f32.mrb[0].mxu0
      %v1472 = vpop.f32.mrb[0].mxu0
      %v1473 = vpop.f32.mrb[0].mxu0
      %1474 = vdwg.mxu0
      %v1479 = vlaneseq
      %v1480 = vshrl.u32 %v1479, 7
      %v1481 = vsub.s32 0, %v1480
      %v1482 = vrot.slane %v993, %v1481
      %v1483 = vlaneseq
      %v1484 = vshrl.u32 %v1483, 7
      %v1485 = vsub.s32 0, %v1484
      %v1486 = vrot.slane %v994, %v1485
      %v1487 = vlaneseq
      %v1488 = vshrl.u32 %v1487, 7
      %v1489 = vsub.s32 0, %v1488
      %v1490 = vrot.slane %v995, %v1489
      %v1491 = vlaneseq
      %v1492 = vshrl.u32 %v1491, 7
      %v1493 = vsub.s32 0, %v1492
      %v1494 = vrot.slane %v996, %v1493
      %v1503 = vunpack.c.l.b16 %v977
      %v1504 = vunpack.c.l.b16 %v978
      %v1505 = vunpack.c.l.b16 %v979
      %v1506 = vunpack.c.l.b16 %v980
      %v1507 = vpack.c.b16 %v1504, %v1503
      %v1508 = vpack.c.b16 %v1506, %v1505
      %1511 = vmatprep.subr.bf16.mxu0 0
      %1512 = vmatpush1.bf16.msra.mxu0 %v1507
      %1513 = vmatprep.subr.bf16.mxu0 0
      %1514 = vmatpush1.bf16.msra.mxu0 %v1508
      %1515 = vmatprep.subr.bf16.mxu0 0
      %1516 = vmatpush1.bf16.msra.mxu0 0
      %1517 = vmatprep.subr.bf16.mxu0 0
      %1518 = vmatpush1.bf16.msra.mxu0 0
      %1519 = vmatprep.subr.bf16.mxu0 0
      %1520 = vmatpush1.bf16.msra.mxu0 0
      %1521 = vmatprep.subr.bf16.mxu0 0
      %1522 = vmatpush1.bf16.msra.mxu0 0
      %1523 = vmatprep.subr.bf16.mxu0 0
      %1524 = vmatpush1.bf16.msra.mxu0 0
      %1525 = vmatprep.subr.bf16.mxu0 0
      %1526 = vmatpush1.bf16.msra.mxu0 0
      %1527 = vmatprep.subr.bf16.mxu0 0
      %1528 = vmatpush1.bf16.msra.mxu0 0
      %1529 = vmatprep.subr.bf16.mxu0 0
      %1530 = vmatpush1.bf16.msra.mxu0 0
      %1531 = vmatprep.subr.bf16.mxu0 0
      %1532 = vmatpush1.bf16.msra.mxu0 0
      %1533 = vmatprep.subr.bf16.mxu0 0
      %1534 = vmatpush1.bf16.msra.mxu0 0
      %1535 = vmatprep.subr.bf16.mxu0 0
      %1536 = vmatpush1.bf16.msra.mxu0 0
      %1537 = vmatprep.subr.bf16.mxu0 0
      %1538 = vmatpush1.bf16.msra.mxu0 0
      %1539 = vmatprep.subr.bf16.mxu0 0
      %1540 = vmatpush1.bf16.msra.mxu0 0
      %1541 = vmatprep.subr.bf16.mxu0 0
      %1542 = vmatpush1.bf16.msra.mxu0 0
      %1543 = vmatprep.mubr.bf16.mxu0 0
      %1544 = vmatmul.mubr.bf16.gmra.mrb[0].mxu0 %v1041
      %v1545 = vpop.f32.mrb[0].mxu0
      %v1546 = vadd.f32 %v1482, %v1545
      %v1547 = vpop.f32.mrb[0].mxu0
      %v1548 = vpop.f32.mrb[0].mxu0
      %v1549 = vpop.f32.mrb[0].mxu0
      %1550 = vdwg.mxu0
      %v1555 = vunpack.c.l.b16 %v981
      %v1556 = vunpack.c.l.b16 %v982
      %v1557 = vunpack.c.l.b16 %v983
      %v1558 = vunpack.c.l.b16 %v984
      %v1559 = vpack.c.b16 %v1556, %v1555
      %v1560 = vpack.c.b16 %v1558, %v1557
      %1563 = vmatprep.subr.bf16.mxu0 0
      %1564 = vmatpush1.bf16.msra.mxu0 %v1559
      %1565 = vmatprep.subr.bf16.mxu0 0
      %1566 = vmatpush1.bf16.msra.mxu0 %v1560
      %1567 = vmatprep.subr.bf16.mxu0 0
      %1568 = vmatpush1.bf16.msra.mxu0 0
      %1569 = vmatprep.subr.bf16.mxu0 0
      %1570 = vmatpush1.bf16.msra.mxu0 0
      %1571 = vmatprep.subr.bf16.mxu0 0
      %1572 = vmatpush1.bf16.msra.mxu0 0
      %1573 = vmatprep.subr.bf16.mxu0 0
      %1574 = vmatpush1.bf16.msra.mxu0 0
      %1575 = vmatprep.subr.bf16.mxu0 0
      %1576 = vmatpush1.bf16.msra.mxu0 0
      %1577 = vmatprep.subr.bf16.mxu0 0
      %1578 = vmatpush1.bf16.msra.mxu0 0
      %1579 = vmatprep.subr.bf16.mxu0 0
      %1580 = vmatpush1.bf16.msra.mxu0 0
      %1581 = vmatprep.subr.bf16.mxu0 0
      %1582 = vmatpush1.bf16.msra.mxu0 0
      %1583 = vmatprep.subr.bf16.mxu0 0
      %1584 = vmatpush1.bf16.msra.mxu0 0
      %1585 = vmatprep.subr.bf16.mxu0 0
      %1586 = vmatpush1.bf16.msra.mxu0 0
      %1587 = vmatprep.subr.bf16.mxu0 0
      %1588 = vmatpush1.bf16.msra.mxu0 0
      %1589 = vmatprep.subr.bf16.mxu0 0
      %1590 = vmatpush1.bf16.msra.mxu0 0
      %1591 = vmatprep.subr.bf16.mxu0 0
      %1592 = vmatpush1.bf16.msra.mxu0 0
      %1593 = vmatprep.subr.bf16.mxu0 0
      %1594 = vmatpush1.bf16.msra.mxu0 0
      %1595 = vmatprep.mubr.bf16.mxu0 0
      %1596 = vmatmul.mubr.bf16.gmra.mrb[0].mxu0 %v1041
      %v1597 = vpop.f32.mrb[0].mxu0
      %v1598 = vadd.f32 %v1486, %v1597
      %v1599 = vpop.f32.mrb[0].mxu0
      %v1600 = vpop.f32.mrb[0].mxu0
      %v1601 = vpop.f32.mrb[0].mxu0
      %1602 = vdwg.mxu0
      %v1607 = vunpack.c.l.b16 %v985
      %v1608 = vunpack.c.l.b16 %v986
      %v1609 = vunpack.c.l.b16 %v987
      %v1610 = vunpack.c.l.b16 %v988
      %v1611 = vpack.c.b16 %v1608, %v1607
      %v1612 = vpack.c.b16 %v1610, %v1609
      %1615 = vmatprep.subr.bf16.mxu0 0
      %1616 = vmatpush1.bf16.msra.mxu0 %v1611
      %1617 = vmatprep.subr.bf16.mxu0 0
      %1618 = vmatpush1.bf16.msra.mxu0 %v1612
      %1619 = vmatprep.subr.bf16.mxu0 0
      %1620 = vmatpush1.bf16.msra.mxu0 0
      %1621 = vmatprep.subr.bf16.mxu0 0
      %1622 = vmatpush1.bf16.msra.mxu0 0
      %1623 = vmatprep.subr.bf16.mxu0 0
      %1624 = vmatpush1.bf16.msra.mxu0 0
      %1625 = vmatprep.subr.bf16.mxu0 0
      %1626 = vmatpush1.bf16.msra.mxu0 0
      %1627 = vmatprep.subr.bf16.mxu0 0
      %1628 = vmatpush1.bf16.msra.mxu0 0
      %1629 = vmatprep.subr.bf16.mxu0 0
      %1630 = vmatpush1.bf16.msra.mxu0 0
      %1631 = vmatprep.subr.bf16.mxu0 0
      %1632 = vmatpush1.bf16.msra.mxu0 0
      %1633 = vmatprep.subr.bf16.mxu0 0
      %1634 = vmatpush1.bf16.msra.mxu0 0
      %1635 = vmatprep.subr.bf16.mxu0 0
      %1636 = vmatpush1.bf16.msra.mxu0 0
      %1637 = vmatprep.subr.bf16.mxu0 0
      %1638 = vmatpush1.bf16.msra.mxu0 0
      %1639 = vmatprep.subr.bf16.mxu0 0
      %1640 = vmatpush1.bf16.msra.mxu0 0
      %1641 = vmatprep.subr.bf16.mxu0 0
      %1642 = vmatpush1.bf16.msra.mxu0 0
      %1643 = vmatprep.subr.bf16.mxu0 0
      %1644 = vmatpush1.bf16.msra.mxu0 0
      %1645 = vmatprep.subr.bf16.mxu0 0
      %1646 = vmatpush1.bf16.msra.mxu0 0
      %1647 = vmatprep.mubr.bf16.mxu0 0
      %1648 = vmatmul.mubr.bf16.gmra.mrb[0].mxu0 %v1041
      %v1649 = vpop.f32.mrb[0].mxu0
      %v1650 = vadd.f32 %v1490, %v1649
      %v1651 = vpop.f32.mrb[0].mxu0
      %v1652 = vpop.f32.mrb[0].mxu0
      %v1653 = vpop.f32.mrb[0].mxu0
      %1654 = vdwg.mxu0
      %v1659 = vunpack.c.l.b16 %v989
      %v1660 = vunpack.c.l.b16 %v990
      %v1661 = vunpack.c.l.b16 %v991
      %v1662 = vunpack.c.l.b16 %v992
      %v1663 = vpack.c.b16 %v1660, %v1659
      %v1664 = vpack.c.b16 %v1662, %v1661
      %1667 = vmatprep.subr.bf16.mxu0 0
      %1668 = vmatpush1.bf16.msra.mxu0 %v1663
      %1669 = vmatprep.subr.bf16.mxu0 0
      %1670 = vmatpush1.bf16.msra.mxu0 %v1664
      %1671 = vmatprep.subr.bf16.mxu0 0
      %1672 = vmatpush1.bf16.msra.mxu0 0
      %1673 = vmatprep.subr.bf16.mxu0 0
      %1674 = vmatpush1.bf16.msra.mxu0 0
      %1675 = vmatprep.subr.bf16.mxu0 0
      %1676 = vmatpush1.bf16.msra.mxu0 0
      %1677 = vmatprep.subr.bf16.mxu0 0
      %1678 = vmatpush1.bf16.msra.mxu0 0
      %1679 = vmatprep.subr.bf16.mxu0 0
      %1680 = vmatpush1.bf16.msra.mxu0 0
      %1681 = vmatprep.subr.bf16.mxu0 0
      %1682 = vmatpush1.bf16.msra.mxu0 0
      %1683 = vmatprep.subr.bf16.mxu0 0
      %1684 = vmatpush1.bf16.msra.mxu0 0
      %1685 = vmatprep.subr.bf16.mxu0 0
      %1686 = vmatpush1.bf16.msra.mxu0 0
      %1687 = vmatprep.subr.bf16.mxu0 0
      %1688 = vmatpush1.bf16.msra.mxu0 0
      %1689 = vmatprep.subr.bf16.mxu0 0
      %1690 = vmatpush1.bf16.msra.mxu0 0
      %1691 = vmatprep.subr.bf16.mxu0 0
      %1692 = vmatpush1.bf16.msra.mxu0 0
      %1693 = vmatprep.subr.bf16.mxu0 0
      %1694 = vmatpush1.bf16.msra.mxu0 0
      %1695 = vmatprep.subr.bf16.mxu0 0
      %1696 = vmatpush1.bf16.msra.mxu0 0
      %1697 = vmatprep.subr.bf16.mxu0 0
      %1698 = vmatpush1.bf16.msra.mxu0 0
      %1699 = vmatprep.mubr.bf16.mxu0 0
      %1700 = vmatmul.mubr.bf16.gmra.mrb[0].mxu0 %v1041
      %v1701 = vpop.f32.mrb[0].mxu0
      %v1702 = vadd.f32 %v1494, %v1701
      %v1703 = vpop.f32.mrb[0].mxu0
      %v1704 = vpop.f32.mrb[0].mxu0
      %v1705 = vpop.f32.mrb[0].mxu0
      %1706 = vdwg.mxu0
      %v1707 = vpack.c.bf16 %v1239, %v1239
      %v1708 = vpack.c.bf16 %v1240, %v1240
      %v1709 = vpack.c.bf16 %v1241, %v1241
      %v1710 = vpack.c.bf16 %v1242, %v1242
      %v1711 = vpack.c.bf16 %v1314, %v1314
      %v1712 = vpack.c.bf16 %v1366, %v1366
      %v1713 = vpack.c.bf16 %v1418, %v1418
      %v1714 = vpack.c.bf16 %v1470, %v1470
      %vm1715 = vcmask 64512
      %v1717 = vsel %vm1715, %v1707, 0
      %v1720 = vsel %vm1715, %v1711, 0
      %1722 = vmatprep.subr.bf16.mxu0 0
      %1723 = vmatpush1.bf16.xpose.msra.mxu0 %v1720
      %1724 = vmatprep.subr.bf16.mxu0 0
      %1725 = vmatpush1.bf16.xpose.msra.mxu0 0
      %1726 = vmatprep.subr.bf16.mxu0 0
      %1727 = vmatpush1.bf16.xpose.msra.mxu0 0
      %1728 = vmatprep.subr.bf16.mxu0 0
      %1729 = vmatpush1.bf16.xpose.msra.mxu0 0
      %1730 = vmatprep.subr.bf16.mxu0 0
      %1731 = vmatpush1.bf16.xpose.msra.mxu0 0
      %1732 = vmatprep.subr.bf16.mxu0 0
      %1733 = vmatpush1.bf16.xpose.msra.mxu0 0
      %1734 = vmatprep.subr.bf16.mxu0 0
      %1735 = vmatpush1.bf16.xpose.msra.mxu0 0
      %1736 = vmatprep.subr.bf16.mxu0 0
      %1737 = vmatpush1.bf16.xpose.msra.mxu0 0
      %1738 = vmatprep.subr.bf16.mxu0 0
      %1739 = vmatpush1.bf16.xpose.msra.mxu0 0
      %1740 = vmatprep.subr.bf16.mxu0 0
      %1741 = vmatpush1.bf16.xpose.msra.mxu0 0
      %1742 = vmatprep.subr.bf16.mxu0 0
      %1743 = vmatpush1.bf16.xpose.msra.mxu0 0
      %1744 = vmatprep.subr.bf16.mxu0 0
      %1745 = vmatpush1.bf16.xpose.msra.mxu0 0
      %1746 = vmatprep.subr.bf16.mxu0 0
      %1747 = vmatpush1.bf16.xpose.msra.mxu0 0
      %1748 = vmatprep.subr.bf16.mxu0 0
      %1749 = vmatpush1.bf16.xpose.msra.mxu0 0
      %1750 = vmatprep.subr.bf16.mxu0 0
      %1751 = vmatpush1.bf16.xpose.msra.mxu0 0
      %1752 = vmatprep.subr.bf16.mxu0 0
      %1753 = vmatpush1.bf16.xpose.msra.mxu0 0
      %1754 = vmatprep.mubr.bf16.mxu0 0
      %1755 = vmatmul.mubr.bf16.gmra.mrb[0].mxu0 %v1717
      %v1756 = vpop.f32.mrb[0].mxu0
      %v1757 = vadd.f32 0.0, %v1756
      %v1758 = vpop.f32.mrb[0].mxu0
      %v1759 = vpop.f32.mrb[0].mxu0
      %v1760 = vpop.f32.mrb[0].mxu0
      %1761 = vdwg.mxu0
      %v1763 = vsel %vm1715, %v1708, 0
      %v1766 = vsel %vm1715, %v1712, 0
      %1768 = vmatprep.subr.bf16.mxu0 0
      %1769 = vmatpush1.bf16.xpose.msra.mxu0 %v1766
      %1770 = vmatprep.subr.bf16.mxu0 0
      %1771 = vmatpush1.bf16.xpose.msra.mxu0 0
      %1772 = vmatprep.subr.bf16.mxu0 0
      %1773 = vmatpush1.bf16.xpose.msra.mxu0 0
      %1774 = vmatprep.subr.bf16.mxu0 0
      %1775 = vmatpush1.bf16.xpose.msra.mxu0 0
      %1776 = vmatprep.subr.bf16.mxu0 0
      %1777 = vmatpush1.bf16.xpose.msra.mxu0 0
      %1778 = vmatprep.subr.bf16.mxu0 0
      %1779 = vmatpush1.bf16.xpose.msra.mxu0 0
      %1780 = vmatprep.subr.bf16.mxu0 0
      %1781 = vmatpush1.bf16.xpose.msra.mxu0 0
      %1782 = vmatprep.subr.bf16.mxu0 0
      %1783 = vmatpush1.bf16.xpose.msra.mxu0 0
      %1784 = vmatprep.subr.bf16.mxu0 0
      %1785 = vmatpush1.bf16.xpose.msra.mxu0 0
      %1786 = vmatprep.subr.bf16.mxu0 0
      %1787 = vmatpush1.bf16.xpose.msra.mxu0 0
      %1788 = vmatprep.subr.bf16.mxu0 0
      %1789 = vmatpush1.bf16.xpose.msra.mxu0 0
      %1790 = vmatprep.subr.bf16.mxu0 0
      %1791 = vmatpush1.bf16.xpose.msra.mxu0 0
      %1792 = vmatprep.subr.bf16.mxu0 0
      %1793 = vmatpush1.bf16.xpose.msra.mxu0 0
      %1794 = vmatprep.subr.bf16.mxu0 0
      %1795 = vmatpush1.bf16.xpose.msra.mxu0 0
      %1796 = vmatprep.subr.bf16.mxu0 0
      %1797 = vmatpush1.bf16.xpose.msra.mxu0 0
      %1798 = vmatprep.subr.bf16.mxu0 0
      %1799 = vmatpush1.bf16.xpose.msra.mxu0 0
      %1800 = vmatprep.mubr.bf16.mxu0 0
      %1801 = vmatmul.mubr.bf16.gmra.mrb[0].mxu0 %v1763
      %v1802 = vpop.f32.mrb[0].mxu0
      %v1803 = vadd.f32 0.0, %v1802
      %v1804 = vpop.f32.mrb[0].mxu0
      %v1805 = vpop.f32.mrb[0].mxu0
      %v1806 = vpop.f32.mrb[0].mxu0
      %1807 = vdwg.mxu0
      %v1809 = vsel %vm1715, %v1709, 0
      %v1812 = vsel %vm1715, %v1713, 0
      %1814 = vmatprep.subr.bf16.mxu0 0
      %1815 = vmatpush1.bf16.xpose.msra.mxu0 %v1812
      %1816 = vmatprep.subr.bf16.mxu0 0
      %1817 = vmatpush1.bf16.xpose.msra.mxu0 0
      %1818 = vmatprep.subr.bf16.mxu0 0
      %1819 = vmatpush1.bf16.xpose.msra.mxu0 0
      %1820 = vmatprep.subr.bf16.mxu0 0
      %1821 = vmatpush1.bf16.xpose.msra.mxu0 0
      %1822 = vmatprep.subr.bf16.mxu0 0
      %1823 = vmatpush1.bf16.xpose.msra.mxu0 0
      %1824 = vmatprep.subr.bf16.mxu0 0
      %1825 = vmatpush1.bf16.xpose.msra.mxu0 0
      %1826 = vmatprep.subr.bf16.mxu0 0
      %1827 = vmatpush1.bf16.xpose.msra.mxu0 0
      %1828 = vmatprep.subr.bf16.mxu0 0
      %1829 = vmatpush1.bf16.xpose.msra.mxu0 0
      %1830 = vmatprep.subr.bf16.mxu0 0
      %1831 = vmatpush1.bf16.xpose.msra.mxu0 0
      %1832 = vmatprep.subr.bf16.mxu0 0
      %1833 = vmatpush1.bf16.xpose.msra.mxu0 0
      %1834 = vmatprep.subr.bf16.mxu0 0
      %1835 = vmatpush1.bf16.xpose.msra.mxu0 0
      %1836 = vmatprep.subr.bf16.mxu0 0
      %1837 = vmatpush1.bf16.xpose.msra.mxu0 0
      %1838 = vmatprep.subr.bf16.mxu0 0
      %1839 = vmatpush1.bf16.xpose.msra.mxu0 0
      %1840 = vmatprep.subr.bf16.mxu0 0
      %1841 = vmatpush1.bf16.xpose.msra.mxu0 0
      %1842 = vmatprep.subr.bf16.mxu0 0
      %1843 = vmatpush1.bf16.xpose.msra.mxu0 0
      %1844 = vmatprep.subr.bf16.mxu0 0
      %1845 = vmatpush1.bf16.xpose.msra.mxu0 0
      %1846 = vmatprep.mubr.bf16.mxu0 0
      %1847 = vmatmul.mubr.bf16.gmra.mrb[0].mxu0 %v1809
      %v1848 = vpop.f32.mrb[0].mxu0
      %v1849 = vadd.f32 0.0, %v1848
      %v1850 = vpop.f32.mrb[0].mxu0
      %v1851 = vpop.f32.mrb[0].mxu0
      %v1852 = vpop.f32.mrb[0].mxu0
      %1853 = vdwg.mxu0
      %v1855 = vsel %vm1715, %v1710, 0
      %v1858 = vsel %vm1715, %v1714, 0
      %1860 = vmatprep.subr.bf16.mxu0 0
      %1861 = vmatpush1.bf16.xpose.msra.mxu0 %v1858
      %1862 = vmatprep.subr.bf16.mxu0 0
      %1863 = vmatpush1.bf16.xpose.msra.mxu0 0
      %1864 = vmatprep.subr.bf16.mxu0 0
      %1865 = vmatpush1.bf16.xpose.msra.mxu0 0
      %1866 = vmatprep.subr.bf16.mxu0 0
      %1867 = vmatpush1.bf16.xpose.msra.mxu0 0
      %1868 = vmatprep.subr.bf16.mxu0 0
      %1869 = vmatpush1.bf16.xpose.msra.mxu0 0
      %1870 = vmatprep.subr.bf16.mxu0 0
      %1871 = vmatpush1.bf16.xpose.msra.mxu0 0
      %1872 = vmatprep.subr.bf16.mxu0 0
      %1873 = vmatpush1.bf16.xpose.msra.mxu0 0
      %1874 = vmatprep.subr.bf16.mxu0 0
      %1875 = vmatpush1.bf16.xpose.msra.mxu0 0
      %1876 = vmatprep.subr.bf16.mxu0 0
      %1877 = vmatpush1.bf16.xpose.msra.mxu0 0
      %1878 = vmatprep.subr.bf16.mxu0 0
      %1879 = vmatpush1.bf16.xpose.msra.mxu0 0
      %1880 = vmatprep.subr.bf16.mxu0 0
      %1881 = vmatpush1.bf16.xpose.msra.mxu0 0
      %1882 = vmatprep.subr.bf16.mxu0 0
      %1883 = vmatpush1.bf16.xpose.msra.mxu0 0
      %1884 = vmatprep.subr.bf16.mxu0 0
      %1885 = vmatpush1.bf16.xpose.msra.mxu0 0
      %1886 = vmatprep.subr.bf16.mxu0 0
      %1887 = vmatpush1.bf16.xpose.msra.mxu0 0
      %1888 = vmatprep.subr.bf16.mxu0 0
      %1889 = vmatpush1.bf16.xpose.msra.mxu0 0
      %1890 = vmatprep.subr.bf16.mxu0 0
      %1891 = vmatpush1.bf16.xpose.msra.mxu0 0
      %1892 = vmatprep.mubr.bf16.mxu0 0
      %1893 = vmatmul.mubr.bf16.gmra.mrb[0].mxu0 %v1855
      %v1894 = vpop.f32.mrb[0].mxu0
      %v1895 = vadd.f32 0.0, %v1894
      %v1896 = vpop.f32.mrb[0].mxu0
      %v1897 = vpop.f32.mrb[0].mxu0
      %v1898 = vpop.f32.mrb[0].mxu0
      %1899 = vdwg.mxu0
      %v1900 = vsel %vm1715, %v1757, -inf
      %1901 = vmax.xlane.f32.xlu0 %v1900
      %v1902 = vpop.xlane.xlu0 %1901
      %v1903 = vsel %vm1715, %v1803, -inf
      %1904 = vmax.xlane.f32.xlu0 %v1903
      %v1905 = vpop.xlane.xlu0 %1904
      %v1906 = vsel %vm1715, %v1849, -inf
      %1907 = vmax.xlane.f32.xlu0 %v1906
      %v1908 = vpop.xlane.xlu0 %1907
      %v1909 = vsel %vm1715, %v1895, -inf
      %1910 = vmax.xlane.f32.xlu0 %v1909
      %v1911 = vpop.xlane.xlu0 %1910
      %v1912 = vsub.f32 %v1757, %v1902
      %v1913 = vsub.f32 %v1803, %v1905
      %v1914 = vsub.f32 %v1849, %v1908
      %v1915 = vsub.f32 %v1895, %v1911
      %v1916 = vmul.f32 %v1912, 1.442695
      %v1917 = vpow.pop %v1916
      %v1918 = vmul.f32 %v1913, 1.442695
      %v1919 = vpow.pop %v1918
      %v1920 = vmul.f32 %v1914, 1.442695
      %v1921 = vpow.pop %v1920
      %v1922 = vmul.f32 %v1915, 1.442695
      %v1923 = vpow.pop %v1922
      %v1924 = vsel %vm1715, %v1917, 0.0
      %1925 = vadd.xlane.f32.xlu0 %v1924
      %v1926 = vpop.xlane.xlu0 %1925
      %v1927 = vsel %vm1715, %v1919, 0.0
      %1928 = vadd.xlane.f32.xlu0 %v1927
      %v1929 = vpop.xlane.xlu0 %1928
      %v1930 = vsel %vm1715, %v1921, 0.0
      %1931 = vadd.xlane.f32.xlu0 %v1930
      %v1932 = vpop.xlane.xlu0 %1931
      %v1933 = vsel %vm1715, %v1923, 0.0
      %1934 = vadd.xlane.f32.xlu0 %v1933
      %v1935 = vpop.xlane.xlu0 %1934
      %v1936 = vrcp.pop %v1926
      %v1937 = vrcp.pop %v1929
      %v1938 = vrcp.pop %v1932
      %v1939 = vrcp.pop %v1935
      %v1940 = vmul.f32 %v1917, %v1936
      %v1941 = vmul.f32 %v1919, %v1937
      %v1942 = vmul.f32 %v1921, %v1938
      %v1943 = vmul.f32 %v1923, %v1939
      %v1944 = vpack.c.bf16 %v1940, %v1940
      %v1945 = vpack.c.bf16 %v1941, %v1941
      %v1946 = vpack.c.bf16 %v1942, %v1942
      %v1947 = vpack.c.bf16 %v1943, %v1943
      %v1948 = vpack.c.bf16 %v1546, %v1546
      %v1949 = vpack.c.bf16 %v1598, %v1598
      %v1950 = vpack.c.bf16 %v1650, %v1650
      %v1951 = vpack.c.bf16 %v1702, %v1702
      %v1953 = vsel %vm1715, %v1944, 0
      %vm1955 = vcmask 1043456
      %v1957 = vsel %vm1955, %v1948, 0
      %1959 = vmatprep.subr.bf16.mxu0 0
      %1960 = vmatpush1.bf16.msra.mxu0 %v1957
      %1961 = vmatprep.subr.bf16.mxu0 0
      %1962 = vmatpush1.bf16.msra.mxu0 0
      %1963 = vmatprep.subr.bf16.mxu0 0
      %1964 = vmatpush1.bf16.msra.mxu0 0
      %1965 = vmatprep.subr.bf16.mxu0 0
      %1966 = vmatpush1.bf16.msra.mxu0 0
      %1967 = vmatprep.subr.bf16.mxu0 0
      %1968 = vmatpush1.bf16.msra.mxu0 0
      %1969 = vmatprep.subr.bf16.mxu0 0
      %1970 = vmatpush1.bf16.msra.mxu0 0
      %1971 = vmatprep.subr.bf16.mxu0 0
      %1972 = vmatpush1.bf16.msra.mxu0 0
      %1973 = vmatprep.subr.bf16.mxu0 0
      %1974 = vmatpush1.bf16.msra.mxu0 0
      %1975 = vmatprep.subr.bf16.mxu0 0
      %1976 = vmatpush1.bf16.msra.mxu0 0
      %1977 = vmatprep.subr.bf16.mxu0 0
      %1978 = vmatpush1.bf16.msra.mxu0 0
      %1979 = vmatprep.subr.bf16.mxu0 0
      %1980 = vmatpush1.bf16.msra.mxu0 0
      %1981 = vmatprep.subr.bf16.mxu0 0
      %1982 = vmatpush1.bf16.msra.mxu0 0
      %1983 = vmatprep.subr.bf16.mxu0 0
      %1984 = vmatpush1.bf16.msra.mxu0 0
      %1985 = vmatprep.subr.bf16.mxu0 0
      %1986 = vmatpush1.bf16.msra.mxu0 0
      %1987 = vmatprep.subr.bf16.mxu0 0
      %1988 = vmatpush1.bf16.msra.mxu0 0
      %1989 = vmatprep.subr.bf16.mxu0 0
      %1990 = vmatpush1.bf16.msra.mxu0 0
      %1991 = vmatprep.mubr.bf16.mxu0 0
      %1992 = vmatmul.mubr.bf16.gmra.mrb[0].mxu0 %v1953
      %v1993 = vpop.f32.mrb[0].mxu0
      %v1994 = vadd.f32 0.0, %v1993
      %v1995 = vpop.f32.mrb[0].mxu0
      %v1996 = vpop.f32.mrb[0].mxu0
      %v1997 = vpop.f32.mrb[0].mxu0
      %1998 = vdwg.mxu0
      %v2000 = vsel %vm1715, %v1945, 0
      %v2003 = vsel %vm1955, %v1949, 0
      %2005 = vmatprep.subr.bf16.mxu0 0
      %2006 = vmatpush1.bf16.msra.mxu0 %v2003
      %2007 = vmatprep.subr.bf16.mxu0 0
      %2008 = vmatpush1.bf16.msra.mxu0 0
      %2009 = vmatprep.subr.bf16.mxu0 0
      %2010 = vmatpush1.bf16.msra.mxu0 0
      %2011 = vmatprep.subr.bf16.mxu0 0
      %2012 = vmatpush1.bf16.msra.mxu0 0
      %2013 = vmatprep.subr.bf16.mxu0 0
      %2014 = vmatpush1.bf16.msra.mxu0 0
      %2015 = vmatprep.subr.bf16.mxu0 0
      %2016 = vmatpush1.bf16.msra.mxu0 0
      %2017 = vmatprep.subr.bf16.mxu0 0
      %2018 = vmatpush1.bf16.msra.mxu0 0
      %2019 = vmatprep.subr.bf16.mxu0 0
      %2020 = vmatpush1.bf16.msra.mxu0 0
      %2021 = vmatprep.subr.bf16.mxu0 0
      %2022 = vmatpush1.bf16.msra.mxu0 0
      %2023 = vmatprep.subr.bf16.mxu0 0
      %2024 = vmatpush1.bf16.msra.mxu0 0
      %2025 = vmatprep.subr.bf16.mxu0 0
      %2026 = vmatpush1.bf16.msra.mxu0 0
      %2027 = vmatprep.subr.bf16.mxu0 0
      %2028 = vmatpush1.bf16.msra.mxu0 0
      %2029 = vmatprep.subr.bf16.mxu0 0
      %2030 = vmatpush1.bf16.msra.mxu0 0
      %2031 = vmatprep.subr.bf16.mxu0 0
      %2032 = vmatpush1.bf16.msra.mxu0 0
      %2033 = vmatprep.subr.bf16.mxu0 0
      %2034 = vmatpush1.bf16.msra.mxu0 0
      %2035 = vmatprep.subr.bf16.mxu0 0
      %2036 = vmatpush1.bf16.msra.mxu0 0
      %2037 = vmatprep.mubr.bf16.mxu0 0
      %2038 = vmatmul.mubr.bf16.gmra.mrb[0].mxu0 %v2000
      %v2039 = vpop.f32.mrb[0].mxu0
      %v2040 = vadd.f32 0.0, %v2039
      %v2041 = vpop.f32.mrb[0].mxu0
      %v2042 = vpop.f32.mrb[0].mxu0
      %v2043 = vpop.f32.mrb[0].mxu0
      %2044 = vdwg.mxu0
      %v2046 = vsel %vm1715, %v1946, 0
      %v2049 = vsel %vm1955, %v1950, 0
      %2051 = vmatprep.subr.bf16.mxu0 0
      %2052 = vmatpush1.bf16.msra.mxu0 %v2049
      %2053 = vmatprep.subr.bf16.mxu0 0
      %2054 = vmatpush1.bf16.msra.mxu0 0
      %2055 = vmatprep.subr.bf16.mxu0 0
      %2056 = vmatpush1.bf16.msra.mxu0 0
      %2057 = vmatprep.subr.bf16.mxu0 0
      %2058 = vmatpush1.bf16.msra.mxu0 0
      %2059 = vmatprep.subr.bf16.mxu0 0
      %2060 = vmatpush1.bf16.msra.mxu0 0
      %2061 = vmatprep.subr.bf16.mxu0 0
      %2062 = vmatpush1.bf16.msra.mxu0 0
      %2063 = vmatprep.subr.bf16.mxu0 0
      %2064 = vmatpush1.bf16.msra.mxu0 0
      %2065 = vmatprep.subr.bf16.mxu0 0
      %2066 = vmatpush1.bf16.msra.mxu0 0
      %2067 = vmatprep.subr.bf16.mxu0 0
      %2068 = vmatpush1.bf16.msra.mxu0 0
      %2069 = vmatprep.subr.bf16.mxu0 0
      %2070 = vmatpush1.bf16.msra.mxu0 0
      %2071 = vmatprep.subr.bf16.mxu0 0
      %2072 = vmatpush1.bf16.msra.mxu0 0
      %2073 = vmatprep.subr.bf16.mxu0 0
      %2074 = vmatpush1.bf16.msra.mxu0 0
      %2075 = vmatprep.subr.bf16.mxu0 0
      %2076 = vmatpush1.bf16.msra.mxu0 0
      %2077 = vmatprep.subr.bf16.mxu0 0
      %2078 = vmatpush1.bf16.msra.mxu0 0
      %2079 = vmatprep.subr.bf16.mxu0 0
      %2080 = vmatpush1.bf16.msra.mxu0 0
      %2081 = vmatprep.subr.bf16.mxu0 0
      %2082 = vmatpush1.bf16.msra.mxu0 0
      %2083 = vmatprep.mubr.bf16.mxu0 0
      %2084 = vmatmul.mubr.bf16.gmra.mrb[0].mxu0 %v2046
      %v2085 = vpop.f32.mrb[0].mxu0
      %v2086 = vadd.f32 0.0, %v2085
      %v2087 = vpop.f32.mrb[0].mxu0
      %v2088 = vpop.f32.mrb[0].mxu0
      %v2089 = vpop.f32.mrb[0].mxu0
      %2090 = vdwg.mxu0
      %v2092 = vsel %vm1715, %v1947, 0
      %v2095 = vsel %vm1955, %v1951, 0
      %2097 = vmatprep.subr.bf16.mxu0 0
      %2098 = vmatpush1.bf16.msra.mxu0 %v2095
      %2099 = vmatprep.subr.bf16.mxu0 0
      %2100 = vmatpush1.bf16.msra.mxu0 0
      %2101 = vmatprep.subr.bf16.mxu0 0
      %2102 = vmatpush1.bf16.msra.mxu0 0
      %2103 = vmatprep.subr.bf16.mxu0 0
      %2104 = vmatpush1.bf16.msra.mxu0 0
      %2105 = vmatprep.subr.bf16.mxu0 0
      %2106 = vmatpush1.bf16.msra.mxu0 0
      %2107 = vmatprep.subr.bf16.mxu0 0
      %2108 = vmatpush1.bf16.msra.mxu0 0
      %2109 = vmatprep.subr.bf16.mxu0 0
      %2110 = vmatpush1.bf16.msra.mxu0 0
      %2111 = vmatprep.subr.bf16.mxu0 0
      %2112 = vmatpush1.bf16.msra.mxu0 0
      %2113 = vmatprep.subr.bf16.mxu0 0
      %2114 = vmatpush1.bf16.msra.mxu0 0
      %2115 = vmatprep.subr.bf16.mxu0 0
      %2116 = vmatpush1.bf16.msra.mxu0 0
      %2117 = vmatprep.subr.bf16.mxu0 0
      %2118 = vmatpush1.bf16.msra.mxu0 0
      %2119 = vmatprep.subr.bf16.mxu0 0
      %2120 = vmatpush1.bf16.msra.mxu0 0
      %2121 = vmatprep.subr.bf16.mxu0 0
      %2122 = vmatpush1.bf16.msra.mxu0 0
      %2123 = vmatprep.subr.bf16.mxu0 0
      %2124 = vmatpush1.bf16.msra.mxu0 0
      %2125 = vmatprep.subr.bf16.mxu0 0
      %2126 = vmatpush1.bf16.msra.mxu0 0
      %2127 = vmatprep.subr.bf16.mxu0 0
      %2128 = vmatpush1.bf16.msra.mxu0 0
      %2129 = vmatprep.mubr.bf16.mxu0 0
      %2130 = vmatmul.mubr.bf16.gmra.mrb[0].mxu0 %v2092
      %v2131 = vpop.f32.mrb[0].mxu0
      %v2132 = vadd.f32 0.0, %v2131
      %v2133 = vpop.f32.mrb[0].mxu0
      %v2134 = vpop.f32.mrb[0].mxu0
      %v2135 = vpop.f32.mrb[0].mxu0
      %2136 = vdwg.mxu0
      %v2137 = vpack.c.bf16 %v1994, %v1994
      %v2138 = vpack.c.bf16 %v2040, %v2040
      %v2139 = vpack.c.bf16 %v2086, %v2086
      %v2140 = vpack.c.bf16 %v2132, %v2132
      %v2142 = vsel %vm1715, %v2137, 0
      %v2145 = vsel %vm1955, %v997, 0
      %2147 = vmatprep.subr.bf16.mxu0 0
      %2148 = vmatpush1.bf16.msra.mxu0 %v2145
      %2149 = vmatprep.subr.bf16.mxu0 0
      %2150 = vmatpush1.bf16.msra.mxu0 0
      %2151 = vmatprep.subr.bf16.mxu0 0
      %2152 = vmatpush1.bf16.msra.mxu0 0
      %2153 = vmatprep.subr.bf16.mxu0 0
      %2154 = vmatpush1.bf16.msra.mxu0 0
      %2155 = vmatprep.subr.bf16.mxu0 0
      %2156 = vmatpush1.bf16.msra.mxu0 0
      %2157 = vmatprep.subr.bf16.mxu0 0
      %2158 = vmatpush1.bf16.msra.mxu0 0
      %2159 = vmatprep.subr.bf16.mxu0 0
      %2160 = vmatpush1.bf16.msra.mxu0 0
      %2161 = vmatprep.subr.bf16.mxu0 0
      %2162 = vmatpush1.bf16.msra.mxu0 0
      %2163 = vmatprep.subr.bf16.mxu0 0
      %2164 = vmatpush1.bf16.msra.mxu0 0
      %2165 = vmatprep.subr.bf16.mxu0 0
      %2166 = vmatpush1.bf16.msra.mxu0 0
      %2167 = vmatprep.subr.bf16.mxu0 0
      %2168 = vmatpush1.bf16.msra.mxu0 0
      %2169 = vmatprep.subr.bf16.mxu0 0
      %2170 = vmatpush1.bf16.msra.mxu0 0
      %2171 = vmatprep.subr.bf16.mxu0 0
      %2172 = vmatpush1.bf16.msra.mxu0 0
      %2173 = vmatprep.subr.bf16.mxu0 0
      %2174 = vmatpush1.bf16.msra.mxu0 0
      %2175 = vmatprep.subr.bf16.mxu0 0
      %2176 = vmatpush1.bf16.msra.mxu0 0
      %2177 = vmatprep.subr.bf16.mxu0 0
      %2178 = vmatpush1.bf16.msra.mxu0 0
      %2179 = vmatprep.mubr.bf16.mxu0 0
      %2180 = vmatmul.mubr.bf16.gmra.mrb[0].mxu0 %v2142
      %v2181 = vpop.f32.mrb[0].mxu0
      %v2182 = vadd.f32 0.0, %v2181
      %v2183 = vpop.f32.mrb[0].mxu0
      %v2184 = vpop.f32.mrb[0].mxu0
      %v2185 = vpop.f32.mrb[0].mxu0
      %2186 = vdwg.mxu0
      %v2188 = vsel %vm1715, %v2138, 0
      %v2191 = vsel %vm1955, %v998, 0
      %2193 = vmatprep.subr.bf16.mxu0 0
      %2194 = vmatpush1.bf16.msra.mxu0 %v2191
      %2195 = vmatprep.subr.bf16.mxu0 0
      %2196 = vmatpush1.bf16.msra.mxu0 0
      %2197 = vmatprep.subr.bf16.mxu0 0
      %2198 = vmatpush1.bf16.msra.mxu0 0
      %2199 = vmatprep.subr.bf16.mxu0 0
      %2200 = vmatpush1.bf16.msra.mxu0 0
      %2201 = vmatprep.subr.bf16.mxu0 0
      %2202 = vmatpush1.bf16.msra.mxu0 0
      %2203 = vmatprep.subr.bf16.mxu0 0
      %2204 = vmatpush1.bf16.msra.mxu0 0
      %2205 = vmatprep.subr.bf16.mxu0 0
      %2206 = vmatpush1.bf16.msra.mxu0 0
      %2207 = vmatprep.subr.bf16.mxu0 0
      %2208 = vmatpush1.bf16.msra.mxu0 0
      %2209 = vmatprep.subr.bf16.mxu0 0
      %2210 = vmatpush1.bf16.msra.mxu0 0
      %2211 = vmatprep.subr.bf16.mxu0 0
      %2212 = vmatpush1.bf16.msra.mxu0 0
      %2213 = vmatprep.subr.bf16.mxu0 0
      %2214 = vmatpush1.bf16.msra.mxu0 0
      %2215 = vmatprep.subr.bf16.mxu0 0
      %2216 = vmatpush1.bf16.msra.mxu0 0
      %2217 = vmatprep.subr.bf16.mxu0 0
      %2218 = vmatpush1.bf16.msra.mxu0 0
      %2219 = vmatprep.subr.bf16.mxu0 0
      %2220 = vmatpush1.bf16.msra.mxu0 0
      %2221 = vmatprep.subr.bf16.mxu0 0
      %2222 = vmatpush1.bf16.msra.mxu0 0
      %2223 = vmatprep.subr.bf16.mxu0 0
      %2224 = vmatpush1.bf16.msra.mxu0 0
      %2225 = vmatprep.mubr.bf16.mxu0 0
      %2226 = vmatmul.mubr.bf16.gmra.mrb[0].mxu0 %v2188
      %v2227 = vpop.f32.mrb[0].mxu0
      %v2228 = vadd.f32 0.0, %v2227
      %v2229 = vpop.f32.mrb[0].mxu0
      %v2230 = vpop.f32.mrb[0].mxu0
      %v2231 = vpop.f32.mrb[0].mxu0
      %2232 = vdwg.mxu0
      %v2234 = vsel %vm1715, %v2139, 0
      %v2237 = vsel %vm1955, %v999, 0
      %2239 = vmatprep.subr.bf16.mxu0 0
      %2240 = vmatpush1.bf16.msra.mxu0 %v2237
      %2241 = vmatprep.subr.bf16.mxu0 0
      %2242 = vmatpush1.bf16.msra.mxu0 0
      %2243 = vmatprep.subr.bf16.mxu0 0
      %2244 = vmatpush1.bf16.msra.mxu0 0
      %2245 = vmatprep.subr.bf16.mxu0 0
      %2246 = vmatpush1.bf16.msra.mxu0 0
      %2247 = vmatprep.subr.bf16.mxu0 0
      %2248 = vmatpush1.bf16.msra.mxu0 0
      %2249 = vmatprep.subr.bf16.mxu0 0
      %2250 = vmatpush1.bf16.msra.mxu0 0
      %2251 = vmatprep.subr.bf16.mxu0 0
      %2252 = vmatpush1.bf16.msra.mxu0 0
      %2253 = vmatprep.subr.bf16.mxu0 0
      %2254 = vmatpush1.bf16.msra.mxu0 0
      %2255 = vmatprep.subr.bf16.mxu0 0
      %2256 = vmatpush1.bf16.msra.mxu0 0
      %2257 = vmatprep.subr.bf16.mxu0 0
      %2258 = vmatpush1.bf16.msra.mxu0 0
      %2259 = vmatprep.subr.bf16.mxu0 0
      %2260 = vmatpush1.bf16.msra.mxu0 0
      %2261 = vmatprep.subr.bf16.mxu0 0
      %2262 = vmatpush1.bf16.msra.mxu0 0
      %2263 = vmatprep.subr.bf16.mxu0 0
      %2264 = vmatpush1.bf16.msra.mxu0 0
      %2265 = vmatprep.subr.bf16.mxu0 0
      %2266 = vmatpush1.bf16.msra.mxu0 0
      %2267 = vmatprep.subr.bf16.mxu0 0
      %2268 = vmatpush1.bf16.msra.mxu0 0
      %2269 = vmatprep.subr.bf16.mxu0 0
      %2270 = vmatpush1.bf16.msra.mxu0 0
      %2271 = vmatprep.mubr.bf16.mxu0 0
      %2272 = vmatmul.mubr.bf16.gmra.mrb[0].mxu0 %v2234
      %v2273 = vpop.f32.mrb[0].mxu0
      %v2274 = vadd.f32 0.0, %v2273
      %v2275 = vpop.f32.mrb[0].mxu0
      %v2276 = vpop.f32.mrb[0].mxu0
      %v2277 = vpop.f32.mrb[0].mxu0
      %2278 = vdwg.mxu0
      %v2280 = vsel %vm1715, %v2140, 0
      %v2283 = vsel %vm1955, %v1000, 0
      %2285 = vmatprep.subr.bf16.mxu0 0
      %2286 = vmatpush1.bf16.msra.mxu0 %v2283
      %2287 = vmatprep.subr.bf16.mxu0 0
      %2288 = vmatpush1.bf16.msra.mxu0 0
      %2289 = vmatprep.subr.bf16.mxu0 0
      %2290 = vmatpush1.bf16.msra.mxu0 0
      %2291 = vmatprep.subr.bf16.mxu0 0
      %2292 = vmatpush1.bf16.msra.mxu0 0
      %2293 = vmatprep.subr.bf16.mxu0 0
      %2294 = vmatpush1.bf16.msra.mxu0 0
      %2295 = vmatprep.subr.bf16.mxu0 0
      %2296 = vmatpush1.bf16.msra.mxu0 0
      %2297 = vmatprep.subr.bf16.mxu0 0
      %2298 = vmatpush1.bf16.msra.mxu0 0
      %2299 = vmatprep.subr.bf16.mxu0 0
      %2300 = vmatpush1.bf16.msra.mxu0 0
      %2301 = vmatprep.subr.bf16.mxu0 0
      %2302 = vmatpush1.bf16.msra.mxu0 0
      %2303 = vmatprep.subr.bf16.mxu0 0
      %2304 = vmatpush1.bf16.msra.mxu0 0
      %2305 = vmatprep.subr.bf16.mxu0 0
      %2306 = vmatpush1.bf16.msra.mxu0 0
      %2307 = vmatprep.subr.bf16.mxu0 0
      %2308 = vmatpush1.bf16.msra.mxu0 0
      %2309 = vmatprep.subr.bf16.mxu0 0
      %2310 = vmatpush1.bf16.msra.mxu0 0
      %2311 = vmatprep.subr.bf16.mxu0 0
      %2312 = vmatpush1.bf16.msra.mxu0 0
      %2313 = vmatprep.subr.bf16.mxu0 0
      %2314 = vmatpush1.bf16.msra.mxu0 0
      %2315 = vmatprep.subr.bf16.mxu0 0
      %2316 = vmatpush1.bf16.msra.mxu0 0
      %2317 = vmatprep.mubr.bf16.mxu0 0
      %2318 = vmatmul.mubr.bf16.gmra.mrb[0].mxu0 %v2280
      %v2319 = vpop.f32.mrb[0].mxu0
      %v2320 = vadd.f32 0.0, %v2319
      %v2321 = vpop.f32.mrb[0].mxu0
      %v2322 = vpop.f32.mrb[0].mxu0
      %v2323 = vpop.f32.mrb[0].mxu0
      %2324 = vdwg.mxu0
      %v2325 = vsel %vm1039, %v2182, 0.0
      %v2326 = vsel %vm1039, %v2228, 0.0
      %v2327 = vadd.f32 %v2325, %v2326
      %v2328 = vsel %vm1039, %v2274, 0.0
      %v2329 = vadd.f32 %v2327, %v2328
      %v2330 = vsel %vm1039, %v2320, 0.0
      %v2331 = vadd.f32 %v2329, %v2330
      %v2333 = vlaneseq
      %v2334 = vshrl.u32 %v2333, 7
      %v2335 = vsub.s32 0, %v2334
      %v2336 = vrot.slane %v1001, %v2335
      %v2338 = vadd.f32 %v2331, %v2336
      %v2339 = vadd.f32 %v933, %v2338
      %v2340 = vld [vmem:[%s23] sm:$0x1]
      %v2341 = vld [vmem:[%s25] sm:$0x1]
      %v2342 = vsel %vm1039, %v2339, 0.0
      %2343 = vadd.xlane.f32.xlu0 %v2342
      %v2344 = vpop.xlane.xlu0 %2343
      %v2345 = vrcp.pop 32.0
      %v2346 = vmul.f32 %v2344, %v2345
      %v2347 = vsub.f32 %v2339, %v2346
      %v2348 = vmul.f32 %v2347, %v2347
      %v2349 = vsel %vm1039, %v2348, 0.0
      %2350 = vadd.xlane.f32.xlu0 %v2349
      %v2351 = vpop.xlane.xlu0 %2350
      %v2352 = vmul.f32 %v2351, %v2345
      %v2353 = vadd.f32 %v2352, 1e-05
      %v2354 = vrsqrt.pop %v2353
      %v2355 = vmul.f32 %v2347, %v2354
      %v2357 = vlaneseq
      %v2358 = vshrl.u32 %v2357, 7
      %v2359 = vsub.s32 0, %v2358
      %v2360 = vrot.slane %v2340, %v2359
      %v2362 = vmul.f32 %v2355, %v2360
      %v2364 = vlaneseq
      %v2365 = vshrl.u32 %v2364, 7
      %v2366 = vsub.s32 0, %v2365
      %v2367 = vrot.slane %v2341, %v2366
      %v2369 = vadd.f32 %v2362, %v2367
      %v2370 = vadd.f32 %v2369, %v934
      %v2371 = vld [vmem:[%s27] sm:$0xf]
      %v2372 = vld [vmem:[%s27 + $0x4] sm:$0xf]
      %v2373 = vld [vmem:[%s27 + $0x8] sm:$0xf]
      %v2374 = vld [vmem:[%s27 + $0xc] sm:$0xf]
      %v2375 = vld [vmem:[%s27 + $0x10] sm:$0xf]
      %v2376 = vld [vmem:[%s27 + $0x14] sm:$0xf]
      %v2377 = vld [vmem:[%s27 + $0x18] sm:$0xf]
      %v2378 = vld [vmem:[%s27 + $0x1c] sm:$0xf]
      %v2379 = vld [vmem:[%s27 + $0x20] sm:$0xf]
      %v2380 = vld [vmem:[%s27 + $0x24] sm:$0xf]
      %v2381 = vld [vmem:[%s27 + $0x28] sm:$0xf]
      %v2382 = vld [vmem:[%s27 + $0x2c] sm:$0xf]
      %v2383 = vld [vmem:[%s27 + $0x30] sm:$0xf]
      %v2384 = vld [vmem:[%s27 + $0x34] sm:$0xf]
      %v2385 = vld [vmem:[%s27 + $0x38] sm:$0xf]
      %v2386 = vld [vmem:[%s27 + $0x3c] sm:$0xf]
      %v2387 = vld [vmem:[%s29] sm:$0x1]
      %v2388 = vld [vmem:[%s29 + $0x1] sm:$0x1]
      %v2389 = vld [vmem:[%s29 + $0x2] sm:$0x1]
      %v2390 = vld [vmem:[%s29 + $0x3] sm:$0x1]
      %v2391 = vld [vmem:[%s31] sm:$0xf]
      %v2392 = vld [vmem:[%s31 + $0x4] sm:$0xf]
      %v2393 = vld [vmem:[%s31 + $0x8] sm:$0xf]
      %v2394 = vld [vmem:[%s31 + $0xc] sm:$0xf]
      %v2395 = vld [vmem:[%s31 + $0x10] sm:$0xf]
      %v2396 = vld [vmem:[%s31 + $0x14] sm:$0xf]
      %v2397 = vld [vmem:[%s31 + $0x18] sm:$0xf]
      %v2398 = vld [vmem:[%s31 + $0x1c] sm:$0xf]
      %v2399 = vld [vmem:[%s31 + $0x20] sm:$0xf]
      %v2400 = vld [vmem:[%s31 + $0x24] sm:$0xf]
      %v2401 = vld [vmem:[%s31 + $0x28] sm:$0xf]
      %v2402 = vld [vmem:[%s31 + $0x2c] sm:$0xf]
      %v2403 = vld [vmem:[%s31 + $0x30] sm:$0xf]
      %v2404 = vld [vmem:[%s31 + $0x34] sm:$0xf]
      %v2405 = vld [vmem:[%s31 + $0x38] sm:$0xf]
      %v2406 = vld [vmem:[%s31 + $0x3c] sm:$0xf]
      %v2407 = vld [vmem:[%s33] sm:$0x1]
      %v2408 = vld [vmem:[%s33 + $0x1] sm:$0x1]
      %v2409 = vld [vmem:[%s33 + $0x2] sm:$0x1]
      %v2410 = vld [vmem:[%s33 + $0x3] sm:$0x1]
      %v2411 = vld [vmem:[%s35] sm:$0xf]
      %v2412 = vld [vmem:[%s35 + $0x4] sm:$0xf]
      %v2413 = vld [vmem:[%s35 + $0x8] sm:$0xf]
      %v2414 = vld [vmem:[%s35 + $0xc] sm:$0xf]
      %v2415 = vld [vmem:[%s35 + $0x10] sm:$0xf]
      %v2416 = vld [vmem:[%s35 + $0x14] sm:$0xf]
      %v2417 = vld [vmem:[%s35 + $0x18] sm:$0xf]
      %v2418 = vld [vmem:[%s35 + $0x1c] sm:$0xf]
      %v2419 = vld [vmem:[%s35 + $0x20] sm:$0xf]
      %v2420 = vld [vmem:[%s35 + $0x24] sm:$0xf]
      %v2421 = vld [vmem:[%s35 + $0x28] sm:$0xf]
      %v2422 = vld [vmem:[%s35 + $0x2c] sm:$0xf]
      %v2423 = vld [vmem:[%s35 + $0x30] sm:$0xf]
      %v2424 = vld [vmem:[%s35 + $0x34] sm:$0xf]
      %v2425 = vld [vmem:[%s35 + $0x38] sm:$0xf]
      %v2426 = vld [vmem:[%s35 + $0x3c] sm:$0xf]
      %v2427 = vld [vmem:[%s37] sm:$0x1]
      %v2428 = vld [vmem:[%s37 + $0x1] sm:$0x1]
      %v2429 = vld [vmem:[%s37 + $0x2] sm:$0x1]
      %v2430 = vld [vmem:[%s37 + $0x3] sm:$0x1]
      %v2431 = vld [vmem:[%s39] sm:$0xf]
      %v2432 = vld [vmem:[%s39 + $0x4] sm:$0xf]
      %v2433 = vld [vmem:[%s39 + $0x8] sm:$0xf]
      %v2434 = vld [vmem:[%s39 + $0xc] sm:$0xf]
      %v2435 = vld [vmem:[%s41] sm:$0x1]
      %v2436 = vpack.c.bf16 %v2370, %v2370
      %v2437 = vpack.c.bf16 %v935, %v935
      %v2442 = vlaneseq
      %v2443 = vshrl.u32 %v2442, 7
      %v2444 = vsub.s32 0, %v2443
      %v2445 = vrot.slane %v2387, %v2444
      %v2446 = vlaneseq
      %v2447 = vshrl.u32 %v2446, 7
      %v2448 = vsub.s32 0, %v2447
      %v2449 = vrot.slane %v2388, %v2448
      %v2450 = vlaneseq
      %v2451 = vshrl.u32 %v2450, 7
      %v2452 = vsub.s32 0, %v2451
      %v2453 = vrot.slane %v2389, %v2452
      %v2454 = vlaneseq
      %v2455 = vshrl.u32 %v2454, 7
      %v2456 = vsub.s32 0, %v2455
      %v2457 = vrot.slane %v2390, %v2456
      %v2466 = vunpack.c.l.b16 %v2371
      %v2467 = vunpack.c.l.b16 %v2372
      %v2468 = vunpack.c.l.b16 %v2373
      %v2469 = vunpack.c.l.b16 %v2374
      %v2470 = vpack.c.b16 %v2467, %v2466
      %v2471 = vpack.c.b16 %v2469, %v2468
      %v2475 = vsel %vm1039, %v2436, 0
      %2477 = vmatprep.subr.bf16.mxu0 0
      %2478 = vmatpush1.bf16.msra.mxu0 %v2470
      %2479 = vmatprep.subr.bf16.mxu0 0
      %2480 = vmatpush1.bf16.msra.mxu0 %v2471
      %2481 = vmatprep.subr.bf16.mxu0 0
      %2482 = vmatpush1.bf16.msra.mxu0 0
      %2483 = vmatprep.subr.bf16.mxu0 0
      %2484 = vmatpush1.bf16.msra.mxu0 0
      %2485 = vmatprep.subr.bf16.mxu0 0
      %2486 = vmatpush1.bf16.msra.mxu0 0
      %2487 = vmatprep.subr.bf16.mxu0 0
      %2488 = vmatpush1.bf16.msra.mxu0 0
      %2489 = vmatprep.subr.bf16.mxu0 0
      %2490 = vmatpush1.bf16.msra.mxu0 0
      %2491 = vmatprep.subr.bf16.mxu0 0
      %2492 = vmatpush1.bf16.msra.mxu0 0
      %2493 = vmatprep.subr.bf16.mxu0 0
      %2494 = vmatpush1.bf16.msra.mxu0 0
      %2495 = vmatprep.subr.bf16.mxu0 0
      %2496 = vmatpush1.bf16.msra.mxu0 0
      %2497 = vmatprep.subr.bf16.mxu0 0
      %2498 = vmatpush1.bf16.msra.mxu0 0
      %2499 = vmatprep.subr.bf16.mxu0 0
      %2500 = vmatpush1.bf16.msra.mxu0 0
      %2501 = vmatprep.subr.bf16.mxu0 0
      %2502 = vmatpush1.bf16.msra.mxu0 0
      %2503 = vmatprep.subr.bf16.mxu0 0
      %2504 = vmatpush1.bf16.msra.mxu0 0
      %2505 = vmatprep.subr.bf16.mxu0 0
      %2506 = vmatpush1.bf16.msra.mxu0 0
      %2507 = vmatprep.subr.bf16.mxu0 0
      %2508 = vmatpush1.bf16.msra.mxu0 0
      %2509 = vmatprep.mubr.bf16.mxu0 0
      %2510 = vmatmul.mubr.bf16.gmra.mrb[0].mxu0 %v2475
      %v2511 = vpop.f32.mrb[0].mxu0
      %v2512 = vadd.f32 %v2445, %v2511
      %v2513 = vpop.f32.mrb[0].mxu0
      %v2514 = vpop.f32.mrb[0].mxu0
      %v2515 = vpop.f32.mrb[0].mxu0
      %2516 = vdwg.mxu0
      %v2521 = vunpack.c.l.b16 %v2375
      %v2522 = vunpack.c.l.b16 %v2376
      %v2523 = vunpack.c.l.b16 %v2377
      %v2524 = vunpack.c.l.b16 %v2378
      %v2525 = vpack.c.b16 %v2522, %v2521
      %v2526 = vpack.c.b16 %v2524, %v2523
      %2529 = vmatprep.subr.bf16.mxu0 0
      %2530 = vmatpush1.bf16.msra.mxu0 %v2525
      %2531 = vmatprep.subr.bf16.mxu0 0
      %2532 = vmatpush1.bf16.msra.mxu0 %v2526
      %2533 = vmatprep.subr.bf16.mxu0 0
      %2534 = vmatpush1.bf16.msra.mxu0 0
      %2535 = vmatprep.subr.bf16.mxu0 0
      %2536 = vmatpush1.bf16.msra.mxu0 0
      %2537 = vmatprep.subr.bf16.mxu0 0
      %2538 = vmatpush1.bf16.msra.mxu0 0
      %2539 = vmatprep.subr.bf16.mxu0 0
      %2540 = vmatpush1.bf16.msra.mxu0 0
      %2541 = vmatprep.subr.bf16.mxu0 0
      %2542 = vmatpush1.bf16.msra.mxu0 0
      %2543 = vmatprep.subr.bf16.mxu0 0
      %2544 = vmatpush1.bf16.msra.mxu0 0
      %2545 = vmatprep.subr.bf16.mxu0 0
      %2546 = vmatpush1.bf16.msra.mxu0 0
      %2547 = vmatprep.subr.bf16.mxu0 0
      %2548 = vmatpush1.bf16.msra.mxu0 0
      %2549 = vmatprep.subr.bf16.mxu0 0
      %2550 = vmatpush1.bf16.msra.mxu0 0
      %2551 = vmatprep.subr.bf16.mxu0 0
      %2552 = vmatpush1.bf16.msra.mxu0 0
      %2553 = vmatprep.subr.bf16.mxu0 0
      %2554 = vmatpush1.bf16.msra.mxu0 0
      %2555 = vmatprep.subr.bf16.mxu0 0
      %2556 = vmatpush1.bf16.msra.mxu0 0
      %2557 = vmatprep.subr.bf16.mxu0 0
      %2558 = vmatpush1.bf16.msra.mxu0 0
      %2559 = vmatprep.subr.bf16.mxu0 0
      %2560 = vmatpush1.bf16.msra.mxu0 0
      %2561 = vmatprep.mubr.bf16.mxu0 0
      %2562 = vmatmul.mubr.bf16.gmra.mrb[0].mxu0 %v2475
      %v2563 = vpop.f32.mrb[0].mxu0
      %v2564 = vadd.f32 %v2449, %v2563
      %v2565 = vpop.f32.mrb[0].mxu0
      %v2566 = vpop.f32.mrb[0].mxu0
      %v2567 = vpop.f32.mrb[0].mxu0
      %2568 = vdwg.mxu0
      %v2573 = vunpack.c.l.b16 %v2379
      %v2574 = vunpack.c.l.b16 %v2380
      %v2575 = vunpack.c.l.b16 %v2381
      %v2576 = vunpack.c.l.b16 %v2382
      %v2577 = vpack.c.b16 %v2574, %v2573
      %v2578 = vpack.c.b16 %v2576, %v2575
      %2581 = vmatprep.subr.bf16.mxu0 0
      %2582 = vmatpush1.bf16.msra.mxu0 %v2577
      %2583 = vmatprep.subr.bf16.mxu0 0
      %2584 = vmatpush1.bf16.msra.mxu0 %v2578
      %2585 = vmatprep.subr.bf16.mxu0 0
      %2586 = vmatpush1.bf16.msra.mxu0 0
      %2587 = vmatprep.subr.bf16.mxu0 0
      %2588 = vmatpush1.bf16.msra.mxu0 0
      %2589 = vmatprep.subr.bf16.mxu0 0
      %2590 = vmatpush1.bf16.msra.mxu0 0
      %2591 = vmatprep.subr.bf16.mxu0 0
      %2592 = vmatpush1.bf16.msra.mxu0 0
      %2593 = vmatprep.subr.bf16.mxu0 0
      %2594 = vmatpush1.bf16.msra.mxu0 0
      %2595 = vmatprep.subr.bf16.mxu0 0
      %2596 = vmatpush1.bf16.msra.mxu0 0
      %2597 = vmatprep.subr.bf16.mxu0 0
      %2598 = vmatpush1.bf16.msra.mxu0 0
      %2599 = vmatprep.subr.bf16.mxu0 0
      %2600 = vmatpush1.bf16.msra.mxu0 0
      %2601 = vmatprep.subr.bf16.mxu0 0
      %2602 = vmatpush1.bf16.msra.mxu0 0
      %2603 = vmatprep.subr.bf16.mxu0 0
      %2604 = vmatpush1.bf16.msra.mxu0 0
      %2605 = vmatprep.subr.bf16.mxu0 0
      %2606 = vmatpush1.bf16.msra.mxu0 0
      %2607 = vmatprep.subr.bf16.mxu0 0
      %2608 = vmatpush1.bf16.msra.mxu0 0
      %2609 = vmatprep.subr.bf16.mxu0 0
      %2610 = vmatpush1.bf16.msra.mxu0 0
      %2611 = vmatprep.subr.bf16.mxu0 0
      %2612 = vmatpush1.bf16.msra.mxu0 0
      %2613 = vmatprep.mubr.bf16.mxu0 0
      %2614 = vmatmul.mubr.bf16.gmra.mrb[0].mxu0 %v2475
      %v2615 = vpop.f32.mrb[0].mxu0
      %v2616 = vadd.f32 %v2453, %v2615
      %v2617 = vpop.f32.mrb[0].mxu0
      %v2618 = vpop.f32.mrb[0].mxu0
      %v2619 = vpop.f32.mrb[0].mxu0
      %2620 = vdwg.mxu0
      %v2625 = vunpack.c.l.b16 %v2383
      %v2626 = vunpack.c.l.b16 %v2384
      %v2627 = vunpack.c.l.b16 %v2385
      %v2628 = vunpack.c.l.b16 %v2386
      %v2629 = vpack.c.b16 %v2626, %v2625
      %v2630 = vpack.c.b16 %v2628, %v2627
      %2633 = vmatprep.subr.bf16.mxu0 0
      %2634 = vmatpush1.bf16.msra.mxu0 %v2629
      %2635 = vmatprep.subr.bf16.mxu0 0
      %2636 = vmatpush1.bf16.msra.mxu0 %v2630
      %2637 = vmatprep.subr.bf16.mxu0 0
      %2638 = vmatpush1.bf16.msra.mxu0 0
      %2639 = vmatprep.subr.bf16.mxu0 0
      %2640 = vmatpush1.bf16.msra.mxu0 0
      %2641 = vmatprep.subr.bf16.mxu0 0
      %2642 = vmatpush1.bf16.msra.mxu0 0
      %2643 = vmatprep.subr.bf16.mxu0 0
      %2644 = vmatpush1.bf16.msra.mxu0 0
      %2645 = vmatprep.subr.bf16.mxu0 0
      %2646 = vmatpush1.bf16.msra.mxu0 0
      %2647 = vmatprep.subr.bf16.mxu0 0
      %2648 = vmatpush1.bf16.msra.mxu0 0
      %2649 = vmatprep.subr.bf16.mxu0 0
      %2650 = vmatpush1.bf16.msra.mxu0 0
      %2651 = vmatprep.subr.bf16.mxu0 0
      %2652 = vmatpush1.bf16.msra.mxu0 0
      %2653 = vmatprep.subr.bf16.mxu0 0
      %2654 = vmatpush1.bf16.msra.mxu0 0
      %2655 = vmatprep.subr.bf16.mxu0 0
      %2656 = vmatpush1.bf16.msra.mxu0 0
      %2657 = vmatprep.subr.bf16.mxu0 0
      %2658 = vmatpush1.bf16.msra.mxu0 0
      %2659 = vmatprep.subr.bf16.mxu0 0
      %2660 = vmatpush1.bf16.msra.mxu0 0
      %2661 = vmatprep.subr.bf16.mxu0 0
      %2662 = vmatpush1.bf16.msra.mxu0 0
      %2663 = vmatprep.subr.bf16.mxu0 0
      %2664 = vmatpush1.bf16.msra.mxu0 0
      %2665 = vmatprep.mubr.bf16.mxu0 0
      %2666 = vmatmul.mubr.bf16.gmra.mrb[0].mxu0 %v2475
      %v2667 = vpop.f32.mrb[0].mxu0
      %v2668 = vadd.f32 %v2457, %v2667
      %v2669 = vpop.f32.mrb[0].mxu0
      %v2670 = vpop.f32.mrb[0].mxu0
      %v2671 = vpop.f32.mrb[0].mxu0
      %2672 = vdwg.mxu0
      %v2673 = vmul.f32 %v2512, 0.35355338
      %v2674 = vmul.f32 %v2564, 0.35355338
      %v2675 = vmul.f32 %v2616, 0.35355338
      %v2676 = vmul.f32 %v2668, 0.35355338
      %v2681 = vlaneseq
      %v2682 = vshrl.u32 %v2681, 7
      %v2683 = vsub.s32 0, %v2682
      %v2684 = vrot.slane %v2407, %v2683
      %v2685 = vlaneseq
      %v2686 = vshrl.u32 %v2685, 7
      %v2687 = vsub.s32 0, %v2686
      %v2688 = vrot.slane %v2408, %v2687
      %v2689 = vlaneseq
      %v2690 = vshrl.u32 %v2689, 7
      %v2691 = vsub.s32 0, %v2690
      %v2692 = vrot.slane %v2409, %v2691
      %v2693 = vlaneseq
      %v2694 = vshrl.u32 %v2693, 7
      %v2695 = vsub.s32 0, %v2694
      %v2696 = vrot.slane %v2410, %v2695
      %v2705 = vunpack.c.l.b16 %v2391
      %v2706 = vunpack.c.l.b16 %v2392
      %v2707 = vunpack.c.l.b16 %v2393
      %v2708 = vunpack.c.l.b16 %v2394
      %v2709 = vpack.c.b16 %v2706, %v2705
      %v2710 = vpack.c.b16 %v2708, %v2707
      %v2714 = vsel %vm1039, %v2437, 0
      %2716 = vmatprep.subr.bf16.mxu0 0
      %2717 = vmatpush1.bf16.msra.mxu0 %v2709
      %2718 = vmatprep.subr.bf16.mxu0 0
      %2719 = vmatpush1.bf16.msra.mxu0 %v2710
      %2720 = vmatprep.subr.bf16.mxu0 0
      %2721 = vmatpush1.bf16.msra.mxu0 0
      %2722 = vmatprep.subr.bf16.mxu0 0
      %2723 = vmatpush1.bf16.msra.mxu0 0
      %2724 = vmatprep.subr.bf16.mxu0 0
      %2725 = vmatpush1.bf16.msra.mxu0 0
      %2726 = vmatprep.subr.bf16.mxu0 0
      %2727 = vmatpush1.bf16.msra.mxu0 0
      %2728 = vmatprep.subr.bf16.mxu0 0
      %2729 = vmatpush1.bf16.msra.mxu0 0
      %2730 = vmatprep.subr.bf16.mxu0 0
      %2731 = vmatpush1.bf16.msra.mxu0 0
      %2732 = vmatprep.subr.bf16.mxu0 0
      %2733 = vmatpush1.bf16.msra.mxu0 0
      %2734 = vmatprep.subr.bf16.mxu0 0
      %2735 = vmatpush1.bf16.msra.mxu0 0
      %2736 = vmatprep.subr.bf16.mxu0 0
      %2737 = vmatpush1.bf16.msra.mxu0 0
      %2738 = vmatprep.subr.bf16.mxu0 0
      %2739 = vmatpush1.bf16.msra.mxu0 0
      %2740 = vmatprep.subr.bf16.mxu0 0
      %2741 = vmatpush1.bf16.msra.mxu0 0
      %2742 = vmatprep.subr.bf16.mxu0 0
      %2743 = vmatpush1.bf16.msra.mxu0 0
      %2744 = vmatprep.subr.bf16.mxu0 0
      %2745 = vmatpush1.bf16.msra.mxu0 0
      %2746 = vmatprep.subr.bf16.mxu0 0
      %2747 = vmatpush1.bf16.msra.mxu0 0
      %2748 = vmatprep.mubr.bf16.mxu0 0
      %2749 = vmatmul.mubr.bf16.gmra.mrb[0].mxu0 %v2714
      %v2750 = vpop.f32.mrb[0].mxu0
      %v2751 = vadd.f32 %v2684, %v2750
      %v2752 = vpop.f32.mrb[0].mxu0
      %v2753 = vpop.f32.mrb[0].mxu0
      %v2754 = vpop.f32.mrb[0].mxu0
      %2755 = vdwg.mxu0
      %v2760 = vunpack.c.l.b16 %v2395
      %v2761 = vunpack.c.l.b16 %v2396
      %v2762 = vunpack.c.l.b16 %v2397
      %v2763 = vunpack.c.l.b16 %v2398
      %v2764 = vpack.c.b16 %v2761, %v2760
      %v2765 = vpack.c.b16 %v2763, %v2762
      %2768 = vmatprep.subr.bf16.mxu0 0
      %2769 = vmatpush1.bf16.msra.mxu0 %v2764
      %2770 = vmatprep.subr.bf16.mxu0 0
      %2771 = vmatpush1.bf16.msra.mxu0 %v2765
      %2772 = vmatprep.subr.bf16.mxu0 0
      %2773 = vmatpush1.bf16.msra.mxu0 0
      %2774 = vmatprep.subr.bf16.mxu0 0
      %2775 = vmatpush1.bf16.msra.mxu0 0
      %2776 = vmatprep.subr.bf16.mxu0 0
      %2777 = vmatpush1.bf16.msra.mxu0 0
      %2778 = vmatprep.subr.bf16.mxu0 0
      %2779 = vmatpush1.bf16.msra.mxu0 0
      %2780 = vmatprep.subr.bf16.mxu0 0
      %2781 = vmatpush1.bf16.msra.mxu0 0
      %2782 = vmatprep.subr.bf16.mxu0 0
      %2783 = vmatpush1.bf16.msra.mxu0 0
      %2784 = vmatprep.subr.bf16.mxu0 0
      %2785 = vmatpush1.bf16.msra.mxu0 0
      %2786 = vmatprep.subr.bf16.mxu0 0
      %2787 = vmatpush1.bf16.msra.mxu0 0
      %2788 = vmatprep.subr.bf16.mxu0 0
      %2789 = vmatpush1.bf16.msra.mxu0 0
      %2790 = vmatprep.subr.bf16.mxu0 0
      %2791 = vmatpush1.bf16.msra.mxu0 0
      %2792 = vmatprep.subr.bf16.mxu0 0
      %2793 = vmatpush1.bf16.msra.mxu0 0
      %2794 = vmatprep.subr.bf16.mxu0 0
      %2795 = vmatpush1.bf16.msra.mxu0 0
      %2796 = vmatprep.subr.bf16.mxu0 0
      %2797 = vmatpush1.bf16.msra.mxu0 0
      %2798 = vmatprep.subr.bf16.mxu0 0
      %2799 = vmatpush1.bf16.msra.mxu0 0
      %2800 = vmatprep.mubr.bf16.mxu0 0
      %2801 = vmatmul.mubr.bf16.gmra.mrb[0].mxu0 %v2714
      %v2802 = vpop.f32.mrb[0].mxu0
      %v2803 = vadd.f32 %v2688, %v2802
      %v2804 = vpop.f32.mrb[0].mxu0
      %v2805 = vpop.f32.mrb[0].mxu0
      %v2806 = vpop.f32.mrb[0].mxu0
      %2807 = vdwg.mxu0
      %v2812 = vunpack.c.l.b16 %v2399
      %v2813 = vunpack.c.l.b16 %v2400
      %v2814 = vunpack.c.l.b16 %v2401
      %v2815 = vunpack.c.l.b16 %v2402
      %v2816 = vpack.c.b16 %v2813, %v2812
      %v2817 = vpack.c.b16 %v2815, %v2814
      %2820 = vmatprep.subr.bf16.mxu0 0
      %2821 = vmatpush1.bf16.msra.mxu0 %v2816
      %2822 = vmatprep.subr.bf16.mxu0 0
      %2823 = vmatpush1.bf16.msra.mxu0 %v2817
      %2824 = vmatprep.subr.bf16.mxu0 0
      %2825 = vmatpush1.bf16.msra.mxu0 0
      %2826 = vmatprep.subr.bf16.mxu0 0
      %2827 = vmatpush1.bf16.msra.mxu0 0
      %2828 = vmatprep.subr.bf16.mxu0 0
      %2829 = vmatpush1.bf16.msra.mxu0 0
      %2830 = vmatprep.subr.bf16.mxu0 0
      %2831 = vmatpush1.bf16.msra.mxu0 0
      %2832 = vmatprep.subr.bf16.mxu0 0
      %2833 = vmatpush1.bf16.msra.mxu0 0
      %2834 = vmatprep.subr.bf16.mxu0 0
      %2835 = vmatpush1.bf16.msra.mxu0 0
      %2836 = vmatprep.subr.bf16.mxu0 0
      %2837 = vmatpush1.bf16.msra.mxu0 0
      %2838 = vmatprep.subr.bf16.mxu0 0
      %2839 = vmatpush1.bf16.msra.mxu0 0
      %2840 = vmatprep.subr.bf16.mxu0 0
      %2841 = vmatpush1.bf16.msra.mxu0 0
      %2842 = vmatprep.subr.bf16.mxu0 0
      %2843 = vmatpush1.bf16.msra.mxu0 0
      %2844 = vmatprep.subr.bf16.mxu0 0
      %2845 = vmatpush1.bf16.msra.mxu0 0
      %2846 = vmatprep.subr.bf16.mxu0 0
      %2847 = vmatpush1.bf16.msra.mxu0 0
      %2848 = vmatprep.subr.bf16.mxu0 0
      %2849 = vmatpush1.bf16.msra.mxu0 0
      %2850 = vmatprep.subr.bf16.mxu0 0
      %2851 = vmatpush1.bf16.msra.mxu0 0
      %2852 = vmatprep.mubr.bf16.mxu0 0
      %2853 = vmatmul.mubr.bf16.gmra.mrb[0].mxu0 %v2714
      %v2854 = vpop.f32.mrb[0].mxu0
      %v2855 = vadd.f32 %v2692, %v2854
      %v2856 = vpop.f32.mrb[0].mxu0
      %v2857 = vpop.f32.mrb[0].mxu0
      %v2858 = vpop.f32.mrb[0].mxu0
      %2859 = vdwg.mxu0
      %v2864 = vunpack.c.l.b16 %v2403
      %v2865 = vunpack.c.l.b16 %v2404
      %v2866 = vunpack.c.l.b16 %v2405
      %v2867 = vunpack.c.l.b16 %v2406
      %v2868 = vpack.c.b16 %v2865, %v2864
      %v2869 = vpack.c.b16 %v2867, %v2866
      %2872 = vmatprep.subr.bf16.mxu0 0
      %2873 = vmatpush1.bf16.msra.mxu0 %v2868
      %2874 = vmatprep.subr.bf16.mxu0 0
      %2875 = vmatpush1.bf16.msra.mxu0 %v2869
      %2876 = vmatprep.subr.bf16.mxu0 0
      %2877 = vmatpush1.bf16.msra.mxu0 0
      %2878 = vmatprep.subr.bf16.mxu0 0
      %2879 = vmatpush1.bf16.msra.mxu0 0
      %2880 = vmatprep.subr.bf16.mxu0 0
      %2881 = vmatpush1.bf16.msra.mxu0 0
      %2882 = vmatprep.subr.bf16.mxu0 0
      %2883 = vmatpush1.bf16.msra.mxu0 0
      %2884 = vmatprep.subr.bf16.mxu0 0
      %2885 = vmatpush1.bf16.msra.mxu0 0
      %2886 = vmatprep.subr.bf16.mxu0 0
      %2887 = vmatpush1.bf16.msra.mxu0 0
      %2888 = vmatprep.subr.bf16.mxu0 0
      %2889 = vmatpush1.bf16.msra.mxu0 0
      %2890 = vmatprep.subr.bf16.mxu0 0
      %2891 = vmatpush1.bf16.msra.mxu0 0
      %2892 = vmatprep.subr.bf16.mxu0 0
      %2893 = vmatpush1.bf16.msra.mxu0 0
      %2894 = vmatprep.subr.bf16.mxu0 0
      %2895 = vmatpush1.bf16.msra.mxu0 0
      %2896 = vmatprep.subr.bf16.mxu0 0
      %2897 = vmatpush1.bf16.msra.mxu0 0
      %2898 = vmatprep.subr.bf16.mxu0 0
      %2899 = vmatpush1.bf16.msra.mxu0 0
      %2900 = vmatprep.subr.bf16.mxu0 0
      %2901 = vmatpush1.bf16.msra.mxu0 0
      %2902 = vmatprep.subr.bf16.mxu0 0
      %2903 = vmatpush1.bf16.msra.mxu0 0
      %2904 = vmatprep.mubr.bf16.mxu0 0
      %2905 = vmatmul.mubr.bf16.gmra.mrb[0].mxu0 %v2714
      %v2906 = vpop.f32.mrb[0].mxu0
      %v2907 = vadd.f32 %v2696, %v2906
      %v2908 = vpop.f32.mrb[0].mxu0
      %v2909 = vpop.f32.mrb[0].mxu0
      %v2910 = vpop.f32.mrb[0].mxu0
      %2911 = vdwg.mxu0
      %v2916 = vlaneseq
      %v2917 = vshrl.u32 %v2916, 7
      %v2918 = vsub.s32 0, %v2917
      %v2919 = vrot.slane %v2427, %v2918
      %v2920 = vlaneseq
      %v2921 = vshrl.u32 %v2920, 7
      %v2922 = vsub.s32 0, %v2921
      %v2923 = vrot.slane %v2428, %v2922
      %v2924 = vlaneseq
      %v2925 = vshrl.u32 %v2924, 7
      %v2926 = vsub.s32 0, %v2925
      %v2927 = vrot.slane %v2429, %v2926
      %v2928 = vlaneseq
      %v2929 = vshrl.u32 %v2928, 7
      %v2930 = vsub.s32 0, %v2929
      %v2931 = vrot.slane %v2430, %v2930
      %v2940 = vunpack.c.l.b16 %v2411
      %v2941 = vunpack.c.l.b16 %v2412
      %v2942 = vunpack.c.l.b16 %v2413
      %v2943 = vunpack.c.l.b16 %v2414
      %v2944 = vpack.c.b16 %v2941, %v2940
      %v2945 = vpack.c.b16 %v2943, %v2942
      %2948 = vmatprep.subr.bf16.mxu0 0
      %2949 = vmatpush1.bf16.msra.mxu0 %v2944
      %2950 = vmatprep.subr.bf16.mxu0 0
      %2951 = vmatpush1.bf16.msra.mxu0 %v2945
      %2952 = vmatprep.subr.bf16.mxu0 0
      %2953 = vmatpush1.bf16.msra.mxu0 0
      %2954 = vmatprep.subr.bf16.mxu0 0
      %2955 = vmatpush1.bf16.msra.mxu0 0
      %2956 = vmatprep.subr.bf16.mxu0 0
      %2957 = vmatpush1.bf16.msra.mxu0 0
      %2958 = vmatprep.subr.bf16.mxu0 0
      %2959 = vmatpush1.bf16.msra.mxu0 0
      %2960 = vmatprep.subr.bf16.mxu0 0
      %2961 = vmatpush1.bf16.msra.mxu0 0
      %2962 = vmatprep.subr.bf16.mxu0 0
      %2963 = vmatpush1.bf16.msra.mxu0 0
      %2964 = vmatprep.subr.bf16.mxu0 0
      %2965 = vmatpush1.bf16.msra.mxu0 0
      %2966 = vmatprep.subr.bf16.mxu0 0
      %2967 = vmatpush1.bf16.msra.mxu0 0
      %2968 = vmatprep.subr.bf16.mxu0 0
      %2969 = vmatpush1.bf16.msra.mxu0 0
      %2970 = vmatprep.subr.bf16.mxu0 0
      %2971 = vmatpush1.bf16.msra.mxu0 0
      %2972 = vmatprep.subr.bf16.mxu0 0
      %2973 = vmatpush1.bf16.msra.mxu0 0
      %2974 = vmatprep.subr.bf16.mxu0 0
      %2975 = vmatpush1.bf16.msra.mxu0 0
      %2976 = vmatprep.subr.bf16.mxu0 0
      %2977 = vmatpush1.bf16.msra.mxu0 0
      %2978 = vmatprep.subr.bf16.mxu0 0
      %2979 = vmatpush1.bf16.msra.mxu0 0
      %2980 = vmatprep.mubr.bf16.mxu0 0
      %2981 = vmatmul.mubr.bf16.gmra.mrb[0].mxu0 %v2714
      %v2982 = vpop.f32.mrb[0].mxu0
      %v2983 = vadd.f32 %v2919, %v2982
      %v2984 = vpop.f32.mrb[0].mxu0
      %v2985 = vpop.f32.mrb[0].mxu0
      %v2986 = vpop.f32.mrb[0].mxu0
      %2987 = vdwg.mxu0
      %v2992 = vunpack.c.l.b16 %v2415
      %v2993 = vunpack.c.l.b16 %v2416
      %v2994 = vunpack.c.l.b16 %v2417
      %v2995 = vunpack.c.l.b16 %v2418
      %v2996 = vpack.c.b16 %v2993, %v2992
      %v2997 = vpack.c.b16 %v2995, %v2994
      %3000 = vmatprep.subr.bf16.mxu0 0
      %3001 = vmatpush1.bf16.msra.mxu0 %v2996
      %3002 = vmatprep.subr.bf16.mxu0 0
      %3003 = vmatpush1.bf16.msra.mxu0 %v2997
      %3004 = vmatprep.subr.bf16.mxu0 0
      %3005 = vmatpush1.bf16.msra.mxu0 0
      %3006 = vmatprep.subr.bf16.mxu0 0
      %3007 = vmatpush1.bf16.msra.mxu0 0
      %3008 = vmatprep.subr.bf16.mxu0 0
      %3009 = vmatpush1.bf16.msra.mxu0 0
      %3010 = vmatprep.subr.bf16.mxu0 0
      %3011 = vmatpush1.bf16.msra.mxu0 0
      %3012 = vmatprep.subr.bf16.mxu0 0
      %3013 = vmatpush1.bf16.msra.mxu0 0
      %3014 = vmatprep.subr.bf16.mxu0 0
      %3015 = vmatpush1.bf16.msra.mxu0 0
      %3016 = vmatprep.subr.bf16.mxu0 0
      %3017 = vmatpush1.bf16.msra.mxu0 0
      %3018 = vmatprep.subr.bf16.mxu0 0
      %3019 = vmatpush1.bf16.msra.mxu0 0
      %3020 = vmatprep.subr.bf16.mxu0 0
      %3021 = vmatpush1.bf16.msra.mxu0 0
      %3022 = vmatprep.subr.bf16.mxu0 0
      %3023 = vmatpush1.bf16.msra.mxu0 0
      %3024 = vmatprep.subr.bf16.mxu0 0
      %3025 = vmatpush1.bf16.msra.mxu0 0
      %3026 = vmatprep.subr.bf16.mxu0 0
      %3027 = vmatpush1.bf16.msra.mxu0 0
      %3028 = vmatprep.subr.bf16.mxu0 0
      %3029 = vmatpush1.bf16.msra.mxu0 0
      %3030 = vmatprep.subr.bf16.mxu0 0
      %3031 = vmatpush1.bf16.msra.mxu0 0
      %3032 = vmatprep.mubr.bf16.mxu0 0
      %3033 = vmatmul.mubr.bf16.gmra.mrb[0].mxu0 %v2714
      %v3034 = vpop.f32.mrb[0].mxu0
      %v3035 = vadd.f32 %v2923, %v3034
      %v3036 = vpop.f32.mrb[0].mxu0
      %v3037 = vpop.f32.mrb[0].mxu0
      %v3038 = vpop.f32.mrb[0].mxu0
      %3039 = vdwg.mxu0
      %v3044 = vunpack.c.l.b16 %v2419
      %v3045 = vunpack.c.l.b16 %v2420
      %v3046 = vunpack.c.l.b16 %v2421
      %v3047 = vunpack.c.l.b16 %v2422
      %v3048 = vpack.c.b16 %v3045, %v3044
      %v3049 = vpack.c.b16 %v3047, %v3046
      %3052 = vmatprep.subr.bf16.mxu0 0
      %3053 = vmatpush1.bf16.msra.mxu0 %v3048
      %3054 = vmatprep.subr.bf16.mxu0 0
      %3055 = vmatpush1.bf16.msra.mxu0 %v3049
      %3056 = vmatprep.subr.bf16.mxu0 0
      %3057 = vmatpush1.bf16.msra.mxu0 0
      %3058 = vmatprep.subr.bf16.mxu0 0
      %3059 = vmatpush1.bf16.msra.mxu0 0
      %3060 = vmatprep.subr.bf16.mxu0 0
      %3061 = vmatpush1.bf16.msra.mxu0 0
      %3062 = vmatprep.subr.bf16.mxu0 0
      %3063 = vmatpush1.bf16.msra.mxu0 0
      %3064 = vmatprep.subr.bf16.mxu0 0
      %3065 = vmatpush1.bf16.msra.mxu0 0
      %3066 = vmatprep.subr.bf16.mxu0 0
      %3067 = vmatpush1.bf16.msra.mxu0 0
      %3068 = vmatprep.subr.bf16.mxu0 0
      %3069 = vmatpush1.bf16.msra.mxu0 0
      %3070 = vmatprep.subr.bf16.mxu0 0
      %3071 = vmatpush1.bf16.msra.mxu0 0
      %3072 = vmatprep.subr.bf16.mxu0 0
      %3073 = vmatpush1.bf16.msra.mxu0 0
      %3074 = vmatprep.subr.bf16.mxu0 0
      %3075 = vmatpush1.bf16.msra.mxu0 0
      %3076 = vmatprep.subr.bf16.mxu0 0
      %3077 = vmatpush1.bf16.msra.mxu0 0
      %3078 = vmatprep.subr.bf16.mxu0 0
      %3079 = vmatpush1.bf16.msra.mxu0 0
      %3080 = vmatprep.subr.bf16.mxu0 0
      %3081 = vmatpush1.bf16.msra.mxu0 0
      %3082 = vmatprep.subr.bf16.mxu0 0
      %3083 = vmatpush1.bf16.msra.mxu0 0
      %3084 = vmatprep.mubr.bf16.mxu0 0
      %3085 = vmatmul.mubr.bf16.gmra.mrb[0].mxu0 %v2714
      %v3086 = vpop.f32.mrb[0].mxu0
      %v3087 = vadd.f32 %v2927, %v3086
      %v3088 = vpop.f32.mrb[0].mxu0
      %v3089 = vpop.f32.mrb[0].mxu0
      %v3090 = vpop.f32.mrb[0].mxu0
      %3091 = vdwg.mxu0
      %v3096 = vunpack.c.l.b16 %v2423
      %v3097 = vunpack.c.l.b16 %v2424
      %v3098 = vunpack.c.l.b16 %v2425
      %v3099 = vunpack.c.l.b16 %v2426
      %v3100 = vpack.c.b16 %v3097, %v3096
      %v3101 = vpack.c.b16 %v3099, %v3098
      %3104 = vmatprep.subr.bf16.mxu0 0
      %3105 = vmatpush1.bf16.msra.mxu0 %v3100
      %3106 = vmatprep.subr.bf16.mxu0 0
      %3107 = vmatpush1.bf16.msra.mxu0 %v3101
      %3108 = vmatprep.subr.bf16.mxu0 0
      %3109 = vmatpush1.bf16.msra.mxu0 0
      %3110 = vmatprep.subr.bf16.mxu0 0
      %3111 = vmatpush1.bf16.msra.mxu0 0
      %3112 = vmatprep.subr.bf16.mxu0 0
      %3113 = vmatpush1.bf16.msra.mxu0 0
      %3114 = vmatprep.subr.bf16.mxu0 0
      %3115 = vmatpush1.bf16.msra.mxu0 0
      %3116 = vmatprep.subr.bf16.mxu0 0
      %3117 = vmatpush1.bf16.msra.mxu0 0
      %3118 = vmatprep.subr.bf16.mxu0 0
      %3119 = vmatpush1.bf16.msra.mxu0 0
      %3120 = vmatprep.subr.bf16.mxu0 0
      %3121 = vmatpush1.bf16.msra.mxu0 0
      %3122 = vmatprep.subr.bf16.mxu0 0
      %3123 = vmatpush1.bf16.msra.mxu0 0
      %3124 = vmatprep.subr.bf16.mxu0 0
      %3125 = vmatpush1.bf16.msra.mxu0 0
      %3126 = vmatprep.subr.bf16.mxu0 0
      %3127 = vmatpush1.bf16.msra.mxu0 0
      %3128 = vmatprep.subr.bf16.mxu0 0
      %3129 = vmatpush1.bf16.msra.mxu0 0
      %3130 = vmatprep.subr.bf16.mxu0 0
      %3131 = vmatpush1.bf16.msra.mxu0 0
      %3132 = vmatprep.subr.bf16.mxu0 0
      %3133 = vmatpush1.bf16.msra.mxu0 0
      %3134 = vmatprep.subr.bf16.mxu0 0
      %3135 = vmatpush1.bf16.msra.mxu0 0
      %3136 = vmatprep.mubr.bf16.mxu0 0
      %3137 = vmatmul.mubr.bf16.gmra.mrb[0].mxu0 %v2714
      %v3138 = vpop.f32.mrb[0].mxu0
      %v3139 = vadd.f32 %v2931, %v3138
      %v3140 = vpop.f32.mrb[0].mxu0
      %v3141 = vpop.f32.mrb[0].mxu0
      %v3142 = vpop.f32.mrb[0].mxu0
      %3143 = vdwg.mxu0
      %v3144 = vpack.c.bf16 %v2673, %v2673
      %v3145 = vpack.c.bf16 %v2674, %v2674
      %v3146 = vpack.c.bf16 %v2675, %v2675
      %v3147 = vpack.c.bf16 %v2676, %v2676
      %v3148 = vpack.c.bf16 %v2751, %v2751
      %v3149 = vpack.c.bf16 %v2803, %v2803
      %v3150 = vpack.c.bf16 %v2855, %v2855
      %v3151 = vpack.c.bf16 %v2907, %v2907
      %v3153 = vsel %vm1715, %v3144, 0
      %v3156 = vsel %vm1715, %v3148, 0
      %3158 = vmatprep.subr.bf16.mxu0 0
      %3159 = vmatpush1.bf16.xpose.msra.mxu0 %v3156
      %3160 = vmatprep.subr.bf16.mxu0 0
      %3161 = vmatpush1.bf16.xpose.msra.mxu0 0
      %3162 = vmatprep.subr.bf16.mxu0 0
      %3163 = vmatpush1.bf16.xpose.msra.mxu0 0
      %3164 = vmatprep.subr.bf16.mxu0 0
      %3165 = vmatpush1.bf16.xpose.msra.mxu0 0
      %3166 = vmatprep.subr.bf16.mxu0 0
      %3167 = vmatpush1.bf16.xpose.msra.mxu0 0
      %3168 = vmatprep.subr.bf16.mxu0 0
      %3169 = vmatpush1.bf16.xpose.msra.mxu0 0
      %3170 = vmatprep.subr.bf16.mxu0 0
      %3171 = vmatpush1.bf16.xpose.msra.mxu0 0
      %3172 = vmatprep.subr.bf16.mxu0 0
      %3173 = vmatpush1.bf16.xpose.msra.mxu0 0
      %3174 = vmatprep.subr.bf16.mxu0 0
      %3175 = vmatpush1.bf16.xpose.msra.mxu0 0
      %3176 = vmatprep.subr.bf16.mxu0 0
      %3177 = vmatpush1.bf16.xpose.msra.mxu0 0
      %3178 = vmatprep.subr.bf16.mxu0 0
      %3179 = vmatpush1.bf16.xpose.msra.mxu0 0
      %3180 = vmatprep.subr.bf16.mxu0 0
      %3181 = vmatpush1.bf16.xpose.msra.mxu0 0
      %3182 = vmatprep.subr.bf16.mxu0 0
      %3183 = vmatpush1.bf16.xpose.msra.mxu0 0
      %3184 = vmatprep.subr.bf16.mxu0 0
      %3185 = vmatpush1.bf16.xpose.msra.mxu0 0
      %3186 = vmatprep.subr.bf16.mxu0 0
      %3187 = vmatpush1.bf16.xpose.msra.mxu0 0
      %3188 = vmatprep.subr.bf16.mxu0 0
      %3189 = vmatpush1.bf16.xpose.msra.mxu0 0
      %3190 = vmatprep.mubr.bf16.mxu0 0
      %3191 = vmatmul.mubr.bf16.gmra.mrb[0].mxu0 %v3153
      %v3192 = vpop.f32.mrb[0].mxu0
      %v3193 = vadd.f32 0.0, %v3192
      %v3194 = vpop.f32.mrb[0].mxu0
      %v3195 = vpop.f32.mrb[0].mxu0
      %v3196 = vpop.f32.mrb[0].mxu0
      %3197 = vdwg.mxu0
      %v3199 = vsel %vm1715, %v3145, 0
      %v3202 = vsel %vm1715, %v3149, 0
      %3204 = vmatprep.subr.bf16.mxu0 0
      %3205 = vmatpush1.bf16.xpose.msra.mxu0 %v3202
      %3206 = vmatprep.subr.bf16.mxu0 0
      %3207 = vmatpush1.bf16.xpose.msra.mxu0 0
      %3208 = vmatprep.subr.bf16.mxu0 0
      %3209 = vmatpush1.bf16.xpose.msra.mxu0 0
      %3210 = vmatprep.subr.bf16.mxu0 0
      %3211 = vmatpush1.bf16.xpose.msra.mxu0 0
      %3212 = vmatprep.subr.bf16.mxu0 0
      %3213 = vmatpush1.bf16.xpose.msra.mxu0 0
      %3214 = vmatprep.subr.bf16.mxu0 0
      %3215 = vmatpush1.bf16.xpose.msra.mxu0 0
      %3216 = vmatprep.subr.bf16.mxu0 0
      %3217 = vmatpush1.bf16.xpose.msra.mxu0 0
      %3218 = vmatprep.subr.bf16.mxu0 0
      %3219 = vmatpush1.bf16.xpose.msra.mxu0 0
      %3220 = vmatprep.subr.bf16.mxu0 0
      %3221 = vmatpush1.bf16.xpose.msra.mxu0 0
      %3222 = vmatprep.subr.bf16.mxu0 0
      %3223 = vmatpush1.bf16.xpose.msra.mxu0 0
      %3224 = vmatprep.subr.bf16.mxu0 0
      %3225 = vmatpush1.bf16.xpose.msra.mxu0 0
      %3226 = vmatprep.subr.bf16.mxu0 0
      %3227 = vmatpush1.bf16.xpose.msra.mxu0 0
      %3228 = vmatprep.subr.bf16.mxu0 0
      %3229 = vmatpush1.bf16.xpose.msra.mxu0 0
      %3230 = vmatprep.subr.bf16.mxu0 0
      %3231 = vmatpush1.bf16.xpose.msra.mxu0 0
      %3232 = vmatprep.subr.bf16.mxu0 0
      %3233 = vmatpush1.bf16.xpose.msra.mxu0 0
      %3234 = vmatprep.subr.bf16.mxu0 0
      %3235 = vmatpush1.bf16.xpose.msra.mxu0 0
      %3236 = vmatprep.mubr.bf16.mxu0 0
      %3237 = vmatmul.mubr.bf16.gmra.mrb[0].mxu0 %v3199
      %v3238 = vpop.f32.mrb[0].mxu0
      %v3239 = vadd.f32 0.0, %v3238
      %v3240 = vpop.f32.mrb[0].mxu0
      %v3241 = vpop.f32.mrb[0].mxu0
      %v3242 = vpop.f32.mrb[0].mxu0
      %3243 = vdwg.mxu0
      %v3245 = vsel %vm1715, %v3146, 0
      %v3248 = vsel %vm1715, %v3150, 0
      %3250 = vmatprep.subr.bf16.mxu0 0
      %3251 = vmatpush1.bf16.xpose.msra.mxu0 %v3248
      %3252 = vmatprep.subr.bf16.mxu0 0
      %3253 = vmatpush1.bf16.xpose.msra.mxu0 0
      %3254 = vmatprep.subr.bf16.mxu0 0
      %3255 = vmatpush1.bf16.xpose.msra.mxu0 0
      %3256 = vmatprep.subr.bf16.mxu0 0
      %3257 = vmatpush1.bf16.xpose.msra.mxu0 0
      %3258 = vmatprep.subr.bf16.mxu0 0
      %3259 = vmatpush1.bf16.xpose.msra.mxu0 0
      %3260 = vmatprep.subr.bf16.mxu0 0
      %3261 = vmatpush1.bf16.xpose.msra.mxu0 0
      %3262 = vmatprep.subr.bf16.mxu0 0
      %3263 = vmatpush1.bf16.xpose.msra.mxu0 0
      %3264 = vmatprep.subr.bf16.mxu0 0
      %3265 = vmatpush1.bf16.xpose.msra.mxu0 0
      %3266 = vmatprep.subr.bf16.mxu0 0
      %3267 = vmatpush1.bf16.xpose.msra.mxu0 0
      %3268 = vmatprep.subr.bf16.mxu0 0
      %3269 = vmatpush1.bf16.xpose.msra.mxu0 0
      %3270 = vmatprep.subr.bf16.mxu0 0
      %3271 = vmatpush1.bf16.xpose.msra.mxu0 0
      %3272 = vmatprep.subr.bf16.mxu0 0
      %3273 = vmatpush1.bf16.xpose.msra.mxu0 0
      %3274 = vmatprep.subr.bf16.mxu0 0
      %3275 = vmatpush1.bf16.xpose.msra.mxu0 0
      %3276 = vmatprep.subr.bf16.mxu0 0
      %3277 = vmatpush1.bf16.xpose.msra.mxu0 0
      %3278 = vmatprep.subr.bf16.mxu0 0
      %3279 = vmatpush1.bf16.xpose.msra.mxu0 0
      %3280 = vmatprep.subr.bf16.mxu0 0
      %3281 = vmatpush1.bf16.xpose.msra.mxu0 0
      %3282 = vmatprep.mubr.bf16.mxu0 0
      %3283 = vmatmul.mubr.bf16.gmra.mrb[0].mxu0 %v3245
      %v3284 = vpop.f32.mrb[0].mxu0
      %v3285 = vadd.f32 0.0, %v3284
      %v3286 = vpop.f32.mrb[0].mxu0
      %v3287 = vpop.f32.mrb[0].mxu0
      %v3288 = vpop.f32.mrb[0].mxu0
      %3289 = vdwg.mxu0
      %v3291 = vsel %vm1715, %v3147, 0
      %v3294 = vsel %vm1715, %v3151, 0
      %3296 = vmatprep.subr.bf16.mxu0 0
      %3297 = vmatpush1.bf16.xpose.msra.mxu0 %v3294
      %3298 = vmatprep.subr.bf16.mxu0 0
      %3299 = vmatpush1.bf16.xpose.msra.mxu0 0
      %3300 = vmatprep.subr.bf16.mxu0 0
      %3301 = vmatpush1.bf16.xpose.msra.mxu0 0
      %3302 = vmatprep.subr.bf16.mxu0 0
      %3303 = vmatpush1.bf16.xpose.msra.mxu0 0
      %3304 = vmatprep.subr.bf16.mxu0 0
      %3305 = vmatpush1.bf16.xpose.msra.mxu0 0
      %3306 = vmatprep.subr.bf16.mxu0 0
      %3307 = vmatpush1.bf16.xpose.msra.mxu0 0
      %3308 = vmatprep.subr.bf16.mxu0 0
      %3309 = vmatpush1.bf16.xpose.msra.mxu0 0
      %3310 = vmatprep.subr.bf16.mxu0 0
      %3311 = vmatpush1.bf16.xpose.msra.mxu0 0
      %3312 = vmatprep.subr.bf16.mxu0 0
      %3313 = vmatpush1.bf16.xpose.msra.mxu0 0
      %3314 = vmatprep.subr.bf16.mxu0 0
      %3315 = vmatpush1.bf16.xpose.msra.mxu0 0
      %3316 = vmatprep.subr.bf16.mxu0 0
      %3317 = vmatpush1.bf16.xpose.msra.mxu0 0
      %3318 = vmatprep.subr.bf16.mxu0 0
      %3319 = vmatpush1.bf16.xpose.msra.mxu0 0
      %3320 = vmatprep.subr.bf16.mxu0 0
      %3321 = vmatpush1.bf16.xpose.msra.mxu0 0
      %3322 = vmatprep.subr.bf16.mxu0 0
      %3323 = vmatpush1.bf16.xpose.msra.mxu0 0
      %3324 = vmatprep.subr.bf16.mxu0 0
      %3325 = vmatpush1.bf16.xpose.msra.mxu0 0
      %3326 = vmatprep.subr.bf16.mxu0 0
      %3327 = vmatpush1.bf16.xpose.msra.mxu0 0
      %3328 = vmatprep.mubr.bf16.mxu0 0
      %3329 = vmatmul.mubr.bf16.gmra.mrb[0].mxu0 %v3291
      %v3330 = vpop.f32.mrb[0].mxu0
      %v3331 = vadd.f32 0.0, %v3330
      %v3332 = vpop.f32.mrb[0].mxu0
      %v3333 = vpop.f32.mrb[0].mxu0
      %v3334 = vpop.f32.mrb[0].mxu0
      %3335 = vdwg.mxu0
      %v3336 = vsel %vm1715, %v3193, -inf
      %3337 = vmax.xlane.f32.xlu0 %v3336
      %v3338 = vpop.xlane.xlu0 %3337
      %v3339 = vsel %vm1715, %v3239, -inf
      %3340 = vmax.xlane.f32.xlu0 %v3339
      %v3341 = vpop.xlane.xlu0 %3340
      %v3342 = vsel %vm1715, %v3285, -inf
      %3343 = vmax.xlane.f32.xlu0 %v3342
      %v3344 = vpop.xlane.xlu0 %3343
      %v3345 = vsel %vm1715, %v3331, -inf
      %3346 = vmax.xlane.f32.xlu0 %v3345
      %v3347 = vpop.xlane.xlu0 %3346
      %v3348 = vsub.f32 %v3193, %v3338
      %v3349 = vsub.f32 %v3239, %v3341
      %v3350 = vsub.f32 %v3285, %v3344
      %v3351 = vsub.f32 %v3331, %v3347
      %v3352 = vmul.f32 %v3348, 1.442695
      %v3353 = vpow.pop %v3352
      %v3354 = vmul.f32 %v3349, 1.442695
      %v3355 = vpow.pop %v3354
      %v3356 = vmul.f32 %v3350, 1.442695
      %v3357 = vpow.pop %v3356
      %v3358 = vmul.f32 %v3351, 1.442695
      %v3359 = vpow.pop %v3358
      %v3360 = vsel %vm1715, %v3353, 0.0
      %3361 = vadd.xlane.f32.xlu0 %v3360
      %v3362 = vpop.xlane.xlu0 %3361
      %v3363 = vsel %vm1715, %v3355, 0.0
      %3364 = vadd.xlane.f32.xlu0 %v3363
      %v3365 = vpop.xlane.xlu0 %3364
      %v3366 = vsel %vm1715, %v3357, 0.0
      %3367 = vadd.xlane.f32.xlu0 %v3366
      %v3368 = vpop.xlane.xlu0 %3367
      %v3369 = vsel %vm1715, %v3359, 0.0
      %3370 = vadd.xlane.f32.xlu0 %v3369
      %v3371 = vpop.xlane.xlu0 %3370
      %v3372 = vrcp.pop %v3362
      %v3373 = vrcp.pop %v3365
      %v3374 = vrcp.pop %v3368
      %v3375 = vrcp.pop %v3371
      %v3376 = vmul.f32 %v3353, %v3372
      %v3377 = vmul.f32 %v3355, %v3373
      %v3378 = vmul.f32 %v3357, %v3374
      %v3379 = vmul.f32 %v3359, %v3375
      %v3380 = vpack.c.bf16 %v3376, %v3376
      %v3381 = vpack.c.bf16 %v3377, %v3377
      %v3382 = vpack.c.bf16 %v3378, %v3378
      %v3383 = vpack.c.bf16 %v3379, %v3379
      %v3384 = vpack.c.bf16 %v2983, %v2983
      %v3385 = vpack.c.bf16 %v3035, %v3035
      %v3386 = vpack.c.bf16 %v3087, %v3087
      %v3387 = vpack.c.bf16 %v3139, %v3139
      %v3389 = vsel %vm1715, %v3380, 0
      %v3392 = vsel %vm1955, %v3384, 0
      %3394 = vmatprep.subr.bf16.mxu0 0
      %3395 = vmatpush1.bf16.msra.mxu0 %v3392
      %3396 = vmatprep.subr.bf16.mxu0 0
      %3397 = vmatpush1.bf16.msra.mxu0 0
      %3398 = vmatprep.subr.bf16.mxu0 0
      %3399 = vmatpush1.bf16.msra.mxu0 0
      %3400 = vmatprep.subr.bf16.mxu0 0
      %3401 = vmatpush1.bf16.msra.mxu0 0
      %3402 = vmatprep.subr.bf16.mxu0 0
      %3403 = vmatpush1.bf16.msra.mxu0 0
      %3404 = vmatprep.subr.bf16.mxu0 0
      %3405 = vmatpush1.bf16.msra.mxu0 0
      %3406 = vmatprep.subr.bf16.mxu0 0
      %3407 = vmatpush1.bf16.msra.mxu0 0
      %3408 = vmatprep.subr.bf16.mxu0 0
      %3409 = vmatpush1.bf16.msra.mxu0 0
      %3410 = vmatprep.subr.bf16.mxu0 0
      %3411 = vmatpush1.bf16.msra.mxu0 0
      %3412 = vmatprep.subr.bf16.mxu0 0
      %3413 = vmatpush1.bf16.msra.mxu0 0
      %3414 = vmatprep.subr.bf16.mxu0 0
      %3415 = vmatpush1.bf16.msra.mxu0 0
      %3416 = vmatprep.subr.bf16.mxu0 0
      %3417 = vmatpush1.bf16.msra.mxu0 0
      %3418 = vmatprep.subr.bf16.mxu0 0
      %3419 = vmatpush1.bf16.msra.mxu0 0
      %3420 = vmatprep.subr.bf16.mxu0 0
      %3421 = vmatpush1.bf16.msra.mxu0 0
      %3422 = vmatprep.subr.bf16.mxu0 0
      %3423 = vmatpush1.bf16.msra.mxu0 0
      %3424 = vmatprep.subr.bf16.mxu0 0
      %3425 = vmatpush1.bf16.msra.mxu0 0
      %3426 = vmatprep.mubr.bf16.mxu0 0
      %3427 = vmatmul.mubr.bf16.gmra.mrb[0].mxu0 %v3389
      %v3428 = vpop.f32.mrb[0].mxu0
      %v3429 = vadd.f32 0.0, %v3428
      %v3430 = vpop.f32.mrb[0].mxu0
      %v3431 = vpop.f32.mrb[0].mxu0
      %v3432 = vpop.f32.mrb[0].mxu0
      %3433 = vdwg.mxu0
      %v3435 = vsel %vm1715, %v3381, 0
      %v3438 = vsel %vm1955, %v3385, 0
      %3440 = vmatprep.subr.bf16.mxu0 0
      %3441 = vmatpush1.bf16.msra.mxu0 %v3438
      %3442 = vmatprep.subr.bf16.mxu0 0
      %3443 = vmatpush1.bf16.msra.mxu0 0
      %3444 = vmatprep.subr.bf16.mxu0 0
      %3445 = vmatpush1.bf16.msra.mxu0 0
      %3446 = vmatprep.subr.bf16.mxu0 0
      %3447 = vmatpush1.bf16.msra.mxu0 0
      %3448 = vmatprep.subr.bf16.mxu0 0
      %3449 = vmatpush1.bf16.msra.mxu0 0
      %3450 = vmatprep.subr.bf16.mxu0 0
      %3451 = vmatpush1.bf16.msra.mxu0 0
      %3452 = vmatprep.subr.bf16.mxu0 0
      %3453 = vmatpush1.bf16.msra.mxu0 0
      %3454 = vmatprep.subr.bf16.mxu0 0
      %3455 = vmatpush1.bf16.msra.mxu0 0
      %3456 = vmatprep.subr.bf16.mxu0 0
      %3457 = vmatpush1.bf16.msra.mxu0 0
      %3458 = vmatprep.subr.bf16.mxu0 0
      %3459 = vmatpush1.bf16.msra.mxu0 0
      %3460 = vmatprep.subr.bf16.mxu0 0
      %3461 = vmatpush1.bf16.msra.mxu0 0
      %3462 = vmatprep.subr.bf16.mxu0 0
      %3463 = vmatpush1.bf16.msra.mxu0 0
      %3464 = vmatprep.subr.bf16.mxu0 0
      %3465 = vmatpush1.bf16.msra.mxu0 0
      %3466 = vmatprep.subr.bf16.mxu0 0
      %3467 = vmatpush1.bf16.msra.mxu0 0
      %3468 = vmatprep.subr.bf16.mxu0 0
      %3469 = vmatpush1.bf16.msra.mxu0 0
      %3470 = vmatprep.subr.bf16.mxu0 0
      %3471 = vmatpush1.bf16.msra.mxu0 0
      %3472 = vmatprep.mubr.bf16.mxu0 0
      %3473 = vmatmul.mubr.bf16.gmra.mrb[0].mxu0 %v3435
      %v3474 = vpop.f32.mrb[0].mxu0
      %v3475 = vadd.f32 0.0, %v3474
      %v3476 = vpop.f32.mrb[0].mxu0
      %v3477 = vpop.f32.mrb[0].mxu0
      %v3478 = vpop.f32.mrb[0].mxu0
      %3479 = vdwg.mxu0
      %v3481 = vsel %vm1715, %v3382, 0
      %v3484 = vsel %vm1955, %v3386, 0
      %3486 = vmatprep.subr.bf16.mxu0 0
      %3487 = vmatpush1.bf16.msra.mxu0 %v3484
      %3488 = vmatprep.subr.bf16.mxu0 0
      %3489 = vmatpush1.bf16.msra.mxu0 0
      %3490 = vmatprep.subr.bf16.mxu0 0
      %3491 = vmatpush1.bf16.msra.mxu0 0
      %3492 = vmatprep.subr.bf16.mxu0 0
      %3493 = vmatpush1.bf16.msra.mxu0 0
      %3494 = vmatprep.subr.bf16.mxu0 0
      %3495 = vmatpush1.bf16.msra.mxu0 0
      %3496 = vmatprep.subr.bf16.mxu0 0
      %3497 = vmatpush1.bf16.msra.mxu0 0
      %3498 = vmatprep.subr.bf16.mxu0 0
      %3499 = vmatpush1.bf16.msra.mxu0 0
      %3500 = vmatprep.subr.bf16.mxu0 0
      %3501 = vmatpush1.bf16.msra.mxu0 0
      %3502 = vmatprep.subr.bf16.mxu0 0
      %3503 = vmatpush1.bf16.msra.mxu0 0
      %3504 = vmatprep.subr.bf16.mxu0 0
      %3505 = vmatpush1.bf16.msra.mxu0 0
      %3506 = vmatprep.subr.bf16.mxu0 0
      %3507 = vmatpush1.bf16.msra.mxu0 0
      %3508 = vmatprep.subr.bf16.mxu0 0
      %3509 = vmatpush1.bf16.msra.mxu0 0
      %3510 = vmatprep.subr.bf16.mxu0 0
      %3511 = vmatpush1.bf16.msra.mxu0 0
      %3512 = vmatprep.subr.bf16.mxu0 0
      %3513 = vmatpush1.bf16.msra.mxu0 0
      %3514 = vmatprep.subr.bf16.mxu0 0
      %3515 = vmatpush1.bf16.msra.mxu0 0
      %3516 = vmatprep.subr.bf16.mxu0 0
      %3517 = vmatpush1.bf16.msra.mxu0 0
      %3518 = vmatprep.mubr.bf16.mxu0 0
      %3519 = vmatmul.mubr.bf16.gmra.mrb[0].mxu0 %v3481
      %v3520 = vpop.f32.mrb[0].mxu0
      %v3521 = vadd.f32 0.0, %v3520
      %v3522 = vpop.f32.mrb[0].mxu0
      %v3523 = vpop.f32.mrb[0].mxu0
      %v3524 = vpop.f32.mrb[0].mxu0
      %3525 = vdwg.mxu0
      %v3527 = vsel %vm1715, %v3383, 0
      %v3530 = vsel %vm1955, %v3387, 0
      %3532 = vmatprep.subr.bf16.mxu0 0
      %3533 = vmatpush1.bf16.msra.mxu0 %v3530
      %3534 = vmatprep.subr.bf16.mxu0 0
      %3535 = vmatpush1.bf16.msra.mxu0 0
      %3536 = vmatprep.subr.bf16.mxu0 0
      %3537 = vmatpush1.bf16.msra.mxu0 0
      %3538 = vmatprep.subr.bf16.mxu0 0
      %3539 = vmatpush1.bf16.msra.mxu0 0
      %3540 = vmatprep.subr.bf16.mxu0 0
      %3541 = vmatpush1.bf16.msra.mxu0 0
      %3542 = vmatprep.subr.bf16.mxu0 0
      %3543 = vmatpush1.bf16.msra.mxu0 0
      %3544 = vmatprep.subr.bf16.mxu0 0
      %3545 = vmatpush1.bf16.msra.mxu0 0
      %3546 = vmatprep.subr.bf16.mxu0 0
      %3547 = vmatpush1.bf16.msra.mxu0 0
      %3548 = vmatprep.subr.bf16.mxu0 0
      %3549 = vmatpush1.bf16.msra.mxu0 0
      %3550 = vmatprep.subr.bf16.mxu0 0
      %3551 = vmatpush1.bf16.msra.mxu0 0
      %3552 = vmatprep.subr.bf16.mxu0 0
      %3553 = vmatpush1.bf16.msra.mxu0 0
      %3554 = vmatprep.subr.bf16.mxu0 0
      %3555 = vmatpush1.bf16.msra.mxu0 0
      %3556 = vmatprep.subr.bf16.mxu0 0
      %3557 = vmatpush1.bf16.msra.mxu0 0
      %3558 = vmatprep.subr.bf16.mxu0 0
      %3559 = vmatpush1.bf16.msra.mxu0 0
      %3560 = vmatprep.subr.bf16.mxu0 0
      %3561 = vmatpush1.bf16.msra.mxu0 0
      %3562 = vmatprep.subr.bf16.mxu0 0
      %3563 = vmatpush1.bf16.msra.mxu0 0
      %3564 = vmatprep.mubr.bf16.mxu0 0
      %3565 = vmatmul.mubr.bf16.gmra.mrb[0].mxu0 %v3527
      %v3566 = vpop.f32.mrb[0].mxu0
      %v3567 = vadd.f32 0.0, %v3566
      %v3568 = vpop.f32.mrb[0].mxu0
      %v3569 = vpop.f32.mrb[0].mxu0
      %v3570 = vpop.f32.mrb[0].mxu0
      %3571 = vdwg.mxu0
      %v3572 = vpack.c.bf16 %v3429, %v3429
      %v3573 = vpack.c.bf16 %v3475, %v3475
      %v3574 = vpack.c.bf16 %v3521, %v3521
      %v3575 = vpack.c.bf16 %v3567, %v3567
      %v3577 = vsel %vm1715, %v3572, 0
      %v3580 = vsel %vm1955, %v2431, 0
      %3582 = vmatprep.subr.bf16.mxu0 0
      %3583 = vmatpush1.bf16.msra.mxu0 %v3580
      %3584 = vmatprep.subr.bf16.mxu0 0
      %3585 = vmatpush1.bf16.msra.mxu0 0
      %3586 = vmatprep.subr.bf16.mxu0 0
      %3587 = vmatpush1.bf16.msra.mxu0 0
      %3588 = vmatprep.subr.bf16.mxu0 0
      %3589 = vmatpush1.bf16.msra.mxu0 0
      %3590 = vmatprep.subr.bf16.mxu0 0
      %3591 = vmatpush1.bf16.msra.mxu0 0
      %3592 = vmatprep.subr.bf16.mxu0 0
      %3593 = vmatpush1.bf16.msra.mxu0 0
      %3594 = vmatprep.subr.bf16.mxu0 0
      %3595 = vmatpush1.bf16.msra.mxu0 0
      %3596 = vmatprep.subr.bf16.mxu0 0
      %3597 = vmatpush1.bf16.msra.mxu0 0
      %3598 = vmatprep.subr.bf16.mxu0 0
      %3599 = vmatpush1.bf16.msra.mxu0 0
      %3600 = vmatprep.subr.bf16.mxu0 0
      %3601 = vmatpush1.bf16.msra.mxu0 0
      %3602 = vmatprep.subr.bf16.mxu0 0
      %3603 = vmatpush1.bf16.msra.mxu0 0
      %3604 = vmatprep.subr.bf16.mxu0 0
      %3605 = vmatpush1.bf16.msra.mxu0 0
      %3606 = vmatprep.subr.bf16.mxu0 0
      %3607 = vmatpush1.bf16.msra.mxu0 0
      %3608 = vmatprep.subr.bf16.mxu0 0
      %3609 = vmatpush1.bf16.msra.mxu0 0
      %3610 = vmatprep.subr.bf16.mxu0 0
      %3611 = vmatpush1.bf16.msra.mxu0 0
      %3612 = vmatprep.subr.bf16.mxu0 0
      %3613 = vmatpush1.bf16.msra.mxu0 0
      %3614 = vmatprep.mubr.bf16.mxu0 0
      %3615 = vmatmul.mubr.bf16.gmra.mrb[0].mxu0 %v3577
      %v3616 = vpop.f32.mrb[0].mxu0
      %v3617 = vadd.f32 0.0, %v3616
      %v3618 = vpop.f32.mrb[0].mxu0
      %v3619 = vpop.f32.mrb[0].mxu0
      %v3620 = vpop.f32.mrb[0].mxu0
      %3621 = vdwg.mxu0
      %v3623 = vsel %vm1715, %v3573, 0
      %v3626 = vsel %vm1955, %v2432, 0
      %3628 = vmatprep.subr.bf16.mxu0 0
      %3629 = vmatpush1.bf16.msra.mxu0 %v3626
      %3630 = vmatprep.subr.bf16.mxu0 0
      %3631 = vmatpush1.bf16.msra.mxu0 0
      %3632 = vmatprep.subr.bf16.mxu0 0
      %3633 = vmatpush1.bf16.msra.mxu0 0
      %3634 = vmatprep.subr.bf16.mxu0 0
      %3635 = vmatpush1.bf16.msra.mxu0 0
      %3636 = vmatprep.subr.bf16.mxu0 0
      %3637 = vmatpush1.bf16.msra.mxu0 0
      %3638 = vmatprep.subr.bf16.mxu0 0
      %3639 = vmatpush1.bf16.msra.mxu0 0
      %3640 = vmatprep.subr.bf16.mxu0 0
      %3641 = vmatpush1.bf16.msra.mxu0 0
      %3642 = vmatprep.subr.bf16.mxu0 0
      %3643 = vmatpush1.bf16.msra.mxu0 0
      %3644 = vmatprep.subr.bf16.mxu0 0
      %3645 = vmatpush1.bf16.msra.mxu0 0
      %3646 = vmatprep.subr.bf16.mxu0 0
      %3647 = vmatpush1.bf16.msra.mxu0 0
      %3648 = vmatprep.subr.bf16.mxu0 0
      %3649 = vmatpush1.bf16.msra.mxu0 0
      %3650 = vmatprep.subr.bf16.mxu0 0
      %3651 = vmatpush1.bf16.msra.mxu0 0
      %3652 = vmatprep.subr.bf16.mxu0 0
      %3653 = vmatpush1.bf16.msra.mxu0 0
      %3654 = vmatprep.subr.bf16.mxu0 0
      %3655 = vmatpush1.bf16.msra.mxu0 0
      %3656 = vmatprep.subr.bf16.mxu0 0
      %3657 = vmatpush1.bf16.msra.mxu0 0
      %3658 = vmatprep.subr.bf16.mxu0 0
      %3659 = vmatpush1.bf16.msra.mxu0 0
      %3660 = vmatprep.mubr.bf16.mxu0 0
      %3661 = vmatmul.mubr.bf16.gmra.mrb[0].mxu0 %v3623
      %v3662 = vpop.f32.mrb[0].mxu0
      %v3663 = vadd.f32 0.0, %v3662
      %v3664 = vpop.f32.mrb[0].mxu0
      %v3665 = vpop.f32.mrb[0].mxu0
      %v3666 = vpop.f32.mrb[0].mxu0
      %3667 = vdwg.mxu0
      %v3669 = vsel %vm1715, %v3574, 0
      %v3672 = vsel %vm1955, %v2433, 0
      %3674 = vmatprep.subr.bf16.mxu0 0
      %3675 = vmatpush1.bf16.msra.mxu0 %v3672
      %3676 = vmatprep.subr.bf16.mxu0 0
      %3677 = vmatpush1.bf16.msra.mxu0 0
      %3678 = vmatprep.subr.bf16.mxu0 0
      %3679 = vmatpush1.bf16.msra.mxu0 0
      %3680 = vmatprep.subr.bf16.mxu0 0
      %3681 = vmatpush1.bf16.msra.mxu0 0
      %3682 = vmatprep.subr.bf16.mxu0 0
      %3683 = vmatpush1.bf16.msra.mxu0 0
      %3684 = vmatprep.subr.bf16.mxu0 0
      %3685 = vmatpush1.bf16.msra.mxu0 0
      %3686 = vmatprep.subr.bf16.mxu0 0
      %3687 = vmatpush1.bf16.msra.mxu0 0
      %3688 = vmatprep.subr.bf16.mxu0 0
      %3689 = vmatpush1.bf16.msra.mxu0 0
      %3690 = vmatprep.subr.bf16.mxu0 0
      %3691 = vmatpush1.bf16.msra.mxu0 0
      %3692 = vmatprep.subr.bf16.mxu0 0
      %3693 = vmatpush1.bf16.msra.mxu0 0
      %3694 = vmatprep.subr.bf16.mxu0 0
      %3695 = vmatpush1.bf16.msra.mxu0 0
      %3696 = vmatprep.subr.bf16.mxu0 0
      %3697 = vmatpush1.bf16.msra.mxu0 0
      %3698 = vmatprep.subr.bf16.mxu0 0
      %3699 = vmatpush1.bf16.msra.mxu0 0
      %3700 = vmatprep.subr.bf16.mxu0 0
      %3701 = vmatpush1.bf16.msra.mxu0 0
      %3702 = vmatprep.subr.bf16.mxu0 0
      %3703 = vmatpush1.bf16.msra.mxu0 0
      %3704 = vmatprep.subr.bf16.mxu0 0
      %3705 = vmatpush1.bf16.msra.mxu0 0
      %3706 = vmatprep.mubr.bf16.mxu0 0
      %3707 = vmatmul.mubr.bf16.gmra.mrb[0].mxu0 %v3669
      %v3708 = vpop.f32.mrb[0].mxu0
      %v3709 = vadd.f32 0.0, %v3708
      %v3710 = vpop.f32.mrb[0].mxu0
      %v3711 = vpop.f32.mrb[0].mxu0
      %v3712 = vpop.f32.mrb[0].mxu0
      %3713 = vdwg.mxu0
      %v3715 = vsel %vm1715, %v3575, 0
      %v3718 = vsel %vm1955, %v2434, 0
      %3720 = vmatprep.subr.bf16.mxu0 0
      %3721 = vmatpush1.bf16.msra.mxu0 %v3718
      %3722 = vmatprep.subr.bf16.mxu0 0
      %3723 = vmatpush1.bf16.msra.mxu0 0
      %3724 = vmatprep.subr.bf16.mxu0 0
      %3725 = vmatpush1.bf16.msra.mxu0 0
      %3726 = vmatprep.subr.bf16.mxu0 0
      %3727 = vmatpush1.bf16.msra.mxu0 0
      %3728 = vmatprep.subr.bf16.mxu0 0
      %3729 = vmatpush1.bf16.msra.mxu0 0
      %3730 = vmatprep.subr.bf16.mxu0 0
      %3731 = vmatpush1.bf16.msra.mxu0 0
      %3732 = vmatprep.subr.bf16.mxu0 0
      %3733 = vmatpush1.bf16.msra.mxu0 0
      %3734 = vmatprep.subr.bf16.mxu0 0
      %3735 = vmatpush1.bf16.msra.mxu0 0
      %3736 = vmatprep.subr.bf16.mxu0 0
      %3737 = vmatpush1.bf16.msra.mxu0 0
      %3738 = vmatprep.subr.bf16.mxu0 0
      %3739 = vmatpush1.bf16.msra.mxu0 0
      %3740 = vmatprep.subr.bf16.mxu0 0
      %3741 = vmatpush1.bf16.msra.mxu0 0
      %3742 = vmatprep.subr.bf16.mxu0 0
      %3743 = vmatpush1.bf16.msra.mxu0 0
      %3744 = vmatprep.subr.bf16.mxu0 0
      %3745 = vmatpush1.bf16.msra.mxu0 0
      %3746 = vmatprep.subr.bf16.mxu0 0
      %3747 = vmatpush1.bf16.msra.mxu0 0
      %3748 = vmatprep.subr.bf16.mxu0 0
      %3749 = vmatpush1.bf16.msra.mxu0 0
      %3750 = vmatprep.subr.bf16.mxu0 0
      %3751 = vmatpush1.bf16.msra.mxu0 0
      %3752 = vmatprep.mubr.bf16.mxu0 0
      %3753 = vmatmul.mubr.bf16.gmra.mrb[0].mxu0 %v3715
      %v3754 = vpop.f32.mrb[0].mxu0
      %v3755 = vadd.f32 0.0, %v3754
      %v3756 = vpop.f32.mrb[0].mxu0
      %v3757 = vpop.f32.mrb[0].mxu0
      %v3758 = vpop.f32.mrb[0].mxu0
      %3759 = vdwg.mxu0
      %v3760 = vsel %vm1039, %v3617, 0.0
      %v3761 = vsel %vm1039, %v3663, 0.0
      %v3762 = vadd.f32 %v3760, %v3761
      %v3763 = vsel %vm1039, %v3709, 0.0
      %v3764 = vadd.f32 %v3762, %v3763
      %v3765 = vsel %vm1039, %v3755, 0.0
      %v3766 = vadd.f32 %v3764, %v3765
      %v3768 = vlaneseq
      %v3769 = vshrl.u32 %v3768, 7
      %v3770 = vsub.s32 0, %v3769
      %v3771 = vrot.slane %v2435, %v3770
      %v3773 = vadd.f32 %v3766, %v3771
      %v3774 = vadd.f32 %v2369, %v3773
      %v3775 = vld [vmem:[%s43] sm:$0x1]
      %v3776 = vld [vmem:[%s45] sm:$0x1]
      %v3777 = vsel %vm1039, %v3774, 0.0
      %3778 = vadd.xlane.f32.xlu0 %v3777
      %v3779 = vpop.xlane.xlu0 %3778
      %v3780 = vmul.f32 %v3779, %v2345
      %v3781 = vsub.f32 %v3774, %v3780
      %v3782 = vmul.f32 %v3781, %v3781
      %v3783 = vsel %vm1039, %v3782, 0.0
      %3784 = vadd.xlane.f32.xlu0 %v3783
      %v3785 = vpop.xlane.xlu0 %3784
      %v3786 = vmul.f32 %v3785, %v2345
      %v3787 = vadd.f32 %v3786, 1e-05
      %v3788 = vrsqrt.pop %v3787
      %v3789 = vmul.f32 %v3781, %v3788
      %v3791 = vlaneseq
      %v3792 = vshrl.u32 %v3791, 7
      %v3793 = vsub.s32 0, %v3792
      %v3794 = vrot.slane %v3775, %v3793
      %v3796 = vmul.f32 %v3789, %v3794
      %v3798 = vlaneseq
      %v3799 = vshrl.u32 %v3798, 7
      %v3800 = vsub.s32 0, %v3799
      %v3801 = vrot.slane %v3776, %v3800
      %v3803 = vadd.f32 %v3796, %v3801
      %v3804 = vld [vmem:[%s47] sm:$0xf]
      %v3805 = vld [vmem:[%s47 + $0x4] sm:$0xf]
      %v3806 = vld [vmem:[%s47 + $0x8] sm:$0xf]
      %v3807 = vld [vmem:[%s47 + $0xc] sm:$0xf]
      %v3808 = vld [vmem:[%s49] sm:$0x1]
      %v3809 = vld [vmem:[%s51] sm:$0xf]
      %v3810 = vld [vmem:[%s51 + $0x4] sm:$0xf]
      %v3811 = vld [vmem:[%s51 + $0x8] sm:$0xf]
      %v3812 = vld [vmem:[%s51 + $0xc] sm:$0xf]
      %v3813 = vld [vmem:[%s51 + $0x10] sm:$0xf]
      %v3814 = vld [vmem:[%s51 + $0x14] sm:$0xf]
      %v3815 = vld [vmem:[%s51 + $0x18] sm:$0xf]
      %v3816 = vld [vmem:[%s51 + $0x1c] sm:$0xf]
      %v3817 = vld [vmem:[%s53] sm:$0x1]
      %v3818 = vpack.c.bf16 %v3803, %v3803
      %v3820 = vlaneseq
      %v3821 = vshrl.u32 %v3820, 7
      %v3822 = vsub.s32 0, %v3821
      %v3823 = vrot.slane %v3808, %v3822
      %v3829 = vunpack.c.l.b16 %v3804
      %v3830 = vunpack.c.l.b16 %v3805
      %v3831 = vunpack.c.l.b16 %v3806
      %v3832 = vunpack.c.l.b16 %v3807
      %v3833 = vpack.c.b16 %v3830, %v3829
      %v3834 = vpack.c.b16 %v3832, %v3831
      %v3838 = vsel %vm1039, %v3818, 0
      %3840 = vmatprep.subr.bf16.mxu0 0
      %3841 = vmatpush1.bf16.msra.mxu0 %v3833
      %3842 = vmatprep.subr.bf16.mxu0 0
      %3843 = vmatpush1.bf16.msra.mxu0 %v3834
      %3844 = vmatprep.subr.bf16.mxu0 0
      %3845 = vmatpush1.bf16.msra.mxu0 0
      %3846 = vmatprep.subr.bf16.mxu0 0
      %3847 = vmatpush1.bf16.msra.mxu0 0
      %3848 = vmatprep.subr.bf16.mxu0 0
      %3849 = vmatpush1.bf16.msra.mxu0 0
      %3850 = vmatprep.subr.bf16.mxu0 0
      %3851 = vmatpush1.bf16.msra.mxu0 0
      %3852 = vmatprep.subr.bf16.mxu0 0
      %3853 = vmatpush1.bf16.msra.mxu0 0
      %3854 = vmatprep.subr.bf16.mxu0 0
      %3855 = vmatpush1.bf16.msra.mxu0 0
      %3856 = vmatprep.subr.bf16.mxu0 0
      %3857 = vmatpush1.bf16.msra.mxu0 0
      %3858 = vmatprep.subr.bf16.mxu0 0
      %3859 = vmatpush1.bf16.msra.mxu0 0
      %3860 = vmatprep.subr.bf16.mxu0 0
      %3861 = vmatpush1.bf16.msra.mxu0 0
      %3862 = vmatprep.subr.bf16.mxu0 0
      %3863 = vmatpush1.bf16.msra.mxu0 0
      %3864 = vmatprep.subr.bf16.mxu0 0
      %3865 = vmatpush1.bf16.msra.mxu0 0
      %3866 = vmatprep.subr.bf16.mxu0 0
      %3867 = vmatpush1.bf16.msra.mxu0 0
      %3868 = vmatprep.subr.bf16.mxu0 0
      %3869 = vmatpush1.bf16.msra.mxu0 0
      %3870 = vmatprep.subr.bf16.mxu0 0
      %3871 = vmatpush1.bf16.msra.mxu0 0
      %3872 = vmatprep.mubr.bf16.mxu0 0
      %3873 = vmatmul.mubr.bf16.gmra.mrb[0].mxu0 %v3838
      %v3874 = vpop.f32.mrb[0].mxu0
      %v3875 = vadd.f32 %v3823, %v3874
      %v3876 = vpop.f32.mrb[0].mxu0
      %v3877 = vpop.f32.mrb[0].mxu0
      %v3878 = vpop.f32.mrb[0].mxu0
      %3879 = vdwg.mxu0
      %v3880 = vmax.f32 %v3875, 0.0
      %v3881 = vpack.c.bf16 %v3880, %v3880
      %v3883 = vlaneseq
      %v3884 = vshrl.u32 %v3883, 7
      %v3885 = vsub.s32 0, %v3884
      %v3886 = vrot.slane %v3817, %v3885
      %v3896 = vunpack.c.l.b16 %v3809
      %v3897 = vunpack.c.l.b16 %v3810
      %v3898 = vunpack.c.l.b16 %v3811
      %v3899 = vunpack.c.l.b16 %v3812
      %v3900 = vunpack.c.l.b16 %v3813
      %v3901 = vunpack.c.l.b16 %v3814
      %v3902 = vunpack.c.l.b16 %v3815
      %v3903 = vunpack.c.l.b16 %v3816
      %v3904 = vpack.c.b16 %v3897, %v3896
      %v3905 = vpack.c.b16 %v3899, %v3898
      %v3906 = vpack.c.b16 %v3901, %v3900
      %v3907 = vpack.c.b16 %v3903, %v3902
      %vm3912 = vcmask 523264
      %v3914 = vsel %vm3912, %v3881, 0
      %3916 = vmatprep.subr.bf16.mxu0 0
      %3917 = vmatpush1.bf16.msra.mxu0 %v3904
      %3918 = vmatprep.subr.bf16.mxu0 0
      %3919 = vmatpush1.bf16.msra.mxu0 %v3905
      %3920 = vmatprep.subr.bf16.mxu0 0
      %3921 = vmatpush1.bf16.msra.mxu0 %v3906
      %3922 = vmatprep.subr.bf16.mxu0 0
      %3923 = vmatpush1.bf16.msra.mxu0 %v3907
      %3924 = vmatprep.subr.bf16.mxu0 0
      %3925 = vmatpush1.bf16.msra.mxu0 0
      %3926 = vmatprep.subr.bf16.mxu0 0
      %3927 = vmatpush1.bf16.msra.mxu0 0
      %3928 = vmatprep.subr.bf16.mxu0 0
      %3929 = vmatpush1.bf16.msra.mxu0 0
      %3930 = vmatprep.subr.bf16.mxu0 0
      %3931 = vmatpush1.bf16.msra.mxu0 0
      %3932 = vmatprep.subr.bf16.mxu0 0
      %3933 = vmatpush1.bf16.msra.mxu0 0
      %3934 = vmatprep.subr.bf16.mxu0 0
      %3935 = vmatpush1.bf16.msra.mxu0 0
      %3936 = vmatprep.subr.bf16.mxu0 0
      %3937 = vmatpush1.bf16.msra.mxu0 0
      %3938 = vmatprep.subr.bf16.mxu0 0
      %3939 = vmatpush1.bf16.msra.mxu0 0
      %3940 = vmatprep.subr.bf16.mxu0 0
      %3941 = vmatpush1.bf16.msra.mxu0 0
      %3942 = vmatprep.subr.bf16.mxu0 0
      %3943 = vmatpush1.bf16.msra.mxu0 0
      %3944 = vmatprep.subr.bf16.mxu0 0
      %3945 = vmatpush1.bf16.msra.mxu0 0
      %3946 = vmatprep.subr.bf16.mxu0 0
      %3947 = vmatpush1.bf16.msra.mxu0 0
      %3948 = vmatprep.mubr.bf16.mxu0 0
      %3949 = vmatmul.mubr.bf16.gmra.mrb[0].mxu0 %v3914
      %v3950 = vpop.f32.mrb[0].mxu0
      %v3951 = vadd.f32 %v3886, %v3950
      %v3952 = vpop.f32.mrb[0].mxu0
      %v3953 = vpop.f32.mrb[0].mxu0
      %v3954 = vpop.f32.mrb[0].mxu0
      %3955 = vdwg.mxu0
      %v3956 = vadd.f32 %v3803, %v3951
      %v3957 = vld [vmem:[%s55] sm:$0x1]
      %v3958 = vld [vmem:[%s57] sm:$0x1]
      %v3959 = vsel %vm1039, %v3956, 0.0
      %3960 = vadd.xlane.f32.xlu0 %v3959
      %v3961 = vpop.xlane.xlu0 %3960
      %v3962 = vmul.f32 %v3961, %v2345
      %v3963 = vsub.f32 %v3956, %v3962
      %v3964 = vmul.f32 %v3963, %v3963
      %v3965 = vsel %vm1039, %v3964, 0.0
      %3966 = vadd.xlane.f32.xlu0 %v3965
      %v3967 = vpop.xlane.xlu0 %3966
      %v3968 = vmul.f32 %v3967, %v2345
      %v3969 = vadd.f32 %v3968, 1e-05
      %v3970 = vrsqrt.pop %v3969
      %v3971 = vmul.f32 %v3963, %v3970
      %v3973 = vlaneseq
      %v3974 = vshrl.u32 %v3973, 7
      %v3975 = vsub.s32 0, %v3974
      %v3976 = vrot.slane %v3957, %v3975
      %v3978 = vmul.f32 %v3971, %v3976
      %v3980 = vlaneseq
      %v3981 = vshrl.u32 %v3980, 7
      %v3982 = vsub.s32 0, %v3981
      %v3983 = vrot.slane %v3958, %v3982
      %v3985 = vadd.f32 %v3978, %v3983
      %3986 = vst.msk [vmem:[%s931] sm:$0xff] %vm1039, %v3985
      %p3987 = scmp.lt.s32.totalorder %s70, 1
      %s3988 = scalar_select %p3987, %s70, 1
      %s3989 = smul.addr %s3988, 8
      %s3990 = scalar_lea.vmem %s59, %s3989
      // Predicated region
      $region137: #{transformer_forward.7} parent=135 // pred_check
        %p3991 = pneg %p712
      $region138: #{transformer_forward.7} parent=135 // pred_check_branch
        %3993 = sbr.rel (%p3991) target = $region140
      $region139: #{transformer_forward.7} parent=135 // pred_region
        _
      $region140: #{transformer_forward.7} parent=135 // pred_fallthru
        _
    $region136: #{transformer_forward.7} parent=5 // pred_fallthru
      _
    %p3994 = scmp.le.s32.totalorder 2, %s65
    // Predicated region
    $region141: #{transformer_forward.7} parent=5 // pred_check
      %p3995 = pneg %p3994
    $region142: #{transformer_forward.7} parent=5 // pred_check_branch
      %3997 = sbr.rel (%p3995) target = $region144
    $region143: #{transformer_forward.7} parent=5 // pred_region
      %s3998 = ssub.s32 %s65, 2
      // Predicated region
      $region145: #{transformer_forward.7} parent=143 // pred_check
        %p3999 = pneg %p718
      $region146: #{transformer_forward.7} parent=143 // pred_check_branch
        %4001 = sbr.rel (%p3999) target = $region148
      $region147: #{transformer_forward.7} parent=143 // pred_region
        %p4002 = scmp.lt.s32.totalorder %s71, 1
        %s4003 = scalar_select %p4002, %s71, 1
        %s4004 = smul.addr %s4003, 8
        %s4005 = scalar_lea.vmem %s59, %s4004
      $region148: #{transformer_forward.7} parent=143 // pred_fallthru
        _
    $region144: #{transformer_forward.7} parent=5 // pred_fallthru
      _
  $region6: #{transformer_forward.7} parent=0 // loop_footer
    %s69 = sadd.s32 1, %s65
  $region7: #{transformer_forward.7} parent=0 // loop_footer_branch
    %64 = sbr.rel target = $region3
  $region8: #{transformer_forward.7} parent=0 // loop_exit
    _

</llo_original>
